<compile_context>
chip_gen: v7x
topology: tpu7x:2x2x1
jax: 0.10.0
libtpu: 0.0.40
codegen_flags: <defaults>
</compile_context>

<pallas_src>
import functools

import jax
import jax.numpy as jnp
from jax import lax
from jax.experimental import pallas as pl
from jax.experimental.pallas import tpu as pltpu


# -----------------------------------------------------------------------------
# Generation-dependent knobs
# -----------------------------------------------------------------------------
def _default_compute_dtype():
    """bf16 tap math on v6e/v7x (packed bf16 VALU); f32 on v5e and older."""
    try:
        kind = jax.devices()[0].device_kind.lower()
    except Exception:
        return jnp.float32
    if ('v6' in kind) or ('v7' in kind) or ('tpu7' in kind):
        return jnp.bfloat16
    return jnp.float32


def _vmem_limit_bytes():
    """Half of physical VMEM: 64 MiB on v5e/v6e (128 MiB), 32 MiB on v7x (64 MiB)."""
    try:
        cap = int(pltpu.get_tpu_info().vmem_capacity_bytes)
    except Exception:
        cap = 128 * 1024 * 1024
    return cap // 2


# -----------------------------------------------------------------------------
# Pallas kernel: CSPN propagation loop (the compute that matters)
# -----------------------------------------------------------------------------
def _cspn_prop_kernel(hn_ref, h0_ref, w3_ref, w5_ref, w7_ref,
                      mask_ref, conf_ref, out_ref,
                      wm3_ref, wm5_ref, wm7_ref, *, pt, compute_dtype):
    H, W = hn_ref.shape[2], hn_ref.shape[3]

    hn = hn_ref[0, 0]
    h0 = h0_ref[0, 0]

    m3 = mask_ref[0, 0]
    m5 = mask_ref[0, 1]
    m7 = mask_ref[0, 2]
    c3 = conf_ref[0, 0]
    c5 = conf_ref[0, 1]
    c7 = conf_ref[0, 2]

    # Hoisted loop invariants (Mosaic does not reliably CSE these across the
    # unrolled pt iterations).
    om3 = 1.0 - m3
    om5 = 1.0 - m5
    om7 = 1.0 - m7
    mh3 = m3 * h0
    mh5 = m5 * h0
    mh7 = m7 * h0

    # ---- Fold zero-padding into border-masked weights, once per grid step ----
    # Tap (oy, ox) reads in[y+oy, x+ox] with zero padding, i.e. the tap only
    # contributes where 0 <= y+oy < H and 0 <= x+ox < W; outside that region we
    # zero the *weight* instead, so the rolled (wrap-around) values never leak
    # into the result.  The bf16 -> compute-dtype cast also happens exactly
    # once per weight plane per grid step here, not pt times.
    row_ids = lax.broadcasted_iota(jnp.int32, (H, W), 0)
    col_ids = lax.broadcasted_iota(jnp.int32, (H, W), 1)

    def write_masked_weights(w_ref, wm_ref, pk):
        pad = pk // 2
        for k in range(pk * pk):
            oy = k // pk - pad
            ox = k % pk - pad
            w = w_ref[0, k].astype(compute_dtype)
            conds = []
            if oy < 0:
                conds.append(row_ids >= -oy)
            elif oy > 0:
                conds.append(row_ids < H - oy)
            if ox < 0:
                conds.append(col_ids >= -ox)
            elif ox > 0:
                conds.append(col_ids < W - ox)
            if conds:
                valid = functools.reduce(lambda a, b: a & b, conds)
                w = jnp.where(valid, w, 0.0)
            wm_ref[k] = w

    write_masked_weights(w3_ref, wm3_ref, 3)
    write_masked_weights(w5_ref, wm5_ref, 5)
    write_masked_weights(w7_ref, wm7_ref, 7)

    def local_conv(h, wm_ref, pk):
        # Spatially-varying pk x pk local convolution (BpOps.Conv2dLocal_F
        # semantics, zero padding).  Tap shifts are pltpu.roll rotations of the
        # unpadded plane; wrap-around contributions are already zeroed in the
        # masked weights.  One sublane roll per kernel row (f32), one lane roll
        # per tap (compute dtype).  Tap products/row sums run in compute_dtype
        # (bf16 on v6e/v7x), each kernel row is upcast once into the f32
        # accumulator.
        pad = pk // 2
        acc = None
        for dy in range(pk):
            oy = dy - pad
            h_row = h if oy == 0 else pltpu.roll(h, shift=(-oy) % H, axis=0)
            h_row = h_row.astype(compute_dtype)
            racc = None
            for dx in range(pk):
                ox = dx - pad
                k = dy * pk + dx
                h_tap = (h_row if ox == 0
                         else pltpu.roll(h_row, shift=(-ox) % W, axis=1))
                tap = wm_ref[k] * h_tap
                racc = tap if racc is None else racc + tap
            racc = racc.astype(jnp.float32)
            acc = racc if acc is None else acc + racc
        return acc

    def step(h3, h5, h7):
        h3n = om3 * local_conv(h3, wm3_ref, 3) + mh3
        h5n = om5 * local_conv(h5, wm5_ref, 5) + mh5
        h7n = om7 * local_conv(h7, wm7_ref, 7) + mh7
        return h3n, h5n, h7n

    mid_idx = pt // 2 - 1

    if pt <= 4:
        # Small pt: fully unrolled (LLO scheduler sees the whole loop body).
        h3 = h5 = h7 = hn
        for i in range(pt):
            h3, h5, h7 = step(h3, h5, h7)
            if i == mid_idx:
                out_ref[0, 0] = c3 * h3 + c5 * h5 + c7 * h7
        out_ref[0, 1] = c3 * h3 + c5 * h5 + c7 * h7
    else:
        # Large pt: a real loop bounds live ranges (3 branches x 83 taps x pt
        # fully unrolled would spill the 64-vreg file).
        def body(i, carry):
            h3, h5, h7 = step(*carry)

            @pl.when(i == mid_idx)
            def _():
                out_ref[0, 0] = c3 * h3 + c5 * h5 + c7 * h7

            return (h3, h5, h7)

        h3, h5, h7 = lax.fori_loop(0, pt, body, (hn, hn, hn))
        out_ref[0, 1] = c3 * h3 + c5 * h5 + c7 * h7


def cspn_propagate(hn, h0, w3, w5, w7, mask, conf, *, pt,
                   weights_dtype=jnp.bfloat16, compute_dtype=None):
    assert pt >= 2, "CSPN needs pt >= 2 (mid snapshot at i == pt//2 - 1)"
    B, _, H, W = hn.shape

    if compute_dtype is None:
        compute_dtype = _default_compute_dtype()

    # The 83 affinity-weight planes dominate HBM traffic and are reused only
    # pt times: store them as bf16 in HBM; cast happens once per grid step
    # inside the kernel (masked-weight scratch).
    w3 = w3.astype(weights_dtype)
    w5 = w5.astype(weights_dtype)
    w7 = w7.astype(weights_dtype)

    def spec(c):
        return pl.BlockSpec((1, c, H, W), lambda b: (b, 0, 0, 0))

    taps = 9 + 25 + 49
    flops = 2 * B * pt * (taps + 12) * H * W
    bytes_accessed = (hn.nbytes + h0.nbytes + w3.nbytes + w5.nbytes
                      + w7.nbytes + mask.nbytes + conf.nbytes
                      + B * 2 * H * W * 4)
    cost = pl.CostEstimate(flops=flops, transcendentals=0,
                           bytes_accessed=bytes_accessed)

    kern = functools.partial(_cspn_prop_kernel, pt=pt,
                             compute_dtype=compute_dtype)
    out = pl.pallas_call(
        kern,
        grid=(B,),
        in_specs=[spec(1), spec(1), spec(9), spec(25), spec(49),
                  spec(3), spec(3)],
        out_specs=spec(2),
        out_shape=jax.ShapeDtypeStruct((B, 2, H, W), jnp.float32),
        scratch_shapes=[
            pltpu.VMEM((9, H, W), compute_dtype),
            pltpu.VMEM((25, H, W), compute_dtype),
            pltpu.VMEM((49, H, W), compute_dtype),
        ],
        compiler_params=pltpu.CompilerParams(
            dimension_semantics=("parallel",),
            vmem_limit_bytes=_vmem_limit_bytes()),
        cost_estimate=cost,
    )(hn, h0, w3, w5, w7, mask, conf)
    return out[:, 0:1], out[:, 1:2]


# -----------------------------------------------------------------------------
# Plain-JAX glue: Basic2d / GenKernel / conf & mask branches
# -----------------------------------------------------------------------------
def apply_basic(x, p, act, bn=True):
    """Basic2d: 3x3 SAME conv -> (folded BN affine | bias) -> activation."""
    y = jax.lax.conv_general_dilated(
        x, p['w'], window_strides=(1, 1), padding='SAME',
        dimension_numbers=('NCHW', 'OIHW', 'NCHW'))
    if bn:
        y = y * p['scale'][None, :, None, None] + p['shift'][None, :, None, None]
    else:
        y = y + p['bias'][None, :, None, None]
    return act(y)


def gen_kernel(fout, p, eps=1e-6):
    """GenKernel: generates pk*pk per-pixel normalized affinity weights."""
    h = apply_basic(fout, p['l1'], jax.nn.relu, bn=True)
    w = apply_basic(h, p['l2'], lambda z: z, bn=True)         # pk*pk - 1 channels
    wsum = jnp.sum(jnp.abs(w), axis=1, keepdims=True)
    w = w / (wsum + eps)
    wmid = 1.0 - jnp.sum(w, axis=1, keepdims=True)
    half = w.shape[1] // 2
    return jnp.concatenate([w[:, :half], wmid, w[:, half:]], axis=1)


def cspn_forward(params, fout, hn, h0, *, pt, eps=1e-6):
    fout = fout.astype(jnp.float32)
    hn = hn.astype(jnp.float32)
    h0 = h0.astype(jnp.float32)

    w3 = gen_kernel(fout, params['w3'], eps)   # (B,  9, H, W)
    w5 = gen_kernel(fout, params['w5'], eps)   # (B, 25, H, W)
    w7 = gen_kernel(fout, params['w7'], eps)   # (B, 49, H, W)

    mask = apply_basic(apply_basic(fout, params['mask']['l1'], jax.nn.relu, bn=True),
                       params['mask']['l2'], jax.nn.sigmoid, bn=False)
    mask = mask * (h0 > 0.001).astype(jnp.float32)             # (B, 3, H, W)

    conf = apply_basic(apply_basic(fout, params['ck']['l1'], jax.nn.relu, bn=True),
                       params['ck']['l2'], lambda z: jax.nn.softmax(z, axis=1),
                       bn=False)                               # (B, 3, H, W)

    hn_mid, hn_fin = cspn_propagate(hn, h0, w3, w5, w7, mask, conf, pt=pt)

    hns = jnp.concatenate([hn, hn_mid, hn_fin], axis=1)        # (B, 3, H, W)
    wt = apply_basic(
        apply_basic(jnp.concatenate([fout, hns], axis=1),
                    params['ct']['l1'], jax.nn.relu, bn=True),
        params['ct']['l2'], lambda z: jax.nn.softmax(z, axis=1), bn=False)
    return jnp.sum(wt * hns, axis=1, keepdims=True)            # (B, 1, H, W)


# -----------------------------------------------------------------------------
# Deterministic synthetic parameter initialization
# -----------------------------------------------------------------------------
def init_params(key, C):
    keys = iter(jax.random.split(key, 64))

    def nk():
        return next(keys)

    def conv_w(oc, ic):
        return 0.1 * jax.random.normal(nk(), (oc, ic, 3, 3), jnp.float32)

    def basic_bn(ic, oc):        # conv (no bias) + folded-BN affine
        return dict(w=conv_w(oc, ic),
                    scale=1.0 + 0.05 * jax.random.normal(nk(), (oc,), jnp.float32),
                    shift=0.05 * jax.random.normal(nk(), (oc,), jnp.float32))

    def basic_bias(ic, oc):      # conv + bias (no norm)
        return dict(w=conv_w(oc, ic),
                    bias=0.05 * jax.random.normal(nk(), (oc,), jnp.float32))

    return dict(
        w3=dict(l1=basic_bn(C, C), l2=basic_bn(C, 3 * 3 - 1)),
        w5=dict(l1=basic_bn(C, C), l2=basic_bn(C, 5 * 5 - 1)),
        w7=dict(l1=basic_bn(C, C), l2=basic_bn(C, 7 * 7 - 1)),
        mask=dict(l1=basic_bn(C, C), l2=basic_bias(C, 3)),
        ck=dict(l1=basic_bn(C, C), l2=basic_bias(C, 3)),
        ct=dict(l1=basic_bn(C + 3, C), l2=basic_bias(C, 3)),
    )


# -----------------------------------------------------------------------------
if __name__ == "__main__":
    B, C, H, W = 2, 4, 16, 16
    PT = 2

    key = jax.random.PRNGKey(0)
    kp, kf, kh, k0 = jax.random.split(key, 4)

    params = init_params(kp, C)
    fout = jax.random.normal(kf, (B, C, H, W), jnp.float32)
    hn = jax.random.uniform(kh, (B, 1, H, W), jnp.float32, minval=0.0, maxval=5.0)
    h0 = jax.random.uniform(k0, (B, 1, H, W), jnp.float32, minval=-0.5, maxval=5.0)
    h0 = jnp.maximum(h0, 0.0)   # sparse depth: some exact zeros -> mask gating active

    fwd = jax.jit(functools.partial(cspn_forward, pt=PT))
    out = fwd(params, fout, hn, h0)
    out = jax.block_until_ready(out)
    assert out.shape == (B, 1, H, W) and out.dtype == jnp.float32
    assert bool(jnp.all(jnp.isfinite(out)))
    print("KERNEL_OK")
</pallas_src>

<mosaic_0001>
module attributes {stable_mosaic.version = 11 : i64} {
  func.func @_cspn_prop_kernel(%arg0: i32, %arg1: memref<1x1x16x16xf32, #tpu.memory_space<vmem>>, %arg2: memref<1x1x16x16xf32, #tpu.memory_space<vmem>>, %arg3: memref<1x9x16x16xbf16, #tpu.memory_space<vmem>>, %arg4: memref<1x25x16x16xbf16, #tpu.memory_space<vmem>>, %arg5: memref<1x49x16x16xbf16, #tpu.memory_space<vmem>>, %arg6: memref<1x3x16x16xf32, #tpu.memory_space<vmem>>, %arg7: memref<1x3x16x16xf32, #tpu.memory_space<vmem>>, %arg8: memref<1x2x16x16xf32, #tpu.memory_space<vmem>>, %arg9: memref<9x16x16xf32, #tpu.memory_space<vmem>>, %arg10: memref<25x16x16xf32, #tpu.memory_space<vmem>>, %arg11: memref<49x16x16xf32, #tpu.memory_space<vmem>>) attributes {dimension_semantics = [#tpu.dimension_semantics<parallel>], iteration_bounds = array<i64: 2>, scalar_prefetch = 0 : i64, scratch_operands = 3 : i64, tpu.core_type = #tpu.core_type<tc>, window_params = [{transform_indices = @transform_0, window_bounds = array<i64: 1, 1, 16, 16>}, {transform_indices = @transform_1, window_bounds = array<i64: 1, 1, 16, 16>}, {transform_indices = @transform_2, window_bounds = array<i64: 1, 9, 16, 16>}, {transform_indices = @transform_3, window_bounds = array<i64: 1, 25, 16, 16>}, {transform_indices = @transform_4, window_bounds = array<i64: 1, 49, 16, 16>}, {transform_indices = @transform_5, window_bounds = array<i64: 1, 3, 16, 16>}, {transform_indices = @transform_6, window_bounds = array<i64: 1, 3, 16, 16>}, {transform_indices = @transform_7, window_bounds = array<i64: 1, 2, 16, 16>}]} {
    %c0 = arith.constant 0 : index
    %c0_0 = arith.constant 0 : index
    %c0_1 = arith.constant 0 : index
    %c0_2 = arith.constant 0 : index
    %0 = vector.load %arg1[%c0, %c0_0, %c0_1, %c0_2] : memref<1x1x16x16xf32, #tpu.memory_space<vmem>>, vector<1x1x16x16xf32>
    %1 = vector.shape_cast %0 : vector<1x1x16x16xf32> to vector<16x16xf32>
    %c0_3 = arith.constant 0 : index
    %c0_4 = arith.constant 0 : index
    %c0_5 = arith.constant 0 : index
    %c0_6 = arith.constant 0 : index
    %2 = vector.load %arg2[%c0_3, %c0_4, %c0_5, %c0_6] : memref<1x1x16x16xf32, #tpu.memory_space<vmem>>, vector<1x1x16x16xf32>
    %3 = vector.shape_cast %2 : vector<1x1x16x16xf32> to vector<16x16xf32>
    %c0_7 = arith.constant 0 : index
    %c0_8 = arith.constant 0 : index
    %c0_9 = arith.constant 0 : index
    %c0_10 = arith.constant 0 : index
    %4 = vector.load %arg6[%c0_7, %c0_8, %c0_9, %c0_10] : memref<1x3x16x16xf32, #tpu.memory_space<vmem>>, vector<1x1x16x16xf32>
    %5 = vector.shape_cast %4 : vector<1x1x16x16xf32> to vector<16x16xf32>
    %c0_11 = arith.constant 0 : index
    %c1 = arith.constant 1 : index
    %c0_12 = arith.constant 0 : index
    %c0_13 = arith.constant 0 : index
    %6 = vector.load %arg6[%c0_11, %c1, %c0_12, %c0_13] : memref<1x3x16x16xf32, #tpu.memory_space<vmem>>, vector<1x1x16x16xf32>
    %7 = vector.shape_cast %6 : vector<1x1x16x16xf32> to vector<16x16xf32>
    %c0_14 = arith.constant 0 : index
    %c2 = arith.constant 2 : index
    %c0_15 = arith.constant 0 : index
    %c0_16 = arith.constant 0 : index
    %8 = vector.load %arg6[%c0_14, %c2, %c0_15, %c0_16] : memref<1x3x16x16xf32, #tpu.memory_space<vmem>>, vector<1x1x16x16xf32>
    %9 = vector.shape_cast %8 : vector<1x1x16x16xf32> to vector<16x16xf32>
    %c0_17 = arith.constant 0 : index
    %c0_18 = arith.constant 0 : index
    %c0_19 = arith.constant 0 : index
    %c0_20 = arith.constant 0 : index
    %10 = vector.load %arg7[%c0_17, %c0_18, %c0_19, %c0_20] : memref<1x3x16x16xf32, #tpu.memory_space<vmem>>, vector<1x1x16x16xf32>
    %11 = vector.shape_cast %10 : vector<1x1x16x16xf32> to vector<16x16xf32>
    %c0_21 = arith.constant 0 : index
    %c1_22 = arith.constant 1 : index
    %c0_23 = arith.constant 0 : index
    %c0_24 = arith.constant 0 : index
    %12 = vector.load %arg7[%c0_21, %c1_22, %c0_23, %c0_24] : memref<1x3x16x16xf32, #tpu.memory_space<vmem>>, vector<1x1x16x16xf32>
    %13 = vector.shape_cast %12 : vector<1x1x16x16xf32> to vector<16x16xf32>
    %c0_25 = arith.constant 0 : index
    %c2_26 = arith.constant 2 : index
    %c0_27 = arith.constant 0 : index
    %c0_28 = arith.constant 0 : index
    %14 = vector.load %arg7[%c0_25, %c2_26, %c0_27, %c0_28] : memref<1x3x16x16xf32, #tpu.memory_space<vmem>>, vector<1x1x16x16xf32>
    %15 = vector.shape_cast %14 : vector<1x1x16x16xf32> to vector<16x16xf32>
    %cst = arith.constant 1.000000e+00 : f32
    %16 = vector.broadcast %cst : f32 to vector<16x16xf32>
    %17 = arith.subf %16, %5 : vector<16x16xf32>
    %cst_29 = arith.constant 1.000000e+00 : f32
    %18 = vector.broadcast %cst_29 : f32 to vector<16x16xf32>
    %19 = arith.subf %18, %7 : vector<16x16xf32>
    %cst_30 = arith.constant 1.000000e+00 : f32
    %20 = vector.broadcast %cst_30 : f32 to vector<16x16xf32>
    %21 = arith.subf %20, %9 : vector<16x16xf32>
    %22 = arith.mulf %5, %3 : vector<16x16xf32>
    %23 = arith.mulf %7, %3 : vector<16x16xf32>
    %24 = arith.mulf %9, %3 : vector<16x16xf32>
    %25 = tpu.iota {dimensions = array<i32: 0>} : vector<16x16xi32>
    %26 = tpu.iota {dimensions = array<i32: 1>} : vector<16x16xi32>
    %c0_31 = arith.constant 0 : index
    %c0_32 = arith.constant 0 : index
    %c0_33 = arith.constant 0 : index
    %c0_34 = arith.constant 0 : index
    %27 = vector.load %arg3[%c0_31, %c0_32, %c0_33, %c0_34] : memref<1x9x16x16xbf16, #tpu.memory_space<vmem>>, vector<1x1x16x16xbf16>
    %28 = vector.shape_cast %27 : vector<1x1x16x16xbf16> to vector<16x16xbf16>
    %29 = arith.extf %28 : vector<16x16xbf16> to vector<16x16xf32>
    %c1_i32 = arith.constant 1 : i32
    %30 = vector.broadcast %c1_i32 : i32 to vector<16x16xi32>
    %31 = arith.cmpi sge, %25, %30 : vector<16x16xi32>
    %c1_i32_35 = arith.constant 1 : i32
    %32 = vector.broadcast %c1_i32_35 : i32 to vector<16x16xi32>
    %33 = arith.cmpi sge, %26, %32 : vector<16x16xi32>
    %34 = arith.andi %31, %33 : vector<16x16xi1>
    %cst_36 = arith.constant 0.000000e+00 : f32
    %35 = vector.broadcast %cst_36 : f32 to vector<16x16xf32>
    %36 = arith.select %34, %29, %35 : vector<16x16xi1>, vector<16x16xf32>
    %c0_37 = arith.constant 0 : index
    %c0_38 = arith.constant 0 : index
    %c0_39 = arith.constant 0 : index
    %37 = vector.load %arg9[%c0_37, %c0_38, %c0_39] : memref<9x16x16xf32, #tpu.memory_space<vmem>>, vector<1x16x16xf32>
    %38 = vector.shape_cast %37 : vector<1x16x16xf32> to vector<16x16xf32>
    %39 = vector.shape_cast %36 : vector<16x16xf32> to vector<1x16x16xf32>
    tpu.vector_store %arg9[%c0_37, %c0_38, %c0_39], %39 {strides = array<i32>} : memref<9x16x16xf32, #tpu.memory_space<vmem>>, vector<1x16x16xf32>,
    %c0_40 = arith.constant 0 : index
    %c1_41 = arith.constant 1 : index
    %c0_42 = arith.constant 0 : index
    %c0_43 = arith.constant 0 : index
    %40 = vector.load %arg3[%c0_40, %c1_41, %c0_42, %c0_43] : memref<1x9x16x16xbf16, #tpu.memory_space<vmem>>, vector<1x1x16x16xbf16>
    %41 = vector.shape_cast %40 : vector<1x1x16x16xbf16> to vector<16x16xbf16>
    %42 = arith.extf %41 : vector<16x16xbf16> to vector<16x16xf32>
    %c1_i32_44 = arith.constant 1 : i32
    %43 = vector.broadcast %c1_i32_44 : i32 to vector<16x16xi32>
    %44 = arith.cmpi sge, %25, %43 : vector<16x16xi32>
    %cst_45 = arith.constant 0.000000e+00 : f32
    %45 = vector.broadcast %cst_45 : f32 to vector<16x16xf32>
    %46 = arith.select %44, %42, %45 : vector<16x16xi1>, vector<16x16xf32>
    %c1_46 = arith.constant 1 : index
    %c0_47 = arith.constant 0 : index
    %c0_48 = arith.constant 0 : index
    %47 = vector.load %arg9[%c1_46, %c0_47, %c0_48] : memref<9x16x16xf32, #tpu.memory_space<vmem>>, vector<1x16x16xf32>
    %48 = vector.shape_cast %47 : vector<1x16x16xf32> to vector<16x16xf32>
    %49 = vector.shape_cast %46 : vector<16x16xf32> to vector<1x16x16xf32>
    tpu.vector_store %arg9[%c1_46, %c0_47, %c0_48], %49 {strides = array<i32>} : memref<9x16x16xf32, #tpu.memory_space<vmem>>, vector<1x16x16xf32>,
    %c0_49 = arith.constant 0 : index
    %c2_50 = arith.constant 2 : index
    %c0_51 = arith.constant 0 : index
    %c0_52 = arith.constant 0 : index
    %50 = vector.load %arg3[%c0_49, %c2_50, %c0_51, %c0_52] : memref<1x9x16x16xbf16, #tpu.memory_space<vmem>>, vector<1x1x16x16xbf16>
    %51 = vector.shape_cast %50 : vector<1x1x16x16xbf16> to vector<16x16xbf16>
    %52 = arith.extf %51 : vector<16x16xbf16> to vector<16x16xf32>
    %c1_i32_53 = arith.constant 1 : i32
    %53 = vector.broadcast %c1_i32_53 : i32 to vector<16x16xi32>
    %54 = arith.cmpi sge, %25, %53 : vector<16x16xi32>
    %c15_i32 = arith.constant 15 : i32
    %55 = vector.broadcast %c15_i32 : i32 to vector<16x16xi32>
    %56 = arith.cmpi slt, %26, %55 : vector<16x16xi32>
    %57 = arith.andi %54, %56 : vector<16x16xi1>
    %cst_54 = arith.constant 0.000000e+00 : f32
    %58 = vector.broadcast %cst_54 : f32 to vector<16x16xf32>
    %59 = arith.select %57, %52, %58 : vector<16x16xi1>, vector<16x16xf32>
    %c2_55 = arith.constant 2 : index
    %c0_56 = arith.constant 0 : index
    %c0_57 = arith.constant 0 : index
    %60 = vector.load %arg9[%c2_55, %c0_56, %c0_57] : memref<9x16x16xf32, #tpu.memory_space<vmem>>, vector<1x16x16xf32>
    %61 = vector.shape_cast %60 : vector<1x16x16xf32> to vector<16x16xf32>
    %62 = vector.shape_cast %59 : vector<16x16xf32> to vector<1x16x16xf32>
    tpu.vector_store %arg9[%c2_55, %c0_56, %c0_57], %62 {strides = array<i32>} : memref<9x16x16xf32, #tpu.memory_space<vmem>>, vector<1x16x16xf32>,
    %c0_58 = arith.constant 0 : index
    %c3 = arith.constant 3 : index
    %c0_59 = arith.constant 0 : index
    %c0_60 = arith.constant 0 : index
    %63 = vector.load %arg3[%c0_58, %c3, %c0_59, %c0_60] : memref<1x9x16x16xbf16, #tpu.memory_space<vmem>>, vector<1x1x16x16xbf16>
    %64 = vector.shape_cast %63 : vector<1x1x16x16xbf16> to vector<16x16xbf16>
    %65 = arith.extf %64 : vector<16x16xbf16> to vector<16x16xf32>
    %c1_i32_61 = arith.constant 1 : i32
    %66 = vector.broadcast %c1_i32_61 : i32 to vector<16x16xi32>
    %67 = arith.cmpi sge, %26, %66 : vector<16x16xi32>
    %cst_62 = arith.constant 0.000000e+00 : f32
    %68 = vector.broadcast %cst_62 : f32 to vector<16x16xf32>
    %69 = arith.select %67, %65, %68 : vector<16x16xi1>, vector<16x16xf32>
    %c3_63 = arith.constant 3 : index
    %c0_64 = arith.constant 0 : index
    %c0_65 = arith.constant 0 : index
    %70 = vector.load %arg9[%c3_63, %c0_64, %c0_65] : memref<9x16x16xf32, #tpu.memory_space<vmem>>, vector<1x16x16xf32>
    %71 = vector.shape_cast %70 : vector<1x16x16xf32> to vector<16x16xf32>
    %72 = vector.shape_cast %69 : vector<16x16xf32> to vector<1x16x16xf32>
    tpu.vector_store %arg9[%c3_63, %c0_64, %c0_65], %72 {strides = array<i32>} : memref<9x16x16xf32, #tpu.memory_space<vmem>>, vector<1x16x16xf32>,
    %c0_66 = arith.constant 0 : index
    %c4 = arith.constant 4 : index
    %c0_67 = arith.constant 0 : index
    %c0_68 = arith.constant 0 : index
    %73 = vector.load %arg3[%c0_66, %c4, %c0_67, %c0_68] : memref<1x9x16x16xbf16, #tpu.memory_space<vmem>>, vector<1x1x16x16xbf16>
    %74 = vector.shape_cast %73 : vector<1x1x16x16xbf16> to vector<16x16xbf16>
    %75 = arith.extf %74 : vector<16x16xbf16> to vector<16x16xf32>
    %c4_69 = arith.constant 4 : index
    %c0_70 = arith.constant 0 : index
    %c0_71 = arith.constant 0 : index
    %76 = vector.load %arg9[%c4_69, %c0_70, %c0_71] : memref<9x16x16xf32, #tpu.memory_space<vmem>>, vector<1x16x16xf32>
    %77 = vector.shape_cast %76 : vector<1x16x16xf32> to vector<16x16xf32>
    %78 = vector.shape_cast %75 : vector<16x16xf32> to vector<1x16x16xf32>
    tpu.vector_store %arg9[%c4_69, %c0_70, %c0_71], %78 {strides = array<i32>} : memref<9x16x16xf32, #tpu.memory_space<vmem>>, vector<1x16x16xf32>,
    %c0_72 = arith.constant 0 : index
    %c5 = arith.constant 5 : index
    %c0_73 = arith.constant 0 : index
    %c0_74 = arith.constant 0 : index
    %79 = vector.load %arg3[%c0_72, %c5, %c0_73, %c0_74] : memref<1x9x16x16xbf16, #tpu.memory_space<vmem>>, vector<1x1x16x16xbf16>
    %80 = vector.shape_cast %79 : vector<1x1x16x16xbf16> to vector<16x16xbf16>
    %81 = arith.extf %80 : vector<16x16xbf16> to vector<16x16xf32>
    %c15_i32_75 = arith.constant 15 : i32
    %82 = vector.broadcast %c15_i32_75 : i32 to vector<16x16xi32>
    %83 = arith.cmpi slt, %26, %82 : vector<16x16xi32>
    %cst_76 = arith.constant 0.000000e+00 : f32
    %84 = vector.broadcast %cst_76 : f32 to vector<16x16xf32>
    %85 = arith.select %83, %81, %84 : vector<16x16xi1>, vector<16x16xf32>
    %c5_77 = arith.constant 5 : index
    %c0_78 = arith.constant 0 : index
    %c0_79 = arith.constant 0 : index
    %86 = vector.load %arg9[%c5_77, %c0_78, %c0_79] : memref<9x16x16xf32, #tpu.memory_space<vmem>>, vector<1x16x16xf32>
    %87 = vector.shape_cast %86 : vector<1x16x16xf32> to vector<16x16xf32>
    %88 = vector.shape_cast %85 : vector<16x16xf32> to vector<1x16x16xf32>
    tpu.vector_store %arg9[%c5_77, %c0_78, %c0_79], %88 {strides = array<i32>} : memref<9x16x16xf32, #tpu.memory_space<vmem>>, vector<1x16x16xf32>,
    %c0_80 = arith.constant 0 : index
    %c6 = arith.constant 6 : index
    %c0_81 = arith.constant 0 : index
    %c0_82 = arith.constant 0 : index
    %89 = vector.load %arg3[%c0_80, %c6, %c0_81, %c0_82] : memref<1x9x16x16xbf16, #tpu.memory_space<vmem>>, vector<1x1x16x16xbf16>
    %90 = vector.shape_cast %89 : vector<1x1x16x16xbf16> to vector<16x16xbf16>
    %91 = arith.extf %90 : vector<16x16xbf16> to vector<16x16xf32>
    %c15_i32_83 = arith.constant 15 : i32
    %92 = vector.broadcast %c15_i32_83 : i32 to vector<16x16xi32>
    %93 = arith.cmpi slt, %25, %92 : vector<16x16xi32>
    %c1_i32_84 = arith.constant 1 : i32
    %94 = vector.broadcast %c1_i32_84 : i32 to vector<16x16xi32>
    %95 = arith.cmpi sge, %26, %94 : vector<16x16xi32>
    %96 = arith.andi %93, %95 : vector<16x16xi1>
    %cst_85 = arith.constant 0.000000e+00 : f32
    %97 = vector.broadcast %cst_85 : f32 to vector<16x16xf32>
    %98 = arith.select %96, %91, %97 : vector<16x16xi1>, vector<16x16xf32>
    %c6_86 = arith.constant 6 : index
    %c0_87 = arith.constant 0 : index
    %c0_88 = arith.constant 0 : index
    %99 = vector.load %arg9[%c6_86, %c0_87, %c0_88] : memref<9x16x16xf32, #tpu.memory_space<vmem>>, vector<1x16x16xf32>
    %100 = vector.shape_cast %99 : vector<1x16x16xf32> to vector<16x16xf32>
    %101 = vector.shape_cast %98 : vector<16x16xf32> to vector<1x16x16xf32>
    tpu.vector_store %arg9[%c6_86, %c0_87, %c0_88], %101 {strides = array<i32>} : memref<9x16x16xf32, #tpu.memory_space<vmem>>, vector<1x16x16xf32>,
    %c0_89 = arith.constant 0 : index
    %c7 = arith.constant 7 : index
    %c0_90 = arith.constant 0 : index
    %c0_91 = arith.constant 0 : index
    %102 = vector.load %arg3[%c0_89, %c7, %c0_90, %c0_91] : memref<1x9x16x16xbf16, #tpu.memory_space<vmem>>, vector<1x1x16x16xbf16>
    %103 = vector.shape_cast %102 : vector<1x1x16x16xbf16> to vector<16x16xbf16>
    %104 = arith.extf %103 : vector<16x16xbf16> to vector<16x16xf32>
    %c15_i32_92 = arith.constant 15 : i32
    %105 = vector.broadcast %c15_i32_92 : i32 to vector<16x16xi32>
    %106 = arith.cmpi slt, %25, %105 : vector<16x16xi32>
    %cst_93 = arith.constant 0.000000e+00 : f32
    %107 = vector.broadcast %cst_93 : f32 to vector<16x16xf32>
    %108 = arith.select %106, %104, %107 : vector<16x16xi1>, vector<16x16xf32>
    %c7_94 = arith.constant 7 : index
    %c0_95 = arith.constant 0 : index
    %c0_96 = arith.constant 0 : index
    %109 = vector.load %arg9[%c7_94, %c0_95, %c0_96] : memref<9x16x16xf32, #tpu.memory_space<vmem>>, vector<1x16x16xf32>
    %110 = vector.shape_cast %109 : vector<1x16x16xf32> to vector<16x16xf32>
    %111 = vector.shape_cast %108 : vector<16x16xf32> to vector<1x16x16xf32>
    tpu.vector_store %arg9[%c7_94, %c0_95, %c0_96], %111 {strides = array<i32>} : memref<9x16x16xf32, #tpu.memory_space<vmem>>, vector<1x16x16xf32>,
    %c0_97 = arith.constant 0 : index
    %c8 = arith.constant 8 : index
    %c0_98 = arith.constant 0 : index
    %c0_99 = arith.constant 0 : index
    %112 = vector.load %arg3[%c0_97, %c8, %c0_98, %c0_99] : memref<1x9x16x16xbf16, #tpu.memory_space<vmem>>, vector<1x1x16x16xbf16>
    %113 = vector.shape_cast %112 : vector<1x1x16x16xbf16> to vector<16x16xbf16>
    %114 = arith.extf %113 : vector<16x16xbf16> to vector<16x16xf32>
    %c15_i32_100 = arith.constant 15 : i32
    %115 = vector.broadcast %c15_i32_100 : i32 to vector<16x16xi32>
    %116 = arith.cmpi slt, %25, %115 : vector<16x16xi32>
    %c15_i32_101 = arith.constant 15 : i32
    %117 = vector.broadcast %c15_i32_101 : i32 to vector<16x16xi32>
    %118 = arith.cmpi slt, %26, %117 : vector<16x16xi32>
    %119 = arith.andi %116, %118 : vector<16x16xi1>
    %cst_102 = arith.constant 0.000000e+00 : f32
    %120 = vector.broadcast %cst_102 : f32 to vector<16x16xf32>
    %121 = arith.select %119, %114, %120 : vector<16x16xi1>, vector<16x16xf32>
    %c8_103 = arith.constant 8 : index
    %c0_104 = arith.constant 0 : index
    %c0_105 = arith.constant 0 : index
    %122 = vector.load %arg9[%c8_103, %c0_104, %c0_105] : memref<9x16x16xf32, #tpu.memory_space<vmem>>, vector<1x16x16xf32>
    %123 = vector.shape_cast %122 : vector<1x16x16xf32> to vector<16x16xf32>
    %124 = vector.shape_cast %121 : vector<16x16xf32> to vector<1x16x16xf32>
    tpu.vector_store %arg9[%c8_103, %c0_104, %c0_105], %124 {strides = array<i32>} : memref<9x16x16xf32, #tpu.memory_space<vmem>>, vector<1x16x16xf32>,
    %c0_106 = arith.constant 0 : index
    %c0_107 = arith.constant 0 : index
    %c0_108 = arith.constant 0 : index
    %c0_109 = arith.constant 0 : index
    %125 = vector.load %arg4[%c0_106, %c0_107, %c0_108, %c0_109] : memref<1x25x16x16xbf16, #tpu.memory_space<vmem>>, vector<1x1x16x16xbf16>
    %126 = vector.shape_cast %125 : vector<1x1x16x16xbf16> to vector<16x16xbf16>
    %127 = arith.extf %126 : vector<16x16xbf16> to vector<16x16xf32>
    %c2_i32 = arith.constant 2 : i32
    %128 = vector.broadcast %c2_i32 : i32 to vector<16x16xi32>
    %129 = arith.cmpi sge, %25, %128 : vector<16x16xi32>
    %c2_i32_110 = arith.constant 2 : i32
    %130 = vector.broadcast %c2_i32_110 : i32 to vector<16x16xi32>
    %131 = arith.cmpi sge, %26, %130 : vector<16x16xi32>
    %132 = arith.andi %129, %131 : vector<16x16xi1>
    %cst_111 = arith.constant 0.000000e+00 : f32
    %133 = vector.broadcast %cst_111 : f32 to vector<16x16xf32>
    %134 = arith.select %132, %127, %133 : vector<16x16xi1>, vector<16x16xf32>
    %c0_112 = arith.constant 0 : index
    %c0_113 = arith.constant 0 : index
    %c0_114 = arith.constant 0 : index
    %135 = vector.load %arg10[%c0_112, %c0_113, %c0_114] : memref<25x16x16xf32, #tpu.memory_space<vmem>>, vector<1x16x16xf32>
    %136 = vector.shape_cast %135 : vector<1x16x16xf32> to vector<16x16xf32>
    %137 = vector.shape_cast %134 : vector<16x16xf32> to vector<1x16x16xf32>
    tpu.vector_store %arg10[%c0_112, %c0_113, %c0_114], %137 {strides = array<i32>} : memref<25x16x16xf32, #tpu.memory_space<vmem>>, vector<1x16x16xf32>,
    %c0_115 = arith.constant 0 : index
    %c1_116 = arith.constant 1 : index
    %c0_117 = arith.constant 0 : index
    %c0_118 = arith.constant 0 : index
    %138 = vector.load %arg4[%c0_115, %c1_116, %c0_117, %c0_118] : memref<1x25x16x16xbf16, #tpu.memory_space<vmem>>, vector<1x1x16x16xbf16>
    %139 = vector.shape_cast %138 : vector<1x1x16x16xbf16> to vector<16x16xbf16>
    %140 = arith.extf %139 : vector<16x16xbf16> to vector<16x16xf32>
    %c2_i32_119 = arith.constant 2 : i32
    %141 = vector.broadcast %c2_i32_119 : i32 to vector<16x16xi32>
    %142 = arith.cmpi sge, %25, %141 : vector<16x16xi32>
    %c1_i32_120 = arith.constant 1 : i32
    %143 = vector.broadcast %c1_i32_120 : i32 to vector<16x16xi32>
    %144 = arith.cmpi sge, %26, %143 : vector<16x16xi32>
    %145 = arith.andi %142, %144 : vector<16x16xi1>
    %cst_121 = arith.constant 0.000000e+00 : f32
    %146 = vector.broadcast %cst_121 : f32 to vector<16x16xf32>
    %147 = arith.select %145, %140, %146 : vector<16x16xi1>, vector<16x16xf32>
    %c1_122 = arith.constant 1 : index
    %c0_123 = arith.constant 0 : index
    %c0_124 = arith.constant 0 : index
    %148 = vector.load %arg10[%c1_122, %c0_123, %c0_124] : memref<25x16x16xf32, #tpu.memory_space<vmem>>, vector<1x16x16xf32>
    %149 = vector.shape_cast %148 : vector<1x16x16xf32> to vector<16x16xf32>
    %150 = vector.shape_cast %147 : vector<16x16xf32> to vector<1x16x16xf32>
    tpu.vector_store %arg10[%c1_122, %c0_123, %c0_124], %150 {strides = array<i32>} : memref<25x16x16xf32, #tpu.memory_space<vmem>>, vector<1x16x16xf32>,
    %c0_125 = arith.constant 0 : index
    %c2_126 = arith.constant 2 : index
    %c0_127 = arith.constant 0 : index
    %c0_128 = arith.constant 0 : index
    %151 = vector.load %arg4[%c0_125, %c2_126, %c0_127, %c0_128] : memref<1x25x16x16xbf16, #tpu.memory_space<vmem>>, vector<1x1x16x16xbf16>
    %152 = vector.shape_cast %151 : vector<1x1x16x16xbf16> to vector<16x16xbf16>
    %153 = arith.extf %152 : vector<16x16xbf16> to vector<16x16xf32>
    %c2_i32_129 = arith.constant 2 : i32
    %154 = vector.broadcast %c2_i32_129 : i32 to vector<16x16xi32>
    %155 = arith.cmpi sge, %25, %154 : vector<16x16xi32>
    %cst_130 = arith.constant 0.000000e+00 : f32
    %156 = vector.broadcast %cst_130 : f32 to vector<16x16xf32>
    %157 = arith.select %155, %153, %156 : vector<16x16xi1>, vector<16x16xf32>
    %c2_131 = arith.constant 2 : index
    %c0_132 = arith.constant 0 : index
    %c0_133 = arith.constant 0 : index
    %158 = vector.load %arg10[%c2_131, %c0_132, %c0_133] : memref<25x16x16xf32, #tpu.memory_space<vmem>>, vector<1x16x16xf32>
    %159 = vector.shape_cast %158 : vector<1x16x16xf32> to vector<16x16xf32>
    %160 = vector.shape_cast %157 : vector<16x16xf32> to vector<1x16x16xf32>
    tpu.vector_store %arg10[%c2_131, %c0_132, %c0_133], %160 {strides = array<i32>} : memref<25x16x16xf32, #tpu.memory_space<vmem>>, vector<1x16x16xf32>,
    %c0_134 = arith.constant 0 : index
    %c3_135 = arith.constant 3 : index
    %c0_136 = arith.constant 0 : index
    %c0_137 = arith.constant 0 : index
    %161 = vector.load %arg4[%c0_134, %c3_135, %c0_136, %c0_137] : memref<1x25x16x16xbf16, #tpu.memory_space<vmem>>, vector<1x1x16x16xbf16>
    %162 = vector.shape_cast %161 : vector<1x1x16x16xbf16> to vector<16x16xbf16>
    %163 = arith.extf %162 : vector<16x16xbf16> to vector<16x16xf32>
    %c2_i32_138 = arith.constant 2 : i32
    %164 = vector.broadcast %c2_i32_138 : i32 to vector<16x16xi32>
    %165 = arith.cmpi sge, %25, %164 : vector<16x16xi32>
    %c15_i32_139 = arith.constant 15 : i32
    %166 = vector.broadcast %c15_i32_139 : i32 to vector<16x16xi32>
    %167 = arith.cmpi slt, %26, %166 : vector<16x16xi32>
    %168 = arith.andi %165, %167 : vector<16x16xi1>
    %cst_140 = arith.constant 0.000000e+00 : f32
    %169 = vector.broadcast %cst_140 : f32 to vector<16x16xf32>
    %170 = arith.select %168, %163, %169 : vector<16x16xi1>, vector<16x16xf32>
    %c3_141 = arith.constant 3 : index
    %c0_142 = arith.constant 0 : index
    %c0_143 = arith.constant 0 : index
    %171 = vector.load %arg10[%c3_141, %c0_142, %c0_143] : memref<25x16x16xf32, #tpu.memory_space<vmem>>, vector<1x16x16xf32>
    %172 = vector.shape_cast %171 : vector<1x16x16xf32> to vector<16x16xf32>
    %173 = vector.shape_cast %170 : vector<16x16xf32> to vector<1x16x16xf32>
    tpu.vector_store %arg10[%c3_141, %c0_142, %c0_143], %173 {strides = array<i32>} : memref<25x16x16xf32, #tpu.memory_space<vmem>>, vector<1x16x16xf32>,
    %c0_144 = arith.constant 0 : index
    %c4_145 = arith.constant 4 : index
    %c0_146 = arith.constant 0 : index
    %c0_147 = arith.constant 0 : index
    %174 = vector.load %arg4[%c0_144, %c4_145, %c0_146, %c0_147] : memref<1x25x16x16xbf16, #tpu.memory_space<vmem>>, vector<1x1x16x16xbf16>
    %175 = vector.shape_cast %174 : vector<1x1x16x16xbf16> to vector<16x16xbf16>
    %176 = arith.extf %175 : vector<16x16xbf16> to vector<16x16xf32>
    %c2_i32_148 = arith.constant 2 : i32
    %177 = vector.broadcast %c2_i32_148 : i32 to vector<16x16xi32>
    %178 = arith.cmpi sge, %25, %177 : vector<16x16xi32>
    %c14_i32 = arith.constant 14 : i32
    %179 = vector.broadcast %c14_i32 : i32 to vector<16x16xi32>
    %180 = arith.cmpi slt, %26, %179 : vector<16x16xi32>
    %181 = arith.andi %178, %180 : vector<16x16xi1>
    %cst_149 = arith.constant 0.000000e+00 : f32
    %182 = vector.broadcast %cst_149 : f32 to vector<16x16xf32>
    %183 = arith.select %181, %176, %182 : vector<16x16xi1>, vector<16x16xf32>
    %c4_150 = arith.constant 4 : index
    %c0_151 = arith.constant 0 : index
    %c0_152 = arith.constant 0 : index
    %184 = vector.load %arg10[%c4_150, %c0_151, %c0_152] : memref<25x16x16xf32, #tpu.memory_space<vmem>>, vector<1x16x16xf32>
    %185 = vector.shape_cast %184 : vector<1x16x16xf32> to vector<16x16xf32>
    %186 = vector.shape_cast %183 : vector<16x16xf32> to vector<1x16x16xf32>
    tpu.vector_store %arg10[%c4_150, %c0_151, %c0_152], %186 {strides = array<i32>} : memref<25x16x16xf32, #tpu.memory_space<vmem>>, vector<1x16x16xf32>,
    %c0_153 = arith.constant 0 : index
    %c5_154 = arith.constant 5 : index
    %c0_155 = arith.constant 0 : index
    %c0_156 = arith.constant 0 : index
    %187 = vector.load %arg4[%c0_153, %c5_154, %c0_155, %c0_156] : memref<1x25x16x16xbf16, #tpu.memory_space<vmem>>, vector<1x1x16x16xbf16>
    %188 = vector.shape_cast %187 : vector<1x1x16x16xbf16> to vector<16x16xbf16>
    %189 = arith.extf %188 : vector<16x16xbf16> to vector<16x16xf32>
    %c1_i32_157 = arith.constant 1 : i32
    %190 = vector.broadcast %c1_i32_157 : i32 to vector<16x16xi32>
    %191 = arith.cmpi sge, %25, %190 : vector<16x16xi32>
    %c2_i32_158 = arith.constant 2 : i32
    %192 = vector.broadcast %c2_i32_158 : i32 to vector<16x16xi32>
    %193 = arith.cmpi sge, %26, %192 : vector<16x16xi32>
    %194 = arith.andi %191, %193 : vector<16x16xi1>
    %cst_159 = arith.constant 0.000000e+00 : f32
    %195 = vector.broadcast %cst_159 : f32 to vector<16x16xf32>
    %196 = arith.select %194, %189, %195 : vector<16x16xi1>, vector<16x16xf32>
    %c5_160 = arith.constant 5 : index
    %c0_161 = arith.constant 0 : index
    %c0_162 = arith.constant 0 : index
    %197 = vector.load %arg10[%c5_160, %c0_161, %c0_162] : memref<25x16x16xf32, #tpu.memory_space<vmem>>, vector<1x16x16xf32>
    %198 = vector.shape_cast %197 : vector<1x16x16xf32> to vector<16x16xf32>
    %199 = vector.shape_cast %196 : vector<16x16xf32> to vector<1x16x16xf32>
    tpu.vector_store %arg10[%c5_160, %c0_161, %c0_162], %199 {strides = array<i32>} : memref<25x16x16xf32, #tpu.memory_space<vmem>>, vector<1x16x16xf32>,
    %c0_163 = arith.constant 0 : index
    %c6_164 = arith.constant 6 : index
    %c0_165 = arith.constant 0 : index
    %c0_166 = arith.constant 0 : index
    %200 = vector.load %arg4[%c0_163, %c6_164, %c0_165, %c0_166] : memref<1x25x16x16xbf16, #tpu.memory_space<vmem>>, vector<1x1x16x16xbf16>
    %201 = vector.shape_cast %200 : vector<1x1x16x16xbf16> to vector<16x16xbf16>
    %202 = arith.extf %201 : vector<16x16xbf16> to vector<16x16xf32>
    %c1_i32_167 = arith.constant 1 : i32
    %203 = vector.broadcast %c1_i32_167 : i32 to vector<16x16xi32>
    %204 = arith.cmpi sge, %25, %203 : vector<16x16xi32>
    %c1_i32_168 = arith.constant 1 : i32
    %205 = vector.broadcast %c1_i32_168 : i32 to vector<16x16xi32>
    %206 = arith.cmpi sge, %26, %205 : vector<16x16xi32>
    %207 = arith.andi %204, %206 : vector<16x16xi1>
    %cst_169 = arith.constant 0.000000e+00 : f32
    %208 = vector.broadcast %cst_169 : f32 to vector<16x16xf32>
    %209 = arith.select %207, %202, %208 : vector<16x16xi1>, vector<16x16xf32>
    %c6_170 = arith.constant 6 : index
    %c0_171 = arith.constant 0 : index
    %c0_172 = arith.constant 0 : index
    %210 = vector.load %arg10[%c6_170, %c0_171, %c0_172] : memref<25x16x16xf32, #tpu.memory_space<vmem>>, vector<1x16x16xf32>
    %211 = vector.shape_cast %210 : vector<1x16x16xf32> to vector<16x16xf32>
    %212 = vector.shape_cast %209 : vector<16x16xf32> to vector<1x16x16xf32>
    tpu.vector_store %arg10[%c6_170, %c0_171, %c0_172], %212 {strides = array<i32>} : memref<25x16x16xf32, #tpu.memory_space<vmem>>, vector<1x16x16xf32>,
    %c0_173 = arith.constant 0 : index
    %c7_174 = arith.constant 7 : index
    %c0_175 = arith.constant 0 : index
    %c0_176 = arith.constant 0 : index
    %213 = vector.load %arg4[%c0_173, %c7_174, %c0_175, %c0_176] : memref<1x25x16x16xbf16, #tpu.memory_space<vmem>>, vector<1x1x16x16xbf16>
    %214 = vector.shape_cast %213 : vector<1x1x16x16xbf16> to vector<16x16xbf16>
    %215 = arith.extf %214 : vector<16x16xbf16> to vector<16x16xf32>
    %c1_i32_177 = arith.constant 1 : i32
    %216 = vector.broadcast %c1_i32_177 : i32 to vector<16x16xi32>
    %217 = arith.cmpi sge, %25, %216 : vector<16x16xi32>
    %cst_178 = arith.constant 0.000000e+00 : f32
    %218 = vector.broadcast %cst_178 : f32 to vector<16x16xf32>
    %219 = arith.select %217, %215, %218 : vector<16x16xi1>, vector<16x16xf32>
    %c7_179 = arith.constant 7 : index
    %c0_180 = arith.constant 0 : index
    %c0_181 = arith.constant 0 : index
    %220 = vector.load %arg10[%c7_179, %c0_180, %c0_181] : memref<25x16x16xf32, #tpu.memory_space<vmem>>, vector<1x16x16xf32>
    %221 = vector.shape_cast %220 : vector<1x16x16xf32> to vector<16x16xf32>
    %222 = vector.shape_cast %219 : vector<16x16xf32> to vector<1x16x16xf32>
    tpu.vector_store %arg10[%c7_179, %c0_180, %c0_181], %222 {strides = array<i32>} : memref<25x16x16xf32, #tpu.memory_space<vmem>>, vector<1x16x16xf32>,
    %c0_182 = arith.constant 0 : index
    %c8_183 = arith.constant 8 : index
    %c0_184 = arith.constant 0 : index
    %c0_185 = arith.constant 0 : index
    %223 = vector.load %arg4[%c0_182, %c8_183, %c0_184, %c0_185] : memref<1x25x16x16xbf16, #tpu.memory_space<vmem>>, vector<1x1x16x16xbf16>
    %224 = vector.shape_cast %223 : vector<1x1x16x16xbf16> to vector<16x16xbf16>
    %225 = arith.extf %224 : vector<16x16xbf16> to vector<16x16xf32>
    %c1_i32_186 = arith.constant 1 : i32
    %226 = vector.broadcast %c1_i32_186 : i32 to vector<16x16xi32>
    %227 = arith.cmpi sge, %25, %226 : vector<16x16xi32>
    %c15_i32_187 = arith.constant 15 : i32
    %228 = vector.broadcast %c15_i32_187 : i32 to vector<16x16xi32>
    %229 = arith.cmpi slt, %26, %228 : vector<16x16xi32>
    %230 = arith.andi %227, %229 : vector<16x16xi1>
    %cst_188 = arith.constant 0.000000e+00 : f32
    %231 = vector.broadcast %cst_188 : f32 to vector<16x16xf32>
    %232 = arith.select %230, %225, %231 : vector<16x16xi1>, vector<16x16xf32>
    %c8_189 = arith.constant 8 : index
    %c0_190 = arith.constant 0 : index
    %c0_191 = arith.constant 0 : index
    %233 = vector.load %arg10[%c8_189, %c0_190, %c0_191] : memref<25x16x16xf32, #tpu.memory_space<vmem>>, vector<1x16x16xf32>
    %234 = vector.shape_cast %233 : vector<1x16x16xf32> to vector<16x16xf32>
    %235 = vector.shape_cast %232 : vector<16x16xf32> to vector<1x16x16xf32>
    tpu.vector_store %arg10[%c8_189, %c0_190, %c0_191], %235 {strides = array<i32>} : memref<25x16x16xf32, #tpu.memory_space<vmem>>, vector<1x16x16xf32>,
    %c0_192 = arith.constant 0 : index
    %c9 = arith.constant 9 : index
    %c0_193 = arith.constant 0 : index
    %c0_194 = arith.constant 0 : index
    %236 = vector.load %arg4[%c0_192, %c9, %c0_193, %c0_194] : memref<1x25x16x16xbf16, #tpu.memory_space<vmem>>, vector<1x1x16x16xbf16>
    %237 = vector.shape_cast %236 : vector<1x1x16x16xbf16> to vector<16x16xbf16>
    %238 = arith.extf %237 : vector<16x16xbf16> to vector<16x16xf32>
    %c1_i32_195 = arith.constant 1 : i32
    %239 = vector.broadcast %c1_i32_195 : i32 to vector<16x16xi32>
    %240 = arith.cmpi sge, %25, %239 : vector<16x16xi32>
    %c14_i32_196 = arith.constant 14 : i32
    %241 = vector.broadcast %c14_i32_196 : i32 to vector<16x16xi32>
    %242 = arith.cmpi slt, %26, %241 : vector<16x16xi32>
    %243 = arith.andi %240, %242 : vector<16x16xi1>
    %cst_197 = arith.constant 0.000000e+00 : f32
    %244 = vector.broadcast %cst_197 : f32 to vector<16x16xf32>
    %245 = arith.select %243, %238, %244 : vector<16x16xi1>, vector<16x16xf32>
    %c9_198 = arith.constant 9 : index
    %c0_199 = arith.constant 0 : index
    %c0_200 = arith.constant 0 : index
    %246 = vector.load %arg10[%c9_198, %c0_199, %c0_200] : memref<25x16x16xf32, #tpu.memory_space<vmem>>, vector<1x16x16xf32>
    %247 = vector.shape_cast %246 : vector<1x16x16xf32> to vector<16x16xf32>
    %248 = vector.shape_cast %245 : vector<16x16xf32> to vector<1x16x16xf32>
    tpu.vector_store %arg10[%c9_198, %c0_199, %c0_200], %248 {strides = array<i32>} : memref<25x16x16xf32, #tpu.memory_space<vmem>>, vector<1x16x16xf32>,
    %c0_201 = arith.constant 0 : index
    %c10 = arith.constant 10 : index
    %c0_202 = arith.constant 0 : index
    %c0_203 = arith.constant 0 : index
    %249 = vector.load %arg4[%c0_201, %c10, %c0_202, %c0_203] : memref<1x25x16x16xbf16, #tpu.memory_space<vmem>>, vector<1x1x16x16xbf16>
    %250 = vector.shape_cast %249 : vector<1x1x16x16xbf16> to vector<16x16xbf16>
    %251 = arith.extf %250 : vector<16x16xbf16> to vector<16x16xf32>
    %c2_i32_204 = arith.constant 2 : i32
    %252 = vector.broadcast %c2_i32_204 : i32 to vector<16x16xi32>
    %253 = arith.cmpi sge, %26, %252 : vector<16x16xi32>
    %cst_205 = arith.constant 0.000000e+00 : f32
    %254 = vector.broadcast %cst_205 : f32 to vector<16x16xf32>
    %255 = arith.select %253, %251, %254 : vector<16x16xi1>, vector<16x16xf32>
    %c10_206 = arith.constant 10 : index
    %c0_207 = arith.constant 0 : index
    %c0_208 = arith.constant 0 : index
    %256 = vector.load %arg10[%c10_206, %c0_207, %c0_208] : memref<25x16x16xf32, #tpu.memory_space<vmem>>, vector<1x16x16xf32>
    %257 = vector.shape_cast %256 : vector<1x16x16xf32> to vector<16x16xf32>
    %258 = vector.shape_cast %255 : vector<16x16xf32> to vector<1x16x16xf32>
    tpu.vector_store %arg10[%c10_206, %c0_207, %c0_208], %258 {strides = array<i32>} : memref<25x16x16xf32, #tpu.memory_space<vmem>>, vector<1x16x16xf32>,
    %c0_209 = arith.constant 0 : index
    %c11 = arith.constant 11 : index
    %c0_210 = arith.constant 0 : index
    %c0_211 = arith.constant 0 : index
    %259 = vector.load %arg4[%c0_209, %c11, %c0_210, %c0_211] : memref<1x25x16x16xbf16, #tpu.memory_space<vmem>>, vector<1x1x16x16xbf16>
    %260 = vector.shape_cast %259 : vector<1x1x16x16xbf16> to vector<16x16xbf16>
    %261 = arith.extf %260 : vector<16x16xbf16> to vector<16x16xf32>
    %c1_i32_212 = arith.constant 1 : i32
    %262 = vector.broadcast %c1_i32_212 : i32 to vector<16x16xi32>
    %263 = arith.cmpi sge, %26, %262 : vector<16x16xi32>
    %cst_213 = arith.constant 0.000000e+00 : f32
    %264 = vector.broadcast %cst_213 : f32 to vector<16x16xf32>
    %265 = arith.select %263, %261, %264 : vector<16x16xi1>, vector<16x16xf32>
    %c11_214 = arith.constant 11 : index
    %c0_215 = arith.constant 0 : index
    %c0_216 = arith.constant 0 : index
    %266 = vector.load %arg10[%c11_214, %c0_215, %c0_216] : memref<25x16x16xf32, #tpu.memory_space<vmem>>, vector<1x16x16xf32>
    %267 = vector.shape_cast %266 : vector<1x16x16xf32> to vector<16x16xf32>
    %268 = vector.shape_cast %265 : vector<16x16xf32> to vector<1x16x16xf32>
    tpu.vector_store %arg10[%c11_214, %c0_215, %c0_216], %268 {strides = array<i32>} : memref<25x16x16xf32, #tpu.memory_space<vmem>>, vector<1x16x16xf32>,
    %c0_217 = arith.constant 0 : index
    %c12 = arith.constant 12 : index
    %c0_218 = arith.constant 0 : index
    %c0_219 = arith.constant 0 : index
    %269 = vector.load %arg4[%c0_217, %c12, %c0_218, %c0_219] : memref<1x25x16x16xbf16, #tpu.memory_space<vmem>>, vector<1x1x16x16xbf16>
    %270 = vector.shape_cast %269 : vector<1x1x16x16xbf16> to vector<16x16xbf16>
    %271 = arith.extf %270 : vector<16x16xbf16> to vector<16x16xf32>
    %c12_220 = arith.constant 12 : index
    %c0_221 = arith.constant 0 : index
    %c0_222 = arith.constant 0 : index
    %272 = vector.load %arg10[%c12_220, %c0_221, %c0_222] : memref<25x16x16xf32, #tpu.memory_space<vmem>>, vector<1x16x16xf32>
    %273 = vector.shape_cast %272 : vector<1x16x16xf32> to vector<16x16xf32>
    %274 = vector.shape_cast %271 : vector<16x16xf32> to vector<1x16x16xf32>
    tpu.vector_store %arg10[%c12_220, %c0_221, %c0_222], %274 {strides = array<i32>} : memref<25x16x16xf32, #tpu.memory_space<vmem>>, vector<1x16x16xf32>,
    %c0_223 = arith.constant 0 : index
    %c13 = arith.constant 13 : index
    %c0_224 = arith.constant 0 : index
    %c0_225 = arith.constant 0 : index
    %275 = vector.load %arg4[%c0_223, %c13, %c0_224, %c0_225] : memref<1x25x16x16xbf16, #tpu.memory_space<vmem>>, vector<1x1x16x16xbf16>
    %276 = vector.shape_cast %275 : vector<1x1x16x16xbf16> to vector<16x16xbf16>
    %277 = arith.extf %276 : vector<16x16xbf16> to vector<16x16xf32>
    %c15_i32_226 = arith.constant 15 : i32
    %278 = vector.broadcast %c15_i32_226 : i32 to vector<16x16xi32>
    %279 = arith.cmpi slt, %26, %278 : vector<16x16xi32>
    %cst_227 = arith.constant 0.000000e+00 : f32
    %280 = vector.broadcast %cst_227 : f32 to vector<16x16xf32>
    %281 = arith.select %279, %277, %280 : vector<16x16xi1>, vector<16x16xf32>
    %c13_228 = arith.constant 13 : index
    %c0_229 = arith.constant 0 : index
    %c0_230 = arith.constant 0 : index
    %282 = vector.load %arg10[%c13_228, %c0_229, %c0_230] : memref<25x16x16xf32, #tpu.memory_space<vmem>>, vector<1x16x16xf32>
    %283 = vector.shape_cast %282 : vector<1x16x16xf32> to vector<16x16xf32>
    %284 = vector.shape_cast %281 : vector<16x16xf32> to vector<1x16x16xf32>
    tpu.vector_store %arg10[%c13_228, %c0_229, %c0_230], %284 {strides = array<i32>} : memref<25x16x16xf32, #tpu.memory_space<vmem>>, vector<1x16x16xf32>,
    %c0_231 = arith.constant 0 : index
    %c14 = arith.constant 14 : index
    %c0_232 = arith.constant 0 : index
    %c0_233 = arith.constant 0 : index
    %285 = vector.load %arg4[%c0_231, %c14, %c0_232, %c0_233] : memref<1x25x16x16xbf16, #tpu.memory_space<vmem>>, vector<1x1x16x16xbf16>
    %286 = vector.shape_cast %285 : vector<1x1x16x16xbf16> to vector<16x16xbf16>
    %287 = arith.extf %286 : vector<16x16xbf16> to vector<16x16xf32>
    %c14_i32_234 = arith.constant 14 : i32
    %288 = vector.broadcast %c14_i32_234 : i32 to vector<16x16xi32>
    %289 = arith.cmpi slt, %26, %288 : vector<16x16xi32>
    %cst_235 = arith.constant 0.000000e+00 : f32
    %290 = vector.broadcast %cst_235 : f32 to vector<16x16xf32>
    %291 = arith.select %289, %287, %290 : vector<16x16xi1>, vector<16x16xf32>
    %c14_236 = arith.constant 14 : index
    %c0_237 = arith.constant 0 : index
    %c0_238 = arith.constant 0 : index
    %292 = vector.load %arg10[%c14_236, %c0_237, %c0_238] : memref<25x16x16xf32, #tpu.memory_space<vmem>>, vector<1x16x16xf32>
    %293 = vector.shape_cast %292 : vector<1x16x16xf32> to vector<16x16xf32>
    %294 = vector.shape_cast %291 : vector<16x16xf32> to vector<1x16x16xf32>
    tpu.vector_store %arg10[%c14_236, %c0_237, %c0_238], %294 {strides = array<i32>} : memref<25x16x16xf32, #tpu.memory_space<vmem>>, vector<1x16x16xf32>,
    %c0_239 = arith.constant 0 : index
    %c15 = arith.constant 15 : index
    %c0_240 = arith.constant 0 : index
    %c0_241 = arith.constant 0 : index
    %295 = vector.load %arg4[%c0_239, %c15, %c0_240, %c0_241] : memref<1x25x16x16xbf16, #tpu.memory_space<vmem>>, vector<1x1x16x16xbf16>
    %296 = vector.shape_cast %295 : vector<1x1x16x16xbf16> to vector<16x16xbf16>
    %297 = arith.extf %296 : vector<16x16xbf16> to vector<16x16xf32>
    %c15_i32_242 = arith.constant 15 : i32
    %298 = vector.broadcast %c15_i32_242 : i32 to vector<16x16xi32>
    %299 = arith.cmpi slt, %25, %298 : vector<16x16xi32>
    %c2_i32_243 = arith.constant 2 : i32
    %300 = vector.broadcast %c2_i32_243 : i32 to vector<16x16xi32>
    %301 = arith.cmpi sge, %26, %300 : vector<16x16xi32>
    %302 = arith.andi %299, %301 : vector<16x16xi1>
    %cst_244 = arith.constant 0.000000e+00 : f32
    %303 = vector.broadcast %cst_244 : f32 to vector<16x16xf32>
    %304 = arith.select %302, %297, %303 : vector<16x16xi1>, vector<16x16xf32>
    %c15_245 = arith.constant 15 : index
    %c0_246 = arith.constant 0 : index
    %c0_247 = arith.constant 0 : index
    %305 = vector.load %arg10[%c15_245, %c0_246, %c0_247] : memref<25x16x16xf32, #tpu.memory_space<vmem>>, vector<1x16x16xf32>
    %306 = vector.shape_cast %305 : vector<1x16x16xf32> to vector<16x16xf32>
    %307 = vector.shape_cast %304 : vector<16x16xf32> to vector<1x16x16xf32>
    tpu.vector_store %arg10[%c15_245, %c0_246, %c0_247], %307 {strides = array<i32>} : memref<25x16x16xf32, #tpu.memory_space<vmem>>, vector<1x16x16xf32>,
    %c0_248 = arith.constant 0 : index
    %c16 = arith.constant 16 : index
    %c0_249 = arith.constant 0 : index
    %c0_250 = arith.constant 0 : index
    %308 = vector.load %arg4[%c0_248, %c16, %c0_249, %c0_250] : memref<1x25x16x16xbf16, #tpu.memory_space<vmem>>, vector<1x1x16x16xbf16>
    %309 = vector.shape_cast %308 : vector<1x1x16x16xbf16> to vector<16x16xbf16>
    %310 = arith.extf %309 : vector<16x16xbf16> to vector<16x16xf32>
    %c15_i32_251 = arith.constant 15 : i32
    %311 = vector.broadcast %c15_i32_251 : i32 to vector<16x16xi32>
    %312 = arith.cmpi slt, %25, %311 : vector<16x16xi32>
    %c1_i32_252 = arith.constant 1 : i32
    %313 = vector.broadcast %c1_i32_252 : i32 to vector<16x16xi32>
    %314 = arith.cmpi sge, %26, %313 : vector<16x16xi32>
    %315 = arith.andi %312, %314 : vector<16x16xi1>
    %cst_253 = arith.constant 0.000000e+00 : f32
    %316 = vector.broadcast %cst_253 : f32 to vector<16x16xf32>
    %317 = arith.select %315, %310, %316 : vector<16x16xi1>, vector<16x16xf32>
    %c16_254 = arith.constant 16 : index
    %c0_255 = arith.constant 0 : index
    %c0_256 = arith.constant 0 : index
    %318 = vector.load %arg10[%c16_254, %c0_255, %c0_256] : memref<25x16x16xf32, #tpu.memory_space<vmem>>, vector<1x16x16xf32>
    %319 = vector.shape_cast %318 : vector<1x16x16xf32> to vector<16x16xf32>
    %320 = vector.shape_cast %317 : vector<16x16xf32> to vector<1x16x16xf32>
    tpu.vector_store %arg10[%c16_254, %c0_255, %c0_256], %320 {strides = array<i32>} : memref<25x16x16xf32, #tpu.memory_space<vmem>>, vector<1x16x16xf32>,
    %c0_257 = arith.constant 0 : index
    %c17 = arith.constant 17 : index
    %c0_258 = arith.constant 0 : index
    %c0_259 = arith.constant 0 : index
    %321 = vector.load %arg4[%c0_257, %c17, %c0_258, %c0_259] : memref<1x25x16x16xbf16, #tpu.memory_space<vmem>>, vector<1x1x16x16xbf16>
    %322 = vector.shape_cast %321 : vector<1x1x16x16xbf16> to vector<16x16xbf16>
    %323 = arith.extf %322 : vector<16x16xbf16> to vector<16x16xf32>
    %c15_i32_260 = arith.constant 15 : i32
    %324 = vector.broadcast %c15_i32_260 : i32 to vector<16x16xi32>
    %325 = arith.cmpi slt, %25, %324 : vector<16x16xi32>
    %cst_261 = arith.constant 0.000000e+00 : f32
    %326 = vector.broadcast %cst_261 : f32 to vector<16x16xf32>
    %327 = arith.select %325, %323, %326 : vector<16x16xi1>, vector<16x16xf32>
    %c17_262 = arith.constant 17 : index
    %c0_263 = arith.constant 0 : index
    %c0_264 = arith.constant 0 : index
    %328 = vector.load %arg10[%c17_262, %c0_263, %c0_264] : memref<25x16x16xf32, #tpu.memory_space<vmem>>, vector<1x16x16xf32>
    %329 = vector.shape_cast %328 : vector<1x16x16xf32> to vector<16x16xf32>
    %330 = vector.shape_cast %327 : vector<16x16xf32> to vector<1x16x16xf32>
    tpu.vector_store %arg10[%c17_262, %c0_263, %c0_264], %330 {strides = array<i32>} : memref<25x16x16xf32, #tpu.memory_space<vmem>>, vector<1x16x16xf32>,
    %c0_265 = arith.constant 0 : index
    %c18 = arith.constant 18 : index
    %c0_266 = arith.constant 0 : index
    %c0_267 = arith.constant 0 : index
    %331 = vector.load %arg4[%c0_265, %c18, %c0_266, %c0_267] : memref<1x25x16x16xbf16, #tpu.memory_space<vmem>>, vector<1x1x16x16xbf16>
    %332 = vector.shape_cast %331 : vector<1x1x16x16xbf16> to vector<16x16xbf16>
    %333 = arith.extf %332 : vector<16x16xbf16> to vector<16x16xf32>
    %c15_i32_268 = arith.constant 15 : i32
    %334 = vector.broadcast %c15_i32_268 : i32 to vector<16x16xi32>
    %335 = arith.cmpi slt, %25, %334 : vector<16x16xi32>
    %c15_i32_269 = arith.constant 15 : i32
    %336 = vector.broadcast %c15_i32_269 : i32 to vector<16x16xi32>
    %337 = arith.cmpi slt, %26, %336 : vector<16x16xi32>
    %338 = arith.andi %335, %337 : vector<16x16xi1>
    %cst_270 = arith.constant 0.000000e+00 : f32
    %339 = vector.broadcast %cst_270 : f32 to vector<16x16xf32>
    %340 = arith.select %338, %333, %339 : vector<16x16xi1>, vector<16x16xf32>
    %c18_271 = arith.constant 18 : index
    %c0_272 = arith.constant 0 : index
    %c0_273 = arith.constant 0 : index
    %341 = vector.load %arg10[%c18_271, %c0_272, %c0_273] : memref<25x16x16xf32, #tpu.memory_space<vmem>>, vector<1x16x16xf32>
    %342 = vector.shape_cast %341 : vector<1x16x16xf32> to vector<16x16xf32>
    %343 = vector.shape_cast %340 : vector<16x16xf32> to vector<1x16x16xf32>
    tpu.vector_store %arg10[%c18_271, %c0_272, %c0_273], %343 {strides = array<i32>} : memref<25x16x16xf32, #tpu.memory_space<vmem>>, vector<1x16x16xf32>,
    %c0_274 = arith.constant 0 : index
    %c19 = arith.constant 19 : index
    %c0_275 = arith.constant 0 : index
    %c0_276 = arith.constant 0 : index
    %344 = vector.load %arg4[%c0_274, %c19, %c0_275, %c0_276] : memref<1x25x16x16xbf16, #tpu.memory_space<vmem>>, vector<1x1x16x16xbf16>
    %345 = vector.shape_cast %344 : vector<1x1x16x16xbf16> to vector<16x16xbf16>
    %346 = arith.extf %345 : vector<16x16xbf16> to vector<16x16xf32>
    %c15_i32_277 = arith.constant 15 : i32
    %347 = vector.broadcast %c15_i32_277 : i32 to vector<16x16xi32>
    %348 = arith.cmpi slt, %25, %347 : vector<16x16xi32>
    %c14_i32_278 = arith.constant 14 : i32
    %349 = vector.broadcast %c14_i32_278 : i32 to vector<16x16xi32>
    %350 = arith.cmpi slt, %26, %349 : vector<16x16xi32>
    %351 = arith.andi %348, %350 : vector<16x16xi1>
    %cst_279 = arith.constant 0.000000e+00 : f32
    %352 = vector.broadcast %cst_279 : f32 to vector<16x16xf32>
    %353 = arith.select %351, %346, %352 : vector<16x16xi1>, vector<16x16xf32>
    %c19_280 = arith.constant 19 : index
    %c0_281 = arith.constant 0 : index
    %c0_282 = arith.constant 0 : index
    %354 = vector.load %arg10[%c19_280, %c0_281, %c0_282] : memref<25x16x16xf32, #tpu.memory_space<vmem>>, vector<1x16x16xf32>
    %355 = vector.shape_cast %354 : vector<1x16x16xf32> to vector<16x16xf32>
    %356 = vector.shape_cast %353 : vector<16x16xf32> to vector<1x16x16xf32>
    tpu.vector_store %arg10[%c19_280, %c0_281, %c0_282], %356 {strides = array<i32>} : memref<25x16x16xf32, #tpu.memory_space<vmem>>, vector<1x16x16xf32>,
    %c0_283 = arith.constant 0 : index
    %c20 = arith.constant 20 : index
    %c0_284 = arith.constant 0 : index
    %c0_285 = arith.constant 0 : index
    %357 = vector.load %arg4[%c0_283, %c20, %c0_284, %c0_285] : memref<1x25x16x16xbf16, #tpu.memory_space<vmem>>, vector<1x1x16x16xbf16>
    %358 = vector.shape_cast %357 : vector<1x1x16x16xbf16> to vector<16x16xbf16>
    %359 = arith.extf %358 : vector<16x16xbf16> to vector<16x16xf32>
    %c14_i32_286 = arith.constant 14 : i32
    %360 = vector.broadcast %c14_i32_286 : i32 to vector<16x16xi32>
    %361 = arith.cmpi slt, %25, %360 : vector<16x16xi32>
    %c2_i32_287 = arith.constant 2 : i32
    %362 = vector.broadcast %c2_i32_287 : i32 to vector<16x16xi32>
    %363 = arith.cmpi sge, %26, %362 : vector<16x16xi32>
    %364 = arith.andi %361, %363 : vector<16x16xi1>
    %cst_288 = arith.constant 0.000000e+00 : f32
    %365 = vector.broadcast %cst_288 : f32 to vector<16x16xf32>
    %366 = arith.select %364, %359, %365 : vector<16x16xi1>, vector<16x16xf32>
    %c20_289 = arith.constant 20 : index
    %c0_290 = arith.constant 0 : index
    %c0_291 = arith.constant 0 : index
    %367 = vector.load %arg10[%c20_289, %c0_290, %c0_291] : memref<25x16x16xf32, #tpu.memory_space<vmem>>, vector<1x16x16xf32>
    %368 = vector.shape_cast %367 : vector<1x16x16xf32> to vector<16x16xf32>
    %369 = vector.shape_cast %366 : vector<16x16xf32> to vector<1x16x16xf32>
    tpu.vector_store %arg10[%c20_289, %c0_290, %c0_291], %369 {strides = array<i32>} : memref<25x16x16xf32, #tpu.memory_space<vmem>>, vector<1x16x16xf32>,
    %c0_292 = arith.constant 0 : index
    %c21 = arith.constant 21 : index
    %c0_293 = arith.constant 0 : index
    %c0_294 = arith.constant 0 : index
    %370 = vector.load %arg4[%c0_292, %c21, %c0_293, %c0_294] : memref<1x25x16x16xbf16, #tpu.memory_space<vmem>>, vector<1x1x16x16xbf16>
    %371 = vector.shape_cast %370 : vector<1x1x16x16xbf16> to vector<16x16xbf16>
    %372 = arith.extf %371 : vector<16x16xbf16> to vector<16x16xf32>
    %c14_i32_295 = arith.constant 14 : i32
    %373 = vector.broadcast %c14_i32_295 : i32 to vector<16x16xi32>
    %374 = arith.cmpi slt, %25, %373 : vector<16x16xi32>
    %c1_i32_296 = arith.constant 1 : i32
    %375 = vector.broadcast %c1_i32_296 : i32 to vector<16x16xi32>
    %376 = arith.cmpi sge, %26, %375 : vector<16x16xi32>
    %377 = arith.andi %374, %376 : vector<16x16xi1>
    %cst_297 = arith.constant 0.000000e+00 : f32
    %378 = vector.broadcast %cst_297 : f32 to vector<16x16xf32>
    %379 = arith.select %377, %372, %378 : vector<16x16xi1>, vector<16x16xf32>
    %c21_298 = arith.constant 21 : index
    %c0_299 = arith.constant 0 : index
    %c0_300 = arith.constant 0 : index
    %380 = vector.load %arg10[%c21_298, %c0_299, %c0_300] : memref<25x16x16xf32, #tpu.memory_space<vmem>>, vector<1x16x16xf32>
    %381 = vector.shape_cast %380 : vector<1x16x16xf32> to vector<16x16xf32>
    %382 = vector.shape_cast %379 : vector<16x16xf32> to vector<1x16x16xf32>
    tpu.vector_store %arg10[%c21_298, %c0_299, %c0_300], %382 {strides = array<i32>} : memref<25x16x16xf32, #tpu.memory_space<vmem>>, vector<1x16x16xf32>,
    %c0_301 = arith.constant 0 : index
    %c22 = arith.constant 22 : index
    %c0_302 = arith.constant 0 : index
    %c0_303 = arith.constant 0 : index
    %383 = vector.load %arg4[%c0_301, %c22, %c0_302, %c0_303] : memref<1x25x16x16xbf16, #tpu.memory_space<vmem>>, vector<1x1x16x16xbf16>
    %384 = vector.shape_cast %383 : vector<1x1x16x16xbf16> to vector<16x16xbf16>
    %385 = arith.extf %384 : vector<16x16xbf16> to vector<16x16xf32>
    %c14_i32_304 = arith.constant 14 : i32
    %386 = vector.broadcast %c14_i32_304 : i32 to vector<16x16xi32>
    %387 = arith.cmpi slt, %25, %386 : vector<16x16xi32>
    %cst_305 = arith.constant 0.000000e+00 : f32
    %388 = vector.broadcast %cst_305 : f32 to vector<16x16xf32>
    %389 = arith.select %387, %385, %388 : vector<16x16xi1>, vector<16x16xf32>
    %c22_306 = arith.constant 22 : index
    %c0_307 = arith.constant 0 : index
    %c0_308 = arith.constant 0 : index
    %390 = vector.load %arg10[%c22_306, %c0_307, %c0_308] : memref<25x16x16xf32, #tpu.memory_space<vmem>>, vector<1x16x16xf32>
    %391 = vector.shape_cast %390 : vector<1x16x16xf32> to vector<16x16xf32>
    %392 = vector.shape_cast %389 : vector<16x16xf32> to vector<1x16x16xf32>
    tpu.vector_store %arg10[%c22_306, %c0_307, %c0_308], %392 {strides = array<i32>} : memref<25x16x16xf32, #tpu.memory_space<vmem>>, vector<1x16x16xf32>,
    %c0_309 = arith.constant 0 : index
    %c23 = arith.constant 23 : index
    %c0_310 = arith.constant 0 : index
    %c0_311 = arith.constant 0 : index
    %393 = vector.load %arg4[%c0_309, %c23, %c0_310, %c0_311] : memref<1x25x16x16xbf16, #tpu.memory_space<vmem>>, vector<1x1x16x16xbf16>
    %394 = vector.shape_cast %393 : vector<1x1x16x16xbf16> to vector<16x16xbf16>
    %395 = arith.extf %394 : vector<16x16xbf16> to vector<16x16xf32>
    %c14_i32_312 = arith.constant 14 : i32
    %396 = vector.broadcast %c14_i32_312 : i32 to vector<16x16xi32>
    %397 = arith.cmpi slt, %25, %396 : vector<16x16xi32>
    %c15_i32_313 = arith.constant 15 : i32
    %398 = vector.broadcast %c15_i32_313 : i32 to vector<16x16xi32>
    %399 = arith.cmpi slt, %26, %398 : vector<16x16xi32>
    %400 = arith.andi %397, %399 : vector<16x16xi1>
    %cst_314 = arith.constant 0.000000e+00 : f32
    %401 = vector.broadcast %cst_314 : f32 to vector<16x16xf32>
    %402 = arith.select %400, %395, %401 : vector<16x16xi1>, vector<16x16xf32>
    %c23_315 = arith.constant 23 : index
    %c0_316 = arith.constant 0 : index
    %c0_317 = arith.constant 0 : index
    %403 = vector.load %arg10[%c23_315, %c0_316, %c0_317] : memref<25x16x16xf32, #tpu.memory_space<vmem>>, vector<1x16x16xf32>
    %404 = vector.shape_cast %403 : vector<1x16x16xf32> to vector<16x16xf32>
    %405 = vector.shape_cast %402 : vector<16x16xf32> to vector<1x16x16xf32>
    tpu.vector_store %arg10[%c23_315, %c0_316, %c0_317], %405 {strides = array<i32>} : memref<25x16x16xf32, #tpu.memory_space<vmem>>, vector<1x16x16xf32>,
    %c0_318 = arith.constant 0 : index
    %c24 = arith.constant 24 : index
    %c0_319 = arith.constant 0 : index
    %c0_320 = arith.constant 0 : index
    %406 = vector.load %arg4[%c0_318, %c24, %c0_319, %c0_320] : memref<1x25x16x16xbf16, #tpu.memory_space<vmem>>, vector<1x1x16x16xbf16>
    %407 = vector.shape_cast %406 : vector<1x1x16x16xbf16> to vector<16x16xbf16>
    %408 = arith.extf %407 : vector<16x16xbf16> to vector<16x16xf32>
    %c14_i32_321 = arith.constant 14 : i32
    %409 = vector.broadcast %c14_i32_321 : i32 to vector<16x16xi32>
    %410 = arith.cmpi slt, %25, %409 : vector<16x16xi32>
    %c14_i32_322 = arith.constant 14 : i32
    %411 = vector.broadcast %c14_i32_322 : i32 to vector<16x16xi32>
    %412 = arith.cmpi slt, %26, %411 : vector<16x16xi32>
    %413 = arith.andi %410, %412 : vector<16x16xi1>
    %cst_323 = arith.constant 0.000000e+00 : f32
    %414 = vector.broadcast %cst_323 : f32 to vector<16x16xf32>
    %415 = arith.select %413, %408, %414 : vector<16x16xi1>, vector<16x16xf32>
    %c24_324 = arith.constant 24 : index
    %c0_325 = arith.constant 0 : index
    %c0_326 = arith.constant 0 : index
    %416 = vector.load %arg10[%c24_324, %c0_325, %c0_326] : memref<25x16x16xf32, #tpu.memory_space<vmem>>, vector<1x16x16xf32>
    %417 = vector.shape_cast %416 : vector<1x16x16xf32> to vector<16x16xf32>
    %418 = vector.shape_cast %415 : vector<16x16xf32> to vector<1x16x16xf32>
    tpu.vector_store %arg10[%c24_324, %c0_325, %c0_326], %418 {strides = array<i32>} : memref<25x16x16xf32, #tpu.memory_space<vmem>>, vector<1x16x16xf32>,
    %c0_327 = arith.constant 0 : index
    %c0_328 = arith.constant 0 : index
    %c0_329 = arith.constant 0 : index
    %c0_330 = arith.constant 0 : index
    %419 = vector.load %arg5[%c0_327, %c0_328, %c0_329, %c0_330] : memref<1x49x16x16xbf16, #tpu.memory_space<vmem>>, vector<1x1x16x16xbf16>
    %420 = vector.shape_cast %419 : vector<1x1x16x16xbf16> to vector<16x16xbf16>
    %421 = arith.extf %420 : vector<16x16xbf16> to vector<16x16xf32>
    %c3_i32 = arith.constant 3 : i32
    %422 = vector.broadcast %c3_i32 : i32 to vector<16x16xi32>
    %423 = arith.cmpi sge, %25, %422 : vector<16x16xi32>
    %c3_i32_331 = arith.constant 3 : i32
    %424 = vector.broadcast %c3_i32_331 : i32 to vector<16x16xi32>
    %425 = arith.cmpi sge, %26, %424 : vector<16x16xi32>
    %426 = arith.andi %423, %425 : vector<16x16xi1>
    %cst_332 = arith.constant 0.000000e+00 : f32
    %427 = vector.broadcast %cst_332 : f32 to vector<16x16xf32>
    %428 = arith.select %426, %421, %427 : vector<16x16xi1>, vector<16x16xf32>
    %c0_333 = arith.constant 0 : index
    %c0_334 = arith.constant 0 : index
    %c0_335 = arith.constant 0 : index
    %429 = vector.load %arg11[%c0_333, %c0_334, %c0_335] : memref<49x16x16xf32, #tpu.memory_space<vmem>>, vector<1x16x16xf32>
    %430 = vector.shape_cast %429 : vector<1x16x16xf32> to vector<16x16xf32>
    %431 = vector.shape_cast %428 : vector<16x16xf32> to vector<1x16x16xf32>
    tpu.vector_store %arg11[%c0_333, %c0_334, %c0_335], %431 {strides = array<i32>} : memref<49x16x16xf32, #tpu.memory_space<vmem>>, vector<1x16x16xf32>,
    %c0_336 = arith.constant 0 : index
    %c1_337 = arith.constant 1 : index
    %c0_338 = arith.constant 0 : index
    %c0_339 = arith.constant 0 : index
    %432 = vector.load %arg5[%c0_336, %c1_337, %c0_338, %c0_339] : memref<1x49x16x16xbf16, #tpu.memory_space<vmem>>, vector<1x1x16x16xbf16>
    %433 = vector.shape_cast %432 : vector<1x1x16x16xbf16> to vector<16x16xbf16>
    %434 = arith.extf %433 : vector<16x16xbf16> to vector<16x16xf32>
    %c3_i32_340 = arith.constant 3 : i32
    %435 = vector.broadcast %c3_i32_340 : i32 to vector<16x16xi32>
    %436 = arith.cmpi sge, %25, %435 : vector<16x16xi32>
    %c2_i32_341 = arith.constant 2 : i32
    %437 = vector.broadcast %c2_i32_341 : i32 to vector<16x16xi32>
    %438 = arith.cmpi sge, %26, %437 : vector<16x16xi32>
    %439 = arith.andi %436, %438 : vector<16x16xi1>
    %cst_342 = arith.constant 0.000000e+00 : f32
    %440 = vector.broadcast %cst_342 : f32 to vector<16x16xf32>
    %441 = arith.select %439, %434, %440 : vector<16x16xi1>, vector<16x16xf32>
    %c1_343 = arith.constant 1 : index
    %c0_344 = arith.constant 0 : index
    %c0_345 = arith.constant 0 : index
    %442 = vector.load %arg11[%c1_343, %c0_344, %c0_345] : memref<49x16x16xf32, #tpu.memory_space<vmem>>, vector<1x16x16xf32>
    %443 = vector.shape_cast %442 : vector<1x16x16xf32> to vector<16x16xf32>
    %444 = vector.shape_cast %441 : vector<16x16xf32> to vector<1x16x16xf32>
    tpu.vector_store %arg11[%c1_343, %c0_344, %c0_345], %444 {strides = array<i32>} : memref<49x16x16xf32, #tpu.memory_space<vmem>>, vector<1x16x16xf32>,
    %c0_346 = arith.constant 0 : index
    %c2_347 = arith.constant 2 : index
    %c0_348 = arith.constant 0 : index
    %c0_349 = arith.constant 0 : index
    %445 = vector.load %arg5[%c0_346, %c2_347, %c0_348, %c0_349] : memref<1x49x16x16xbf16, #tpu.memory_space<vmem>>, vector<1x1x16x16xbf16>
    %446 = vector.shape_cast %445 : vector<1x1x16x16xbf16> to vector<16x16xbf16>
    %447 = arith.extf %446 : vector<16x16xbf16> to vector<16x16xf32>
    %c3_i32_350 = arith.constant 3 : i32
    %448 = vector.broadcast %c3_i32_350 : i32 to vector<16x16xi32>
    %449 = arith.cmpi sge, %25, %448 : vector<16x16xi32>
    %c1_i32_351 = arith.constant 1 : i32
    %450 = vector.broadcast %c1_i32_351 : i32 to vector<16x16xi32>
    %451 = arith.cmpi sge, %26, %450 : vector<16x16xi32>
    %452 = arith.andi %449, %451 : vector<16x16xi1>
    %cst_352 = arith.constant 0.000000e+00 : f32
    %453 = vector.broadcast %cst_352 : f32 to vector<16x16xf32>
    %454 = arith.select %452, %447, %453 : vector<16x16xi1>, vector<16x16xf32>
    %c2_353 = arith.constant 2 : index
    %c0_354 = arith.constant 0 : index
    %c0_355 = arith.constant 0 : index
    %455 = vector.load %arg11[%c2_353, %c0_354, %c0_355] : memref<49x16x16xf32, #tpu.memory_space<vmem>>, vector<1x16x16xf32>
    %456 = vector.shape_cast %455 : vector<1x16x16xf32> to vector<16x16xf32>
    %457 = vector.shape_cast %454 : vector<16x16xf32> to vector<1x16x16xf32>
    tpu.vector_store %arg11[%c2_353, %c0_354, %c0_355], %457 {strides = array<i32>} : memref<49x16x16xf32, #tpu.memory_space<vmem>>, vector<1x16x16xf32>,
    %c0_356 = arith.constant 0 : index
    %c3_357 = arith.constant 3 : index
    %c0_358 = arith.constant 0 : index
    %c0_359 = arith.constant 0 : index
    %458 = vector.load %arg5[%c0_356, %c3_357, %c0_358, %c0_359] : memref<1x49x16x16xbf16, #tpu.memory_space<vmem>>, vector<1x1x16x16xbf16>
    %459 = vector.shape_cast %458 : vector<1x1x16x16xbf16> to vector<16x16xbf16>
    %460 = arith.extf %459 : vector<16x16xbf16> to vector<16x16xf32>
    %c3_i32_360 = arith.constant 3 : i32
    %461 = vector.broadcast %c3_i32_360 : i32 to vector<16x16xi32>
    %462 = arith.cmpi sge, %25, %461 : vector<16x16xi32>
    %cst_361 = arith.constant 0.000000e+00 : f32
    %463 = vector.broadcast %cst_361 : f32 to vector<16x16xf32>
    %464 = arith.select %462, %460, %463 : vector<16x16xi1>, vector<16x16xf32>
    %c3_362 = arith.constant 3 : index
    %c0_363 = arith.constant 0 : index
    %c0_364 = arith.constant 0 : index
    %465 = vector.load %arg11[%c3_362, %c0_363, %c0_364] : memref<49x16x16xf32, #tpu.memory_space<vmem>>, vector<1x16x16xf32>
    %466 = vector.shape_cast %465 : vector<1x16x16xf32> to vector<16x16xf32>
    %467 = vector.shape_cast %464 : vector<16x16xf32> to vector<1x16x16xf32>
    tpu.vector_store %arg11[%c3_362, %c0_363, %c0_364], %467 {strides = array<i32>} : memref<49x16x16xf32, #tpu.memory_space<vmem>>, vector<1x16x16xf32>,
    %c0_365 = arith.constant 0 : index
    %c4_366 = arith.constant 4 : index
    %c0_367 = arith.constant 0 : index
    %c0_368 = arith.constant 0 : index
    %468 = vector.load %arg5[%c0_365, %c4_366, %c0_367, %c0_368] : memref<1x49x16x16xbf16, #tpu.memory_space<vmem>>, vector<1x1x16x16xbf16>
    %469 = vector.shape_cast %468 : vector<1x1x16x16xbf16> to vector<16x16xbf16>
    %470 = arith.extf %469 : vector<16x16xbf16> to vector<16x16xf32>
    %c3_i32_369 = arith.constant 3 : i32
    %471 = vector.broadcast %c3_i32_369 : i32 to vector<16x16xi32>
    %472 = arith.cmpi sge, %25, %471 : vector<16x16xi32>
    %c15_i32_370 = arith.constant 15 : i32
    %473 = vector.broadcast %c15_i32_370 : i32 to vector<16x16xi32>
    %474 = arith.cmpi slt, %26, %473 : vector<16x16xi32>
    %475 = arith.andi %472, %474 : vector<16x16xi1>
    %cst_371 = arith.constant 0.000000e+00 : f32
    %476 = vector.broadcast %cst_371 : f32 to vector<16x16xf32>
    %477 = arith.select %475, %470, %476 : vector<16x16xi1>, vector<16x16xf32>
    %c4_372 = arith.constant 4 : index
    %c0_373 = arith.constant 0 : index
    %c0_374 = arith.constant 0 : index
    %478 = vector.load %arg11[%c4_372, %c0_373, %c0_374] : memref<49x16x16xf32, #tpu.memory_space<vmem>>, vector<1x16x16xf32>
    %479 = vector.shape_cast %478 : vector<1x16x16xf32> to vector<16x16xf32>
    %480 = vector.shape_cast %477 : vector<16x16xf32> to vector<1x16x16xf32>
    tpu.vector_store %arg11[%c4_372, %c0_373, %c0_374], %480 {strides = array<i32>} : memref<49x16x16xf32, #tpu.memory_space<vmem>>, vector<1x16x16xf32>,
    %c0_375 = arith.constant 0 : index
    %c5_376 = arith.constant 5 : index
    %c0_377 = arith.constant 0 : index
    %c0_378 = arith.constant 0 : index
    %481 = vector.load %arg5[%c0_375, %c5_376, %c0_377, %c0_378] : memref<1x49x16x16xbf16, #tpu.memory_space<vmem>>, vector<1x1x16x16xbf16>
    %482 = vector.shape_cast %481 : vector<1x1x16x16xbf16> to vector<16x16xbf16>
    %483 = arith.extf %482 : vector<16x16xbf16> to vector<16x16xf32>
    %c3_i32_379 = arith.constant 3 : i32
    %484 = vector.broadcast %c3_i32_379 : i32 to vector<16x16xi32>
    %485 = arith.cmpi sge, %25, %484 : vector<16x16xi32>
    %c14_i32_380 = arith.constant 14 : i32
    %486 = vector.broadcast %c14_i32_380 : i32 to vector<16x16xi32>
    %487 = arith.cmpi slt, %26, %486 : vector<16x16xi32>
    %488 = arith.andi %485, %487 : vector<16x16xi1>
    %cst_381 = arith.constant 0.000000e+00 : f32
    %489 = vector.broadcast %cst_381 : f32 to vector<16x16xf32>
    %490 = arith.select %488, %483, %489 : vector<16x16xi1>, vector<16x16xf32>
    %c5_382 = arith.constant 5 : index
    %c0_383 = arith.constant 0 : index
    %c0_384 = arith.constant 0 : index
    %491 = vector.load %arg11[%c5_382, %c0_383, %c0_384] : memref<49x16x16xf32, #tpu.memory_space<vmem>>, vector<1x16x16xf32>
    %492 = vector.shape_cast %491 : vector<1x16x16xf32> to vector<16x16xf32>
    %493 = vector.shape_cast %490 : vector<16x16xf32> to vector<1x16x16xf32>
    tpu.vector_store %arg11[%c5_382, %c0_383, %c0_384], %493 {strides = array<i32>} : memref<49x16x16xf32, #tpu.memory_space<vmem>>, vector<1x16x16xf32>,
    %c0_385 = arith.constant 0 : index
    %c6_386 = arith.constant 6 : index
    %c0_387 = arith.constant 0 : index
    %c0_388 = arith.constant 0 : index
    %494 = vector.load %arg5[%c0_385, %c6_386, %c0_387, %c0_388] : memref<1x49x16x16xbf16, #tpu.memory_space<vmem>>, vector<1x1x16x16xbf16>
    %495 = vector.shape_cast %494 : vector<1x1x16x16xbf16> to vector<16x16xbf16>
    %496 = arith.extf %495 : vector<16x16xbf16> to vector<16x16xf32>
    %c3_i32_389 = arith.constant 3 : i32
    %497 = vector.broadcast %c3_i32_389 : i32 to vector<16x16xi32>
    %498 = arith.cmpi sge, %25, %497 : vector<16x16xi32>
    %c13_i32 = arith.constant 13 : i32
    %499 = vector.broadcast %c13_i32 : i32 to vector<16x16xi32>
    %500 = arith.cmpi slt, %26, %499 : vector<16x16xi32>
    %501 = arith.andi %498, %500 : vector<16x16xi1>
    %cst_390 = arith.constant 0.000000e+00 : f32
    %502 = vector.broadcast %cst_390 : f32 to vector<16x16xf32>
    %503 = arith.select %501, %496, %502 : vector<16x16xi1>, vector<16x16xf32>
    %c6_391 = arith.constant 6 : index
    %c0_392 = arith.constant 0 : index
    %c0_393 = arith.constant 0 : index
    %504 = vector.load %arg11[%c6_391, %c0_392, %c0_393] : memref<49x16x16xf32, #tpu.memory_space<vmem>>, vector<1x16x16xf32>
    %505 = vector.shape_cast %504 : vector<1x16x16xf32> to vector<16x16xf32>
    %506 = vector.shape_cast %503 : vector<16x16xf32> to vector<1x16x16xf32>
    tpu.vector_store %arg11[%c6_391, %c0_392, %c0_393], %506 {strides = array<i32>} : memref<49x16x16xf32, #tpu.memory_space<vmem>>, vector<1x16x16xf32>,
    %c0_394 = arith.constant 0 : index
    %c7_395 = arith.constant 7 : index
    %c0_396 = arith.constant 0 : index
    %c0_397 = arith.constant 0 : index
    %507 = vector.load %arg5[%c0_394, %c7_395, %c0_396, %c0_397] : memref<1x49x16x16xbf16, #tpu.memory_space<vmem>>, vector<1x1x16x16xbf16>
    %508 = vector.shape_cast %507 : vector<1x1x16x16xbf16> to vector<16x16xbf16>
    %509 = arith.extf %508 : vector<16x16xbf16> to vector<16x16xf32>
    %c2_i32_398 = arith.constant 2 : i32
    %510 = vector.broadcast %c2_i32_398 : i32 to vector<16x16xi32>
    %511 = arith.cmpi sge, %25, %510 : vector<16x16xi32>
    %c3_i32_399 = arith.constant 3 : i32
    %512 = vector.broadcast %c3_i32_399 : i32 to vector<16x16xi32>
    %513 = arith.cmpi sge, %26, %512 : vector<16x16xi32>
    %514 = arith.andi %511, %513 : vector<16x16xi1>
    %cst_400 = arith.constant 0.000000e+00 : f32
    %515 = vector.broadcast %cst_400 : f32 to vector<16x16xf32>
    %516 = arith.select %514, %509, %515 : vector<16x16xi1>, vector<16x16xf32>
    %c7_401 = arith.constant 7 : index
    %c0_402 = arith.constant 0 : index
    %c0_403 = arith.constant 0 : index
    %517 = vector.load %arg11[%c7_401, %c0_402, %c0_403] : memref<49x16x16xf32, #tpu.memory_space<vmem>>, vector<1x16x16xf32>
    %518 = vector.shape_cast %517 : vector<1x16x16xf32> to vector<16x16xf32>
    %519 = vector.shape_cast %516 : vector<16x16xf32> to vector<1x16x16xf32>
    tpu.vector_store %arg11[%c7_401, %c0_402, %c0_403], %519 {strides = array<i32>} : memref<49x16x16xf32, #tpu.memory_space<vmem>>, vector<1x16x16xf32>,
    %c0_404 = arith.constant 0 : index
    %c8_405 = arith.constant 8 : index
    %c0_406 = arith.constant 0 : index
    %c0_407 = arith.constant 0 : index
    %520 = vector.load %arg5[%c0_404, %c8_405, %c0_406, %c0_407] : memref<1x49x16x16xbf16, #tpu.memory_space<vmem>>, vector<1x1x16x16xbf16>
    %521 = vector.shape_cast %520 : vector<1x1x16x16xbf16> to vector<16x16xbf16>
    %522 = arith.extf %521 : vector<16x16xbf16> to vector<16x16xf32>
    %c2_i32_408 = arith.constant 2 : i32
    %523 = vector.broadcast %c2_i32_408 : i32 to vector<16x16xi32>
    %524 = arith.cmpi sge, %25, %523 : vector<16x16xi32>
    %c2_i32_409 = arith.constant 2 : i32
    %525 = vector.broadcast %c2_i32_409 : i32 to vector<16x16xi32>
    %526 = arith.cmpi sge, %26, %525 : vector<16x16xi32>
    %527 = arith.andi %524, %526 : vector<16x16xi1>
    %cst_410 = arith.constant 0.000000e+00 : f32
    %528 = vector.broadcast %cst_410 : f32 to vector<16x16xf32>
    %529 = arith.select %527, %522, %528 : vector<16x16xi1>, vector<16x16xf32>
    %c8_411 = arith.constant 8 : index
    %c0_412 = arith.constant 0 : index
    %c0_413 = arith.constant 0 : index
    %530 = vector.load %arg11[%c8_411, %c0_412, %c0_413] : memref<49x16x16xf32, #tpu.memory_space<vmem>>, vector<1x16x16xf32>
    %531 = vector.shape_cast %530 : vector<1x16x16xf32> to vector<16x16xf32>
    %532 = vector.shape_cast %529 : vector<16x16xf32> to vector<1x16x16xf32>
    tpu.vector_store %arg11[%c8_411, %c0_412, %c0_413], %532 {strides = array<i32>} : memref<49x16x16xf32, #tpu.memory_space<vmem>>, vector<1x16x16xf32>,
    %c0_414 = arith.constant 0 : index
    %c9_415 = arith.constant 9 : index
    %c0_416 = arith.constant 0 : index
    %c0_417 = arith.constant 0 : index
    %533 = vector.load %arg5[%c0_414, %c9_415, %c0_416, %c0_417] : memref<1x49x16x16xbf16, #tpu.memory_space<vmem>>, vector<1x1x16x16xbf16>
    %534 = vector.shape_cast %533 : vector<1x1x16x16xbf16> to vector<16x16xbf16>
    %535 = arith.extf %534 : vector<16x16xbf16> to vector<16x16xf32>
    %c2_i32_418 = arith.constant 2 : i32
    %536 = vector.broadcast %c2_i32_418 : i32 to vector<16x16xi32>
    %537 = arith.cmpi sge, %25, %536 : vector<16x16xi32>
    %c1_i32_419 = arith.constant 1 : i32
    %538 = vector.broadcast %c1_i32_419 : i32 to vector<16x16xi32>
    %539 = arith.cmpi sge, %26, %538 : vector<16x16xi32>
    %540 = arith.andi %537, %539 : vector<16x16xi1>
    %cst_420 = arith.constant 0.000000e+00 : f32
    %541 = vector.broadcast %cst_420 : f32 to vector<16x16xf32>
    %542 = arith.select %540, %535, %541 : vector<16x16xi1>, vector<16x16xf32>
    %c9_421 = arith.constant 9 : index
    %c0_422 = arith.constant 0 : index
    %c0_423 = arith.constant 0 : index
    %543 = vector.load %arg11[%c9_421, %c0_422, %c0_423] : memref<49x16x16xf32, #tpu.memory_space<vmem>>, vector<1x16x16xf32>
    %544 = vector.shape_cast %543 : vector<1x16x16xf32> to vector<16x16xf32>
    %545 = vector.shape_cast %542 : vector<16x16xf32> to vector<1x16x16xf32>
    tpu.vector_store %arg11[%c9_421, %c0_422, %c0_423], %545 {strides = array<i32>} : memref<49x16x16xf32, #tpu.memory_space<vmem>>, vector<1x16x16xf32>,
    %c0_424 = arith.constant 0 : index
    %c10_425 = arith.constant 10 : index
    %c0_426 = arith.constant 0 : index
    %c0_427 = arith.constant 0 : index
    %546 = vector.load %arg5[%c0_424, %c10_425, %c0_426, %c0_427] : memref<1x49x16x16xbf16, #tpu.memory_space<vmem>>, vector<1x1x16x16xbf16>
    %547 = vector.shape_cast %546 : vector<1x1x16x16xbf16> to vector<16x16xbf16>
    %548 = arith.extf %547 : vector<16x16xbf16> to vector<16x16xf32>
    %c2_i32_428 = arith.constant 2 : i32
    %549 = vector.broadcast %c2_i32_428 : i32 to vector<16x16xi32>
    %550 = arith.cmpi sge, %25, %549 : vector<16x16xi32>
    %cst_429 = arith.constant 0.000000e+00 : f32
    %551 = vector.broadcast %cst_429 : f32 to vector<16x16xf32>
    %552 = arith.select %550, %548, %551 : vector<16x16xi1>, vector<16x16xf32>
    %c10_430 = arith.constant 10 : index
    %c0_431 = arith.constant 0 : index
    %c0_432 = arith.constant 0 : index
    %553 = vector.load %arg11[%c10_430, %c0_431, %c0_432] : memref<49x16x16xf32, #tpu.memory_space<vmem>>, vector<1x16x16xf32>
    %554 = vector.shape_cast %553 : vector<1x16x16xf32> to vector<16x16xf32>
    %555 = vector.shape_cast %552 : vector<16x16xf32> to vector<1x16x16xf32>
    tpu.vector_store %arg11[%c10_430, %c0_431, %c0_432], %555 {strides = array<i32>} : memref<49x16x16xf32, #tpu.memory_space<vmem>>, vector<1x16x16xf32>,
    %c0_433 = arith.constant 0 : index
    %c11_434 = arith.constant 11 : index
    %c0_435 = arith.constant 0 : index
    %c0_436 = arith.constant 0 : index
    %556 = vector.load %arg5[%c0_433, %c11_434, %c0_435, %c0_436] : memref<1x49x16x16xbf16, #tpu.memory_space<vmem>>, vector<1x1x16x16xbf16>
    %557 = vector.shape_cast %556 : vector<1x1x16x16xbf16> to vector<16x16xbf16>
    %558 = arith.extf %557 : vector<16x16xbf16> to vector<16x16xf32>
    %c2_i32_437 = arith.constant 2 : i32
    %559 = vector.broadcast %c2_i32_437 : i32 to vector<16x16xi32>
    %560 = arith.cmpi sge, %25, %559 : vector<16x16xi32>
    %c15_i32_438 = arith.constant 15 : i32
    %561 = vector.broadcast %c15_i32_438 : i32 to vector<16x16xi32>
    %562 = arith.cmpi slt, %26, %561 : vector<16x16xi32>
    %563 = arith.andi %560, %562 : vector<16x16xi1>
    %cst_439 = arith.constant 0.000000e+00 : f32
    %564 = vector.broadcast %cst_439 : f32 to vector<16x16xf32>
    %565 = arith.select %563, %558, %564 : vector<16x16xi1>, vector<16x16xf32>
    %c11_440 = arith.constant 11 : index
    %c0_441 = arith.constant 0 : index
    %c0_442 = arith.constant 0 : index
    %566 = vector.load %arg11[%c11_440, %c0_441, %c0_442] : memref<49x16x16xf32, #tpu.memory_space<vmem>>, vector<1x16x16xf32>
    %567 = vector.shape_cast %566 : vector<1x16x16xf32> to vector<16x16xf32>
    %568 = vector.shape_cast %565 : vector<16x16xf32> to vector<1x16x16xf32>
    tpu.vector_store %arg11[%c11_440, %c0_441, %c0_442], %568 {strides = array<i32>} : memref<49x16x16xf32, #tpu.memory_space<vmem>>, vector<1x16x16xf32>,
    %c0_443 = arith.constant 0 : index
    %c12_444 = arith.constant 12 : index
    %c0_445 = arith.constant 0 : index
    %c0_446 = arith.constant 0 : index
    %569 = vector.load %arg5[%c0_443, %c12_444, %c0_445, %c0_446] : memref<1x49x16x16xbf16, #tpu.memory_space<vmem>>, vector<1x1x16x16xbf16>
    %570 = vector.shape_cast %569 : vector<1x1x16x16xbf16> to vector<16x16xbf16>
    %571 = arith.extf %570 : vector<16x16xbf16> to vector<16x16xf32>
    %c2_i32_447 = arith.constant 2 : i32
    %572 = vector.broadcast %c2_i32_447 : i32 to vector<16x16xi32>
    %573 = arith.cmpi sge, %25, %572 : vector<16x16xi32>
    %c14_i32_448 = arith.constant 14 : i32
    %574 = vector.broadcast %c14_i32_448 : i32 to vector<16x16xi32>
    %575 = arith.cmpi slt, %26, %574 : vector<16x16xi32>
    %576 = arith.andi %573, %575 : vector<16x16xi1>
    %cst_449 = arith.constant 0.000000e+00 : f32
    %577 = vector.broadcast %cst_449 : f32 to vector<16x16xf32>
    %578 = arith.select %576, %571, %577 : vector<16x16xi1>, vector<16x16xf32>
    %c12_450 = arith.constant 12 : index
    %c0_451 = arith.constant 0 : index
    %c0_452 = arith.constant 0 : index
    %579 = vector.load %arg11[%c12_450, %c0_451, %c0_452] : memref<49x16x16xf32, #tpu.memory_space<vmem>>, vector<1x16x16xf32>
    %580 = vector.shape_cast %579 : vector<1x16x16xf32> to vector<16x16xf32>
    %581 = vector.shape_cast %578 : vector<16x16xf32> to vector<1x16x16xf32>
    tpu.vector_store %arg11[%c12_450, %c0_451, %c0_452], %581 {strides = array<i32>} : memref<49x16x16xf32, #tpu.memory_space<vmem>>, vector<1x16x16xf32>,
    %c0_453 = arith.constant 0 : index
    %c13_454 = arith.constant 13 : index
    %c0_455 = arith.constant 0 : index
    %c0_456 = arith.constant 0 : index
    %582 = vector.load %arg5[%c0_453, %c13_454, %c0_455, %c0_456] : memref<1x49x16x16xbf16, #tpu.memory_space<vmem>>, vector<1x1x16x16xbf16>
    %583 = vector.shape_cast %582 : vector<1x1x16x16xbf16> to vector<16x16xbf16>
    %584 = arith.extf %583 : vector<16x16xbf16> to vector<16x16xf32>
    %c2_i32_457 = arith.constant 2 : i32
    %585 = vector.broadcast %c2_i32_457 : i32 to vector<16x16xi32>
    %586 = arith.cmpi sge, %25, %585 : vector<16x16xi32>
    %c13_i32_458 = arith.constant 13 : i32
    %587 = vector.broadcast %c13_i32_458 : i32 to vector<16x16xi32>
    %588 = arith.cmpi slt, %26, %587 : vector<16x16xi32>
    %589 = arith.andi %586, %588 : vector<16x16xi1>
    %cst_459 = arith.constant 0.000000e+00 : f32
    %590 = vector.broadcast %cst_459 : f32 to vector<16x16xf32>
    %591 = arith.select %589, %584, %590 : vector<16x16xi1>, vector<16x16xf32>
    %c13_460 = arith.constant 13 : index
    %c0_461 = arith.constant 0 : index
    %c0_462 = arith.constant 0 : index
    %592 = vector.load %arg11[%c13_460, %c0_461, %c0_462] : memref<49x16x16xf32, #tpu.memory_space<vmem>>, vector<1x16x16xf32>
    %593 = vector.shape_cast %592 : vector<1x16x16xf32> to vector<16x16xf32>
    %594 = vector.shape_cast %591 : vector<16x16xf32> to vector<1x16x16xf32>
    tpu.vector_store %arg11[%c13_460, %c0_461, %c0_462], %594 {strides = array<i32>} : memref<49x16x16xf32, #tpu.memory_space<vmem>>, vector<1x16x16xf32>,
    %c0_463 = arith.constant 0 : index
    %c14_464 = arith.constant 14 : index
    %c0_465 = arith.constant 0 : index
    %c0_466 = arith.constant 0 : index
    %595 = vector.load %arg5[%c0_463, %c14_464, %c0_465, %c0_466] : memref<1x49x16x16xbf16, #tpu.memory_space<vmem>>, vector<1x1x16x16xbf16>
    %596 = vector.shape_cast %595 : vector<1x1x16x16xbf16> to vector<16x16xbf16>
    %597 = arith.extf %596 : vector<16x16xbf16> to vector<16x16xf32>
    %c1_i32_467 = arith.constant 1 : i32
    %598 = vector.broadcast %c1_i32_467 : i32 to vector<16x16xi32>
    %599 = arith.cmpi sge, %25, %598 : vector<16x16xi32>
    %c3_i32_468 = arith.constant 3 : i32
    %600 = vector.broadcast %c3_i32_468 : i32 to vector<16x16xi32>
    %601 = arith.cmpi sge, %26, %600 : vector<16x16xi32>
    %602 = arith.andi %599, %601 : vector<16x16xi1>
    %cst_469 = arith.constant 0.000000e+00 : f32
    %603 = vector.broadcast %cst_469 : f32 to vector<16x16xf32>
    %604 = arith.select %602, %597, %603 : vector<16x16xi1>, vector<16x16xf32>
    %c14_470 = arith.constant 14 : index
    %c0_471 = arith.constant 0 : index
    %c0_472 = arith.constant 0 : index
    %605 = vector.load %arg11[%c14_470, %c0_471, %c0_472] : memref<49x16x16xf32, #tpu.memory_space<vmem>>, vector<1x16x16xf32>
    %606 = vector.shape_cast %605 : vector<1x16x16xf32> to vector<16x16xf32>
    %607 = vector.shape_cast %604 : vector<16x16xf32> to vector<1x16x16xf32>
    tpu.vector_store %arg11[%c14_470, %c0_471, %c0_472], %607 {strides = array<i32>} : memref<49x16x16xf32, #tpu.memory_space<vmem>>, vector<1x16x16xf32>,
    %c0_473 = arith.constant 0 : index
    %c15_474 = arith.constant 15 : index
    %c0_475 = arith.constant 0 : index
    %c0_476 = arith.constant 0 : index
    %608 = vector.load %arg5[%c0_473, %c15_474, %c0_475, %c0_476] : memref<1x49x16x16xbf16, #tpu.memory_space<vmem>>, vector<1x1x16x16xbf16>
    %609 = vector.shape_cast %608 : vector<1x1x16x16xbf16> to vector<16x16xbf16>
    %610 = arith.extf %609 : vector<16x16xbf16> to vector<16x16xf32>
    %c1_i32_477 = arith.constant 1 : i32
    %611 = vector.broadcast %c1_i32_477 : i32 to vector<16x16xi32>
    %612 = arith.cmpi sge, %25, %611 : vector<16x16xi32>
    %c2_i32_478 = arith.constant 2 : i32
    %613 = vector.broadcast %c2_i32_478 : i32 to vector<16x16xi32>
    %614 = arith.cmpi sge, %26, %613 : vector<16x16xi32>
    %615 = arith.andi %612, %614 : vector<16x16xi1>
    %cst_479 = arith.constant 0.000000e+00 : f32
    %616 = vector.broadcast %cst_479 : f32 to vector<16x16xf32>
    %617 = arith.select %615, %610, %616 : vector<16x16xi1>, vector<16x16xf32>
    %c15_480 = arith.constant 15 : index
    %c0_481 = arith.constant 0 : index
    %c0_482 = arith.constant 0 : index
    %618 = vector.load %arg11[%c15_480, %c0_481, %c0_482] : memref<49x16x16xf32, #tpu.memory_space<vmem>>, vector<1x16x16xf32>
    %619 = vector.shape_cast %618 : vector<1x16x16xf32> to vector<16x16xf32>
    %620 = vector.shape_cast %617 : vector<16x16xf32> to vector<1x16x16xf32>
    tpu.vector_store %arg11[%c15_480, %c0_481, %c0_482], %620 {strides = array<i32>} : memref<49x16x16xf32, #tpu.memory_space<vmem>>, vector<1x16x16xf32>,
    %c0_483 = arith.constant 0 : index
    %c16_484 = arith.constant 16 : index
    %c0_485 = arith.constant 0 : index
    %c0_486 = arith.constant 0 : index
    %621 = vector.load %arg5[%c0_483, %c16_484, %c0_485, %c0_486] : memref<1x49x16x16xbf16, #tpu.memory_space<vmem>>, vector<1x1x16x16xbf16>
    %622 = vector.shape_cast %621 : vector<1x1x16x16xbf16> to vector<16x16xbf16>
    %623 = arith.extf %622 : vector<16x16xbf16> to vector<16x16xf32>
    %c1_i32_487 = arith.constant 1 : i32
    %624 = vector.broadcast %c1_i32_487 : i32 to vector<16x16xi32>
    %625 = arith.cmpi sge, %25, %624 : vector<16x16xi32>
    %c1_i32_488 = arith.constant 1 : i32
    %626 = vector.broadcast %c1_i32_488 : i32 to vector<16x16xi32>
    %627 = arith.cmpi sge, %26, %626 : vector<16x16xi32>
    %628 = arith.andi %625, %627 : vector<16x16xi1>
    %cst_489 = arith.constant 0.000000e+00 : f32
    %629 = vector.broadcast %cst_489 : f32 to vector<16x16xf32>
    %630 = arith.select %628, %623, %629 : vector<16x16xi1>, vector<16x16xf32>
    %c16_490 = arith.constant 16 : index
    %c0_491 = arith.constant 0 : index
    %c0_492 = arith.constant 0 : index
    %631 = vector.load %arg11[%c16_490, %c0_491, %c0_492] : memref<49x16x16xf32, #tpu.memory_space<vmem>>, vector<1x16x16xf32>
    %632 = vector.shape_cast %631 : vector<1x16x16xf32> to vector<16x16xf32>
    %633 = vector.shape_cast %630 : vector<16x16xf32> to vector<1x16x16xf32>
    tpu.vector_store %arg11[%c16_490, %c0_491, %c0_492], %633 {strides = array<i32>} : memref<49x16x16xf32, #tpu.memory_space<vmem>>, vector<1x16x16xf32>,
    %c0_493 = arith.constant 0 : index
    %c17_494 = arith.constant 17 : index
    %c0_495 = arith.constant 0 : index
    %c0_496 = arith.constant 0 : index
    %634 = vector.load %arg5[%c0_493, %c17_494, %c0_495, %c0_496] : memref<1x49x16x16xbf16, #tpu.memory_space<vmem>>, vector<1x1x16x16xbf16>
    %635 = vector.shape_cast %634 : vector<1x1x16x16xbf16> to vector<16x16xbf16>
    %636 = arith.extf %635 : vector<16x16xbf16> to vector<16x16xf32>
    %c1_i32_497 = arith.constant 1 : i32
    %637 = vector.broadcast %c1_i32_497 : i32 to vector<16x16xi32>
    %638 = arith.cmpi sge, %25, %637 : vector<16x16xi32>
    %cst_498 = arith.constant 0.000000e+00 : f32
    %639 = vector.broadcast %cst_498 : f32 to vector<16x16xf32>
    %640 = arith.select %638, %636, %639 : vector<16x16xi1>, vector<16x16xf32>
    %c17_499 = arith.constant 17 : index
    %c0_500 = arith.constant 0 : index
    %c0_501 = arith.constant 0 : index
    %641 = vector.load %arg11[%c17_499, %c0_500, %c0_501] : memref<49x16x16xf32, #tpu.memory_space<vmem>>, vector<1x16x16xf32>
    %642 = vector.shape_cast %641 : vector<1x16x16xf32> to vector<16x16xf32>
    %643 = vector.shape_cast %640 : vector<16x16xf32> to vector<1x16x16xf32>
    tpu.vector_store %arg11[%c17_499, %c0_500, %c0_501], %643 {strides = array<i32>} : memref<49x16x16xf32, #tpu.memory_space<vmem>>, vector<1x16x16xf32>,
    %c0_502 = arith.constant 0 : index
    %c18_503 = arith.constant 18 : index
    %c0_504 = arith.constant 0 : index
    %c0_505 = arith.constant 0 : index
    %644 = vector.load %arg5[%c0_502, %c18_503, %c0_504, %c0_505] : memref<1x49x16x16xbf16, #tpu.memory_space<vmem>>, vector<1x1x16x16xbf16>
    %645 = vector.shape_cast %644 : vector<1x1x16x16xbf16> to vector<16x16xbf16>
    %646 = arith.extf %645 : vector<16x16xbf16> to vector<16x16xf32>
    %c1_i32_506 = arith.constant 1 : i32
    %647 = vector.broadcast %c1_i32_506 : i32 to vector<16x16xi32>
    %648 = arith.cmpi sge, %25, %647 : vector<16x16xi32>
    %c15_i32_507 = arith.constant 15 : i32
    %649 = vector.broadcast %c15_i32_507 : i32 to vector<16x16xi32>
    %650 = arith.cmpi slt, %26, %649 : vector<16x16xi32>
    %651 = arith.andi %648, %650 : vector<16x16xi1>
    %cst_508 = arith.constant 0.000000e+00 : f32
    %652 = vector.broadcast %cst_508 : f32 to vector<16x16xf32>
    %653 = arith.select %651, %646, %652 : vector<16x16xi1>, vector<16x16xf32>
    %c18_509 = arith.constant 18 : index
    %c0_510 = arith.constant 0 : index
    %c0_511 = arith.constant 0 : index
    %654 = vector.load %arg11[%c18_509, %c0_510, %c0_511] : memref<49x16x16xf32, #tpu.memory_space<vmem>>, vector<1x16x16xf32>
    %655 = vector.shape_cast %654 : vector<1x16x16xf32> to vector<16x16xf32>
    %656 = vector.shape_cast %653 : vector<16x16xf32> to vector<1x16x16xf32>
    tpu.vector_store %arg11[%c18_509, %c0_510, %c0_511], %656 {strides = array<i32>} : memref<49x16x16xf32, #tpu.memory_space<vmem>>, vector<1x16x16xf32>,
    %c0_512 = arith.constant 0 : index
    %c19_513 = arith.constant 19 : index
    %c0_514 = arith.constant 0 : index
    %c0_515 = arith.constant 0 : index
    %657 = vector.load %arg5[%c0_512, %c19_513, %c0_514, %c0_515] : memref<1x49x16x16xbf16, #tpu.memory_space<vmem>>, vector<1x1x16x16xbf16>
    %658 = vector.shape_cast %657 : vector<1x1x16x16xbf16> to vector<16x16xbf16>
    %659 = arith.extf %658 : vector<16x16xbf16> to vector<16x16xf32>
    %c1_i32_516 = arith.constant 1 : i32
    %660 = vector.broadcast %c1_i32_516 : i32 to vector<16x16xi32>
    %661 = arith.cmpi sge, %25, %660 : vector<16x16xi32>
    %c14_i32_517 = arith.constant 14 : i32
    %662 = vector.broadcast %c14_i32_517 : i32 to vector<16x16xi32>
    %663 = arith.cmpi slt, %26, %662 : vector<16x16xi32>
    %664 = arith.andi %661, %663 : vector<16x16xi1>
    %cst_518 = arith.constant 0.000000e+00 : f32
    %665 = vector.broadcast %cst_518 : f32 to vector<16x16xf32>
    %666 = arith.select %664, %659, %665 : vector<16x16xi1>, vector<16x16xf32>
    %c19_519 = arith.constant 19 : index
    %c0_520 = arith.constant 0 : index
    %c0_521 = arith.constant 0 : index
    %667 = vector.load %arg11[%c19_519, %c0_520, %c0_521] : memref<49x16x16xf32, #tpu.memory_space<vmem>>, vector<1x16x16xf32>
    %668 = vector.shape_cast %667 : vector<1x16x16xf32> to vector<16x16xf32>
    %669 = vector.shape_cast %666 : vector<16x16xf32> to vector<1x16x16xf32>
    tpu.vector_store %arg11[%c19_519, %c0_520, %c0_521], %669 {strides = array<i32>} : memref<49x16x16xf32, #tpu.memory_space<vmem>>, vector<1x16x16xf32>,
    %c0_522 = arith.constant 0 : index
    %c20_523 = arith.constant 20 : index
    %c0_524 = arith.constant 0 : index
    %c0_525 = arith.constant 0 : index
    %670 = vector.load %arg5[%c0_522, %c20_523, %c0_524, %c0_525] : memref<1x49x16x16xbf16, #tpu.memory_space<vmem>>, vector<1x1x16x16xbf16>
    %671 = vector.shape_cast %670 : vector<1x1x16x16xbf16> to vector<16x16xbf16>
    %672 = arith.extf %671 : vector<16x16xbf16> to vector<16x16xf32>
    %c1_i32_526 = arith.constant 1 : i32
    %673 = vector.broadcast %c1_i32_526 : i32 to vector<16x16xi32>
    %674 = arith.cmpi sge, %25, %673 : vector<16x16xi32>
    %c13_i32_527 = arith.constant 13 : i32
    %675 = vector.broadcast %c13_i32_527 : i32 to vector<16x16xi32>
    %676 = arith.cmpi slt, %26, %675 : vector<16x16xi32>
    %677 = arith.andi %674, %676 : vector<16x16xi1>
    %cst_528 = arith.constant 0.000000e+00 : f32
    %678 = vector.broadcast %cst_528 : f32 to vector<16x16xf32>
    %679 = arith.select %677, %672, %678 : vector<16x16xi1>, vector<16x16xf32>
    %c20_529 = arith.constant 20 : index
    %c0_530 = arith.constant 0 : index
    %c0_531 = arith.constant 0 : index
    %680 = vector.load %arg11[%c20_529, %c0_530, %c0_531] : memref<49x16x16xf32, #tpu.memory_space<vmem>>, vector<1x16x16xf32>
    %681 = vector.shape_cast %680 : vector<1x16x16xf32> to vector<16x16xf32>
    %682 = vector.shape_cast %679 : vector<16x16xf32> to vector<1x16x16xf32>
    tpu.vector_store %arg11[%c20_529, %c0_530, %c0_531], %682 {strides = array<i32>} : memref<49x16x16xf32, #tpu.memory_space<vmem>>, vector<1x16x16xf32>,
    %c0_532 = arith.constant 0 : index
    %c21_533 = arith.constant 21 : index
    %c0_534 = arith.constant 0 : index
    %c0_535 = arith.constant 0 : index
    %683 = vector.load %arg5[%c0_532, %c21_533, %c0_534, %c0_535] : memref<1x49x16x16xbf16, #tpu.memory_space<vmem>>, vector<1x1x16x16xbf16>
    %684 = vector.shape_cast %683 : vector<1x1x16x16xbf16> to vector<16x16xbf16>
    %685 = arith.extf %684 : vector<16x16xbf16> to vector<16x16xf32>
    %c3_i32_536 = arith.constant 3 : i32
    %686 = vector.broadcast %c3_i32_536 : i32 to vector<16x16xi32>
    %687 = arith.cmpi sge, %26, %686 : vector<16x16xi32>
    %cst_537 = arith.constant 0.000000e+00 : f32
    %688 = vector.broadcast %cst_537 : f32 to vector<16x16xf32>
    %689 = arith.select %687, %685, %688 : vector<16x16xi1>, vector<16x16xf32>
    %c21_538 = arith.constant 21 : index
    %c0_539 = arith.constant 0 : index
    %c0_540 = arith.constant 0 : index
    %690 = vector.load %arg11[%c21_538, %c0_539, %c0_540] : memref<49x16x16xf32, #tpu.memory_space<vmem>>, vector<1x16x16xf32>
    %691 = vector.shape_cast %690 : vector<1x16x16xf32> to vector<16x16xf32>
    %692 = vector.shape_cast %689 : vector<16x16xf32> to vector<1x16x16xf32>
    tpu.vector_store %arg11[%c21_538, %c0_539, %c0_540], %692 {strides = array<i32>} : memref<49x16x16xf32, #tpu.memory_space<vmem>>, vector<1x16x16xf32>,
    %c0_541 = arith.constant 0 : index
    %c22_542 = arith.constant 22 : index
    %c0_543 = arith.constant 0 : index
    %c0_544 = arith.constant 0 : index
    %693 = vector.load %arg5[%c0_541, %c22_542, %c0_543, %c0_544] : memref<1x49x16x16xbf16, #tpu.memory_space<vmem>>, vector<1x1x16x16xbf16>
    %694 = vector.shape_cast %693 : vector<1x1x16x16xbf16> to vector<16x16xbf16>
    %695 = arith.extf %694 : vector<16x16xbf16> to vector<16x16xf32>
    %c2_i32_545 = arith.constant 2 : i32
    %696 = vector.broadcast %c2_i32_545 : i32 to vector<16x16xi32>
    %697 = arith.cmpi sge, %26, %696 : vector<16x16xi32>
    %cst_546 = arith.constant 0.000000e+00 : f32
    %698 = vector.broadcast %cst_546 : f32 to vector<16x16xf32>
    %699 = arith.select %697, %695, %698 : vector<16x16xi1>, vector<16x16xf32>
    %c22_547 = arith.constant 22 : index
    %c0_548 = arith.constant 0 : index
    %c0_549 = arith.constant 0 : index
    %700 = vector.load %arg11[%c22_547, %c0_548, %c0_549] : memref<49x16x16xf32, #tpu.memory_space<vmem>>, vector<1x16x16xf32>
    %701 = vector.shape_cast %700 : vector<1x16x16xf32> to vector<16x16xf32>
    %702 = vector.shape_cast %699 : vector<16x16xf32> to vector<1x16x16xf32>
    tpu.vector_store %arg11[%c22_547, %c0_548, %c0_549], %702 {strides = array<i32>} : memref<49x16x16xf32, #tpu.memory_space<vmem>>, vector<1x16x16xf32>,
    %c0_550 = arith.constant 0 : index
    %c23_551 = arith.constant 23 : index
    %c0_552 = arith.constant 0 : index
    %c0_553 = arith.constant 0 : index
    %703 = vector.load %arg5[%c0_550, %c23_551, %c0_552, %c0_553] : memref<1x49x16x16xbf16, #tpu.memory_space<vmem>>, vector<1x1x16x16xbf16>
    %704 = vector.shape_cast %703 : vector<1x1x16x16xbf16> to vector<16x16xbf16>
    %705 = arith.extf %704 : vector<16x16xbf16> to vector<16x16xf32>
    %c1_i32_554 = arith.constant 1 : i32
    %706 = vector.broadcast %c1_i32_554 : i32 to vector<16x16xi32>
    %707 = arith.cmpi sge, %26, %706 : vector<16x16xi32>
    %cst_555 = arith.constant 0.000000e+00 : f32
    %708 = vector.broadcast %cst_555 : f32 to vector<16x16xf32>
    %709 = arith.select %707, %705, %708 : vector<16x16xi1>, vector<16x16xf32>
    %c23_556 = arith.constant 23 : index
    %c0_557 = arith.constant 0 : index
    %c0_558 = arith.constant 0 : index
    %710 = vector.load %arg11[%c23_556, %c0_557, %c0_558] : memref<49x16x16xf32, #tpu.memory_space<vmem>>, vector<1x16x16xf32>
    %711 = vector.shape_cast %710 : vector<1x16x16xf32> to vector<16x16xf32>
    %712 = vector.shape_cast %709 : vector<16x16xf32> to vector<1x16x16xf32>
    tpu.vector_store %arg11[%c23_556, %c0_557, %c0_558], %712 {strides = array<i32>} : memref<49x16x16xf32, #tpu.memory_space<vmem>>, vector<1x16x16xf32>,
    %c0_559 = arith.constant 0 : index
    %c24_560 = arith.constant 24 : index
    %c0_561 = arith.constant 0 : index
    %c0_562 = arith.constant 0 : index
    %713 = vector.load %arg5[%c0_559, %c24_560, %c0_561, %c0_562] : memref<1x49x16x16xbf16, #tpu.memory_space<vmem>>, vector<1x1x16x16xbf16>
    %714 = vector.shape_cast %713 : vector<1x1x16x16xbf16> to vector<16x16xbf16>
    %715 = arith.extf %714 : vector<16x16xbf16> to vector<16x16xf32>
    %c24_563 = arith.constant 24 : index
    %c0_564 = arith.constant 0 : index
    %c0_565 = arith.constant 0 : index
    %716 = vector.load %arg11[%c24_563, %c0_564, %c0_565] : memref<49x16x16xf32, #tpu.memory_space<vmem>>, vector<1x16x16xf32>
    %717 = vector.shape_cast %716 : vector<1x16x16xf32> to vector<16x16xf32>
    %718 = vector.shape_cast %715 : vector<16x16xf32> to vector<1x16x16xf32>
    tpu.vector_store %arg11[%c24_563, %c0_564, %c0_565], %718 {strides = array<i32>} : memref<49x16x16xf32, #tpu.memory_space<vmem>>, vector<1x16x16xf32>,
    %c0_566 = arith.constant 0 : index
    %c25 = arith.constant 25 : index
    %c0_567 = arith.constant 0 : index
    %c0_568 = arith.constant 0 : index
    %719 = vector.load %arg5[%c0_566, %c25, %c0_567, %c0_568] : memref<1x49x16x16xbf16, #tpu.memory_space<vmem>>, vector<1x1x16x16xbf16>
    %720 = vector.shape_cast %719 : vector<1x1x16x16xbf16> to vector<16x16xbf16>
    %721 = arith.extf %720 : vector<16x16xbf16> to vector<16x16xf32>
    %c15_i32_569 = arith.constant 15 : i32
    %722 = vector.broadcast %c15_i32_569 : i32 to vector<16x16xi32>
    %723 = arith.cmpi slt, %26, %722 : vector<16x16xi32>
    %cst_570 = arith.constant 0.000000e+00 : f32
    %724 = vector.broadcast %cst_570 : f32 to vector<16x16xf32>
    %725 = arith.select %723, %721, %724 : vector<16x16xi1>, vector<16x16xf32>
    %c25_571 = arith.constant 25 : index
    %c0_572 = arith.constant 0 : index
    %c0_573 = arith.constant 0 : index
    %726 = vector.load %arg11[%c25_571, %c0_572, %c0_573] : memref<49x16x16xf32, #tpu.memory_space<vmem>>, vector<1x16x16xf32>
    %727 = vector.shape_cast %726 : vector<1x16x16xf32> to vector<16x16xf32>
    %728 = vector.shape_cast %725 : vector<16x16xf32> to vector<1x16x16xf32>
    tpu.vector_store %arg11[%c25_571, %c0_572, %c0_573], %728 {strides = array<i32>} : memref<49x16x16xf32, #tpu.memory_space<vmem>>, vector<1x16x16xf32>,
    %c0_574 = arith.constant 0 : index
    %c26 = arith.constant 26 : index
    %c0_575 = arith.constant 0 : index
    %c0_576 = arith.constant 0 : index
    %729 = vector.load %arg5[%c0_574, %c26, %c0_575, %c0_576] : memref<1x49x16x16xbf16, #tpu.memory_space<vmem>>, vector<1x1x16x16xbf16>
    %730 = vector.shape_cast %729 : vector<1x1x16x16xbf16> to vector<16x16xbf16>
    %731 = arith.extf %730 : vector<16x16xbf16> to vector<16x16xf32>
    %c14_i32_577 = arith.constant 14 : i32
    %732 = vector.broadcast %c14_i32_577 : i32 to vector<16x16xi32>
    %733 = arith.cmpi slt, %26, %732 : vector<16x16xi32>
    %cst_578 = arith.constant 0.000000e+00 : f32
    %734 = vector.broadcast %cst_578 : f32 to vector<16x16xf32>
    %735 = arith.select %733, %731, %734 : vector<16x16xi1>, vector<16x16xf32>
    %c26_579 = arith.constant 26 : index
    %c0_580 = arith.constant 0 : index
    %c0_581 = arith.constant 0 : index
    %736 = vector.load %arg11[%c26_579, %c0_580, %c0_581] : memref<49x16x16xf32, #tpu.memory_space<vmem>>, vector<1x16x16xf32>
    %737 = vector.shape_cast %736 : vector<1x16x16xf32> to vector<16x16xf32>
    %738 = vector.shape_cast %735 : vector<16x16xf32> to vector<1x16x16xf32>
    tpu.vector_store %arg11[%c26_579, %c0_580, %c0_581], %738 {strides = array<i32>} : memref<49x16x16xf32, #tpu.memory_space<vmem>>, vector<1x16x16xf32>,
    %c0_582 = arith.constant 0 : index
    %c27 = arith.constant 27 : index
    %c0_583 = arith.constant 0 : index
    %c0_584 = arith.constant 0 : index
    %739 = vector.load %arg5[%c0_582, %c27, %c0_583, %c0_584] : memref<1x49x16x16xbf16, #tpu.memory_space<vmem>>, vector<1x1x16x16xbf16>
    %740 = vector.shape_cast %739 : vector<1x1x16x16xbf16> to vector<16x16xbf16>
    %741 = arith.extf %740 : vector<16x16xbf16> to vector<16x16xf32>
    %c13_i32_585 = arith.constant 13 : i32
    %742 = vector.broadcast %c13_i32_585 : i32 to vector<16x16xi32>
    %743 = arith.cmpi slt, %26, %742 : vector<16x16xi32>
    %cst_586 = arith.constant 0.000000e+00 : f32
    %744 = vector.broadcast %cst_586 : f32 to vector<16x16xf32>
    %745 = arith.select %743, %741, %744 : vector<16x16xi1>, vector<16x16xf32>
    %c27_587 = arith.constant 27 : index
    %c0_588 = arith.constant 0 : index
    %c0_589 = arith.constant 0 : index
    %746 = vector.load %arg11[%c27_587, %c0_588, %c0_589] : memref<49x16x16xf32, #tpu.memory_space<vmem>>, vector<1x16x16xf32>
    %747 = vector.shape_cast %746 : vector<1x16x16xf32> to vector<16x16xf32>
    %748 = vector.shape_cast %745 : vector<16x16xf32> to vector<1x16x16xf32>
    tpu.vector_store %arg11[%c27_587, %c0_588, %c0_589], %748 {strides = array<i32>} : memref<49x16x16xf32, #tpu.memory_space<vmem>>, vector<1x16x16xf32>,
    %c0_590 = arith.constant 0 : index
    %c28 = arith.constant 28 : index
    %c0_591 = arith.constant 0 : index
    %c0_592 = arith.constant 0 : index
    %749 = vector.load %arg5[%c0_590, %c28, %c0_591, %c0_592] : memref<1x49x16x16xbf16, #tpu.memory_space<vmem>>, vector<1x1x16x16xbf16>
    %750 = vector.shape_cast %749 : vector<1x1x16x16xbf16> to vector<16x16xbf16>
    %751 = arith.extf %750 : vector<16x16xbf16> to vector<16x16xf32>
    %c15_i32_593 = arith.constant 15 : i32
    %752 = vector.broadcast %c15_i32_593 : i32 to vector<16x16xi32>
    %753 = arith.cmpi slt, %25, %752 : vector<16x16xi32>
    %c3_i32_594 = arith.constant 3 : i32
    %754 = vector.broadcast %c3_i32_594 : i32 to vector<16x16xi32>
    %755 = arith.cmpi sge, %26, %754 : vector<16x16xi32>
    %756 = arith.andi %753, %755 : vector<16x16xi1>
    %cst_595 = arith.constant 0.000000e+00 : f32
    %757 = vector.broadcast %cst_595 : f32 to vector<16x16xf32>
    %758 = arith.select %756, %751, %757 : vector<16x16xi1>, vector<16x16xf32>
    %c28_596 = arith.constant 28 : index
    %c0_597 = arith.constant 0 : index
    %c0_598 = arith.constant 0 : index
    %759 = vector.load %arg11[%c28_596, %c0_597, %c0_598] : memref<49x16x16xf32, #tpu.memory_space<vmem>>, vector<1x16x16xf32>
    %760 = vector.shape_cast %759 : vector<1x16x16xf32> to vector<16x16xf32>
    %761 = vector.shape_cast %758 : vector<16x16xf32> to vector<1x16x16xf32>
    tpu.vector_store %arg11[%c28_596, %c0_597, %c0_598], %761 {strides = array<i32>} : memref<49x16x16xf32, #tpu.memory_space<vmem>>, vector<1x16x16xf32>,
    %c0_599 = arith.constant 0 : index
    %c29 = arith.constant 29 : index
    %c0_600 = arith.constant 0 : index
    %c0_601 = arith.constant 0 : index
    %762 = vector.load %arg5[%c0_599, %c29, %c0_600, %c0_601] : memref<1x49x16x16xbf16, #tpu.memory_space<vmem>>, vector<1x1x16x16xbf16>
    %763 = vector.shape_cast %762 : vector<1x1x16x16xbf16> to vector<16x16xbf16>
    %764 = arith.extf %763 : vector<16x16xbf16> to vector<16x16xf32>
    %c15_i32_602 = arith.constant 15 : i32
    %765 = vector.broadcast %c15_i32_602 : i32 to vector<16x16xi32>
    %766 = arith.cmpi slt, %25, %765 : vector<16x16xi32>
    %c2_i32_603 = arith.constant 2 : i32
    %767 = vector.broadcast %c2_i32_603 : i32 to vector<16x16xi32>
    %768 = arith.cmpi sge, %26, %767 : vector<16x16xi32>
    %769 = arith.andi %766, %768 : vector<16x16xi1>
    %cst_604 = arith.constant 0.000000e+00 : f32
    %770 = vector.broadcast %cst_604 : f32 to vector<16x16xf32>
    %771 = arith.select %769, %764, %770 : vector<16x16xi1>, vector<16x16xf32>
    %c29_605 = arith.constant 29 : index
    %c0_606 = arith.constant 0 : index
    %c0_607 = arith.constant 0 : index
    %772 = vector.load %arg11[%c29_605, %c0_606, %c0_607] : memref<49x16x16xf32, #tpu.memory_space<vmem>>, vector<1x16x16xf32>
    %773 = vector.shape_cast %772 : vector<1x16x16xf32> to vector<16x16xf32>
    %774 = vector.shape_cast %771 : vector<16x16xf32> to vector<1x16x16xf32>
    tpu.vector_store %arg11[%c29_605, %c0_606, %c0_607], %774 {strides = array<i32>} : memref<49x16x16xf32, #tpu.memory_space<vmem>>, vector<1x16x16xf32>,
    %c0_608 = arith.constant 0 : index
    %c30 = arith.constant 30 : index
    %c0_609 = arith.constant 0 : index
    %c0_610 = arith.constant 0 : index
    %775 = vector.load %arg5[%c0_608, %c30, %c0_609, %c0_610] : memref<1x49x16x16xbf16, #tpu.memory_space<vmem>>, vector<1x1x16x16xbf16>
    %776 = vector.shape_cast %775 : vector<1x1x16x16xbf16> to vector<16x16xbf16>
    %777 = arith.extf %776 : vector<16x16xbf16> to vector<16x16xf32>
    %c15_i32_611 = arith.constant 15 : i32
    %778 = vector.broadcast %c15_i32_611 : i32 to vector<16x16xi32>
    %779 = arith.cmpi slt, %25, %778 : vector<16x16xi32>
    %c1_i32_612 = arith.constant 1 : i32
    %780 = vector.broadcast %c1_i32_612 : i32 to vector<16x16xi32>
    %781 = arith.cmpi sge, %26, %780 : vector<16x16xi32>
    %782 = arith.andi %779, %781 : vector<16x16xi1>
    %cst_613 = arith.constant 0.000000e+00 : f32
    %783 = vector.broadcast %cst_613 : f32 to vector<16x16xf32>
    %784 = arith.select %782, %777, %783 : vector<16x16xi1>, vector<16x16xf32>
    %c30_614 = arith.constant 30 : index
    %c0_615 = arith.constant 0 : index
    %c0_616 = arith.constant 0 : index
    %785 = vector.load %arg11[%c30_614, %c0_615, %c0_616] : memref<49x16x16xf32, #tpu.memory_space<vmem>>, vector<1x16x16xf32>
    %786 = vector.shape_cast %785 : vector<1x16x16xf32> to vector<16x16xf32>
    %787 = vector.shape_cast %784 : vector<16x16xf32> to vector<1x16x16xf32>
    tpu.vector_store %arg11[%c30_614, %c0_615, %c0_616], %787 {strides = array<i32>} : memref<49x16x16xf32, #tpu.memory_space<vmem>>, vector<1x16x16xf32>,
    %c0_617 = arith.constant 0 : index
    %c31 = arith.constant 31 : index
    %c0_618 = arith.constant 0 : index
    %c0_619 = arith.constant 0 : index
    %788 = vector.load %arg5[%c0_617, %c31, %c0_618, %c0_619] : memref<1x49x16x16xbf16, #tpu.memory_space<vmem>>, vector<1x1x16x16xbf16>
    %789 = vector.shape_cast %788 : vector<1x1x16x16xbf16> to vector<16x16xbf16>
    %790 = arith.extf %789 : vector<16x16xbf16> to vector<16x16xf32>
    %c15_i32_620 = arith.constant 15 : i32
    %791 = vector.broadcast %c15_i32_620 : i32 to vector<16x16xi32>
    %792 = arith.cmpi slt, %25, %791 : vector<16x16xi32>
    %cst_621 = arith.constant 0.000000e+00 : f32
    %793 = vector.broadcast %cst_621 : f32 to vector<16x16xf32>
    %794 = arith.select %792, %790, %793 : vector<16x16xi1>, vector<16x16xf32>
    %c31_622 = arith.constant 31 : index
    %c0_623 = arith.constant 0 : index
    %c0_624 = arith.constant 0 : index
    %795 = vector.load %arg11[%c31_622, %c0_623, %c0_624] : memref<49x16x16xf32, #tpu.memory_space<vmem>>, vector<1x16x16xf32>
    %796 = vector.shape_cast %795 : vector<1x16x16xf32> to vector<16x16xf32>
    %797 = vector.shape_cast %794 : vector<16x16xf32> to vector<1x16x16xf32>
    tpu.vector_store %arg11[%c31_622, %c0_623, %c0_624], %797 {strides = array<i32>} : memref<49x16x16xf32, #tpu.memory_space<vmem>>, vector<1x16x16xf32>,
    %c0_625 = arith.constant 0 : index
    %c32 = arith.constant 32 : index
    %c0_626 = arith.constant 0 : index
    %c0_627 = arith.constant 0 : index
    %798 = vector.load %arg5[%c0_625, %c32, %c0_626, %c0_627] : memref<1x49x16x16xbf16, #tpu.memory_space<vmem>>, vector<1x1x16x16xbf16>
    %799 = vector.shape_cast %798 : vector<1x1x16x16xbf16> to vector<16x16xbf16>
    %800 = arith.extf %799 : vector<16x16xbf16> to vector<16x16xf32>
    %c15_i32_628 = arith.constant 15 : i32
    %801 = vector.broadcast %c15_i32_628 : i32 to vector<16x16xi32>
    %802 = arith.cmpi slt, %25, %801 : vector<16x16xi32>
    %c15_i32_629 = arith.constant 15 : i32
    %803 = vector.broadcast %c15_i32_629 : i32 to vector<16x16xi32>
    %804 = arith.cmpi slt, %26, %803 : vector<16x16xi32>
    %805 = arith.andi %802, %804 : vector<16x16xi1>
    %cst_630 = arith.constant 0.000000e+00 : f32
    %806 = vector.broadcast %cst_630 : f32 to vector<16x16xf32>
    %807 = arith.select %805, %800, %806 : vector<16x16xi1>, vector<16x16xf32>
    %c32_631 = arith.constant 32 : index
    %c0_632 = arith.constant 0 : index
    %c0_633 = arith.constant 0 : index
    %808 = vector.load %arg11[%c32_631, %c0_632, %c0_633] : memref<49x16x16xf32, #tpu.memory_space<vmem>>, vector<1x16x16xf32>
    %809 = vector.shape_cast %808 : vector<1x16x16xf32> to vector<16x16xf32>
    %810 = vector.shape_cast %807 : vector<16x16xf32> to vector<1x16x16xf32>
    tpu.vector_store %arg11[%c32_631, %c0_632, %c0_633], %810 {strides = array<i32>} : memref<49x16x16xf32, #tpu.memory_space<vmem>>, vector<1x16x16xf32>,
    %c0_634 = arith.constant 0 : index
    %c33 = arith.constant 33 : index
    %c0_635 = arith.constant 0 : index
    %c0_636 = arith.constant 0 : index
    %811 = vector.load %arg5[%c0_634, %c33, %c0_635, %c0_636] : memref<1x49x16x16xbf16, #tpu.memory_space<vmem>>, vector<1x1x16x16xbf16>
    %812 = vector.shape_cast %811 : vector<1x1x16x16xbf16> to vector<16x16xbf16>
    %813 = arith.extf %812 : vector<16x16xbf16> to vector<16x16xf32>
    %c15_i32_637 = arith.constant 15 : i32
    %814 = vector.broadcast %c15_i32_637 : i32 to vector<16x16xi32>
    %815 = arith.cmpi slt, %25, %814 : vector<16x16xi32>
    %c14_i32_638 = arith.constant 14 : i32
    %816 = vector.broadcast %c14_i32_638 : i32 to vector<16x16xi32>
    %817 = arith.cmpi slt, %26, %816 : vector<16x16xi32>
    %818 = arith.andi %815, %817 : vector<16x16xi1>
    %cst_639 = arith.constant 0.000000e+00 : f32
    %819 = vector.broadcast %cst_639 : f32 to vector<16x16xf32>
    %820 = arith.select %818, %813, %819 : vector<16x16xi1>, vector<16x16xf32>
    %c33_640 = arith.constant 33 : index
    %c0_641 = arith.constant 0 : index
    %c0_642 = arith.constant 0 : index
    %821 = vector.load %arg11[%c33_640, %c0_641, %c0_642] : memref<49x16x16xf32, #tpu.memory_space<vmem>>, vector<1x16x16xf32>
    %822 = vector.shape_cast %821 : vector<1x16x16xf32> to vector<16x16xf32>
    %823 = vector.shape_cast %820 : vector<16x16xf32> to vector<1x16x16xf32>
    tpu.vector_store %arg11[%c33_640, %c0_641, %c0_642], %823 {strides = array<i32>} : memref<49x16x16xf32, #tpu.memory_space<vmem>>, vector<1x16x16xf32>,
    %c0_643 = arith.constant 0 : index
    %c34 = arith.constant 34 : index
    %c0_644 = arith.constant 0 : index
    %c0_645 = arith.constant 0 : index
    %824 = vector.load %arg5[%c0_643, %c34, %c0_644, %c0_645] : memref<1x49x16x16xbf16, #tpu.memory_space<vmem>>, vector<1x1x16x16xbf16>
    %825 = vector.shape_cast %824 : vector<1x1x16x16xbf16> to vector<16x16xbf16>
    %826 = arith.extf %825 : vector<16x16xbf16> to vector<16x16xf32>
    %c15_i32_646 = arith.constant 15 : i32
    %827 = vector.broadcast %c15_i32_646 : i32 to vector<16x16xi32>
    %828 = arith.cmpi slt, %25, %827 : vector<16x16xi32>
    %c13_i32_647 = arith.constant 13 : i32
    %829 = vector.broadcast %c13_i32_647 : i32 to vector<16x16xi32>
    %830 = arith.cmpi slt, %26, %829 : vector<16x16xi32>
    %831 = arith.andi %828, %830 : vector<16x16xi1>
    %cst_648 = arith.constant 0.000000e+00 : f32
    %832 = vector.broadcast %cst_648 : f32 to vector<16x16xf32>
    %833 = arith.select %831, %826, %832 : vector<16x16xi1>, vector<16x16xf32>
    %c34_649 = arith.constant 34 : index
    %c0_650 = arith.constant 0 : index
    %c0_651 = arith.constant 0 : index
    %834 = vector.load %arg11[%c34_649, %c0_650, %c0_651] : memref<49x16x16xf32, #tpu.memory_space<vmem>>, vector<1x16x16xf32>
    %835 = vector.shape_cast %834 : vector<1x16x16xf32> to vector<16x16xf32>
    %836 = vector.shape_cast %833 : vector<16x16xf32> to vector<1x16x16xf32>
    tpu.vector_store %arg11[%c34_649, %c0_650, %c0_651], %836 {strides = array<i32>} : memref<49x16x16xf32, #tpu.memory_space<vmem>>, vector<1x16x16xf32>,
    %c0_652 = arith.constant 0 : index
    %c35 = arith.constant 35 : index
    %c0_653 = arith.constant 0 : index
    %c0_654 = arith.constant 0 : index
    %837 = vector.load %arg5[%c0_652, %c35, %c0_653, %c0_654] : memref<1x49x16x16xbf16, #tpu.memory_space<vmem>>, vector<1x1x16x16xbf16>
    %838 = vector.shape_cast %837 : vector<1x1x16x16xbf16> to vector<16x16xbf16>
    %839 = arith.extf %838 : vector<16x16xbf16> to vector<16x16xf32>
    %c14_i32_655 = arith.constant 14 : i32
    %840 = vector.broadcast %c14_i32_655 : i32 to vector<16x16xi32>
    %841 = arith.cmpi slt, %25, %840 : vector<16x16xi32>
    %c3_i32_656 = arith.constant 3 : i32
    %842 = vector.broadcast %c3_i32_656 : i32 to vector<16x16xi32>
    %843 = arith.cmpi sge, %26, %842 : vector<16x16xi32>
    %844 = arith.andi %841, %843 : vector<16x16xi1>
    %cst_657 = arith.constant 0.000000e+00 : f32
    %845 = vector.broadcast %cst_657 : f32 to vector<16x16xf32>
    %846 = arith.select %844, %839, %845 : vector<16x16xi1>, vector<16x16xf32>
    %c35_658 = arith.constant 35 : index
    %c0_659 = arith.constant 0 : index
    %c0_660 = arith.constant 0 : index
    %847 = vector.load %arg11[%c35_658, %c0_659, %c0_660] : memref<49x16x16xf32, #tpu.memory_space<vmem>>, vector<1x16x16xf32>
    %848 = vector.shape_cast %847 : vector<1x16x16xf32> to vector<16x16xf32>
    %849 = vector.shape_cast %846 : vector<16x16xf32> to vector<1x16x16xf32>
    tpu.vector_store %arg11[%c35_658, %c0_659, %c0_660], %849 {strides = array<i32>} : memref<49x16x16xf32, #tpu.memory_space<vmem>>, vector<1x16x16xf32>,
    %c0_661 = arith.constant 0 : index
    %c36 = arith.constant 36 : index
    %c0_662 = arith.constant 0 : index
    %c0_663 = arith.constant 0 : index
    %850 = vector.load %arg5[%c0_661, %c36, %c0_662, %c0_663] : memref<1x49x16x16xbf16, #tpu.memory_space<vmem>>, vector<1x1x16x16xbf16>
    %851 = vector.shape_cast %850 : vector<1x1x16x16xbf16> to vector<16x16xbf16>
    %852 = arith.extf %851 : vector<16x16xbf16> to vector<16x16xf32>
    %c14_i32_664 = arith.constant 14 : i32
    %853 = vector.broadcast %c14_i32_664 : i32 to vector<16x16xi32>
    %854 = arith.cmpi slt, %25, %853 : vector<16x16xi32>
    %c2_i32_665 = arith.constant 2 : i32
    %855 = vector.broadcast %c2_i32_665 : i32 to vector<16x16xi32>
    %856 = arith.cmpi sge, %26, %855 : vector<16x16xi32>
    %857 = arith.andi %854, %856 : vector<16x16xi1>
    %cst_666 = arith.constant 0.000000e+00 : f32
    %858 = vector.broadcast %cst_666 : f32 to vector<16x16xf32>
    %859 = arith.select %857, %852, %858 : vector<16x16xi1>, vector<16x16xf32>
    %c36_667 = arith.constant 36 : index
    %c0_668 = arith.constant 0 : index
    %c0_669 = arith.constant 0 : index
    %860 = vector.load %arg11[%c36_667, %c0_668, %c0_669] : memref<49x16x16xf32, #tpu.memory_space<vmem>>, vector<1x16x16xf32>
    %861 = vector.shape_cast %860 : vector<1x16x16xf32> to vector<16x16xf32>
    %862 = vector.shape_cast %859 : vector<16x16xf32> to vector<1x16x16xf32>
    tpu.vector_store %arg11[%c36_667, %c0_668, %c0_669], %862 {strides = array<i32>} : memref<49x16x16xf32, #tpu.memory_space<vmem>>, vector<1x16x16xf32>,
    %c0_670 = arith.constant 0 : index
    %c37 = arith.constant 37 : index
    %c0_671 = arith.constant 0 : index
    %c0_672 = arith.constant 0 : index
    %863 = vector.load %arg5[%c0_670, %c37, %c0_671, %c0_672] : memref<1x49x16x16xbf16, #tpu.memory_space<vmem>>, vector<1x1x16x16xbf16>
    %864 = vector.shape_cast %863 : vector<1x1x16x16xbf16> to vector<16x16xbf16>
    %865 = arith.extf %864 : vector<16x16xbf16> to vector<16x16xf32>
    %c14_i32_673 = arith.constant 14 : i32
    %866 = vector.broadcast %c14_i32_673 : i32 to vector<16x16xi32>
    %867 = arith.cmpi slt, %25, %866 : vector<16x16xi32>
    %c1_i32_674 = arith.constant 1 : i32
    %868 = vector.broadcast %c1_i32_674 : i32 to vector<16x16xi32>
    %869 = arith.cmpi sge, %26, %868 : vector<16x16xi32>
    %870 = arith.andi %867, %869 : vector<16x16xi1>
    %cst_675 = arith.constant 0.000000e+00 : f32
    %871 = vector.broadcast %cst_675 : f32 to vector<16x16xf32>
    %872 = arith.select %870, %865, %871 : vector<16x16xi1>, vector<16x16xf32>
    %c37_676 = arith.constant 37 : index
    %c0_677 = arith.constant 0 : index
    %c0_678 = arith.constant 0 : index
    %873 = vector.load %arg11[%c37_676, %c0_677, %c0_678] : memref<49x16x16xf32, #tpu.memory_space<vmem>>, vector<1x16x16xf32>
    %874 = vector.shape_cast %873 : vector<1x16x16xf32> to vector<16x16xf32>
    %875 = vector.shape_cast %872 : vector<16x16xf32> to vector<1x16x16xf32>
    tpu.vector_store %arg11[%c37_676, %c0_677, %c0_678], %875 {strides = array<i32>} : memref<49x16x16xf32, #tpu.memory_space<vmem>>, vector<1x16x16xf32>,
    %c0_679 = arith.constant 0 : index
    %c38 = arith.constant 38 : index
    %c0_680 = arith.constant 0 : index
    %c0_681 = arith.constant 0 : index
    %876 = vector.load %arg5[%c0_679, %c38, %c0_680, %c0_681] : memref<1x49x16x16xbf16, #tpu.memory_space<vmem>>, vector<1x1x16x16xbf16>
    %877 = vector.shape_cast %876 : vector<1x1x16x16xbf16> to vector<16x16xbf16>
    %878 = arith.extf %877 : vector<16x16xbf16> to vector<16x16xf32>
    %c14_i32_682 = arith.constant 14 : i32
    %879 = vector.broadcast %c14_i32_682 : i32 to vector<16x16xi32>
    %880 = arith.cmpi slt, %25, %879 : vector<16x16xi32>
    %cst_683 = arith.constant 0.000000e+00 : f32
    %881 = vector.broadcast %cst_683 : f32 to vector<16x16xf32>
    %882 = arith.select %880, %878, %881 : vector<16x16xi1>, vector<16x16xf32>
    %c38_684 = arith.constant 38 : index
    %c0_685 = arith.constant 0 : index
    %c0_686 = arith.constant 0 : index
    %883 = vector.load %arg11[%c38_684, %c0_685, %c0_686] : memref<49x16x16xf32, #tpu.memory_space<vmem>>, vector<1x16x16xf32>
    %884 = vector.shape_cast %883 : vector<1x16x16xf32> to vector<16x16xf32>
    %885 = vector.shape_cast %882 : vector<16x16xf32> to vector<1x16x16xf32>
    tpu.vector_store %arg11[%c38_684, %c0_685, %c0_686], %885 {strides = array<i32>} : memref<49x16x16xf32, #tpu.memory_space<vmem>>, vector<1x16x16xf32>,
    %c0_687 = arith.constant 0 : index
    %c39 = arith.constant 39 : index
    %c0_688 = arith.constant 0 : index
    %c0_689 = arith.constant 0 : index
    %886 = vector.load %arg5[%c0_687, %c39, %c0_688, %c0_689] : memref<1x49x16x16xbf16, #tpu.memory_space<vmem>>, vector<1x1x16x16xbf16>
    %887 = vector.shape_cast %886 : vector<1x1x16x16xbf16> to vector<16x16xbf16>
    %888 = arith.extf %887 : vector<16x16xbf16> to vector<16x16xf32>
    %c14_i32_690 = arith.constant 14 : i32
    %889 = vector.broadcast %c14_i32_690 : i32 to vector<16x16xi32>
    %890 = arith.cmpi slt, %25, %889 : vector<16x16xi32>
    %c15_i32_691 = arith.constant 15 : i32
    %891 = vector.broadcast %c15_i32_691 : i32 to vector<16x16xi32>
    %892 = arith.cmpi slt, %26, %891 : vector<16x16xi32>
    %893 = arith.andi %890, %892 : vector<16x16xi1>
    %cst_692 = arith.constant 0.000000e+00 : f32
    %894 = vector.broadcast %cst_692 : f32 to vector<16x16xf32>
    %895 = arith.select %893, %888, %894 : vector<16x16xi1>, vector<16x16xf32>
    %c39_693 = arith.constant 39 : index
    %c0_694 = arith.constant 0 : index
    %c0_695 = arith.constant 0 : index
    %896 = vector.load %arg11[%c39_693, %c0_694, %c0_695] : memref<49x16x16xf32, #tpu.memory_space<vmem>>, vector<1x16x16xf32>
    %897 = vector.shape_cast %896 : vector<1x16x16xf32> to vector<16x16xf32>
    %898 = vector.shape_cast %895 : vector<16x16xf32> to vector<1x16x16xf32>
    tpu.vector_store %arg11[%c39_693, %c0_694, %c0_695], %898 {strides = array<i32>} : memref<49x16x16xf32, #tpu.memory_space<vmem>>, vector<1x16x16xf32>,
    %c0_696 = arith.constant 0 : index
    %c40 = arith.constant 40 : index
    %c0_697 = arith.constant 0 : index
    %c0_698 = arith.constant 0 : index
    %899 = vector.load %arg5[%c0_696, %c40, %c0_697, %c0_698] : memref<1x49x16x16xbf16, #tpu.memory_space<vmem>>, vector<1x1x16x16xbf16>
    %900 = vector.shape_cast %899 : vector<1x1x16x16xbf16> to vector<16x16xbf16>
    %901 = arith.extf %900 : vector<16x16xbf16> to vector<16x16xf32>
    %c14_i32_699 = arith.constant 14 : i32
    %902 = vector.broadcast %c14_i32_699 : i32 to vector<16x16xi32>
    %903 = arith.cmpi slt, %25, %902 : vector<16x16xi32>
    %c14_i32_700 = arith.constant 14 : i32
    %904 = vector.broadcast %c14_i32_700 : i32 to vector<16x16xi32>
    %905 = arith.cmpi slt, %26, %904 : vector<16x16xi32>
    %906 = arith.andi %903, %905 : vector<16x16xi1>
    %cst_701 = arith.constant 0.000000e+00 : f32
    %907 = vector.broadcast %cst_701 : f32 to vector<16x16xf32>
    %908 = arith.select %906, %901, %907 : vector<16x16xi1>, vector<16x16xf32>
    %c40_702 = arith.constant 40 : index
    %c0_703 = arith.constant 0 : index
    %c0_704 = arith.constant 0 : index
    %909 = vector.load %arg11[%c40_702, %c0_703, %c0_704] : memref<49x16x16xf32, #tpu.memory_space<vmem>>, vector<1x16x16xf32>
    %910 = vector.shape_cast %909 : vector<1x16x16xf32> to vector<16x16xf32>
    %911 = vector.shape_cast %908 : vector<16x16xf32> to vector<1x16x16xf32>
    tpu.vector_store %arg11[%c40_702, %c0_703, %c0_704], %911 {strides = array<i32>} : memref<49x16x16xf32, #tpu.memory_space<vmem>>, vector<1x16x16xf32>,
    %c0_705 = arith.constant 0 : index
    %c41 = arith.constant 41 : index
    %c0_706 = arith.constant 0 : index
    %c0_707 = arith.constant 0 : index
    %912 = vector.load %arg5[%c0_705, %c41, %c0_706, %c0_707] : memref<1x49x16x16xbf16, #tpu.memory_space<vmem>>, vector<1x1x16x16xbf16>
    %913 = vector.shape_cast %912 : vector<1x1x16x16xbf16> to vector<16x16xbf16>
    %914 = arith.extf %913 : vector<16x16xbf16> to vector<16x16xf32>
    %c14_i32_708 = arith.constant 14 : i32
    %915 = vector.broadcast %c14_i32_708 : i32 to vector<16x16xi32>
    %916 = arith.cmpi slt, %25, %915 : vector<16x16xi32>
    %c13_i32_709 = arith.constant 13 : i32
    %917 = vector.broadcast %c13_i32_709 : i32 to vector<16x16xi32>
    %918 = arith.cmpi slt, %26, %917 : vector<16x16xi32>
    %919 = arith.andi %916, %918 : vector<16x16xi1>
    %cst_710 = arith.constant 0.000000e+00 : f32
    %920 = vector.broadcast %cst_710 : f32 to vector<16x16xf32>
    %921 = arith.select %919, %914, %920 : vector<16x16xi1>, vector<16x16xf32>
    %c41_711 = arith.constant 41 : index
    %c0_712 = arith.constant 0 : index
    %c0_713 = arith.constant 0 : index
    %922 = vector.load %arg11[%c41_711, %c0_712, %c0_713] : memref<49x16x16xf32, #tpu.memory_space<vmem>>, vector<1x16x16xf32>
    %923 = vector.shape_cast %922 : vector<1x16x16xf32> to vector<16x16xf32>
    %924 = vector.shape_cast %921 : vector<16x16xf32> to vector<1x16x16xf32>
    tpu.vector_store %arg11[%c41_711, %c0_712, %c0_713], %924 {strides = array<i32>} : memref<49x16x16xf32, #tpu.memory_space<vmem>>, vector<1x16x16xf32>,
    %c0_714 = arith.constant 0 : index
    %c42 = arith.constant 42 : index
    %c0_715 = arith.constant 0 : index
    %c0_716 = arith.constant 0 : index
    %925 = vector.load %arg5[%c0_714, %c42, %c0_715, %c0_716] : memref<1x49x16x16xbf16, #tpu.memory_space<vmem>>, vector<1x1x16x16xbf16>
    %926 = vector.shape_cast %925 : vector<1x1x16x16xbf16> to vector<16x16xbf16>
    %927 = arith.extf %926 : vector<16x16xbf16> to vector<16x16xf32>
    %c13_i32_717 = arith.constant 13 : i32
    %928 = vector.broadcast %c13_i32_717 : i32 to vector<16x16xi32>
    %929 = arith.cmpi slt, %25, %928 : vector<16x16xi32>
    %c3_i32_718 = arith.constant 3 : i32
    %930 = vector.broadcast %c3_i32_718 : i32 to vector<16x16xi32>
    %931 = arith.cmpi sge, %26, %930 : vector<16x16xi32>
    %932 = arith.andi %929, %931 : vector<16x16xi1>
    %cst_719 = arith.constant 0.000000e+00 : f32
    %933 = vector.broadcast %cst_719 : f32 to vector<16x16xf32>
    %934 = arith.select %932, %927, %933 : vector<16x16xi1>, vector<16x16xf32>
    %c42_720 = arith.constant 42 : index
    %c0_721 = arith.constant 0 : index
    %c0_722 = arith.constant 0 : index
    %935 = vector.load %arg11[%c42_720, %c0_721, %c0_722] : memref<49x16x16xf32, #tpu.memory_space<vmem>>, vector<1x16x16xf32>
    %936 = vector.shape_cast %935 : vector<1x16x16xf32> to vector<16x16xf32>
    %937 = vector.shape_cast %934 : vector<16x16xf32> to vector<1x16x16xf32>
    tpu.vector_store %arg11[%c42_720, %c0_721, %c0_722], %937 {strides = array<i32>} : memref<49x16x16xf32, #tpu.memory_space<vmem>>, vector<1x16x16xf32>,
    %c0_723 = arith.constant 0 : index
    %c43 = arith.constant 43 : index
    %c0_724 = arith.constant 0 : index
    %c0_725 = arith.constant 0 : index
    %938 = vector.load %arg5[%c0_723, %c43, %c0_724, %c0_725] : memref<1x49x16x16xbf16, #tpu.memory_space<vmem>>, vector<1x1x16x16xbf16>
    %939 = vector.shape_cast %938 : vector<1x1x16x16xbf16> to vector<16x16xbf16>
    %940 = arith.extf %939 : vector<16x16xbf16> to vector<16x16xf32>
    %c13_i32_726 = arith.constant 13 : i32
    %941 = vector.broadcast %c13_i32_726 : i32 to vector<16x16xi32>
    %942 = arith.cmpi slt, %25, %941 : vector<16x16xi32>
    %c2_i32_727 = arith.constant 2 : i32
    %943 = vector.broadcast %c2_i32_727 : i32 to vector<16x16xi32>
    %944 = arith.cmpi sge, %26, %943 : vector<16x16xi32>
    %945 = arith.andi %942, %944 : vector<16x16xi1>
    %cst_728 = arith.constant 0.000000e+00 : f32
    %946 = vector.broadcast %cst_728 : f32 to vector<16x16xf32>
    %947 = arith.select %945, %940, %946 : vector<16x16xi1>, vector<16x16xf32>
    %c43_729 = arith.constant 43 : index
    %c0_730 = arith.constant 0 : index
    %c0_731 = arith.constant 0 : index
    %948 = vector.load %arg11[%c43_729, %c0_730, %c0_731] : memref<49x16x16xf32, #tpu.memory_space<vmem>>, vector<1x16x16xf32>
    %949 = vector.shape_cast %948 : vector<1x16x16xf32> to vector<16x16xf32>
    %950 = vector.shape_cast %947 : vector<16x16xf32> to vector<1x16x16xf32>
    tpu.vector_store %arg11[%c43_729, %c0_730, %c0_731], %950 {strides = array<i32>} : memref<49x16x16xf32, #tpu.memory_space<vmem>>, vector<1x16x16xf32>,
    %c0_732 = arith.constant 0 : index
    %c44 = arith.constant 44 : index
    %c0_733 = arith.constant 0 : index
    %c0_734 = arith.constant 0 : index
    %951 = vector.load %arg5[%c0_732, %c44, %c0_733, %c0_734] : memref<1x49x16x16xbf16, #tpu.memory_space<vmem>>, vector<1x1x16x16xbf16>
    %952 = vector.shape_cast %951 : vector<1x1x16x16xbf16> to vector<16x16xbf16>
    %953 = arith.extf %952 : vector<16x16xbf16> to vector<16x16xf32>
    %c13_i32_735 = arith.constant 13 : i32
    %954 = vector.broadcast %c13_i32_735 : i32 to vector<16x16xi32>
    %955 = arith.cmpi slt, %25, %954 : vector<16x16xi32>
    %c1_i32_736 = arith.constant 1 : i32
    %956 = vector.broadcast %c1_i32_736 : i32 to vector<16x16xi32>
    %957 = arith.cmpi sge, %26, %956 : vector<16x16xi32>
    %958 = arith.andi %955, %957 : vector<16x16xi1>
    %cst_737 = arith.constant 0.000000e+00 : f32
    %959 = vector.broadcast %cst_737 : f32 to vector<16x16xf32>
    %960 = arith.select %958, %953, %959 : vector<16x16xi1>, vector<16x16xf32>
    %c44_738 = arith.constant 44 : index
    %c0_739 = arith.constant 0 : index
    %c0_740 = arith.constant 0 : index
    %961 = vector.load %arg11[%c44_738, %c0_739, %c0_740] : memref<49x16x16xf32, #tpu.memory_space<vmem>>, vector<1x16x16xf32>
    %962 = vector.shape_cast %961 : vector<1x16x16xf32> to vector<16x16xf32>
    %963 = vector.shape_cast %960 : vector<16x16xf32> to vector<1x16x16xf32>
    tpu.vector_store %arg11[%c44_738, %c0_739, %c0_740], %963 {strides = array<i32>} : memref<49x16x16xf32, #tpu.memory_space<vmem>>, vector<1x16x16xf32>,
    %c0_741 = arith.constant 0 : index
    %c45 = arith.constant 45 : index
    %c0_742 = arith.constant 0 : index
    %c0_743 = arith.constant 0 : index
    %964 = vector.load %arg5[%c0_741, %c45, %c0_742, %c0_743] : memref<1x49x16x16xbf16, #tpu.memory_space<vmem>>, vector<1x1x16x16xbf16>
    %965 = vector.shape_cast %964 : vector<1x1x16x16xbf16> to vector<16x16xbf16>
    %966 = arith.extf %965 : vector<16x16xbf16> to vector<16x16xf32>
    %c13_i32_744 = arith.constant 13 : i32
    %967 = vector.broadcast %c13_i32_744 : i32 to vector<16x16xi32>
    %968 = arith.cmpi slt, %25, %967 : vector<16x16xi32>
    %cst_745 = arith.constant 0.000000e+00 : f32
    %969 = vector.broadcast %cst_745 : f32 to vector<16x16xf32>
    %970 = arith.select %968, %966, %969 : vector<16x16xi1>, vector<16x16xf32>
    %c45_746 = arith.constant 45 : index
    %c0_747 = arith.constant 0 : index
    %c0_748 = arith.constant 0 : index
    %971 = vector.load %arg11[%c45_746, %c0_747, %c0_748] : memref<49x16x16xf32, #tpu.memory_space<vmem>>, vector<1x16x16xf32>
    %972 = vector.shape_cast %971 : vector<1x16x16xf32> to vector<16x16xf32>
    %973 = vector.shape_cast %970 : vector<16x16xf32> to vector<1x16x16xf32>
    tpu.vector_store %arg11[%c45_746, %c0_747, %c0_748], %973 {strides = array<i32>} : memref<49x16x16xf32, #tpu.memory_space<vmem>>, vector<1x16x16xf32>,
    %c0_749 = arith.constant 0 : index
    %c46 = arith.constant 46 : index
    %c0_750 = arith.constant 0 : index
    %c0_751 = arith.constant 0 : index
    %974 = vector.load %arg5[%c0_749, %c46, %c0_750, %c0_751] : memref<1x49x16x16xbf16, #tpu.memory_space<vmem>>, vector<1x1x16x16xbf16>
    %975 = vector.shape_cast %974 : vector<1x1x16x16xbf16> to vector<16x16xbf16>
    %976 = arith.extf %975 : vector<16x16xbf16> to vector<16x16xf32>
    %c13_i32_752 = arith.constant 13 : i32
    %977 = vector.broadcast %c13_i32_752 : i32 to vector<16x16xi32>
    %978 = arith.cmpi slt, %25, %977 : vector<16x16xi32>
    %c15_i32_753 = arith.constant 15 : i32
    %979 = vector.broadcast %c15_i32_753 : i32 to vector<16x16xi32>
    %980 = arith.cmpi slt, %26, %979 : vector<16x16xi32>
    %981 = arith.andi %978, %980 : vector<16x16xi1>
    %cst_754 = arith.constant 0.000000e+00 : f32
    %982 = vector.broadcast %cst_754 : f32 to vector<16x16xf32>
    %983 = arith.select %981, %976, %982 : vector<16x16xi1>, vector<16x16xf32>
    %c46_755 = arith.constant 46 : index
    %c0_756 = arith.constant 0 : index
    %c0_757 = arith.constant 0 : index
    %984 = vector.load %arg11[%c46_755, %c0_756, %c0_757] : memref<49x16x16xf32, #tpu.memory_space<vmem>>, vector<1x16x16xf32>
    %985 = vector.shape_cast %984 : vector<1x16x16xf32> to vector<16x16xf32>
    %986 = vector.shape_cast %983 : vector<16x16xf32> to vector<1x16x16xf32>
    tpu.vector_store %arg11[%c46_755, %c0_756, %c0_757], %986 {strides = array<i32>} : memref<49x16x16xf32, #tpu.memory_space<vmem>>, vector<1x16x16xf32>,
    %c0_758 = arith.constant 0 : index
    %c47 = arith.constant 47 : index
    %c0_759 = arith.constant 0 : index
    %c0_760 = arith.constant 0 : index
    %987 = vector.load %arg5[%c0_758, %c47, %c0_759, %c0_760] : memref<1x49x16x16xbf16, #tpu.memory_space<vmem>>, vector<1x1x16x16xbf16>
    %988 = vector.shape_cast %987 : vector<1x1x16x16xbf16> to vector<16x16xbf16>
    %989 = arith.extf %988 : vector<16x16xbf16> to vector<16x16xf32>
    %c13_i32_761 = arith.constant 13 : i32
    %990 = vector.broadcast %c13_i32_761 : i32 to vector<16x16xi32>
    %991 = arith.cmpi slt, %25, %990 : vector<16x16xi32>
    %c14_i32_762 = arith.constant 14 : i32
    %992 = vector.broadcast %c14_i32_762 : i32 to vector<16x16xi32>
    %993 = arith.cmpi slt, %26, %992 : vector<16x16xi32>
    %994 = arith.andi %991, %993 : vector<16x16xi1>
    %cst_763 = arith.constant 0.000000e+00 : f32
    %995 = vector.broadcast %cst_763 : f32 to vector<16x16xf32>
    %996 = arith.select %994, %989, %995 : vector<16x16xi1>, vector<16x16xf32>
    %c47_764 = arith.constant 47 : index
    %c0_765 = arith.constant 0 : index
    %c0_766 = arith.constant 0 : index
    %997 = vector.load %arg11[%c47_764, %c0_765, %c0_766] : memref<49x16x16xf32, #tpu.memory_space<vmem>>, vector<1x16x16xf32>
    %998 = vector.shape_cast %997 : vector<1x16x16xf32> to vector<16x16xf32>
    %999 = vector.shape_cast %996 : vector<16x16xf32> to vector<1x16x16xf32>
    tpu.vector_store %arg11[%c47_764, %c0_765, %c0_766], %999 {strides = array<i32>} : memref<49x16x16xf32, #tpu.memory_space<vmem>>, vector<1x16x16xf32>,
    %c0_767 = arith.constant 0 : index
    %c48 = arith.constant 48 : index
    %c0_768 = arith.constant 0 : index
    %c0_769 = arith.constant 0 : index
    %1000 = vector.load %arg5[%c0_767, %c48, %c0_768, %c0_769] : memref<1x49x16x16xbf16, #tpu.memory_space<vmem>>, vector<1x1x16x16xbf16>
    %1001 = vector.shape_cast %1000 : vector<1x1x16x16xbf16> to vector<16x16xbf16>
    %1002 = arith.extf %1001 : vector<16x16xbf16> to vector<16x16xf32>
    %c13_i32_770 = arith.constant 13 : i32
    %1003 = vector.broadcast %c13_i32_770 : i32 to vector<16x16xi32>
    %1004 = arith.cmpi slt, %25, %1003 : vector<16x16xi32>
    %c13_i32_771 = arith.constant 13 : i32
    %1005 = vector.broadcast %c13_i32_771 : i32 to vector<16x16xi32>
    %1006 = arith.cmpi slt, %26, %1005 : vector<16x16xi32>
    %1007 = arith.andi %1004, %1006 : vector<16x16xi1>
    %cst_772 = arith.constant 0.000000e+00 : f32
    %1008 = vector.broadcast %cst_772 : f32 to vector<16x16xf32>
    %1009 = arith.select %1007, %1002, %1008 : vector<16x16xi1>, vector<16x16xf32>
    %c48_773 = arith.constant 48 : index
    %c0_774 = arith.constant 0 : index
    %c0_775 = arith.constant 0 : index
    %1010 = vector.load %arg11[%c48_773, %c0_774, %c0_775] : memref<49x16x16xf32, #tpu.memory_space<vmem>>, vector<1x16x16xf32>
    %1011 = vector.shape_cast %1010 : vector<1x16x16xf32> to vector<16x16xf32>
    %1012 = vector.shape_cast %1009 : vector<16x16xf32> to vector<1x16x16xf32>
    tpu.vector_store %arg11[%c48_773, %c0_774, %c0_775], %1012 {strides = array<i32>} : memref<49x16x16xf32, #tpu.memory_space<vmem>>, vector<1x16x16xf32>,
    %c1_i32_776 = arith.constant 1 : i32
    %1013 = tpu.dynamic_rotate %1 by %c1_i32_776 dim 0 : vector<16x16xf32>, i32 -> vector<16x16xf32>
    %c1_i32_777 = arith.constant 1 : i32
    %1014 = tpu.dynamic_rotate %1013 by %c1_i32_777 dim 1 : vector<16x16xf32>, i32 -> vector<16x16xf32>
    %c0_778 = arith.constant 0 : index
    %c0_779 = arith.constant 0 : index
    %c0_780 = arith.constant 0 : index
    %1015 = vector.load %arg9[%c0_778, %c0_779, %c0_780] : memref<9x16x16xf32, #tpu.memory_space<vmem>>, vector<1x16x16xf32>
    %1016 = vector.shape_cast %1015 : vector<1x16x16xf32> to vector<16x16xf32>
    %1017 = arith.mulf %1016, %1014 : vector<16x16xf32>
    %c1_781 = arith.constant 1 : index
    %c0_782 = arith.constant 0 : index
    %c0_783 = arith.constant 0 : index
    %1018 = vector.load %arg9[%c1_781, %c0_782, %c0_783] : memref<9x16x16xf32, #tpu.memory_space<vmem>>, vector<1x16x16xf32>
    %1019 = vector.shape_cast %1018 : vector<1x16x16xf32> to vector<16x16xf32>
    %1020 = arith.mulf %1019, %1013 : vector<16x16xf32>
    %1021 = arith.addf %1017, %1020 : vector<16x16xf32>
    %c15_i32_784 = arith.constant 15 : i32
    %1022 = tpu.dynamic_rotate %1013 by %c15_i32_784 dim 1 : vector<16x16xf32>, i32 -> vector<16x16xf32>
    %c2_785 = arith.constant 2 : index
    %c0_786 = arith.constant 0 : index
    %c0_787 = arith.constant 0 : index
    %1023 = vector.load %arg9[%c2_785, %c0_786, %c0_787] : memref<9x16x16xf32, #tpu.memory_space<vmem>>, vector<1x16x16xf32>
    %1024 = vector.shape_cast %1023 : vector<1x16x16xf32> to vector<16x16xf32>
    %1025 = arith.mulf %1024, %1022 : vector<16x16xf32>
    %1026 = arith.addf %1021, %1025 : vector<16x16xf32>
    %c1_i32_788 = arith.constant 1 : i32
    %1027 = tpu.dynamic_rotate %1 by %c1_i32_788 dim 1 : vector<16x16xf32>, i32 -> vector<16x16xf32>
    %c3_789 = arith.constant 3 : index
    %c0_790 = arith.constant 0 : index
    %c0_791 = arith.constant 0 : index
    %1028 = vector.load %arg9[%c3_789, %c0_790, %c0_791] : memref<9x16x16xf32, #tpu.memory_space<vmem>>, vector<1x16x16xf32>
    %1029 = vector.shape_cast %1028 : vector<1x16x16xf32> to vector<16x16xf32>
    %1030 = arith.mulf %1029, %1027 : vector<16x16xf32>
    %c4_792 = arith.constant 4 : index
    %c0_793 = arith.constant 0 : index
    %c0_794 = arith.constant 0 : index
    %1031 = vector.load %arg9[%c4_792, %c0_793, %c0_794] : memref<9x16x16xf32, #tpu.memory_space<vmem>>, vector<1x16x16xf32>
    %1032 = vector.shape_cast %1031 : vector<1x16x16xf32> to vector<16x16xf32>
    %1033 = arith.mulf %1032, %1 : vector<16x16xf32>
    %1034 = arith.addf %1030, %1033 : vector<16x16xf32>
    %c15_i32_795 = arith.constant 15 : i32
    %1035 = tpu.dynamic_rotate %1 by %c15_i32_795 dim 1 : vector<16x16xf32>, i32 -> vector<16x16xf32>
    %c5_796 = arith.constant 5 : index
    %c0_797 = arith.constant 0 : index
    %c0_798 = arith.constant 0 : index
    %1036 = vector.load %arg9[%c5_796, %c0_797, %c0_798] : memref<9x16x16xf32, #tpu.memory_space<vmem>>, vector<1x16x16xf32>
    %1037 = vector.shape_cast %1036 : vector<1x16x16xf32> to vector<16x16xf32>
    %1038 = arith.mulf %1037, %1035 : vector<16x16xf32>
    %1039 = arith.addf %1034, %1038 : vector<16x16xf32>
    %1040 = arith.addf %1026, %1039 : vector<16x16xf32>
    %c15_i32_799 = arith.constant 15 : i32
    %1041 = tpu.dynamic_rotate %1 by %c15_i32_799 dim 0 : vector<16x16xf32>, i32 -> vector<16x16xf32>
    %c1_i32_800 = arith.constant 1 : i32
    %1042 = tpu.dynamic_rotate %1041 by %c1_i32_800 dim 1 : vector<16x16xf32>, i32 -> vector<16x16xf32>
    %c6_801 = arith.constant 6 : index
    %c0_802 = arith.constant 0 : index
    %c0_803 = arith.constant 0 : index
    %1043 = vector.load %arg9[%c6_801, %c0_802, %c0_803] : memref<9x16x16xf32, #tpu.memory_space<vmem>>, vector<1x16x16xf32>
    %1044 = vector.shape_cast %1043 : vector<1x16x16xf32> to vector<16x16xf32>
    %1045 = arith.mulf %1044, %1042 : vector<16x16xf32>
    %c7_804 = arith.constant 7 : index
    %c0_805 = arith.constant 0 : index
    %c0_806 = arith.constant 0 : index
    %1046 = vector.load %arg9[%c7_804, %c0_805, %c0_806] : memref<9x16x16xf32, #tpu.memory_space<vmem>>, vector<1x16x16xf32>
    %1047 = vector.shape_cast %1046 : vector<1x16x16xf32> to vector<16x16xf32>
    %1048 = arith.mulf %1047, %1041 : vector<16x16xf32>
    %1049 = arith.addf %1045, %1048 : vector<16x16xf32>
    %c15_i32_807 = arith.constant 15 : i32
    %1050 = tpu.dynamic_rotate %1041 by %c15_i32_807 dim 1 : vector<16x16xf32>, i32 -> vector<16x16xf32>
    %c8_808 = arith.constant 8 : index
    %c0_809 = arith.constant 0 : index
    %c0_810 = arith.constant 0 : index
    %1051 = vector.load %arg9[%c8_808, %c0_809, %c0_810] : memref<9x16x16xf32, #tpu.memory_space<vmem>>, vector<1x16x16xf32>
    %1052 = vector.shape_cast %1051 : vector<1x16x16xf32> to vector<16x16xf32>
    %1053 = arith.mulf %1052, %1050 : vector<16x16xf32>
    %1054 = arith.addf %1049, %1053 : vector<16x16xf32>
    %1055 = arith.addf %1040, %1054 : vector<16x16xf32>
    %1056 = arith.mulf %17, %1055 : vector<16x16xf32>
    %1057 = arith.addf %1056, %22 : vector<16x16xf32>
    %c2_i32_811 = arith.constant 2 : i32
    %1058 = tpu.dynamic_rotate %1 by %c2_i32_811 dim 0 : vector<16x16xf32>, i32 -> vector<16x16xf32>
    %c2_i32_812 = arith.constant 2 : i32
    %1059 = tpu.dynamic_rotate %1058 by %c2_i32_812 dim 1 : vector<16x16xf32>, i32 -> vector<16x16xf32>
    %c0_813 = arith.constant 0 : index
    %c0_814 = arith.constant 0 : index
    %c0_815 = arith.constant 0 : index
    %1060 = vector.load %arg10[%c0_813, %c0_814, %c0_815] : memref<25x16x16xf32, #tpu.memory_space<vmem>>, vector<1x16x16xf32>
    %1061 = vector.shape_cast %1060 : vector<1x16x16xf32> to vector<16x16xf32>
    %1062 = arith.mulf %1061, %1059 : vector<16x16xf32>
    %c1_i32_816 = arith.constant 1 : i32
    %1063 = tpu.dynamic_rotate %1058 by %c1_i32_816 dim 1 : vector<16x16xf32>, i32 -> vector<16x16xf32>
    %c1_817 = arith.constant 1 : index
    %c0_818 = arith.constant 0 : index
    %c0_819 = arith.constant 0 : index
    %1064 = vector.load %arg10[%c1_817, %c0_818, %c0_819] : memref<25x16x16xf32, #tpu.memory_space<vmem>>, vector<1x16x16xf32>
    %1065 = vector.shape_cast %1064 : vector<1x16x16xf32> to vector<16x16xf32>
    %1066 = arith.mulf %1065, %1063 : vector<16x16xf32>
    %1067 = arith.addf %1062, %1066 : vector<16x16xf32>
    %c2_820 = arith.constant 2 : index
    %c0_821 = arith.constant 0 : index
    %c0_822 = arith.constant 0 : index
    %1068 = vector.load %arg10[%c2_820, %c0_821, %c0_822] : memref<25x16x16xf32, #tpu.memory_space<vmem>>, vector<1x16x16xf32>
    %1069 = vector.shape_cast %1068 : vector<1x16x16xf32> to vector<16x16xf32>
    %1070 = arith.mulf %1069, %1058 : vector<16x16xf32>
    %1071 = arith.addf %1067, %1070 : vector<16x16xf32>
    %c15_i32_823 = arith.constant 15 : i32
    %1072 = tpu.dynamic_rotate %1058 by %c15_i32_823 dim 1 : vector<16x16xf32>, i32 -> vector<16x16xf32>
    %c3_824 = arith.constant 3 : index
    %c0_825 = arith.constant 0 : index
    %c0_826 = arith.constant 0 : index
    %1073 = vector.load %arg10[%c3_824, %c0_825, %c0_826] : memref<25x16x16xf32, #tpu.memory_space<vmem>>, vector<1x16x16xf32>
    %1074 = vector.shape_cast %1073 : vector<1x16x16xf32> to vector<16x16xf32>
    %1075 = arith.mulf %1074, %1072 : vector<16x16xf32>
    %1076 = arith.addf %1071, %1075 : vector<16x16xf32>
    %c14_i32_827 = arith.constant 14 : i32
    %1077 = tpu.dynamic_rotate %1058 by %c14_i32_827 dim 1 : vector<16x16xf32>, i32 -> vector<16x16xf32>
    %c4_828 = arith.constant 4 : index
    %c0_829 = arith.constant 0 : index
    %c0_830 = arith.constant 0 : index
    %1078 = vector.load %arg10[%c4_828, %c0_829, %c0_830] : memref<25x16x16xf32, #tpu.memory_space<vmem>>, vector<1x16x16xf32>
    %1079 = vector.shape_cast %1078 : vector<1x16x16xf32> to vector<16x16xf32>
    %1080 = arith.mulf %1079, %1077 : vector<16x16xf32>
    %1081 = arith.addf %1076, %1080 : vector<16x16xf32>
    %c1_i32_831 = arith.constant 1 : i32
    %1082 = tpu.dynamic_rotate %1 by %c1_i32_831 dim 0 : vector<16x16xf32>, i32 -> vector<16x16xf32>
    %c2_i32_832 = arith.constant 2 : i32
    %1083 = tpu.dynamic_rotate %1082 by %c2_i32_832 dim 1 : vector<16x16xf32>, i32 -> vector<16x16xf32>
    %c5_833 = arith.constant 5 : index
    %c0_834 = arith.constant 0 : index
    %c0_835 = arith.constant 0 : index
    %1084 = vector.load %arg10[%c5_833, %c0_834, %c0_835] : memref<25x16x16xf32, #tpu.memory_space<vmem>>, vector<1x16x16xf32>
    %1085 = vector.shape_cast %1084 : vector<1x16x16xf32> to vector<16x16xf32>
    %1086 = arith.mulf %1085, %1083 : vector<16x16xf32>
    %c1_i32_836 = arith.constant 1 : i32
    %1087 = tpu.dynamic_rotate %1082 by %c1_i32_836 dim 1 : vector<16x16xf32>, i32 -> vector<16x16xf32>
    %c6_837 = arith.constant 6 : index
    %c0_838 = arith.constant 0 : index
    %c0_839 = arith.constant 0 : index
    %1088 = vector.load %arg10[%c6_837, %c0_838, %c0_839] : memref<25x16x16xf32, #tpu.memory_space<vmem>>, vector<1x16x16xf32>
    %1089 = vector.shape_cast %1088 : vector<1x16x16xf32> to vector<16x16xf32>
    %1090 = arith.mulf %1089, %1087 : vector<16x16xf32>
    %1091 = arith.addf %1086, %1090 : vector<16x16xf32>
    %c7_840 = arith.constant 7 : index
    %c0_841 = arith.constant 0 : index
    %c0_842 = arith.constant 0 : index
    %1092 = vector.load %arg10[%c7_840, %c0_841, %c0_842] : memref<25x16x16xf32, #tpu.memory_space<vmem>>, vector<1x16x16xf32>
    %1093 = vector.shape_cast %1092 : vector<1x16x16xf32> to vector<16x16xf32>
    %1094 = arith.mulf %1093, %1082 : vector<16x16xf32>
    %1095 = arith.addf %1091, %1094 : vector<16x16xf32>
    %c15_i32_843 = arith.constant 15 : i32
    %1096 = tpu.dynamic_rotate %1082 by %c15_i32_843 dim 1 : vector<16x16xf32>, i32 -> vector<16x16xf32>
    %c8_844 = arith.constant 8 : index
    %c0_845 = arith.constant 0 : index
    %c0_846 = arith.constant 0 : index
    %1097 = vector.load %arg10[%c8_844, %c0_845, %c0_846] : memref<25x16x16xf32, #tpu.memory_space<vmem>>, vector<1x16x16xf32>
    %1098 = vector.shape_cast %1097 : vector<1x16x16xf32> to vector<16x16xf32>
    %1099 = arith.mulf %1098, %1096 : vector<16x16xf32>
    %1100 = arith.addf %1095, %1099 : vector<16x16xf32>
    %c14_i32_847 = arith.constant 14 : i32
    %1101 = tpu.dynamic_rotate %1082 by %c14_i32_847 dim 1 : vector<16x16xf32>, i32 -> vector<16x16xf32>
    %c9_848 = arith.constant 9 : index
    %c0_849 = arith.constant 0 : index
    %c0_850 = arith.constant 0 : index
    %1102 = vector.load %arg10[%c9_848, %c0_849, %c0_850] : memref<25x16x16xf32, #tpu.memory_space<vmem>>, vector<1x16x16xf32>
    %1103 = vector.shape_cast %1102 : vector<1x16x16xf32> to vector<16x16xf32>
    %1104 = arith.mulf %1103, %1101 : vector<16x16xf32>
    %1105 = arith.addf %1100, %1104 : vector<16x16xf32>
    %1106 = arith.addf %1081, %1105 : vector<16x16xf32>
    %c2_i32_851 = arith.constant 2 : i32
    %1107 = tpu.dynamic_rotate %1 by %c2_i32_851 dim 1 : vector<16x16xf32>, i32 -> vector<16x16xf32>
    %c10_852 = arith.constant 10 : index
    %c0_853 = arith.constant 0 : index
    %c0_854 = arith.constant 0 : index
    %1108 = vector.load %arg10[%c10_852, %c0_853, %c0_854] : memref<25x16x16xf32, #tpu.memory_space<vmem>>, vector<1x16x16xf32>
    %1109 = vector.shape_cast %1108 : vector<1x16x16xf32> to vector<16x16xf32>
    %1110 = arith.mulf %1109, %1107 : vector<16x16xf32>
    %c1_i32_855 = arith.constant 1 : i32
    %1111 = tpu.dynamic_rotate %1 by %c1_i32_855 dim 1 : vector<16x16xf32>, i32 -> vector<16x16xf32>
    %c11_856 = arith.constant 11 : index
    %c0_857 = arith.constant 0 : index
    %c0_858 = arith.constant 0 : index
    %1112 = vector.load %arg10[%c11_856, %c0_857, %c0_858] : memref<25x16x16xf32, #tpu.memory_space<vmem>>, vector<1x16x16xf32>
    %1113 = vector.shape_cast %1112 : vector<1x16x16xf32> to vector<16x16xf32>
    %1114 = arith.mulf %1113, %1111 : vector<16x16xf32>
    %1115 = arith.addf %1110, %1114 : vector<16x16xf32>
    %c12_859 = arith.constant 12 : index
    %c0_860 = arith.constant 0 : index
    %c0_861 = arith.constant 0 : index
    %1116 = vector.load %arg10[%c12_859, %c0_860, %c0_861] : memref<25x16x16xf32, #tpu.memory_space<vmem>>, vector<1x16x16xf32>
    %1117 = vector.shape_cast %1116 : vector<1x16x16xf32> to vector<16x16xf32>
    %1118 = arith.mulf %1117, %1 : vector<16x16xf32>
    %1119 = arith.addf %1115, %1118 : vector<16x16xf32>
    %c15_i32_862 = arith.constant 15 : i32
    %1120 = tpu.dynamic_rotate %1 by %c15_i32_862 dim 1 : vector<16x16xf32>, i32 -> vector<16x16xf32>
    %c13_863 = arith.constant 13 : index
    %c0_864 = arith.constant 0 : index
    %c0_865 = arith.constant 0 : index
    %1121 = vector.load %arg10[%c13_863, %c0_864, %c0_865] : memref<25x16x16xf32, #tpu.memory_space<vmem>>, vector<1x16x16xf32>
    %1122 = vector.shape_cast %1121 : vector<1x16x16xf32> to vector<16x16xf32>
    %1123 = arith.mulf %1122, %1120 : vector<16x16xf32>
    %1124 = arith.addf %1119, %1123 : vector<16x16xf32>
    %c14_i32_866 = arith.constant 14 : i32
    %1125 = tpu.dynamic_rotate %1 by %c14_i32_866 dim 1 : vector<16x16xf32>, i32 -> vector<16x16xf32>
    %c14_867 = arith.constant 14 : index
    %c0_868 = arith.constant 0 : index
    %c0_869 = arith.constant 0 : index
    %1126 = vector.load %arg10[%c14_867, %c0_868, %c0_869] : memref<25x16x16xf32, #tpu.memory_space<vmem>>, vector<1x16x16xf32>
    %1127 = vector.shape_cast %1126 : vector<1x16x16xf32> to vector<16x16xf32>
    %1128 = arith.mulf %1127, %1125 : vector<16x16xf32>
    %1129 = arith.addf %1124, %1128 : vector<16x16xf32>
    %1130 = arith.addf %1106, %1129 : vector<16x16xf32>
    %c15_i32_870 = arith.constant 15 : i32
    %1131 = tpu.dynamic_rotate %1 by %c15_i32_870 dim 0 : vector<16x16xf32>, i32 -> vector<16x16xf32>
    %c2_i32_871 = arith.constant 2 : i32
    %1132 = tpu.dynamic_rotate %1131 by %c2_i32_871 dim 1 : vector<16x16xf32>, i32 -> vector<16x16xf32>
    %c15_872 = arith.constant 15 : index
    %c0_873 = arith.constant 0 : index
    %c0_874 = arith.constant 0 : index
    %1133 = vector.load %arg10[%c15_872, %c0_873, %c0_874] : memref<25x16x16xf32, #tpu.memory_space<vmem>>, vector<1x16x16xf32>
    %1134 = vector.shape_cast %1133 : vector<1x16x16xf32> to vector<16x16xf32>
    %1135 = arith.mulf %1134, %1132 : vector<16x16xf32>
    %c1_i32_875 = arith.constant 1 : i32
    %1136 = tpu.dynamic_rotate %1131 by %c1_i32_875 dim 1 : vector<16x16xf32>, i32 -> vector<16x16xf32>
    %c16_876 = arith.constant 16 : index
    %c0_877 = arith.constant 0 : index
    %c0_878 = arith.constant 0 : index
    %1137 = vector.load %arg10[%c16_876, %c0_877, %c0_878] : memref<25x16x16xf32, #tpu.memory_space<vmem>>, vector<1x16x16xf32>
    %1138 = vector.shape_cast %1137 : vector<1x16x16xf32> to vector<16x16xf32>
    %1139 = arith.mulf %1138, %1136 : vector<16x16xf32>
    %1140 = arith.addf %1135, %1139 : vector<16x16xf32>
    %c17_879 = arith.constant 17 : index
    %c0_880 = arith.constant 0 : index
    %c0_881 = arith.constant 0 : index
    %1141 = vector.load %arg10[%c17_879, %c0_880, %c0_881] : memref<25x16x16xf32, #tpu.memory_space<vmem>>, vector<1x16x16xf32>
    %1142 = vector.shape_cast %1141 : vector<1x16x16xf32> to vector<16x16xf32>
    %1143 = arith.mulf %1142, %1131 : vector<16x16xf32>
    %1144 = arith.addf %1140, %1143 : vector<16x16xf32>
    %c15_i32_882 = arith.constant 15 : i32
    %1145 = tpu.dynamic_rotate %1131 by %c15_i32_882 dim 1 : vector<16x16xf32>, i32 -> vector<16x16xf32>
    %c18_883 = arith.constant 18 : index
    %c0_884 = arith.constant 0 : index
    %c0_885 = arith.constant 0 : index
    %1146 = vector.load %arg10[%c18_883, %c0_884, %c0_885] : memref<25x16x16xf32, #tpu.memory_space<vmem>>, vector<1x16x16xf32>
    %1147 = vector.shape_cast %1146 : vector<1x16x16xf32> to vector<16x16xf32>
    %1148 = arith.mulf %1147, %1145 : vector<16x16xf32>
    %1149 = arith.addf %1144, %1148 : vector<16x16xf32>
    %c14_i32_886 = arith.constant 14 : i32
    %1150 = tpu.dynamic_rotate %1131 by %c14_i32_886 dim 1 : vector<16x16xf32>, i32 -> vector<16x16xf32>
    %c19_887 = arith.constant 19 : index
    %c0_888 = arith.constant 0 : index
    %c0_889 = arith.constant 0 : index
    %1151 = vector.load %arg10[%c19_887, %c0_888, %c0_889] : memref<25x16x16xf32, #tpu.memory_space<vmem>>, vector<1x16x16xf32>
    %1152 = vector.shape_cast %1151 : vector<1x16x16xf32> to vector<16x16xf32>
    %1153 = arith.mulf %1152, %1150 : vector<16x16xf32>
    %1154 = arith.addf %1149, %1153 : vector<16x16xf32>
    %1155 = arith.addf %1130, %1154 : vector<16x16xf32>
    %c14_i32_890 = arith.constant 14 : i32
    %1156 = tpu.dynamic_rotate %1 by %c14_i32_890 dim 0 : vector<16x16xf32>, i32 -> vector<16x16xf32>
    %c2_i32_891 = arith.constant 2 : i32
    %1157 = tpu.dynamic_rotate %1156 by %c2_i32_891 dim 1 : vector<16x16xf32>, i32 -> vector<16x16xf32>
    %c20_892 = arith.constant 20 : index
    %c0_893 = arith.constant 0 : index
    %c0_894 = arith.constant 0 : index
    %1158 = vector.load %arg10[%c20_892, %c0_893, %c0_894] : memref<25x16x16xf32, #tpu.memory_space<vmem>>, vector<1x16x16xf32>
    %1159 = vector.shape_cast %1158 : vector<1x16x16xf32> to vector<16x16xf32>
    %1160 = arith.mulf %1159, %1157 : vector<16x16xf32>
    %c1_i32_895 = arith.constant 1 : i32
    %1161 = tpu.dynamic_rotate %1156 by %c1_i32_895 dim 1 : vector<16x16xf32>, i32 -> vector<16x16xf32>
    %c21_896 = arith.constant 21 : index
    %c0_897 = arith.constant 0 : index
    %c0_898 = arith.constant 0 : index
    %1162 = vector.load %arg10[%c21_896, %c0_897, %c0_898] : memref<25x16x16xf32, #tpu.memory_space<vmem>>, vector<1x16x16xf32>
    %1163 = vector.shape_cast %1162 : vector<1x16x16xf32> to vector<16x16xf32>
    %1164 = arith.mulf %1163, %1161 : vector<16x16xf32>
    %1165 = arith.addf %1160, %1164 : vector<16x16xf32>
    %c22_899 = arith.constant 22 : index
    %c0_900 = arith.constant 0 : index
    %c0_901 = arith.constant 0 : index
    %1166 = vector.load %arg10[%c22_899, %c0_900, %c0_901] : memref<25x16x16xf32, #tpu.memory_space<vmem>>, vector<1x16x16xf32>
    %1167 = vector.shape_cast %1166 : vector<1x16x16xf32> to vector<16x16xf32>
    %1168 = arith.mulf %1167, %1156 : vector<16x16xf32>
    %1169 = arith.addf %1165, %1168 : vector<16x16xf32>
    %c15_i32_902 = arith.constant 15 : i32
    %1170 = tpu.dynamic_rotate %1156 by %c15_i32_902 dim 1 : vector<16x16xf32>, i32 -> vector<16x16xf32>
    %c23_903 = arith.constant 23 : index
    %c0_904 = arith.constant 0 : index
    %c0_905 = arith.constant 0 : index
    %1171 = vector.load %arg10[%c23_903, %c0_904, %c0_905] : memref<25x16x16xf32, #tpu.memory_space<vmem>>, vector<1x16x16xf32>
    %1172 = vector.shape_cast %1171 : vector<1x16x16xf32> to vector<16x16xf32>
    %1173 = arith.mulf %1172, %1170 : vector<16x16xf32>
    %1174 = arith.addf %1169, %1173 : vector<16x16xf32>
    %c14_i32_906 = arith.constant 14 : i32
    %1175 = tpu.dynamic_rotate %1156 by %c14_i32_906 dim 1 : vector<16x16xf32>, i32 -> vector<16x16xf32>
    %c24_907 = arith.constant 24 : index
    %c0_908 = arith.constant 0 : index
    %c0_909 = arith.constant 0 : index
    %1176 = vector.load %arg10[%c24_907, %c0_908, %c0_909] : memref<25x16x16xf32, #tpu.memory_space<vmem>>, vector<1x16x16xf32>
    %1177 = vector.shape_cast %1176 : vector<1x16x16xf32> to vector<16x16xf32>
    %1178 = arith.mulf %1177, %1175 : vector<16x16xf32>
    %1179 = arith.addf %1174, %1178 : vector<16x16xf32>
    %1180 = arith.addf %1155, %1179 : vector<16x16xf32>
    %1181 = arith.mulf %19, %1180 : vector<16x16xf32>
    %1182 = arith.addf %1181, %23 : vector<16x16xf32>
    %c3_i32_910 = arith.constant 3 : i32
    %1183 = tpu.dynamic_rotate %1 by %c3_i32_910 dim 0 : vector<16x16xf32>, i32 -> vector<16x16xf32>
    %c3_i32_911 = arith.constant 3 : i32
    %1184 = tpu.dynamic_rotate %1183 by %c3_i32_911 dim 1 : vector<16x16xf32>, i32 -> vector<16x16xf32>
    %c0_912 = arith.constant 0 : index
    %c0_913 = arith.constant 0 : index
    %c0_914 = arith.constant 0 : index
    %1185 = vector.load %arg11[%c0_912, %c0_913, %c0_914] : memref<49x16x16xf32, #tpu.memory_space<vmem>>, vector<1x16x16xf32>
    %1186 = vector.shape_cast %1185 : vector<1x16x16xf32> to vector<16x16xf32>
    %1187 = arith.mulf %1186, %1184 : vector<16x16xf32>
    %c2_i32_915 = arith.constant 2 : i32
    %1188 = tpu.dynamic_rotate %1183 by %c2_i32_915 dim 1 : vector<16x16xf32>, i32 -> vector<16x16xf32>
    %c1_916 = arith.constant 1 : index
    %c0_917 = arith.constant 0 : index
    %c0_918 = arith.constant 0 : index
    %1189 = vector.load %arg11[%c1_916, %c0_917, %c0_918] : memref<49x16x16xf32, #tpu.memory_space<vmem>>, vector<1x16x16xf32>
    %1190 = vector.shape_cast %1189 : vector<1x16x16xf32> to vector<16x16xf32>
    %1191 = arith.mulf %1190, %1188 : vector<16x16xf32>
    %1192 = arith.addf %1187, %1191 : vector<16x16xf32>
    %c1_i32_919 = arith.constant 1 : i32
    %1193 = tpu.dynamic_rotate %1183 by %c1_i32_919 dim 1 : vector<16x16xf32>, i32 -> vector<16x16xf32>
    %c2_920 = arith.constant 2 : index
    %c0_921 = arith.constant 0 : index
    %c0_922 = arith.constant 0 : index
    %1194 = vector.load %arg11[%c2_920, %c0_921, %c0_922] : memref<49x16x16xf32, #tpu.memory_space<vmem>>, vector<1x16x16xf32>
    %1195 = vector.shape_cast %1194 : vector<1x16x16xf32> to vector<16x16xf32>
    %1196 = arith.mulf %1195, %1193 : vector<16x16xf32>
    %1197 = arith.addf %1192, %1196 : vector<16x16xf32>
    %c3_923 = arith.constant 3 : index
    %c0_924 = arith.constant 0 : index
    %c0_925 = arith.constant 0 : index
    %1198 = vector.load %arg11[%c3_923, %c0_924, %c0_925] : memref<49x16x16xf32, #tpu.memory_space<vmem>>, vector<1x16x16xf32>
    %1199 = vector.shape_cast %1198 : vector<1x16x16xf32> to vector<16x16xf32>
    %1200 = arith.mulf %1199, %1183 : vector<16x16xf32>
    %1201 = arith.addf %1197, %1200 : vector<16x16xf32>
    %c15_i32_926 = arith.constant 15 : i32
    %1202 = tpu.dynamic_rotate %1183 by %c15_i32_926 dim 1 : vector<16x16xf32>, i32 -> vector<16x16xf32>
    %c4_927 = arith.constant 4 : index
    %c0_928 = arith.constant 0 : index
    %c0_929 = arith.constant 0 : index
    %1203 = vector.load %arg11[%c4_927, %c0_928, %c0_929] : memref<49x16x16xf32, #tpu.memory_space<vmem>>, vector<1x16x16xf32>
    %1204 = vector.shape_cast %1203 : vector<1x16x16xf32> to vector<16x16xf32>
    %1205 = arith.mulf %1204, %1202 : vector<16x16xf32>
    %1206 = arith.addf %1201, %1205 : vector<16x16xf32>
    %c14_i32_930 = arith.constant 14 : i32
    %1207 = tpu.dynamic_rotate %1183 by %c14_i32_930 dim 1 : vector<16x16xf32>, i32 -> vector<16x16xf32>
    %c5_931 = arith.constant 5 : index
    %c0_932 = arith.constant 0 : index
    %c0_933 = arith.constant 0 : index
    %1208 = vector.load %arg11[%c5_931, %c0_932, %c0_933] : memref<49x16x16xf32, #tpu.memory_space<vmem>>, vector<1x16x16xf32>
    %1209 = vector.shape_cast %1208 : vector<1x16x16xf32> to vector<16x16xf32>
    %1210 = arith.mulf %1209, %1207 : vector<16x16xf32>
    %1211 = arith.addf %1206, %1210 : vector<16x16xf32>
    %c13_i32_934 = arith.constant 13 : i32
    %1212 = tpu.dynamic_rotate %1183 by %c13_i32_934 dim 1 : vector<16x16xf32>, i32 -> vector<16x16xf32>
    %c6_935 = arith.constant 6 : index
    %c0_936 = arith.constant 0 : index
    %c0_937 = arith.constant 0 : index
    %1213 = vector.load %arg11[%c6_935, %c0_936, %c0_937] : memref<49x16x16xf32, #tpu.memory_space<vmem>>, vector<1x16x16xf32>
    %1214 = vector.shape_cast %1213 : vector<1x16x16xf32> to vector<16x16xf32>
    %1215 = arith.mulf %1214, %1212 : vector<16x16xf32>
    %1216 = arith.addf %1211, %1215 : vector<16x16xf32>
    %c2_i32_938 = arith.constant 2 : i32
    %1217 = tpu.dynamic_rotate %1 by %c2_i32_938 dim 0 : vector<16x16xf32>, i32 -> vector<16x16xf32>
    %c3_i32_939 = arith.constant 3 : i32
    %1218 = tpu.dynamic_rotate %1217 by %c3_i32_939 dim 1 : vector<16x16xf32>, i32 -> vector<16x16xf32>
    %c7_940 = arith.constant 7 : index
    %c0_941 = arith.constant 0 : index
    %c0_942 = arith.constant 0 : index
    %1219 = vector.load %arg11[%c7_940, %c0_941, %c0_942] : memref<49x16x16xf32, #tpu.memory_space<vmem>>, vector<1x16x16xf32>
    %1220 = vector.shape_cast %1219 : vector<1x16x16xf32> to vector<16x16xf32>
    %1221 = arith.mulf %1220, %1218 : vector<16x16xf32>
    %c2_i32_943 = arith.constant 2 : i32
    %1222 = tpu.dynamic_rotate %1217 by %c2_i32_943 dim 1 : vector<16x16xf32>, i32 -> vector<16x16xf32>
    %c8_944 = arith.constant 8 : index
    %c0_945 = arith.constant 0 : index
    %c0_946 = arith.constant 0 : index
    %1223 = vector.load %arg11[%c8_944, %c0_945, %c0_946] : memref<49x16x16xf32, #tpu.memory_space<vmem>>, vector<1x16x16xf32>
    %1224 = vector.shape_cast %1223 : vector<1x16x16xf32> to vector<16x16xf32>
    %1225 = arith.mulf %1224, %1222 : vector<16x16xf32>
    %1226 = arith.addf %1221, %1225 : vector<16x16xf32>
    %c1_i32_947 = arith.constant 1 : i32
    %1227 = tpu.dynamic_rotate %1217 by %c1_i32_947 dim 1 : vector<16x16xf32>, i32 -> vector<16x16xf32>
    %c9_948 = arith.constant 9 : index
    %c0_949 = arith.constant 0 : index
    %c0_950 = arith.constant 0 : index
    %1228 = vector.load %arg11[%c9_948, %c0_949, %c0_950] : memref<49x16x16xf32, #tpu.memory_space<vmem>>, vector<1x16x16xf32>
    %1229 = vector.shape_cast %1228 : vector<1x16x16xf32> to vector<16x16xf32>
    %1230 = arith.mulf %1229, %1227 : vector<16x16xf32>
    %1231 = arith.addf %1226, %1230 : vector<16x16xf32>
    %c10_951 = arith.constant 10 : index
    %c0_952 = arith.constant 0 : index
    %c0_953 = arith.constant 0 : index
    %1232 = vector.load %arg11[%c10_951, %c0_952, %c0_953] : memref<49x16x16xf32, #tpu.memory_space<vmem>>, vector<1x16x16xf32>
    %1233 = vector.shape_cast %1232 : vector<1x16x16xf32> to vector<16x16xf32>
    %1234 = arith.mulf %1233, %1217 : vector<16x16xf32>
    %1235 = arith.addf %1231, %1234 : vector<16x16xf32>
    %c15_i32_954 = arith.constant 15 : i32
    %1236 = tpu.dynamic_rotate %1217 by %c15_i32_954 dim 1 : vector<16x16xf32>, i32 -> vector<16x16xf32>
    %c11_955 = arith.constant 11 : index
    %c0_956 = arith.constant 0 : index
    %c0_957 = arith.constant 0 : index
    %1237 = vector.load %arg11[%c11_955, %c0_956, %c0_957] : memref<49x16x16xf32, #tpu.memory_space<vmem>>, vector<1x16x16xf32>
    %1238 = vector.shape_cast %1237 : vector<1x16x16xf32> to vector<16x16xf32>
    %1239 = arith.mulf %1238, %1236 : vector<16x16xf32>
    %1240 = arith.addf %1235, %1239 : vector<16x16xf32>
    %c14_i32_958 = arith.constant 14 : i32
    %1241 = tpu.dynamic_rotate %1217 by %c14_i32_958 dim 1 : vector<16x16xf32>, i32 -> vector<16x16xf32>
    %c12_959 = arith.constant 12 : index
    %c0_960 = arith.constant 0 : index
    %c0_961 = arith.constant 0 : index
    %1242 = vector.load %arg11[%c12_959, %c0_960, %c0_961] : memref<49x16x16xf32, #tpu.memory_space<vmem>>, vector<1x16x16xf32>
    %1243 = vector.shape_cast %1242 : vector<1x16x16xf32> to vector<16x16xf32>
    %1244 = arith.mulf %1243, %1241 : vector<16x16xf32>
    %1245 = arith.addf %1240, %1244 : vector<16x16xf32>
    %c13_i32_962 = arith.constant 13 : i32
    %1246 = tpu.dynamic_rotate %1217 by %c13_i32_962 dim 1 : vector<16x16xf32>, i32 -> vector<16x16xf32>
    %c13_963 = arith.constant 13 : index
    %c0_964 = arith.constant 0 : index
    %c0_965 = arith.constant 0 : index
    %1247 = vector.load %arg11[%c13_963, %c0_964, %c0_965] : memref<49x16x16xf32, #tpu.memory_space<vmem>>, vector<1x16x16xf32>
    %1248 = vector.shape_cast %1247 : vector<1x16x16xf32> to vector<16x16xf32>
    %1249 = arith.mulf %1248, %1246 : vector<16x16xf32>
    %1250 = arith.addf %1245, %1249 : vector<16x16xf32>
    %1251 = arith.addf %1216, %1250 : vector<16x16xf32>
    %c1_i32_966 = arith.constant 1 : i32
    %1252 = tpu.dynamic_rotate %1 by %c1_i32_966 dim 0 : vector<16x16xf32>, i32 -> vector<16x16xf32>
    %c3_i32_967 = arith.constant 3 : i32
    %1253 = tpu.dynamic_rotate %1252 by %c3_i32_967 dim 1 : vector<16x16xf32>, i32 -> vector<16x16xf32>
    %c14_968 = arith.constant 14 : index
    %c0_969 = arith.constant 0 : index
    %c0_970 = arith.constant 0 : index
    %1254 = vector.load %arg11[%c14_968, %c0_969, %c0_970] : memref<49x16x16xf32, #tpu.memory_space<vmem>>, vector<1x16x16xf32>
    %1255 = vector.shape_cast %1254 : vector<1x16x16xf32> to vector<16x16xf32>
    %1256 = arith.mulf %1255, %1253 : vector<16x16xf32>
    %c2_i32_971 = arith.constant 2 : i32
    %1257 = tpu.dynamic_rotate %1252 by %c2_i32_971 dim 1 : vector<16x16xf32>, i32 -> vector<16x16xf32>
    %c15_972 = arith.constant 15 : index
    %c0_973 = arith.constant 0 : index
    %c0_974 = arith.constant 0 : index
    %1258 = vector.load %arg11[%c15_972, %c0_973, %c0_974] : memref<49x16x16xf32, #tpu.memory_space<vmem>>, vector<1x16x16xf32>
    %1259 = vector.shape_cast %1258 : vector<1x16x16xf32> to vector<16x16xf32>
    %1260 = arith.mulf %1259, %1257 : vector<16x16xf32>
    %1261 = arith.addf %1256, %1260 : vector<16x16xf32>
    %c1_i32_975 = arith.constant 1 : i32
    %1262 = tpu.dynamic_rotate %1252 by %c1_i32_975 dim 1 : vector<16x16xf32>, i32 -> vector<16x16xf32>
    %c16_976 = arith.constant 16 : index
    %c0_977 = arith.constant 0 : index
    %c0_978 = arith.constant 0 : index
    %1263 = vector.load %arg11[%c16_976, %c0_977, %c0_978] : memref<49x16x16xf32, #tpu.memory_space<vmem>>, vector<1x16x16xf32>
    %1264 = vector.shape_cast %1263 : vector<1x16x16xf32> to vector<16x16xf32>
    %1265 = arith.mulf %1264, %1262 : vector<16x16xf32>
    %1266 = arith.addf %1261, %1265 : vector<16x16xf32>
    %c17_979 = arith.constant 17 : index
    %c0_980 = arith.constant 0 : index
    %c0_981 = arith.constant 0 : index
    %1267 = vector.load %arg11[%c17_979, %c0_980, %c0_981] : memref<49x16x16xf32, #tpu.memory_space<vmem>>, vector<1x16x16xf32>
    %1268 = vector.shape_cast %1267 : vector<1x16x16xf32> to vector<16x16xf32>
    %1269 = arith.mulf %1268, %1252 : vector<16x16xf32>
    %1270 = arith.addf %1266, %1269 : vector<16x16xf32>
    %c15_i32_982 = arith.constant 15 : i32
    %1271 = tpu.dynamic_rotate %1252 by %c15_i32_982 dim 1 : vector<16x16xf32>, i32 -> vector<16x16xf32>
    %c18_983 = arith.constant 18 : index
    %c0_984 = arith.constant 0 : index
    %c0_985 = arith.constant 0 : index
    %1272 = vector.load %arg11[%c18_983, %c0_984, %c0_985] : memref<49x16x16xf32, #tpu.memory_space<vmem>>, vector<1x16x16xf32>
    %1273 = vector.shape_cast %1272 : vector<1x16x16xf32> to vector<16x16xf32>
    %1274 = arith.mulf %1273, %1271 : vector<16x16xf32>
    %1275 = arith.addf %1270, %1274 : vector<16x16xf32>
    %c14_i32_986 = arith.constant 14 : i32
    %1276 = tpu.dynamic_rotate %1252 by %c14_i32_986 dim 1 : vector<16x16xf32>, i32 -> vector<16x16xf32>
    %c19_987 = arith.constant 19 : index
    %c0_988 = arith.constant 0 : index
    %c0_989 = arith.constant 0 : index
    %1277 = vector.load %arg11[%c19_987, %c0_988, %c0_989] : memref<49x16x16xf32, #tpu.memory_space<vmem>>, vector<1x16x16xf32>
    %1278 = vector.shape_cast %1277 : vector<1x16x16xf32> to vector<16x16xf32>
    %1279 = arith.mulf %1278, %1276 : vector<16x16xf32>
    %1280 = arith.addf %1275, %1279 : vector<16x16xf32>
    %c13_i32_990 = arith.constant 13 : i32
    %1281 = tpu.dynamic_rotate %1252 by %c13_i32_990 dim 1 : vector<16x16xf32>, i32 -> vector<16x16xf32>
    %c20_991 = arith.constant 20 : index
    %c0_992 = arith.constant 0 : index
    %c0_993 = arith.constant 0 : index
    %1282 = vector.load %arg11[%c20_991, %c0_992, %c0_993] : memref<49x16x16xf32, #tpu.memory_space<vmem>>, vector<1x16x16xf32>
    %1283 = vector.shape_cast %1282 : vector<1x16x16xf32> to vector<16x16xf32>
    %1284 = arith.mulf %1283, %1281 : vector<16x16xf32>
    %1285 = arith.addf %1280, %1284 : vector<16x16xf32>
    %1286 = arith.addf %1251, %1285 : vector<16x16xf32>
    %c3_i32_994 = arith.constant 3 : i32
    %1287 = tpu.dynamic_rotate %1 by %c3_i32_994 dim 1 : vector<16x16xf32>, i32 -> vector<16x16xf32>
    %c21_995 = arith.constant 21 : index
    %c0_996 = arith.constant 0 : index
    %c0_997 = arith.constant 0 : index
    %1288 = vector.load %arg11[%c21_995, %c0_996, %c0_997] : memref<49x16x16xf32, #tpu.memory_space<vmem>>, vector<1x16x16xf32>
    %1289 = vector.shape_cast %1288 : vector<1x16x16xf32> to vector<16x16xf32>
    %1290 = arith.mulf %1289, %1287 : vector<16x16xf32>
    %c2_i32_998 = arith.constant 2 : i32
    %1291 = tpu.dynamic_rotate %1 by %c2_i32_998 dim 1 : vector<16x16xf32>, i32 -> vector<16x16xf32>
    %c22_999 = arith.constant 22 : index
    %c0_1000 = arith.constant 0 : index
    %c0_1001 = arith.constant 0 : index
    %1292 = vector.load %arg11[%c22_999, %c0_1000, %c0_1001] : memref<49x16x16xf32, #tpu.memory_space<vmem>>, vector<1x16x16xf32>
    %1293 = vector.shape_cast %1292 : vector<1x16x16xf32> to vector<16x16xf32>
    %1294 = arith.mulf %1293, %1291 : vector<16x16xf32>
    %1295 = arith.addf %1290, %1294 : vector<16x16xf32>
    %c1_i32_1002 = arith.constant 1 : i32
    %1296 = tpu.dynamic_rotate %1 by %c1_i32_1002 dim 1 : vector<16x16xf32>, i32 -> vector<16x16xf32>
    %c23_1003 = arith.constant 23 : index
    %c0_1004 = arith.constant 0 : index
    %c0_1005 = arith.constant 0 : index
    %1297 = vector.load %arg11[%c23_1003, %c0_1004, %c0_1005] : memref<49x16x16xf32, #tpu.memory_space<vmem>>, vector<1x16x16xf32>
    %1298 = vector.shape_cast %1297 : vector<1x16x16xf32> to vector<16x16xf32>
    %1299 = arith.mulf %1298, %1296 : vector<16x16xf32>
    %1300 = arith.addf %1295, %1299 : vector<16x16xf32>
    %c24_1006 = arith.constant 24 : index
    %c0_1007 = arith.constant 0 : index
    %c0_1008 = arith.constant 0 : index
    %1301 = vector.load %arg11[%c24_1006, %c0_1007, %c0_1008] : memref<49x16x16xf32, #tpu.memory_space<vmem>>, vector<1x16x16xf32>
    %1302 = vector.shape_cast %1301 : vector<1x16x16xf32> to vector<16x16xf32>
    %1303 = arith.mulf %1302, %1 : vector<16x16xf32>
    %1304 = arith.addf %1300, %1303 : vector<16x16xf32>
    %c15_i32_1009 = arith.constant 15 : i32
    %1305 = tpu.dynamic_rotate %1 by %c15_i32_1009 dim 1 : vector<16x16xf32>, i32 -> vector<16x16xf32>
    %c25_1010 = arith.constant 25 : index
    %c0_1011 = arith.constant 0 : index
    %c0_1012 = arith.constant 0 : index
    %1306 = vector.load %arg11[%c25_1010, %c0_1011, %c0_1012] : memref<49x16x16xf32, #tpu.memory_space<vmem>>, vector<1x16x16xf32>
    %1307 = vector.shape_cast %1306 : vector<1x16x16xf32> to vector<16x16xf32>
    %1308 = arith.mulf %1307, %1305 : vector<16x16xf32>
    %1309 = arith.addf %1304, %1308 : vector<16x16xf32>
    %c14_i32_1013 = arith.constant 14 : i32
    %1310 = tpu.dynamic_rotate %1 by %c14_i32_1013 dim 1 : vector<16x16xf32>, i32 -> vector<16x16xf32>
    %c26_1014 = arith.constant 26 : index
    %c0_1015 = arith.constant 0 : index
    %c0_1016 = arith.constant 0 : index
    %1311 = vector.load %arg11[%c26_1014, %c0_1015, %c0_1016] : memref<49x16x16xf32, #tpu.memory_space<vmem>>, vector<1x16x16xf32>
    %1312 = vector.shape_cast %1311 : vector<1x16x16xf32> to vector<16x16xf32>
    %1313 = arith.mulf %1312, %1310 : vector<16x16xf32>
    %1314 = arith.addf %1309, %1313 : vector<16x16xf32>
    %c13_i32_1017 = arith.constant 13 : i32
    %1315 = tpu.dynamic_rotate %1 by %c13_i32_1017 dim 1 : vector<16x16xf32>, i32 -> vector<16x16xf32>
    %c27_1018 = arith.constant 27 : index
    %c0_1019 = arith.constant 0 : index
    %c0_1020 = arith.constant 0 : index
    %1316 = vector.load %arg11[%c27_1018, %c0_1019, %c0_1020] : memref<49x16x16xf32, #tpu.memory_space<vmem>>, vector<1x16x16xf32>
    %1317 = vector.shape_cast %1316 : vector<1x16x16xf32> to vector<16x16xf32>
    %1318 = arith.mulf %1317, %1315 : vector<16x16xf32>
    %1319 = arith.addf %1314, %1318 : vector<16x16xf32>
    %1320 = arith.addf %1286, %1319 : vector<16x16xf32>
    %c15_i32_1021 = arith.constant 15 : i32
    %1321 = tpu.dynamic_rotate %1 by %c15_i32_1021 dim 0 : vector<16x16xf32>, i32 -> vector<16x16xf32>
    %c3_i32_1022 = arith.constant 3 : i32
    %1322 = tpu.dynamic_rotate %1321 by %c3_i32_1022 dim 1 : vector<16x16xf32>, i32 -> vector<16x16xf32>
    %c28_1023 = arith.constant 28 : index
    %c0_1024 = arith.constant 0 : index
    %c0_1025 = arith.constant 0 : index
    %1323 = vector.load %arg11[%c28_1023, %c0_1024, %c0_1025] : memref<49x16x16xf32, #tpu.memory_space<vmem>>, vector<1x16x16xf32>
    %1324 = vector.shape_cast %1323 : vector<1x16x16xf32> to vector<16x16xf32>
    %1325 = arith.mulf %1324, %1322 : vector<16x16xf32>
    %c2_i32_1026 = arith.constant 2 : i32
    %1326 = tpu.dynamic_rotate %1321 by %c2_i32_1026 dim 1 : vector<16x16xf32>, i32 -> vector<16x16xf32>
    %c29_1027 = arith.constant 29 : index
    %c0_1028 = arith.constant 0 : index
    %c0_1029 = arith.constant 0 : index
    %1327 = vector.load %arg11[%c29_1027, %c0_1028, %c0_1029] : memref<49x16x16xf32, #tpu.memory_space<vmem>>, vector<1x16x16xf32>
    %1328 = vector.shape_cast %1327 : vector<1x16x16xf32> to vector<16x16xf32>
    %1329 = arith.mulf %1328, %1326 : vector<16x16xf32>
    %1330 = arith.addf %1325, %1329 : vector<16x16xf32>
    %c1_i32_1030 = arith.constant 1 : i32
    %1331 = tpu.dynamic_rotate %1321 by %c1_i32_1030 dim 1 : vector<16x16xf32>, i32 -> vector<16x16xf32>
    %c30_1031 = arith.constant 30 : index
    %c0_1032 = arith.constant 0 : index
    %c0_1033 = arith.constant 0 : index
    %1332 = vector.load %arg11[%c30_1031, %c0_1032, %c0_1033] : memref<49x16x16xf32, #tpu.memory_space<vmem>>, vector<1x16x16xf32>
    %1333 = vector.shape_cast %1332 : vector<1x16x16xf32> to vector<16x16xf32>
    %1334 = arith.mulf %1333, %1331 : vector<16x16xf32>
    %1335 = arith.addf %1330, %1334 : vector<16x16xf32>
    %c31_1034 = arith.constant 31 : index
    %c0_1035 = arith.constant 0 : index
    %c0_1036 = arith.constant 0 : index
    %1336 = vector.load %arg11[%c31_1034, %c0_1035, %c0_1036] : memref<49x16x16xf32, #tpu.memory_space<vmem>>, vector<1x16x16xf32>
    %1337 = vector.shape_cast %1336 : vector<1x16x16xf32> to vector<16x16xf32>
    %1338 = arith.mulf %1337, %1321 : vector<16x16xf32>
    %1339 = arith.addf %1335, %1338 : vector<16x16xf32>
    %c15_i32_1037 = arith.constant 15 : i32
    %1340 = tpu.dynamic_rotate %1321 by %c15_i32_1037 dim 1 : vector<16x16xf32>, i32 -> vector<16x16xf32>
    %c32_1038 = arith.constant 32 : index
    %c0_1039 = arith.constant 0 : index
    %c0_1040 = arith.constant 0 : index
    %1341 = vector.load %arg11[%c32_1038, %c0_1039, %c0_1040] : memref<49x16x16xf32, #tpu.memory_space<vmem>>, vector<1x16x16xf32>
    %1342 = vector.shape_cast %1341 : vector<1x16x16xf32> to vector<16x16xf32>
    %1343 = arith.mulf %1342, %1340 : vector<16x16xf32>
    %1344 = arith.addf %1339, %1343 : vector<16x16xf32>
    %c14_i32_1041 = arith.constant 14 : i32
    %1345 = tpu.dynamic_rotate %1321 by %c14_i32_1041 dim 1 : vector<16x16xf32>, i32 -> vector<16x16xf32>
    %c33_1042 = arith.constant 33 : index
    %c0_1043 = arith.constant 0 : index
    %c0_1044 = arith.constant 0 : index
    %1346 = vector.load %arg11[%c33_1042, %c0_1043, %c0_1044] : memref<49x16x16xf32, #tpu.memory_space<vmem>>, vector<1x16x16xf32>
    %1347 = vector.shape_cast %1346 : vector<1x16x16xf32> to vector<16x16xf32>
    %1348 = arith.mulf %1347, %1345 : vector<16x16xf32>
    %1349 = arith.addf %1344, %1348 : vector<16x16xf32>
    %c13_i32_1045 = arith.constant 13 : i32
    %1350 = tpu.dynamic_rotate %1321 by %c13_i32_1045 dim 1 : vector<16x16xf32>, i32 -> vector<16x16xf32>
    %c34_1046 = arith.constant 34 : index
    %c0_1047 = arith.constant 0 : index
    %c0_1048 = arith.constant 0 : index
    %1351 = vector.load %arg11[%c34_1046, %c0_1047, %c0_1048] : memref<49x16x16xf32, #tpu.memory_space<vmem>>, vector<1x16x16xf32>
    %1352 = vector.shape_cast %1351 : vector<1x16x16xf32> to vector<16x16xf32>
    %1353 = arith.mulf %1352, %1350 : vector<16x16xf32>
    %1354 = arith.addf %1349, %1353 : vector<16x16xf32>
    %1355 = arith.addf %1320, %1354 : vector<16x16xf32>
    %c14_i32_1049 = arith.constant 14 : i32
    %1356 = tpu.dynamic_rotate %1 by %c14_i32_1049 dim 0 : vector<16x16xf32>, i32 -> vector<16x16xf32>
    %c3_i32_1050 = arith.constant 3 : i32
    %1357 = tpu.dynamic_rotate %1356 by %c3_i32_1050 dim 1 : vector<16x16xf32>, i32 -> vector<16x16xf32>
    %c35_1051 = arith.constant 35 : index
    %c0_1052 = arith.constant 0 : index
    %c0_1053 = arith.constant 0 : index
    %1358 = vector.load %arg11[%c35_1051, %c0_1052, %c0_1053] : memref<49x16x16xf32, #tpu.memory_space<vmem>>, vector<1x16x16xf32>
    %1359 = vector.shape_cast %1358 : vector<1x16x16xf32> to vector<16x16xf32>
    %1360 = arith.mulf %1359, %1357 : vector<16x16xf32>
    %c2_i32_1054 = arith.constant 2 : i32
    %1361 = tpu.dynamic_rotate %1356 by %c2_i32_1054 dim 1 : vector<16x16xf32>, i32 -> vector<16x16xf32>
    %c36_1055 = arith.constant 36 : index
    %c0_1056 = arith.constant 0 : index
    %c0_1057 = arith.constant 0 : index
    %1362 = vector.load %arg11[%c36_1055, %c0_1056, %c0_1057] : memref<49x16x16xf32, #tpu.memory_space<vmem>>, vector<1x16x16xf32>
    %1363 = vector.shape_cast %1362 : vector<1x16x16xf32> to vector<16x16xf32>
    %1364 = arith.mulf %1363, %1361 : vector<16x16xf32>
    %1365 = arith.addf %1360, %1364 : vector<16x16xf32>
    %c1_i32_1058 = arith.constant 1 : i32
    %1366 = tpu.dynamic_rotate %1356 by %c1_i32_1058 dim 1 : vector<16x16xf32>, i32 -> vector<16x16xf32>
    %c37_1059 = arith.constant 37 : index
    %c0_1060 = arith.constant 0 : index
    %c0_1061 = arith.constant 0 : index
    %1367 = vector.load %arg11[%c37_1059, %c0_1060, %c0_1061] : memref<49x16x16xf32, #tpu.memory_space<vmem>>, vector<1x16x16xf32>
    %1368 = vector.shape_cast %1367 : vector<1x16x16xf32> to vector<16x16xf32>
    %1369 = arith.mulf %1368, %1366 : vector<16x16xf32>
    %1370 = arith.addf %1365, %1369 : vector<16x16xf32>
    %c38_1062 = arith.constant 38 : index
    %c0_1063 = arith.constant 0 : index
    %c0_1064 = arith.constant 0 : index
    %1371 = vector.load %arg11[%c38_1062, %c0_1063, %c0_1064] : memref<49x16x16xf32, #tpu.memory_space<vmem>>, vector<1x16x16xf32>
    %1372 = vector.shape_cast %1371 : vector<1x16x16xf32> to vector<16x16xf32>
    %1373 = arith.mulf %1372, %1356 : vector<16x16xf32>
    %1374 = arith.addf %1370, %1373 : vector<16x16xf32>
    %c15_i32_1065 = arith.constant 15 : i32
    %1375 = tpu.dynamic_rotate %1356 by %c15_i32_1065 dim 1 : vector<16x16xf32>, i32 -> vector<16x16xf32>
    %c39_1066 = arith.constant 39 : index
    %c0_1067 = arith.constant 0 : index
    %c0_1068 = arith.constant 0 : index
    %1376 = vector.load %arg11[%c39_1066, %c0_1067, %c0_1068] : memref<49x16x16xf32, #tpu.memory_space<vmem>>, vector<1x16x16xf32>
    %1377 = vector.shape_cast %1376 : vector<1x16x16xf32> to vector<16x16xf32>
    %1378 = arith.mulf %1377, %1375 : vector<16x16xf32>
    %1379 = arith.addf %1374, %1378 : vector<16x16xf32>
    %c14_i32_1069 = arith.constant 14 : i32
    %1380 = tpu.dynamic_rotate %1356 by %c14_i32_1069 dim 1 : vector<16x16xf32>, i32 -> vector<16x16xf32>
    %c40_1070 = arith.constant 40 : index
    %c0_1071 = arith.constant 0 : index
    %c0_1072 = arith.constant 0 : index
    %1381 = vector.load %arg11[%c40_1070, %c0_1071, %c0_1072] : memref<49x16x16xf32, #tpu.memory_space<vmem>>, vector<1x16x16xf32>
    %1382 = vector.shape_cast %1381 : vector<1x16x16xf32> to vector<16x16xf32>
    %1383 = arith.mulf %1382, %1380 : vector<16x16xf32>
    %1384 = arith.addf %1379, %1383 : vector<16x16xf32>
    %c13_i32_1073 = arith.constant 13 : i32
    %1385 = tpu.dynamic_rotate %1356 by %c13_i32_1073 dim 1 : vector<16x16xf32>, i32 -> vector<16x16xf32>
    %c41_1074 = arith.constant 41 : index
    %c0_1075 = arith.constant 0 : index
    %c0_1076 = arith.constant 0 : index
    %1386 = vector.load %arg11[%c41_1074, %c0_1075, %c0_1076] : memref<49x16x16xf32, #tpu.memory_space<vmem>>, vector<1x16x16xf32>
    %1387 = vector.shape_cast %1386 : vector<1x16x16xf32> to vector<16x16xf32>
    %1388 = arith.mulf %1387, %1385 : vector<16x16xf32>
    %1389 = arith.addf %1384, %1388 : vector<16x16xf32>
    %1390 = arith.addf %1355, %1389 : vector<16x16xf32>
    %c13_i32_1077 = arith.constant 13 : i32
    %1391 = tpu.dynamic_rotate %1 by %c13_i32_1077 dim 0 : vector<16x16xf32>, i32 -> vector<16x16xf32>
    %c3_i32_1078 = arith.constant 3 : i32
    %1392 = tpu.dynamic_rotate %1391 by %c3_i32_1078 dim 1 : vector<16x16xf32>, i32 -> vector<16x16xf32>
    %c42_1079 = arith.constant 42 : index
    %c0_1080 = arith.constant 0 : index
    %c0_1081 = arith.constant 0 : index
    %1393 = vector.load %arg11[%c42_1079, %c0_1080, %c0_1081] : memref<49x16x16xf32, #tpu.memory_space<vmem>>, vector<1x16x16xf32>
    %1394 = vector.shape_cast %1393 : vector<1x16x16xf32> to vector<16x16xf32>
    %1395 = arith.mulf %1394, %1392 : vector<16x16xf32>
    %c2_i32_1082 = arith.constant 2 : i32
    %1396 = tpu.dynamic_rotate %1391 by %c2_i32_1082 dim 1 : vector<16x16xf32>, i32 -> vector<16x16xf32>
    %c43_1083 = arith.constant 43 : index
    %c0_1084 = arith.constant 0 : index
    %c0_1085 = arith.constant 0 : index
    %1397 = vector.load %arg11[%c43_1083, %c0_1084, %c0_1085] : memref<49x16x16xf32, #tpu.memory_space<vmem>>, vector<1x16x16xf32>
    %1398 = vector.shape_cast %1397 : vector<1x16x16xf32> to vector<16x16xf32>
    %1399 = arith.mulf %1398, %1396 : vector<16x16xf32>
    %1400 = arith.addf %1395, %1399 : vector<16x16xf32>
    %c1_i32_1086 = arith.constant 1 : i32
    %1401 = tpu.dynamic_rotate %1391 by %c1_i32_1086 dim 1 : vector<16x16xf32>, i32 -> vector<16x16xf32>
    %c44_1087 = arith.constant 44 : index
    %c0_1088 = arith.constant 0 : index
    %c0_1089 = arith.constant 0 : index
    %1402 = vector.load %arg11[%c44_1087, %c0_1088, %c0_1089] : memref<49x16x16xf32, #tpu.memory_space<vmem>>, vector<1x16x16xf32>
    %1403 = vector.shape_cast %1402 : vector<1x16x16xf32> to vector<16x16xf32>
    %1404 = arith.mulf %1403, %1401 : vector<16x16xf32>
    %1405 = arith.addf %1400, %1404 : vector<16x16xf32>
    %c45_1090 = arith.constant 45 : index
    %c0_1091 = arith.constant 0 : index
    %c0_1092 = arith.constant 0 : index
    %1406 = vector.load %arg11[%c45_1090, %c0_1091, %c0_1092] : memref<49x16x16xf32, #tpu.memory_space<vmem>>, vector<1x16x16xf32>
    %1407 = vector.shape_cast %1406 : vector<1x16x16xf32> to vector<16x16xf32>
    %1408 = arith.mulf %1407, %1391 : vector<16x16xf32>
    %1409 = arith.addf %1405, %1408 : vector<16x16xf32>
    %c15_i32_1093 = arith.constant 15 : i32
    %1410 = tpu.dynamic_rotate %1391 by %c15_i32_1093 dim 1 : vector<16x16xf32>, i32 -> vector<16x16xf32>
    %c46_1094 = arith.constant 46 : index
    %c0_1095 = arith.constant 0 : index
    %c0_1096 = arith.constant 0 : index
    %1411 = vector.load %arg11[%c46_1094, %c0_1095, %c0_1096] : memref<49x16x16xf32, #tpu.memory_space<vmem>>, vector<1x16x16xf32>
    %1412 = vector.shape_cast %1411 : vector<1x16x16xf32> to vector<16x16xf32>
    %1413 = arith.mulf %1412, %1410 : vector<16x16xf32>
    %1414 = arith.addf %1409, %1413 : vector<16x16xf32>
    %c14_i32_1097 = arith.constant 14 : i32
    %1415 = tpu.dynamic_rotate %1391 by %c14_i32_1097 dim 1 : vector<16x16xf32>, i32 -> vector<16x16xf32>
    %c47_1098 = arith.constant 47 : index
    %c0_1099 = arith.constant 0 : index
    %c0_1100 = arith.constant 0 : index
    %1416 = vector.load %arg11[%c47_1098, %c0_1099, %c0_1100] : memref<49x16x16xf32, #tpu.memory_space<vmem>>, vector<1x16x16xf32>
    %1417 = vector.shape_cast %1416 : vector<1x16x16xf32> to vector<16x16xf32>
    %1418 = arith.mulf %1417, %1415 : vector<16x16xf32>
    %1419 = arith.addf %1414, %1418 : vector<16x16xf32>
    %c13_i32_1101 = arith.constant 13 : i32
    %1420 = tpu.dynamic_rotate %1391 by %c13_i32_1101 dim 1 : vector<16x16xf32>, i32 -> vector<16x16xf32>
    %c48_1102 = arith.constant 48 : index
    %c0_1103 = arith.constant 0 : index
    %c0_1104 = arith.constant 0 : index
    %1421 = vector.load %arg11[%c48_1102, %c0_1103, %c0_1104] : memref<49x16x16xf32, #tpu.memory_space<vmem>>, vector<1x16x16xf32>
    %1422 = vector.shape_cast %1421 : vector<1x16x16xf32> to vector<16x16xf32>
    %1423 = arith.mulf %1422, %1420 : vector<16x16xf32>
    %1424 = arith.addf %1419, %1423 : vector<16x16xf32>
    %1425 = arith.addf %1390, %1424 : vector<16x16xf32>
    %1426 = arith.mulf %21, %1425 : vector<16x16xf32>
    %1427 = arith.addf %1426, %24 : vector<16x16xf32>
    %1428 = arith.mulf %11, %1057 : vector<16x16xf32>
    %1429 = arith.mulf %13, %1182 : vector<16x16xf32>
    %1430 = arith.addf %1428, %1429 : vector<16x16xf32>
    %1431 = arith.mulf %15, %1427 : vector<16x16xf32>
    %1432 = arith.addf %1430, %1431 : vector<16x16xf32>
    %c0_1105 = arith.constant 0 : index
    %c0_1106 = arith.constant 0 : index
    %c0_1107 = arith.constant 0 : index
    %c0_1108 = arith.constant 0 : index
    %1433 = vector.load %arg8[%c0_1105, %c0_1106, %c0_1107, %c0_1108] : memref<1x2x16x16xf32, #tpu.memory_space<vmem>>, vector<1x1x16x16xf32>
    %1434 = vector.shape_cast %1433 : vector<1x1x16x16xf32> to vector<16x16xf32>
    %1435 = vector.shape_cast %1432 : vector<16x16xf32> to vector<1x1x16x16xf32>
    tpu.vector_store %arg8[%c0_1105, %c0_1106, %c0_1107, %c0_1108], %1435 {strides = array<i32>} : memref<1x2x16x16xf32, #tpu.memory_space<vmem>>, vector<1x1x16x16xf32>,
    %c1_i32_1109 = arith.constant 1 : i32
    %1436 = tpu.dynamic_rotate %1057 by %c1_i32_1109 dim 0 : vector<16x16xf32>, i32 -> vector<16x16xf32>
    %c1_i32_1110 = arith.constant 1 : i32
    %1437 = tpu.dynamic_rotate %1436 by %c1_i32_1110 dim 1 : vector<16x16xf32>, i32 -> vector<16x16xf32>
    %c0_1111 = arith.constant 0 : index
    %c0_1112 = arith.constant 0 : index
    %c0_1113 = arith.constant 0 : index
    %1438 = vector.load %arg9[%c0_1111, %c0_1112, %c0_1113] : memref<9x16x16xf32, #tpu.memory_space<vmem>>, vector<1x16x16xf32>
    %1439 = vector.shape_cast %1438 : vector<1x16x16xf32> to vector<16x16xf32>
    %1440 = arith.mulf %1439, %1437 : vector<16x16xf32>
    %c1_1114 = arith.constant 1 : index
    %c0_1115 = arith.constant 0 : index
    %c0_1116 = arith.constant 0 : index
    %1441 = vector.load %arg9[%c1_1114, %c0_1115, %c0_1116] : memref<9x16x16xf32, #tpu.memory_space<vmem>>, vector<1x16x16xf32>
    %1442 = vector.shape_cast %1441 : vector<1x16x16xf32> to vector<16x16xf32>
    %1443 = arith.mulf %1442, %1436 : vector<16x16xf32>
    %1444 = arith.addf %1440, %1443 : vector<16x16xf32>
    %c15_i32_1117 = arith.constant 15 : i32
    %1445 = tpu.dynamic_rotate %1436 by %c15_i32_1117 dim 1 : vector<16x16xf32>, i32 -> vector<16x16xf32>
    %c2_1118 = arith.constant 2 : index
    %c0_1119 = arith.constant 0 : index
    %c0_1120 = arith.constant 0 : index
    %1446 = vector.load %arg9[%c2_1118, %c0_1119, %c0_1120] : memref<9x16x16xf32, #tpu.memory_space<vmem>>, vector<1x16x16xf32>
    %1447 = vector.shape_cast %1446 : vector<1x16x16xf32> to vector<16x16xf32>
    %1448 = arith.mulf %1447, %1445 : vector<16x16xf32>
    %1449 = arith.addf %1444, %1448 : vector<16x16xf32>
    %c1_i32_1121 = arith.constant 1 : i32
    %1450 = tpu.dynamic_rotate %1057 by %c1_i32_1121 dim 1 : vector<16x16xf32>, i32 -> vector<16x16xf32>
    %c3_1122 = arith.constant 3 : index
    %c0_1123 = arith.constant 0 : index
    %c0_1124 = arith.constant 0 : index
    %1451 = vector.load %arg9[%c3_1122, %c0_1123, %c0_1124] : memref<9x16x16xf32, #tpu.memory_space<vmem>>, vector<1x16x16xf32>
    %1452 = vector.shape_cast %1451 : vector<1x16x16xf32> to vector<16x16xf32>
    %1453 = arith.mulf %1452, %1450 : vector<16x16xf32>
    %c4_1125 = arith.constant 4 : index
    %c0_1126 = arith.constant 0 : index
    %c0_1127 = arith.constant 0 : index
    %1454 = vector.load %arg9[%c4_1125, %c0_1126, %c0_1127] : memref<9x16x16xf32, #tpu.memory_space<vmem>>, vector<1x16x16xf32>
    %1455 = vector.shape_cast %1454 : vector<1x16x16xf32> to vector<16x16xf32>
    %1456 = arith.mulf %1455, %1057 : vector<16x16xf32>
    %1457 = arith.addf %1453, %1456 : vector<16x16xf32>
    %c15_i32_1128 = arith.constant 15 : i32
    %1458 = tpu.dynamic_rotate %1057 by %c15_i32_1128 dim 1 : vector<16x16xf32>, i32 -> vector<16x16xf32>
    %c5_1129 = arith.constant 5 : index
    %c0_1130 = arith.constant 0 : index
    %c0_1131 = arith.constant 0 : index
    %1459 = vector.load %arg9[%c5_1129, %c0_1130, %c0_1131] : memref<9x16x16xf32, #tpu.memory_space<vmem>>, vector<1x16x16xf32>
    %1460 = vector.shape_cast %1459 : vector<1x16x16xf32> to vector<16x16xf32>
    %1461 = arith.mulf %1460, %1458 : vector<16x16xf32>
    %1462 = arith.addf %1457, %1461 : vector<16x16xf32>
    %1463 = arith.addf %1449, %1462 : vector<16x16xf32>
    %c15_i32_1132 = arith.constant 15 : i32
    %1464 = tpu.dynamic_rotate %1057 by %c15_i32_1132 dim 0 : vector<16x16xf32>, i32 -> vector<16x16xf32>
    %c1_i32_1133 = arith.constant 1 : i32
    %1465 = tpu.dynamic_rotate %1464 by %c1_i32_1133 dim 1 : vector<16x16xf32>, i32 -> vector<16x16xf32>
    %c6_1134 = arith.constant 6 : index
    %c0_1135 = arith.constant 0 : index
    %c0_1136 = arith.constant 0 : index
    %1466 = vector.load %arg9[%c6_1134, %c0_1135, %c0_1136] : memref<9x16x16xf32, #tpu.memory_space<vmem>>, vector<1x16x16xf32>
    %1467 = vector.shape_cast %1466 : vector<1x16x16xf32> to vector<16x16xf32>
    %1468 = arith.mulf %1467, %1465 : vector<16x16xf32>
    %c7_1137 = arith.constant 7 : index
    %c0_1138 = arith.constant 0 : index
    %c0_1139 = arith.constant 0 : index
    %1469 = vector.load %arg9[%c7_1137, %c0_1138, %c0_1139] : memref<9x16x16xf32, #tpu.memory_space<vmem>>, vector<1x16x16xf32>
    %1470 = vector.shape_cast %1469 : vector<1x16x16xf32> to vector<16x16xf32>
    %1471 = arith.mulf %1470, %1464 : vector<16x16xf32>
    %1472 = arith.addf %1468, %1471 : vector<16x16xf32>
    %c15_i32_1140 = arith.constant 15 : i32
    %1473 = tpu.dynamic_rotate %1464 by %c15_i32_1140 dim 1 : vector<16x16xf32>, i32 -> vector<16x16xf32>
    %c8_1141 = arith.constant 8 : index
    %c0_1142 = arith.constant 0 : index
    %c0_1143 = arith.constant 0 : index
    %1474 = vector.load %arg9[%c8_1141, %c0_1142, %c0_1143] : memref<9x16x16xf32, #tpu.memory_space<vmem>>, vector<1x16x16xf32>
    %1475 = vector.shape_cast %1474 : vector<1x16x16xf32> to vector<16x16xf32>
    %1476 = arith.mulf %1475, %1473 : vector<16x16xf32>
    %1477 = arith.addf %1472, %1476 : vector<16x16xf32>
    %1478 = arith.addf %1463, %1477 : vector<16x16xf32>
    %1479 = arith.mulf %17, %1478 : vector<16x16xf32>
    %1480 = arith.addf %1479, %22 : vector<16x16xf32>
    %c2_i32_1144 = arith.constant 2 : i32
    %1481 = tpu.dynamic_rotate %1182 by %c2_i32_1144 dim 0 : vector<16x16xf32>, i32 -> vector<16x16xf32>
    %c2_i32_1145 = arith.constant 2 : i32
    %1482 = tpu.dynamic_rotate %1481 by %c2_i32_1145 dim 1 : vector<16x16xf32>, i32 -> vector<16x16xf32>
    %c0_1146 = arith.constant 0 : index
    %c0_1147 = arith.constant 0 : index
    %c0_1148 = arith.constant 0 : index
    %1483 = vector.load %arg10[%c0_1146, %c0_1147, %c0_1148] : memref<25x16x16xf32, #tpu.memory_space<vmem>>, vector<1x16x16xf32>
    %1484 = vector.shape_cast %1483 : vector<1x16x16xf32> to vector<16x16xf32>
    %1485 = arith.mulf %1484, %1482 : vector<16x16xf32>
    %c1_i32_1149 = arith.constant 1 : i32
    %1486 = tpu.dynamic_rotate %1481 by %c1_i32_1149 dim 1 : vector<16x16xf32>, i32 -> vector<16x16xf32>
    %c1_1150 = arith.constant 1 : index
    %c0_1151 = arith.constant 0 : index
    %c0_1152 = arith.constant 0 : index
    %1487 = vector.load %arg10[%c1_1150, %c0_1151, %c0_1152] : memref<25x16x16xf32, #tpu.memory_space<vmem>>, vector<1x16x16xf32>
    %1488 = vector.shape_cast %1487 : vector<1x16x16xf32> to vector<16x16xf32>
    %1489 = arith.mulf %1488, %1486 : vector<16x16xf32>
    %1490 = arith.addf %1485, %1489 : vector<16x16xf32>
    %c2_1153 = arith.constant 2 : index
    %c0_1154 = arith.constant 0 : index
    %c0_1155 = arith.constant 0 : index
    %1491 = vector.load %arg10[%c2_1153, %c0_1154, %c0_1155] : memref<25x16x16xf32, #tpu.memory_space<vmem>>, vector<1x16x16xf32>
    %1492 = vector.shape_cast %1491 : vector<1x16x16xf32> to vector<16x16xf32>
    %1493 = arith.mulf %1492, %1481 : vector<16x16xf32>
    %1494 = arith.addf %1490, %1493 : vector<16x16xf32>
    %c15_i32_1156 = arith.constant 15 : i32
    %1495 = tpu.dynamic_rotate %1481 by %c15_i32_1156 dim 1 : vector<16x16xf32>, i32 -> vector<16x16xf32>
    %c3_1157 = arith.constant 3 : index
    %c0_1158 = arith.constant 0 : index
    %c0_1159 = arith.constant 0 : index
    %1496 = vector.load %arg10[%c3_1157, %c0_1158, %c0_1159] : memref<25x16x16xf32, #tpu.memory_space<vmem>>, vector<1x16x16xf32>
    %1497 = vector.shape_cast %1496 : vector<1x16x16xf32> to vector<16x16xf32>
    %1498 = arith.mulf %1497, %1495 : vector<16x16xf32>
    %1499 = arith.addf %1494, %1498 : vector<16x16xf32>
    %c14_i32_1160 = arith.constant 14 : i32
    %1500 = tpu.dynamic_rotate %1481 by %c14_i32_1160 dim 1 : vector<16x16xf32>, i32 -> vector<16x16xf32>
    %c4_1161 = arith.constant 4 : index
    %c0_1162 = arith.constant 0 : index
    %c0_1163 = arith.constant 0 : index
    %1501 = vector.load %arg10[%c4_1161, %c0_1162, %c0_1163] : memref<25x16x16xf32, #tpu.memory_space<vmem>>, vector<1x16x16xf32>
    %1502 = vector.shape_cast %1501 : vector<1x16x16xf32> to vector<16x16xf32>
    %1503 = arith.mulf %1502, %1500 : vector<16x16xf32>
    %1504 = arith.addf %1499, %1503 : vector<16x16xf32>
    %c1_i32_1164 = arith.constant 1 : i32
    %1505 = tpu.dynamic_rotate %1182 by %c1_i32_1164 dim 0 : vector<16x16xf32>, i32 -> vector<16x16xf32>
    %c2_i32_1165 = arith.constant 2 : i32
    %1506 = tpu.dynamic_rotate %1505 by %c2_i32_1165 dim 1 : vector<16x16xf32>, i32 -> vector<16x16xf32>
    %c5_1166 = arith.constant 5 : index
    %c0_1167 = arith.constant 0 : index
    %c0_1168 = arith.constant 0 : index
    %1507 = vector.load %arg10[%c5_1166, %c0_1167, %c0_1168] : memref<25x16x16xf32, #tpu.memory_space<vmem>>, vector<1x16x16xf32>
    %1508 = vector.shape_cast %1507 : vector<1x16x16xf32> to vector<16x16xf32>
    %1509 = arith.mulf %1508, %1506 : vector<16x16xf32>
    %c1_i32_1169 = arith.constant 1 : i32
    %1510 = tpu.dynamic_rotate %1505 by %c1_i32_1169 dim 1 : vector<16x16xf32>, i32 -> vector<16x16xf32>
    %c6_1170 = arith.constant 6 : index
    %c0_1171 = arith.constant 0 : index
    %c0_1172 = arith.constant 0 : index
    %1511 = vector.load %arg10[%c6_1170, %c0_1171, %c0_1172] : memref<25x16x16xf32, #tpu.memory_space<vmem>>, vector<1x16x16xf32>
    %1512 = vector.shape_cast %1511 : vector<1x16x16xf32> to vector<16x16xf32>
    %1513 = arith.mulf %1512, %1510 : vector<16x16xf32>
    %1514 = arith.addf %1509, %1513 : vector<16x16xf32>
    %c7_1173 = arith.constant 7 : index
    %c0_1174 = arith.constant 0 : index
    %c0_1175 = arith.constant 0 : index
    %1515 = vector.load %arg10[%c7_1173, %c0_1174, %c0_1175] : memref<25x16x16xf32, #tpu.memory_space<vmem>>, vector<1x16x16xf32>
    %1516 = vector.shape_cast %1515 : vector<1x16x16xf32> to vector<16x16xf32>
    %1517 = arith.mulf %1516, %1505 : vector<16x16xf32>
    %1518 = arith.addf %1514, %1517 : vector<16x16xf32>
    %c15_i32_1176 = arith.constant 15 : i32
    %1519 = tpu.dynamic_rotate %1505 by %c15_i32_1176 dim 1 : vector<16x16xf32>, i32 -> vector<16x16xf32>
    %c8_1177 = arith.constant 8 : index
    %c0_1178 = arith.constant 0 : index
    %c0_1179 = arith.constant 0 : index
    %1520 = vector.load %arg10[%c8_1177, %c0_1178, %c0_1179] : memref<25x16x16xf32, #tpu.memory_space<vmem>>, vector<1x16x16xf32>
    %1521 = vector.shape_cast %1520 : vector<1x16x16xf32> to vector<16x16xf32>
    %1522 = arith.mulf %1521, %1519 : vector<16x16xf32>
    %1523 = arith.addf %1518, %1522 : vector<16x16xf32>
    %c14_i32_1180 = arith.constant 14 : i32
    %1524 = tpu.dynamic_rotate %1505 by %c14_i32_1180 dim 1 : vector<16x16xf32>, i32 -> vector<16x16xf32>
    %c9_1181 = arith.constant 9 : index
    %c0_1182 = arith.constant 0 : index
    %c0_1183 = arith.constant 0 : index
    %1525 = vector.load %arg10[%c9_1181, %c0_1182, %c0_1183] : memref<25x16x16xf32, #tpu.memory_space<vmem>>, vector<1x16x16xf32>
    %1526 = vector.shape_cast %1525 : vector<1x16x16xf32> to vector<16x16xf32>
    %1527 = arith.mulf %1526, %1524 : vector<16x16xf32>
    %1528 = arith.addf %1523, %1527 : vector<16x16xf32>
    %1529 = arith.addf %1504, %1528 : vector<16x16xf32>
    %c2_i32_1184 = arith.constant 2 : i32
    %1530 = tpu.dynamic_rotate %1182 by %c2_i32_1184 dim 1 : vector<16x16xf32>, i32 -> vector<16x16xf32>
    %c10_1185 = arith.constant 10 : index
    %c0_1186 = arith.constant 0 : index
    %c0_1187 = arith.constant 0 : index
    %1531 = vector.load %arg10[%c10_1185, %c0_1186, %c0_1187] : memref<25x16x16xf32, #tpu.memory_space<vmem>>, vector<1x16x16xf32>
    %1532 = vector.shape_cast %1531 : vector<1x16x16xf32> to vector<16x16xf32>
    %1533 = arith.mulf %1532, %1530 : vector<16x16xf32>
    %c1_i32_1188 = arith.constant 1 : i32
    %1534 = tpu.dynamic_rotate %1182 by %c1_i32_1188 dim 1 : vector<16x16xf32>, i32 -> vector<16x16xf32>
    %c11_1189 = arith.constant 11 : index
    %c0_1190 = arith.constant 0 : index
    %c0_1191 = arith.constant 0 : index
    %1535 = vector.load %arg10[%c11_1189, %c0_1190, %c0_1191] : memref<25x16x16xf32, #tpu.memory_space<vmem>>, vector<1x16x16xf32>
    %1536 = vector.shape_cast %1535 : vector<1x16x16xf32> to vector<16x16xf32>
    %1537 = arith.mulf %1536, %1534 : vector<16x16xf32>
    %1538 = arith.addf %1533, %1537 : vector<16x16xf32>
    %c12_1192 = arith.constant 12 : index
    %c0_1193 = arith.constant 0 : index
    %c0_1194 = arith.constant 0 : index
    %1539 = vector.load %arg10[%c12_1192, %c0_1193, %c0_1194] : memref<25x16x16xf32, #tpu.memory_space<vmem>>, vector<1x16x16xf32>
    %1540 = vector.shape_cast %1539 : vector<1x16x16xf32> to vector<16x16xf32>
    %1541 = arith.mulf %1540, %1182 : vector<16x16xf32>
    %1542 = arith.addf %1538, %1541 : vector<16x16xf32>
    %c15_i32_1195 = arith.constant 15 : i32
    %1543 = tpu.dynamic_rotate %1182 by %c15_i32_1195 dim 1 : vector<16x16xf32>, i32 -> vector<16x16xf32>
    %c13_1196 = arith.constant 13 : index
    %c0_1197 = arith.constant 0 : index
    %c0_1198 = arith.constant 0 : index
    %1544 = vector.load %arg10[%c13_1196, %c0_1197, %c0_1198] : memref<25x16x16xf32, #tpu.memory_space<vmem>>, vector<1x16x16xf32>
    %1545 = vector.shape_cast %1544 : vector<1x16x16xf32> to vector<16x16xf32>
    %1546 = arith.mulf %1545, %1543 : vector<16x16xf32>
    %1547 = arith.addf %1542, %1546 : vector<16x16xf32>
    %c14_i32_1199 = arith.constant 14 : i32
    %1548 = tpu.dynamic_rotate %1182 by %c14_i32_1199 dim 1 : vector<16x16xf32>, i32 -> vector<16x16xf32>
    %c14_1200 = arith.constant 14 : index
    %c0_1201 = arith.constant 0 : index
    %c0_1202 = arith.constant 0 : index
    %1549 = vector.load %arg10[%c14_1200, %c0_1201, %c0_1202] : memref<25x16x16xf32, #tpu.memory_space<vmem>>, vector<1x16x16xf32>
    %1550 = vector.shape_cast %1549 : vector<1x16x16xf32> to vector<16x16xf32>
    %1551 = arith.mulf %1550, %1548 : vector<16x16xf32>
    %1552 = arith.addf %1547, %1551 : vector<16x16xf32>
    %1553 = arith.addf %1529, %1552 : vector<16x16xf32>
    %c15_i32_1203 = arith.constant 15 : i32
    %1554 = tpu.dynamic_rotate %1182 by %c15_i32_1203 dim 0 : vector<16x16xf32>, i32 -> vector<16x16xf32>
    %c2_i32_1204 = arith.constant 2 : i32
    %1555 = tpu.dynamic_rotate %1554 by %c2_i32_1204 dim 1 : vector<16x16xf32>, i32 -> vector<16x16xf32>
    %c15_1205 = arith.constant 15 : index
    %c0_1206 = arith.constant 0 : index
    %c0_1207 = arith.constant 0 : index
    %1556 = vector.load %arg10[%c15_1205, %c0_1206, %c0_1207] : memref<25x16x16xf32, #tpu.memory_space<vmem>>, vector<1x16x16xf32>
    %1557 = vector.shape_cast %1556 : vector<1x16x16xf32> to vector<16x16xf32>
    %1558 = arith.mulf %1557, %1555 : vector<16x16xf32>
    %c1_i32_1208 = arith.constant 1 : i32
    %1559 = tpu.dynamic_rotate %1554 by %c1_i32_1208 dim 1 : vector<16x16xf32>, i32 -> vector<16x16xf32>
    %c16_1209 = arith.constant 16 : index
    %c0_1210 = arith.constant 0 : index
    %c0_1211 = arith.constant 0 : index
    %1560 = vector.load %arg10[%c16_1209, %c0_1210, %c0_1211] : memref<25x16x16xf32, #tpu.memory_space<vmem>>, vector<1x16x16xf32>
    %1561 = vector.shape_cast %1560 : vector<1x16x16xf32> to vector<16x16xf32>
    %1562 = arith.mulf %1561, %1559 : vector<16x16xf32>
    %1563 = arith.addf %1558, %1562 : vector<16x16xf32>
    %c17_1212 = arith.constant 17 : index
    %c0_1213 = arith.constant 0 : index
    %c0_1214 = arith.constant 0 : index
    %1564 = vector.load %arg10[%c17_1212, %c0_1213, %c0_1214] : memref<25x16x16xf32, #tpu.memory_space<vmem>>, vector<1x16x16xf32>
    %1565 = vector.shape_cast %1564 : vector<1x16x16xf32> to vector<16x16xf32>
    %1566 = arith.mulf %1565, %1554 : vector<16x16xf32>
    %1567 = arith.addf %1563, %1566 : vector<16x16xf32>
    %c15_i32_1215 = arith.constant 15 : i32
    %1568 = tpu.dynamic_rotate %1554 by %c15_i32_1215 dim 1 : vector<16x16xf32>, i32 -> vector<16x16xf32>
    %c18_1216 = arith.constant 18 : index
    %c0_1217 = arith.constant 0 : index
    %c0_1218 = arith.constant 0 : index
    %1569 = vector.load %arg10[%c18_1216, %c0_1217, %c0_1218] : memref<25x16x16xf32, #tpu.memory_space<vmem>>, vector<1x16x16xf32>
    %1570 = vector.shape_cast %1569 : vector<1x16x16xf32> to vector<16x16xf32>
    %1571 = arith.mulf %1570, %1568 : vector<16x16xf32>
    %1572 = arith.addf %1567, %1571 : vector<16x16xf32>
    %c14_i32_1219 = arith.constant 14 : i32
    %1573 = tpu.dynamic_rotate %1554 by %c14_i32_1219 dim 1 : vector<16x16xf32>, i32 -> vector<16x16xf32>
    %c19_1220 = arith.constant 19 : index
    %c0_1221 = arith.constant 0 : index
    %c0_1222 = arith.constant 0 : index
    %1574 = vector.load %arg10[%c19_1220, %c0_1221, %c0_1222] : memref<25x16x16xf32, #tpu.memory_space<vmem>>, vector<1x16x16xf32>
    %1575 = vector.shape_cast %1574 : vector<1x16x16xf32> to vector<16x16xf32>
    %1576 = arith.mulf %1575, %1573 : vector<16x16xf32>
    %1577 = arith.addf %1572, %1576 : vector<16x16xf32>
    %1578 = arith.addf %1553, %1577 : vector<16x16xf32>
    %c14_i32_1223 = arith.constant 14 : i32
    %1579 = tpu.dynamic_rotate %1182 by %c14_i32_1223 dim 0 : vector<16x16xf32>, i32 -> vector<16x16xf32>
    %c2_i32_1224 = arith.constant 2 : i32
    %1580 = tpu.dynamic_rotate %1579 by %c2_i32_1224 dim 1 : vector<16x16xf32>, i32 -> vector<16x16xf32>
    %c20_1225 = arith.constant 20 : index
    %c0_1226 = arith.constant 0 : index
    %c0_1227 = arith.constant 0 : index
    %1581 = vector.load %arg10[%c20_1225, %c0_1226, %c0_1227] : memref<25x16x16xf32, #tpu.memory_space<vmem>>, vector<1x16x16xf32>
    %1582 = vector.shape_cast %1581 : vector<1x16x16xf32> to vector<16x16xf32>
    %1583 = arith.mulf %1582, %1580 : vector<16x16xf32>
    %c1_i32_1228 = arith.constant 1 : i32
    %1584 = tpu.dynamic_rotate %1579 by %c1_i32_1228 dim 1 : vector<16x16xf32>, i32 -> vector<16x16xf32>
    %c21_1229 = arith.constant 21 : index
    %c0_1230 = arith.constant 0 : index
    %c0_1231 = arith.constant 0 : index
    %1585 = vector.load %arg10[%c21_1229, %c0_1230, %c0_1231] : memref<25x16x16xf32, #tpu.memory_space<vmem>>, vector<1x16x16xf32>
    %1586 = vector.shape_cast %1585 : vector<1x16x16xf32> to vector<16x16xf32>
    %1587 = arith.mulf %1586, %1584 : vector<16x16xf32>
    %1588 = arith.addf %1583, %1587 : vector<16x16xf32>
    %c22_1232 = arith.constant 22 : index
    %c0_1233 = arith.constant 0 : index
    %c0_1234 = arith.constant 0 : index
    %1589 = vector.load %arg10[%c22_1232, %c0_1233, %c0_1234] : memref<25x16x16xf32, #tpu.memory_space<vmem>>, vector<1x16x16xf32>
    %1590 = vector.shape_cast %1589 : vector<1x16x16xf32> to vector<16x16xf32>
    %1591 = arith.mulf %1590, %1579 : vector<16x16xf32>
    %1592 = arith.addf %1588, %1591 : vector<16x16xf32>
    %c15_i32_1235 = arith.constant 15 : i32
    %1593 = tpu.dynamic_rotate %1579 by %c15_i32_1235 dim 1 : vector<16x16xf32>, i32 -> vector<16x16xf32>
    %c23_1236 = arith.constant 23 : index
    %c0_1237 = arith.constant 0 : index
    %c0_1238 = arith.constant 0 : index
    %1594 = vector.load %arg10[%c23_1236, %c0_1237, %c0_1238] : memref<25x16x16xf32, #tpu.memory_space<vmem>>, vector<1x16x16xf32>
    %1595 = vector.shape_cast %1594 : vector<1x16x16xf32> to vector<16x16xf32>
    %1596 = arith.mulf %1595, %1593 : vector<16x16xf32>
    %1597 = arith.addf %1592, %1596 : vector<16x16xf32>
    %c14_i32_1239 = arith.constant 14 : i32
    %1598 = tpu.dynamic_rotate %1579 by %c14_i32_1239 dim 1 : vector<16x16xf32>, i32 -> vector<16x16xf32>
    %c24_1240 = arith.constant 24 : index
    %c0_1241 = arith.constant 0 : index
    %c0_1242 = arith.constant 0 : index
    %1599 = vector.load %arg10[%c24_1240, %c0_1241, %c0_1242] : memref<25x16x16xf32, #tpu.memory_space<vmem>>, vector<1x16x16xf32>
    %1600 = vector.shape_cast %1599 : vector<1x16x16xf32> to vector<16x16xf32>
    %1601 = arith.mulf %1600, %1598 : vector<16x16xf32>
    %1602 = arith.addf %1597, %1601 : vector<16x16xf32>
    %1603 = arith.addf %1578, %1602 : vector<16x16xf32>
    %1604 = arith.mulf %19, %1603 : vector<16x16xf32>
    %1605 = arith.addf %1604, %23 : vector<16x16xf32>
    %c3_i32_1243 = arith.constant 3 : i32
    %1606 = tpu.dynamic_rotate %1427 by %c3_i32_1243 dim 0 : vector<16x16xf32>, i32 -> vector<16x16xf32>
    %c3_i32_1244 = arith.constant 3 : i32
    %1607 = tpu.dynamic_rotate %1606 by %c3_i32_1244 dim 1 : vector<16x16xf32>, i32 -> vector<16x16xf32>
    %c0_1245 = arith.constant 0 : index
    %c0_1246 = arith.constant 0 : index
    %c0_1247 = arith.constant 0 : index
    %1608 = vector.load %arg11[%c0_1245, %c0_1246, %c0_1247] : memref<49x16x16xf32, #tpu.memory_space<vmem>>, vector<1x16x16xf32>
    %1609 = vector.shape_cast %1608 : vector<1x16x16xf32> to vector<16x16xf32>
    %1610 = arith.mulf %1609, %1607 : vector<16x16xf32>
    %c2_i32_1248 = arith.constant 2 : i32
    %1611 = tpu.dynamic_rotate %1606 by %c2_i32_1248 dim 1 : vector<16x16xf32>, i32 -> vector<16x16xf32>
    %c1_1249 = arith.constant 1 : index
    %c0_1250 = arith.constant 0 : index
    %c0_1251 = arith.constant 0 : index
    %1612 = vector.load %arg11[%c1_1249, %c0_1250, %c0_1251] : memref<49x16x16xf32, #tpu.memory_space<vmem>>, vector<1x16x16xf32>
    %1613 = vector.shape_cast %1612 : vector<1x16x16xf32> to vector<16x16xf32>
    %1614 = arith.mulf %1613, %1611 : vector<16x16xf32>
    %1615 = arith.addf %1610, %1614 : vector<16x16xf32>
    %c1_i32_1252 = arith.constant 1 : i32
    %1616 = tpu.dynamic_rotate %1606 by %c1_i32_1252 dim 1 : vector<16x16xf32>, i32 -> vector<16x16xf32>
    %c2_1253 = arith.constant 2 : index
    %c0_1254 = arith.constant 0 : index
    %c0_1255 = arith.constant 0 : index
    %1617 = vector.load %arg11[%c2_1253, %c0_1254, %c0_1255] : memref<49x16x16xf32, #tpu.memory_space<vmem>>, vector<1x16x16xf32>
    %1618 = vector.shape_cast %1617 : vector<1x16x16xf32> to vector<16x16xf32>
    %1619 = arith.mulf %1618, %1616 : vector<16x16xf32>
    %1620 = arith.addf %1615, %1619 : vector<16x16xf32>
    %c3_1256 = arith.constant 3 : index
    %c0_1257 = arith.constant 0 : index
    %c0_1258 = arith.constant 0 : index
    %1621 = vector.load %arg11[%c3_1256, %c0_1257, %c0_1258] : memref<49x16x16xf32, #tpu.memory_space<vmem>>, vector<1x16x16xf32>
    %1622 = vector.shape_cast %1621 : vector<1x16x16xf32> to vector<16x16xf32>
    %1623 = arith.mulf %1622, %1606 : vector<16x16xf32>
    %1624 = arith.addf %1620, %1623 : vector<16x16xf32>
    %c15_i32_1259 = arith.constant 15 : i32
    %1625 = tpu.dynamic_rotate %1606 by %c15_i32_1259 dim 1 : vector<16x16xf32>, i32 -> vector<16x16xf32>
    %c4_1260 = arith.constant 4 : index
    %c0_1261 = arith.constant 0 : index
    %c0_1262 = arith.constant 0 : index
    %1626 = vector.load %arg11[%c4_1260, %c0_1261, %c0_1262] : memref<49x16x16xf32, #tpu.memory_space<vmem>>, vector<1x16x16xf32>
    %1627 = vector.shape_cast %1626 : vector<1x16x16xf32> to vector<16x16xf32>
    %1628 = arith.mulf %1627, %1625 : vector<16x16xf32>
    %1629 = arith.addf %1624, %1628 : vector<16x16xf32>
    %c14_i32_1263 = arith.constant 14 : i32
    %1630 = tpu.dynamic_rotate %1606 by %c14_i32_1263 dim 1 : vector<16x16xf32>, i32 -> vector<16x16xf32>
    %c5_1264 = arith.constant 5 : index
    %c0_1265 = arith.constant 0 : index
    %c0_1266 = arith.constant 0 : index
    %1631 = vector.load %arg11[%c5_1264, %c0_1265, %c0_1266] : memref<49x16x16xf32, #tpu.memory_space<vmem>>, vector<1x16x16xf32>
    %1632 = vector.shape_cast %1631 : vector<1x16x16xf32> to vector<16x16xf32>
    %1633 = arith.mulf %1632, %1630 : vector<16x16xf32>
    %1634 = arith.addf %1629, %1633 : vector<16x16xf32>
    %c13_i32_1267 = arith.constant 13 : i32
    %1635 = tpu.dynamic_rotate %1606 by %c13_i32_1267 dim 1 : vector<16x16xf32>, i32 -> vector<16x16xf32>
    %c6_1268 = arith.constant 6 : index
    %c0_1269 = arith.constant 0 : index
    %c0_1270 = arith.constant 0 : index
    %1636 = vector.load %arg11[%c6_1268, %c0_1269, %c0_1270] : memref<49x16x16xf32, #tpu.memory_space<vmem>>, vector<1x16x16xf32>
    %1637 = vector.shape_cast %1636 : vector<1x16x16xf32> to vector<16x16xf32>
    %1638 = arith.mulf %1637, %1635 : vector<16x16xf32>
    %1639 = arith.addf %1634, %1638 : vector<16x16xf32>
    %c2_i32_1271 = arith.constant 2 : i32
    %1640 = tpu.dynamic_rotate %1427 by %c2_i32_1271 dim 0 : vector<16x16xf32>, i32 -> vector<16x16xf32>
    %c3_i32_1272 = arith.constant 3 : i32
    %1641 = tpu.dynamic_rotate %1640 by %c3_i32_1272 dim 1 : vector<16x16xf32>, i32 -> vector<16x16xf32>
    %c7_1273 = arith.constant 7 : index
    %c0_1274 = arith.constant 0 : index
    %c0_1275 = arith.constant 0 : index
    %1642 = vector.load %arg11[%c7_1273, %c0_1274, %c0_1275] : memref<49x16x16xf32, #tpu.memory_space<vmem>>, vector<1x16x16xf32>
    %1643 = vector.shape_cast %1642 : vector<1x16x16xf32> to vector<16x16xf32>
    %1644 = arith.mulf %1643, %1641 : vector<16x16xf32>
    %c2_i32_1276 = arith.constant 2 : i32
    %1645 = tpu.dynamic_rotate %1640 by %c2_i32_1276 dim 1 : vector<16x16xf32>, i32 -> vector<16x16xf32>
    %c8_1277 = arith.constant 8 : index
    %c0_1278 = arith.constant 0 : index
    %c0_1279 = arith.constant 0 : index
    %1646 = vector.load %arg11[%c8_1277, %c0_1278, %c0_1279] : memref<49x16x16xf32, #tpu.memory_space<vmem>>, vector<1x16x16xf32>
    %1647 = vector.shape_cast %1646 : vector<1x16x16xf32> to vector<16x16xf32>
    %1648 = arith.mulf %1647, %1645 : vector<16x16xf32>
    %1649 = arith.addf %1644, %1648 : vector<16x16xf32>
    %c1_i32_1280 = arith.constant 1 : i32
    %1650 = tpu.dynamic_rotate %1640 by %c1_i32_1280 dim 1 : vector<16x16xf32>, i32 -> vector<16x16xf32>
    %c9_1281 = arith.constant 9 : index
    %c0_1282 = arith.constant 0 : index
    %c0_1283 = arith.constant 0 : index
    %1651 = vector.load %arg11[%c9_1281, %c0_1282, %c0_1283] : memref<49x16x16xf32, #tpu.memory_space<vmem>>, vector<1x16x16xf32>
    %1652 = vector.shape_cast %1651 : vector<1x16x16xf32> to vector<16x16xf32>
    %1653 = arith.mulf %1652, %1650 : vector<16x16xf32>
    %1654 = arith.addf %1649, %1653 : vector<16x16xf32>
    %c10_1284 = arith.constant 10 : index
    %c0_1285 = arith.constant 0 : index
    %c0_1286 = arith.constant 0 : index
    %1655 = vector.load %arg11[%c10_1284, %c0_1285, %c0_1286] : memref<49x16x16xf32, #tpu.memory_space<vmem>>, vector<1x16x16xf32>
    %1656 = vector.shape_cast %1655 : vector<1x16x16xf32> to vector<16x16xf32>
    %1657 = arith.mulf %1656, %1640 : vector<16x16xf32>
    %1658 = arith.addf %1654, %1657 : vector<16x16xf32>
    %c15_i32_1287 = arith.constant 15 : i32
    %1659 = tpu.dynamic_rotate %1640 by %c15_i32_1287 dim 1 : vector<16x16xf32>, i32 -> vector<16x16xf32>
    %c11_1288 = arith.constant 11 : index
    %c0_1289 = arith.constant 0 : index
    %c0_1290 = arith.constant 0 : index
    %1660 = vector.load %arg11[%c11_1288, %c0_1289, %c0_1290] : memref<49x16x16xf32, #tpu.memory_space<vmem>>, vector<1x16x16xf32>
    %1661 = vector.shape_cast %1660 : vector<1x16x16xf32> to vector<16x16xf32>
    %1662 = arith.mulf %1661, %1659 : vector<16x16xf32>
    %1663 = arith.addf %1658, %1662 : vector<16x16xf32>
    %c14_i32_1291 = arith.constant 14 : i32
    %1664 = tpu.dynamic_rotate %1640 by %c14_i32_1291 dim 1 : vector<16x16xf32>, i32 -> vector<16x16xf32>
    %c12_1292 = arith.constant 12 : index
    %c0_1293 = arith.constant 0 : index
    %c0_1294 = arith.constant 0 : index
    %1665 = vector.load %arg11[%c12_1292, %c0_1293, %c0_1294] : memref<49x16x16xf32, #tpu.memory_space<vmem>>, vector<1x16x16xf32>
    %1666 = vector.shape_cast %1665 : vector<1x16x16xf32> to vector<16x16xf32>
    %1667 = arith.mulf %1666, %1664 : vector<16x16xf32>
    %1668 = arith.addf %1663, %1667 : vector<16x16xf32>
    %c13_i32_1295 = arith.constant 13 : i32
    %1669 = tpu.dynamic_rotate %1640 by %c13_i32_1295 dim 1 : vector<16x16xf32>, i32 -> vector<16x16xf32>
    %c13_1296 = arith.constant 13 : index
    %c0_1297 = arith.constant 0 : index
    %c0_1298 = arith.constant 0 : index
    %1670 = vector.load %arg11[%c13_1296, %c0_1297, %c0_1298] : memref<49x16x16xf32, #tpu.memory_space<vmem>>, vector<1x16x16xf32>
    %1671 = vector.shape_cast %1670 : vector<1x16x16xf32> to vector<16x16xf32>
    %1672 = arith.mulf %1671, %1669 : vector<16x16xf32>
    %1673 = arith.addf %1668, %1672 : vector<16x16xf32>
    %1674 = arith.addf %1639, %1673 : vector<16x16xf32>
    %c1_i32_1299 = arith.constant 1 : i32
    %1675 = tpu.dynamic_rotate %1427 by %c1_i32_1299 dim 0 : vector<16x16xf32>, i32 -> vector<16x16xf32>
    %c3_i32_1300 = arith.constant 3 : i32
    %1676 = tpu.dynamic_rotate %1675 by %c3_i32_1300 dim 1 : vector<16x16xf32>, i32 -> vector<16x16xf32>
    %c14_1301 = arith.constant 14 : index
    %c0_1302 = arith.constant 0 : index
    %c0_1303 = arith.constant 0 : index
    %1677 = vector.load %arg11[%c14_1301, %c0_1302, %c0_1303] : memref<49x16x16xf32, #tpu.memory_space<vmem>>, vector<1x16x16xf32>
    %1678 = vector.shape_cast %1677 : vector<1x16x16xf32> to vector<16x16xf32>
    %1679 = arith.mulf %1678, %1676 : vector<16x16xf32>
    %c2_i32_1304 = arith.constant 2 : i32
    %1680 = tpu.dynamic_rotate %1675 by %c2_i32_1304 dim 1 : vector<16x16xf32>, i32 -> vector<16x16xf32>
    %c15_1305 = arith.constant 15 : index
    %c0_1306 = arith.constant 0 : index
    %c0_1307 = arith.constant 0 : index
    %1681 = vector.load %arg11[%c15_1305, %c0_1306, %c0_1307] : memref<49x16x16xf32, #tpu.memory_space<vmem>>, vector<1x16x16xf32>
    %1682 = vector.shape_cast %1681 : vector<1x16x16xf32> to vector<16x16xf32>
    %1683 = arith.mulf %1682, %1680 : vector<16x16xf32>
    %1684 = arith.addf %1679, %1683 : vector<16x16xf32>
    %c1_i32_1308 = arith.constant 1 : i32
    %1685 = tpu.dynamic_rotate %1675 by %c1_i32_1308 dim 1 : vector<16x16xf32>, i32 -> vector<16x16xf32>
    %c16_1309 = arith.constant 16 : index
    %c0_1310 = arith.constant 0 : index
    %c0_1311 = arith.constant 0 : index
    %1686 = vector.load %arg11[%c16_1309, %c0_1310, %c0_1311] : memref<49x16x16xf32, #tpu.memory_space<vmem>>, vector<1x16x16xf32>
    %1687 = vector.shape_cast %1686 : vector<1x16x16xf32> to vector<16x16xf32>
    %1688 = arith.mulf %1687, %1685 : vector<16x16xf32>
    %1689 = arith.addf %1684, %1688 : vector<16x16xf32>
    %c17_1312 = arith.constant 17 : index
    %c0_1313 = arith.constant 0 : index
    %c0_1314 = arith.constant 0 : index
    %1690 = vector.load %arg11[%c17_1312, %c0_1313, %c0_1314] : memref<49x16x16xf32, #tpu.memory_space<vmem>>, vector<1x16x16xf32>
    %1691 = vector.shape_cast %1690 : vector<1x16x16xf32> to vector<16x16xf32>
    %1692 = arith.mulf %1691, %1675 : vector<16x16xf32>
    %1693 = arith.addf %1689, %1692 : vector<16x16xf32>
    %c15_i32_1315 = arith.constant 15 : i32
    %1694 = tpu.dynamic_rotate %1675 by %c15_i32_1315 dim 1 : vector<16x16xf32>, i32 -> vector<16x16xf32>
    %c18_1316 = arith.constant 18 : index
    %c0_1317 = arith.constant 0 : index
    %c0_1318 = arith.constant 0 : index
    %1695 = vector.load %arg11[%c18_1316, %c0_1317, %c0_1318] : memref<49x16x16xf32, #tpu.memory_space<vmem>>, vector<1x16x16xf32>
    %1696 = vector.shape_cast %1695 : vector<1x16x16xf32> to vector<16x16xf32>
    %1697 = arith.mulf %1696, %1694 : vector<16x16xf32>
    %1698 = arith.addf %1693, %1697 : vector<16x16xf32>
    %c14_i32_1319 = arith.constant 14 : i32
    %1699 = tpu.dynamic_rotate %1675 by %c14_i32_1319 dim 1 : vector<16x16xf32>, i32 -> vector<16x16xf32>
    %c19_1320 = arith.constant 19 : index
    %c0_1321 = arith.constant 0 : index
    %c0_1322 = arith.constant 0 : index
    %1700 = vector.load %arg11[%c19_1320, %c0_1321, %c0_1322] : memref<49x16x16xf32, #tpu.memory_space<vmem>>, vector<1x16x16xf32>
    %1701 = vector.shape_cast %1700 : vector<1x16x16xf32> to vector<16x16xf32>
    %1702 = arith.mulf %1701, %1699 : vector<16x16xf32>
    %1703 = arith.addf %1698, %1702 : vector<16x16xf32>
    %c13_i32_1323 = arith.constant 13 : i32
    %1704 = tpu.dynamic_rotate %1675 by %c13_i32_1323 dim 1 : vector<16x16xf32>, i32 -> vector<16x16xf32>
    %c20_1324 = arith.constant 20 : index
    %c0_1325 = arith.constant 0 : index
    %c0_1326 = arith.constant 0 : index
    %1705 = vector.load %arg11[%c20_1324, %c0_1325, %c0_1326] : memref<49x16x16xf32, #tpu.memory_space<vmem>>, vector<1x16x16xf32>
    %1706 = vector.shape_cast %1705 : vector<1x16x16xf32> to vector<16x16xf32>
    %1707 = arith.mulf %1706, %1704 : vector<16x16xf32>
    %1708 = arith.addf %1703, %1707 : vector<16x16xf32>
    %1709 = arith.addf %1674, %1708 : vector<16x16xf32>
    %c3_i32_1327 = arith.constant 3 : i32
    %1710 = tpu.dynamic_rotate %1427 by %c3_i32_1327 dim 1 : vector<16x16xf32>, i32 -> vector<16x16xf32>
    %c21_1328 = arith.constant 21 : index
    %c0_1329 = arith.constant 0 : index
    %c0_1330 = arith.constant 0 : index
    %1711 = vector.load %arg11[%c21_1328, %c0_1329, %c0_1330] : memref<49x16x16xf32, #tpu.memory_space<vmem>>, vector<1x16x16xf32>
    %1712 = vector.shape_cast %1711 : vector<1x16x16xf32> to vector<16x16xf32>
    %1713 = arith.mulf %1712, %1710 : vector<16x16xf32>
    %c2_i32_1331 = arith.constant 2 : i32
    %1714 = tpu.dynamic_rotate %1427 by %c2_i32_1331 dim 1 : vector<16x16xf32>, i32 -> vector<16x16xf32>
    %c22_1332 = arith.constant 22 : index
    %c0_1333 = arith.constant 0 : index
    %c0_1334 = arith.constant 0 : index
    %1715 = vector.load %arg11[%c22_1332, %c0_1333, %c0_1334] : memref<49x16x16xf32, #tpu.memory_space<vmem>>, vector<1x16x16xf32>
    %1716 = vector.shape_cast %1715 : vector<1x16x16xf32> to vector<16x16xf32>
    %1717 = arith.mulf %1716, %1714 : vector<16x16xf32>
    %1718 = arith.addf %1713, %1717 : vector<16x16xf32>
    %c1_i32_1335 = arith.constant 1 : i32
    %1719 = tpu.dynamic_rotate %1427 by %c1_i32_1335 dim 1 : vector<16x16xf32>, i32 -> vector<16x16xf32>
    %c23_1336 = arith.constant 23 : index
    %c0_1337 = arith.constant 0 : index
    %c0_1338 = arith.constant 0 : index
    %1720 = vector.load %arg11[%c23_1336, %c0_1337, %c0_1338] : memref<49x16x16xf32, #tpu.memory_space<vmem>>, vector<1x16x16xf32>
    %1721 = vector.shape_cast %1720 : vector<1x16x16xf32> to vector<16x16xf32>
    %1722 = arith.mulf %1721, %1719 : vector<16x16xf32>
    %1723 = arith.addf %1718, %1722 : vector<16x16xf32>
    %c24_1339 = arith.constant 24 : index
    %c0_1340 = arith.constant 0 : index
    %c0_1341 = arith.constant 0 : index
    %1724 = vector.load %arg11[%c24_1339, %c0_1340, %c0_1341] : memref<49x16x16xf32, #tpu.memory_space<vmem>>, vector<1x16x16xf32>
    %1725 = vector.shape_cast %1724 : vector<1x16x16xf32> to vector<16x16xf32>
    %1726 = arith.mulf %1725, %1427 : vector<16x16xf32>
    %1727 = arith.addf %1723, %1726 : vector<16x16xf32>
    %c15_i32_1342 = arith.constant 15 : i32
    %1728 = tpu.dynamic_rotate %1427 by %c15_i32_1342 dim 1 : vector<16x16xf32>, i32 -> vector<16x16xf32>
    %c25_1343 = arith.constant 25 : index
    %c0_1344 = arith.constant 0 : index
    %c0_1345 = arith.constant 0 : index
    %1729 = vector.load %arg11[%c25_1343, %c0_1344, %c0_1345] : memref<49x16x16xf32, #tpu.memory_space<vmem>>, vector<1x16x16xf32>
    %1730 = vector.shape_cast %1729 : vector<1x16x16xf32> to vector<16x16xf32>
    %1731 = arith.mulf %1730, %1728 : vector<16x16xf32>
    %1732 = arith.addf %1727, %1731 : vector<16x16xf32>
    %c14_i32_1346 = arith.constant 14 : i32
    %1733 = tpu.dynamic_rotate %1427 by %c14_i32_1346 dim 1 : vector<16x16xf32>, i32 -> vector<16x16xf32>
    %c26_1347 = arith.constant 26 : index
    %c0_1348 = arith.constant 0 : index
    %c0_1349 = arith.constant 0 : index
    %1734 = vector.load %arg11[%c26_1347, %c0_1348, %c0_1349] : memref<49x16x16xf32, #tpu.memory_space<vmem>>, vector<1x16x16xf32>
    %1735 = vector.shape_cast %1734 : vector<1x16x16xf32> to vector<16x16xf32>
    %1736 = arith.mulf %1735, %1733 : vector<16x16xf32>
    %1737 = arith.addf %1732, %1736 : vector<16x16xf32>
    %c13_i32_1350 = arith.constant 13 : i32
    %1738 = tpu.dynamic_rotate %1427 by %c13_i32_1350 dim 1 : vector<16x16xf32>, i32 -> vector<16x16xf32>
    %c27_1351 = arith.constant 27 : index
    %c0_1352 = arith.constant 0 : index
    %c0_1353 = arith.constant 0 : index
    %1739 = vector.load %arg11[%c27_1351, %c0_1352, %c0_1353] : memref<49x16x16xf32, #tpu.memory_space<vmem>>, vector<1x16x16xf32>
    %1740 = vector.shape_cast %1739 : vector<1x16x16xf32> to vector<16x16xf32>
    %1741 = arith.mulf %1740, %1738 : vector<16x16xf32>
    %1742 = arith.addf %1737, %1741 : vector<16x16xf32>
    %1743 = arith.addf %1709, %1742 : vector<16x16xf32>
    %c15_i32_1354 = arith.constant 15 : i32
    %1744 = tpu.dynamic_rotate %1427 by %c15_i32_1354 dim 0 : vector<16x16xf32>, i32 -> vector<16x16xf32>
    %c3_i32_1355 = arith.constant 3 : i32
    %1745 = tpu.dynamic_rotate %1744 by %c3_i32_1355 dim 1 : vector<16x16xf32>, i32 -> vector<16x16xf32>
    %c28_1356 = arith.constant 28 : index
    %c0_1357 = arith.constant 0 : index
    %c0_1358 = arith.constant 0 : index
    %1746 = vector.load %arg11[%c28_1356, %c0_1357, %c0_1358] : memref<49x16x16xf32, #tpu.memory_space<vmem>>, vector<1x16x16xf32>
    %1747 = vector.shape_cast %1746 : vector<1x16x16xf32> to vector<16x16xf32>
    %1748 = arith.mulf %1747, %1745 : vector<16x16xf32>
    %c2_i32_1359 = arith.constant 2 : i32
    %1749 = tpu.dynamic_rotate %1744 by %c2_i32_1359 dim 1 : vector<16x16xf32>, i32 -> vector<16x16xf32>
    %c29_1360 = arith.constant 29 : index
    %c0_1361 = arith.constant 0 : index
    %c0_1362 = arith.constant 0 : index
    %1750 = vector.load %arg11[%c29_1360, %c0_1361, %c0_1362] : memref<49x16x16xf32, #tpu.memory_space<vmem>>, vector<1x16x16xf32>
    %1751 = vector.shape_cast %1750 : vector<1x16x16xf32> to vector<16x16xf32>
    %1752 = arith.mulf %1751, %1749 : vector<16x16xf32>
    %1753 = arith.addf %1748, %1752 : vector<16x16xf32>
    %c1_i32_1363 = arith.constant 1 : i32
    %1754 = tpu.dynamic_rotate %1744 by %c1_i32_1363 dim 1 : vector<16x16xf32>, i32 -> vector<16x16xf32>
    %c30_1364 = arith.constant 30 : index
    %c0_1365 = arith.constant 0 : index
    %c0_1366 = arith.constant 0 : index
    %1755 = vector.load %arg11[%c30_1364, %c0_1365, %c0_1366] : memref<49x16x16xf32, #tpu.memory_space<vmem>>, vector<1x16x16xf32>
    %1756 = vector.shape_cast %1755 : vector<1x16x16xf32> to vector<16x16xf32>
    %1757 = arith.mulf %1756, %1754 : vector<16x16xf32>
    %1758 = arith.addf %1753, %1757 : vector<16x16xf32>
    %c31_1367 = arith.constant 31 : index
    %c0_1368 = arith.constant 0 : index
    %c0_1369 = arith.constant 0 : index
    %1759 = vector.load %arg11[%c31_1367, %c0_1368, %c0_1369] : memref<49x16x16xf32, #tpu.memory_space<vmem>>, vector<1x16x16xf32>
    %1760 = vector.shape_cast %1759 : vector<1x16x16xf32> to vector<16x16xf32>
    %1761 = arith.mulf %1760, %1744 : vector<16x16xf32>
    %1762 = arith.addf %1758, %1761 : vector<16x16xf32>
    %c15_i32_1370 = arith.constant 15 : i32
    %1763 = tpu.dynamic_rotate %1744 by %c15_i32_1370 dim 1 : vector<16x16xf32>, i32 -> vector<16x16xf32>
    %c32_1371 = arith.constant 32 : index
    %c0_1372 = arith.constant 0 : index
    %c0_1373 = arith.constant 0 : index
    %1764 = vector.load %arg11[%c32_1371, %c0_1372, %c0_1373] : memref<49x16x16xf32, #tpu.memory_space<vmem>>, vector<1x16x16xf32>
    %1765 = vector.shape_cast %1764 : vector<1x16x16xf32> to vector<16x16xf32>
    %1766 = arith.mulf %1765, %1763 : vector<16x16xf32>
    %1767 = arith.addf %1762, %1766 : vector<16x16xf32>
    %c14_i32_1374 = arith.constant 14 : i32
    %1768 = tpu.dynamic_rotate %1744 by %c14_i32_1374 dim 1 : vector<16x16xf32>, i32 -> vector<16x16xf32>
    %c33_1375 = arith.constant 33 : index
    %c0_1376 = arith.constant 0 : index
    %c0_1377 = arith.constant 0 : index
    %1769 = vector.load %arg11[%c33_1375, %c0_1376, %c0_1377] : memref<49x16x16xf32, #tpu.memory_space<vmem>>, vector<1x16x16xf32>
    %1770 = vector.shape_cast %1769 : vector<1x16x16xf32> to vector<16x16xf32>
    %1771 = arith.mulf %1770, %1768 : vector<16x16xf32>
    %1772 = arith.addf %1767, %1771 : vector<16x16xf32>
    %c13_i32_1378 = arith.constant 13 : i32
    %1773 = tpu.dynamic_rotate %1744 by %c13_i32_1378 dim 1 : vector<16x16xf32>, i32 -> vector<16x16xf32>
    %c34_1379 = arith.constant 34 : index
    %c0_1380 = arith.constant 0 : index
    %c0_1381 = arith.constant 0 : index
    %1774 = vector.load %arg11[%c34_1379, %c0_1380, %c0_1381] : memref<49x16x16xf32, #tpu.memory_space<vmem>>, vector<1x16x16xf32>
    %1775 = vector.shape_cast %1774 : vector<1x16x16xf32> to vector<16x16xf32>
    %1776 = arith.mulf %1775, %1773 : vector<16x16xf32>
    %1777 = arith.addf %1772, %1776 : vector<16x16xf32>
    %1778 = arith.addf %1743, %1777 : vector<16x16xf32>
    %c14_i32_1382 = arith.constant 14 : i32
    %1779 = tpu.dynamic_rotate %1427 by %c14_i32_1382 dim 0 : vector<16x16xf32>, i32 -> vector<16x16xf32>
    %c3_i32_1383 = arith.constant 3 : i32
    %1780 = tpu.dynamic_rotate %1779 by %c3_i32_1383 dim 1 : vector<16x16xf32>, i32 -> vector<16x16xf32>
    %c35_1384 = arith.constant 35 : index
    %c0_1385 = arith.constant 0 : index
    %c0_1386 = arith.constant 0 : index
    %1781 = vector.load %arg11[%c35_1384, %c0_1385, %c0_1386] : memref<49x16x16xf32, #tpu.memory_space<vmem>>, vector<1x16x16xf32>
    %1782 = vector.shape_cast %1781 : vector<1x16x16xf32> to vector<16x16xf32>
    %1783 = arith.mulf %1782, %1780 : vector<16x16xf32>
    %c2_i32_1387 = arith.constant 2 : i32
    %1784 = tpu.dynamic_rotate %1779 by %c2_i32_1387 dim 1 : vector<16x16xf32>, i32 -> vector<16x16xf32>
    %c36_1388 = arith.constant 36 : index
    %c0_1389 = arith.constant 0 : index
    %c0_1390 = arith.constant 0 : index
    %1785 = vector.load %arg11[%c36_1388, %c0_1389, %c0_1390] : memref<49x16x16xf32, #tpu.memory_space<vmem>>, vector<1x16x16xf32>
    %1786 = vector.shape_cast %1785 : vector<1x16x16xf32> to vector<16x16xf32>
    %1787 = arith.mulf %1786, %1784 : vector<16x16xf32>
    %1788 = arith.addf %1783, %1787 : vector<16x16xf32>
    %c1_i32_1391 = arith.constant 1 : i32
    %1789 = tpu.dynamic_rotate %1779 by %c1_i32_1391 dim 1 : vector<16x16xf32>, i32 -> vector<16x16xf32>
    %c37_1392 = arith.constant 37 : index
    %c0_1393 = arith.constant 0 : index
    %c0_1394 = arith.constant 0 : index
    %1790 = vector.load %arg11[%c37_1392, %c0_1393, %c0_1394] : memref<49x16x16xf32, #tpu.memory_space<vmem>>, vector<1x16x16xf32>
    %1791 = vector.shape_cast %1790 : vector<1x16x16xf32> to vector<16x16xf32>
    %1792 = arith.mulf %1791, %1789 : vector<16x16xf32>
    %1793 = arith.addf %1788, %1792 : vector<16x16xf32>
    %c38_1395 = arith.constant 38 : index
    %c0_1396 = arith.constant 0 : index
    %c0_1397 = arith.constant 0 : index
    %1794 = vector.load %arg11[%c38_1395, %c0_1396, %c0_1397] : memref<49x16x16xf32, #tpu.memory_space<vmem>>, vector<1x16x16xf32>
    %1795 = vector.shape_cast %1794 : vector<1x16x16xf32> to vector<16x16xf32>
    %1796 = arith.mulf %1795, %1779 : vector<16x16xf32>
    %1797 = arith.addf %1793, %1796 : vector<16x16xf32>
    %c15_i32_1398 = arith.constant 15 : i32
    %1798 = tpu.dynamic_rotate %1779 by %c15_i32_1398 dim 1 : vector<16x16xf32>, i32 -> vector<16x16xf32>
    %c39_1399 = arith.constant 39 : index
    %c0_1400 = arith.constant 0 : index
    %c0_1401 = arith.constant 0 : index
    %1799 = vector.load %arg11[%c39_1399, %c0_1400, %c0_1401] : memref<49x16x16xf32, #tpu.memory_space<vmem>>, vector<1x16x16xf32>
    %1800 = vector.shape_cast %1799 : vector<1x16x16xf32> to vector<16x16xf32>
    %1801 = arith.mulf %1800, %1798 : vector<16x16xf32>
    %1802 = arith.addf %1797, %1801 : vector<16x16xf32>
    %c14_i32_1402 = arith.constant 14 : i32
    %1803 = tpu.dynamic_rotate %1779 by %c14_i32_1402 dim 1 : vector<16x16xf32>, i32 -> vector<16x16xf32>
    %c40_1403 = arith.constant 40 : index
    %c0_1404 = arith.constant 0 : index
    %c0_1405 = arith.constant 0 : index
    %1804 = vector.load %arg11[%c40_1403, %c0_1404, %c0_1405] : memref<49x16x16xf32, #tpu.memory_space<vmem>>, vector<1x16x16xf32>
    %1805 = vector.shape_cast %1804 : vector<1x16x16xf32> to vector<16x16xf32>
    %1806 = arith.mulf %1805, %1803 : vector<16x16xf32>
    %1807 = arith.addf %1802, %1806 : vector<16x16xf32>
    %c13_i32_1406 = arith.constant 13 : i32
    %1808 = tpu.dynamic_rotate %1779 by %c13_i32_1406 dim 1 : vector<16x16xf32>, i32 -> vector<16x16xf32>
    %c41_1407 = arith.constant 41 : index
    %c0_1408 = arith.constant 0 : index
    %c0_1409 = arith.constant 0 : index
    %1809 = vector.load %arg11[%c41_1407, %c0_1408, %c0_1409] : memref<49x16x16xf32, #tpu.memory_space<vmem>>, vector<1x16x16xf32>
    %1810 = vector.shape_cast %1809 : vector<1x16x16xf32> to vector<16x16xf32>
    %1811 = arith.mulf %1810, %1808 : vector<16x16xf32>
    %1812 = arith.addf %1807, %1811 : vector<16x16xf32>
    %1813 = arith.addf %1778, %1812 : vector<16x16xf32>
    %c13_i32_1410 = arith.constant 13 : i32
    %1814 = tpu.dynamic_rotate %1427 by %c13_i32_1410 dim 0 : vector<16x16xf32>, i32 -> vector<16x16xf32>
    %c3_i32_1411 = arith.constant 3 : i32
    %1815 = tpu.dynamic_rotate %1814 by %c3_i32_1411 dim 1 : vector<16x16xf32>, i32 -> vector<16x16xf32>
    %c42_1412 = arith.constant 42 : index
    %c0_1413 = arith.constant 0 : index
    %c0_1414 = arith.constant 0 : index
    %1816 = vector.load %arg11[%c42_1412, %c0_1413, %c0_1414] : memref<49x16x16xf32, #tpu.memory_space<vmem>>, vector<1x16x16xf32>
    %1817 = vector.shape_cast %1816 : vector<1x16x16xf32> to vector<16x16xf32>
    %1818 = arith.mulf %1817, %1815 : vector<16x16xf32>
    %c2_i32_1415 = arith.constant 2 : i32
    %1819 = tpu.dynamic_rotate %1814 by %c2_i32_1415 dim 1 : vector<16x16xf32>, i32 -> vector<16x16xf32>
    %c43_1416 = arith.constant 43 : index
    %c0_1417 = arith.constant 0 : index
    %c0_1418 = arith.constant 0 : index
    %1820 = vector.load %arg11[%c43_1416, %c0_1417, %c0_1418] : memref<49x16x16xf32, #tpu.memory_space<vmem>>, vector<1x16x16xf32>
    %1821 = vector.shape_cast %1820 : vector<1x16x16xf32> to vector<16x16xf32>
    %1822 = arith.mulf %1821, %1819 : vector<16x16xf32>
    %1823 = arith.addf %1818, %1822 : vector<16x16xf32>
    %c1_i32_1419 = arith.constant 1 : i32
    %1824 = tpu.dynamic_rotate %1814 by %c1_i32_1419 dim 1 : vector<16x16xf32>, i32 -> vector<16x16xf32>
    %c44_1420 = arith.constant 44 : index
    %c0_1421 = arith.constant 0 : index
    %c0_1422 = arith.constant 0 : index
    %1825 = vector.load %arg11[%c44_1420, %c0_1421, %c0_1422] : memref<49x16x16xf32, #tpu.memory_space<vmem>>, vector<1x16x16xf32>
    %1826 = vector.shape_cast %1825 : vector<1x16x16xf32> to vector<16x16xf32>
    %1827 = arith.mulf %1826, %1824 : vector<16x16xf32>
    %1828 = arith.addf %1823, %1827 : vector<16x16xf32>
    %c45_1423 = arith.constant 45 : index
    %c0_1424 = arith.constant 0 : index
    %c0_1425 = arith.constant 0 : index
    %1829 = vector.load %arg11[%c45_1423, %c0_1424, %c0_1425] : memref<49x16x16xf32, #tpu.memory_space<vmem>>, vector<1x16x16xf32>
    %1830 = vector.shape_cast %1829 : vector<1x16x16xf32> to vector<16x16xf32>
    %1831 = arith.mulf %1830, %1814 : vector<16x16xf32>
    %1832 = arith.addf %1828, %1831 : vector<16x16xf32>
    %c15_i32_1426 = arith.constant 15 : i32
    %1833 = tpu.dynamic_rotate %1814 by %c15_i32_1426 dim 1 : vector<16x16xf32>, i32 -> vector<16x16xf32>
    %c46_1427 = arith.constant 46 : index
    %c0_1428 = arith.constant 0 : index
    %c0_1429 = arith.constant 0 : index
    %1834 = vector.load %arg11[%c46_1427, %c0_1428, %c0_1429] : memref<49x16x16xf32, #tpu.memory_space<vmem>>, vector<1x16x16xf32>
    %1835 = vector.shape_cast %1834 : vector<1x16x16xf32> to vector<16x16xf32>
    %1836 = arith.mulf %1835, %1833 : vector<16x16xf32>
    %1837 = arith.addf %1832, %1836 : vector<16x16xf32>
    %c14_i32_1430 = arith.constant 14 : i32
    %1838 = tpu.dynamic_rotate %1814 by %c14_i32_1430 dim 1 : vector<16x16xf32>, i32 -> vector<16x16xf32>
    %c47_1431 = arith.constant 47 : index
    %c0_1432 = arith.constant 0 : index
    %c0_1433 = arith.constant 0 : index
    %1839 = vector.load %arg11[%c47_1431, %c0_1432, %c0_1433] : memref<49x16x16xf32, #tpu.memory_space<vmem>>, vector<1x16x16xf32>
    %1840 = vector.shape_cast %1839 : vector<1x16x16xf32> to vector<16x16xf32>
    %1841 = arith.mulf %1840, %1838 : vector<16x16xf32>
    %1842 = arith.addf %1837, %1841 : vector<16x16xf32>
    %c13_i32_1434 = arith.constant 13 : i32
    %1843 = tpu.dynamic_rotate %1814 by %c13_i32_1434 dim 1 : vector<16x16xf32>, i32 -> vector<16x16xf32>
    %c48_1435 = arith.constant 48 : index
    %c0_1436 = arith.constant 0 : index
    %c0_1437 = arith.constant 0 : index
    %1844 = vector.load %arg11[%c48_1435, %c0_1436, %c0_1437] : memref<49x16x16xf32, #tpu.memory_space<vmem>>, vector<1x16x16xf32>
    %1845 = vector.shape_cast %1844 : vector<1x16x16xf32> to vector<16x16xf32>
    %1846 = arith.mulf %1845, %1843 : vector<16x16xf32>
    %1847 = arith.addf %1842, %1846 : vector<16x16xf32>
    %1848 = arith.addf %1813, %1847 : vector<16x16xf32>
    %1849 = arith.mulf %21, %1848 : vector<16x16xf32>
    %1850 = arith.addf %1849, %24 : vector<16x16xf32>
    %1851 = arith.mulf %11, %1480 : vector<16x16xf32>
    %1852 = arith.mulf %13, %1605 : vector<16x16xf32>
    %1853 = arith.addf %1851, %1852 : vector<16x16xf32>
    %1854 = arith.mulf %15, %1850 : vector<16x16xf32>
    %1855 = arith.addf %1853, %1854 : vector<16x16xf32>
    %c0_1438 = arith.constant 0 : index
    %c1_1439 = arith.constant 1 : index
    %c0_1440 = arith.constant 0 : index
    %c0_1441 = arith.constant 0 : index
    %1856 = vector.load %arg8[%c0_1438, %c1_1439, %c0_1440, %c0_1441] : memref<1x2x16x16xf32, #tpu.memory_space<vmem>>, vector<1x1x16x16xf32>
    %1857 = vector.shape_cast %1856 : vector<1x1x16x16xf32> to vector<16x16xf32>
    %1858 = vector.shape_cast %1855 : vector<16x16xf32> to vector<1x1x16x16xf32>
    tpu.vector_store %arg8[%c0_1438, %c1_1439, %c0_1440, %c0_1441], %1858 {strides = array<i32>} : memref<1x2x16x16xf32, #tpu.memory_space<vmem>>, vector<1x1x16x16xf32>,
    return
  }
  func.func @transform_0(%arg0: i32) -> (i32, i32, i32, i32) {
    %c0_i32 = arith.constant 0 : i32
    %c0_i32_0 = arith.constant 0 : i32
    %c0_i32_1 = arith.constant 0 : i32
    %c0_i32_2 = arith.constant 0 : i32
    return %arg0, %c0_i32, %c0_i32_0, %c0_i32_1 : i32, i32, i32, i32
  }
  func.func @transform_1(%arg0: i32) -> (i32, i32, i32, i32) {
    %c0_i32 = arith.constant 0 : i32
    %c0_i32_0 = arith.constant 0 : i32
    %c0_i32_1 = arith.constant 0 : i32
    %c0_i32_2 = arith.constant 0 : i32
    return %arg0, %c0_i32, %c0_i32_0, %c0_i32_1 : i32, i32, i32, i32
  }
  func.func @transform_2(%arg0: i32) -> (i32, i32, i32, i32) {
    %c0_i32 = arith.constant 0 : i32
    %c0_i32_0 = arith.constant 0 : i32
    %c0_i32_1 = arith.constant 0 : i32
    %c0_i32_2 = arith.constant 0 : i32
    return %arg0, %c0_i32, %c0_i32_0, %c0_i32_1 : i32, i32, i32, i32
  }
  func.func @transform_3(%arg0: i32) -> (i32, i32, i32, i32) {
    %c0_i32 = arith.constant 0 : i32
    %c0_i32_0 = arith.constant 0 : i32
    %c0_i32_1 = arith.constant 0 : i32
    %c0_i32_2 = arith.constant 0 : i32
    return %arg0, %c0_i32, %c0_i32_0, %c0_i32_1 : i32, i32, i32, i32
  }
  func.func @transform_4(%arg0: i32) -> (i32, i32, i32, i32) {
    %c0_i32 = arith.constant 0 : i32
    %c0_i32_0 = arith.constant 0 : i32
    %c0_i32_1 = arith.constant 0 : i32
    %c0_i32_2 = arith.constant 0 : i32
    return %arg0, %c0_i32, %c0_i32_0, %c0_i32_1 : i32, i32, i32, i32
  }
  func.func @transform_5(%arg0: i32) -> (i32, i32, i32, i32) {
    %c0_i32 = arith.constant 0 : i32
    %c0_i32_0 = arith.constant 0 : i32
    %c0_i32_1 = arith.constant 0 : i32
    %c0_i32_2 = arith.constant 0 : i32
    return %arg0, %c0_i32, %c0_i32_0, %c0_i32_1 : i32, i32, i32, i32
  }
  func.func @transform_6(%arg0: i32) -> (i32, i32, i32, i32) {
    %c0_i32 = arith.constant 0 : i32
    %c0_i32_0 = arith.constant 0 : i32
    %c0_i32_1 = arith.constant 0 : i32
    %c0_i32_2 = arith.constant 0 : i32
    return %arg0, %c0_i32, %c0_i32_0, %c0_i32_1 : i32, i32, i32, i32
  }
  func.func @transform_7(%arg0: i32) -> (i32, i32, i32, i32) {
    %c0_i32 = arith.constant 0 : i32
    %c0_i32_0 = arith.constant 0 : i32
    %c0_i32_1 = arith.constant 0 : i32
    %c0_i32_2 = arith.constant 0 : i32
    return %arg0, %c0_i32, %c0_i32_0, %c0_i32_1 : i32, i32, i32, i32
  }
}

</mosaic_0001>

<llo_original>
// kernel: cspn_forward.1
$region0: #{cspn_forward.1}
  #allocation0 [shape = 'u32[]', space=smem, size = 0x4, offset = 0x4, fixed_abs, tag = 'smem constant byte address 0x4 - core index']
  #allocation1 [shape = 'u32[144,128]{1,0:T(1,128)}', space=vmem, size = 0x12000, scoped, tag = 'internal scratch']
  #allocation2 [shape = 'f32[9,16,16]{2,1,0:T(8,128)}', space=vmem, size = 0x12000, scoped, tag = 'scratch operand']
  #allocation3 [shape = 'f32[25,16,16]{2,1,0:T(8,128)}', space=vmem, size = 0x32000, scoped, tag = 'scratch operand']
  #allocation4 [shape = 'f32[49,16,16]{2,1,0:T(8,128)}', space=vmem, size = 0x62000, scoped, tag = 'scratch operand']
  %s0 = inlined_call_operand.hbm [shape: f32[2,1,16,16], index: 0, kind: input, shape index: {}]
  %s1 = inlined_call_operand.hbm [shape: f32[2,1,16,16], index: 1, kind: input, shape index: {}]
  %s2 = inlined_call_operand.hbm [shape: bf16[2,9,16,16], index: 2, kind: input, shape index: {}]
  %s3 = inlined_call_operand.hbm [shape: bf16[2,25,16,16], index: 3, kind: input, shape index: {}]
  %s4 = inlined_call_operand.hbm [shape: bf16[2,49,16,16], index: 4, kind: input, shape index: {}]
  %s5 = inlined_call_operand.hbm [shape: f32[2,3,16,16], index: 5, kind: input, shape index: {}]
  %s6 = inlined_call_operand.hbm [shape: f32[2,3,16,16], index: 6, kind: input, shape index: {}]
  %s7 = inlined_call_operand.hbm [shape: f32[2,2,16,16], index: 7, kind: output, shape index: {}]
  %s8 = sld [smem:[#allocation0]]
  $region89: #{cspn_forward.1} parent=0
    _
  %s10 = ssub.s32 1, %s8
  %s11 = scalar_select 0, %s10, %s8
  $region1: #{cspn_forward.1} parent=0
    #allocation5 [shape = 'u8[16384]{0}', space=vmem, size = 0x4000, scoped, tag = 'input window, operand 0']
    #allocation6 [shape = 's32[2]{0}', space=sflag, size = 0x8, scoped, tag = 'scoped memory for cspn_forward.1']
    #allocation7 [shape = 's32[2]{0}', space=sflag, size = 0x8, scoped, tag = 'scoped memory for cspn_forward.1']
    #allocation8 [shape = 'u8[16384]{0}', space=vmem, size = 0x4000, scoped, tag = 'input window, operand 1']
    #allocation9 [shape = 's32[2]{0}', space=sflag, size = 0x8, scoped, tag = 'scoped memory for cspn_forward.1']
    #allocation10 [shape = 'u8[73728]{0}', space=vmem, size = 0x12000, scoped, tag = 'input window, operand 2']
    #allocation11 [shape = 'u8[204800]{0}', space=vmem, size = 0x32000, scoped, tag = 'input window, operand 3']
    #allocation12 [shape = 's32[2]{0}', space=sflag, size = 0x8, scoped, tag = 'scoped memory for cspn_forward.1']
    #allocation13 [shape = 'u8[401408]{0}', space=vmem, size = 0x62000, scoped, tag = 'input window, operand 4']
    #allocation14 [shape = 'u8[49152]{0}', space=vmem, size = 0xc000, scoped, tag = 'input window, operand 5']
    #allocation15 [shape = 's32[2]{0}', space=sflag, size = 0x8, scoped, tag = 'scoped memory for cspn_forward.1']
    #allocation16 [shape = 'u8[49152]{0}', space=vmem, size = 0xc000, scoped, tag = 'input window, operand 6']
    #allocation17 [shape = 'u8[32768]{0}', space=vmem, size = 0x8000, scoped, tag = 'output window, operand 0']
    %12 = vsyncpa [#allocation6], 0
    %s13 = scalar_lea.sflag [#allocation6], 1
    %14 = vsyncpa %s13, 0
    %15 = vsyncpa [#allocation9], 0
    %s16 = scalar_lea.sflag [#allocation9], 1
    %17 = vsyncpa %s16, 0
    %18 = vsyncpa [#allocation12], 0
    %s19 = scalar_lea.sflag [#allocation12], 1
    %20 = vsyncpa %s19, 0
    %21 = vsyncpa [#allocation15], 0
    %s22 = scalar_lea.sflag [#allocation15], 1
    %23 = vsyncpa %s22, 0
    %24 = vsyncpa [#allocation7], 0
    %s25 = scalar_lea.sflag [#allocation7], 1
    %26 = vsyncpa %s25, 0
    loop: start=0, step=1, limit=4
    $region2: #{cspn_forward.1} parent=1 // loop_pre_header
      _
    $region3: #{cspn_forward.1} parent=1 // loop_header
      %s28 = sphi 0, %s32
      %p29 = scmp.ge.s32.totalorder %s28, 4
      %s38 = sphi 0, %s40
      %s41 = sphi 0, %s38
      %s42 = sphi 0, %s41
      %s58 = sphi 0, %s42
      %s64 = sphi 0, %s66
      %s67 = sphi 0, %s64
      %s68 = sphi 0, %s67
      %s84 = sphi 0, %s68
      %s90 = sphi 0, %s92
      %s93 = sphi 0, %s90
      %s94 = sphi 0, %s93
      %s110 = sphi 0, %s94
      %s116 = sphi 0, %s118
      %s119 = sphi 0, %s116
      %s120 = sphi 0, %s119
      %s136 = sphi 0, %s120
      %s142 = sphi 0, %s144
      %s145 = sphi 0, %s142
      %s146 = sphi 0, %s145
      %s162 = sphi 0, %s146
      %s168 = sphi 0, %s170
      %s171 = sphi 0, %s168
      %s172 = sphi 0, %s171
      %s188 = sphi 0, %s172
      %s194 = sphi 0, %s196
      %s197 = sphi 0, %s194
      %s198 = sphi 0, %s197
      %s214 = sphi 0, %s198
      %s220 = sphi 0, %s222
      %s223 = sphi 0, %s220
      %s224 = sphi 0, %s223
      %s240 = sphi 0, %s224
    $region4: #{cspn_forward.1} parent=1 // loop_header_branch
      %31 = sbr.rel (%p29) target = $region8
    $region5: #{cspn_forward.1} parent=1 // loop_body
      %s33 = ssub.s32 %s28, 1
      %s34 = ssub.s32 %s28, 2
      %s35 = sadd.s32 %s28, 1
      %s36 = ssub.s32 %s28, %s35
      %p37 = scmp.eq.s32.totalorder %s36, 0
      %s39 = sadd.s32 %s38, 1
      %s40 = scalar_select %p37, %s38, %s39
      %p43 = pneg %p37
      %p44 = scmp.eq.s32.totalorder %s28, 1
      %p45 = por %p43, %p44
      %p46 = scmp.ne.s32.totalorder %s38, %s41
      %p47 = scmp.eq.s32.totalorder %s28, 0
      %p48 = por %p46, %p47
      %p49 = scmp.ne.s32.totalorder %s38, %s41
      %p50 = scmp.eq.s32.totalorder %s33, 1
      %p51 = por %p49, %p50
      %p52 = scmp.ne.s32.totalorder %s41, %s42
      %p53 = scmp.eq.s32.totalorder %s33, 0
      %p54 = por %p52, %p53
      %p55 = scmp.ne.s32.totalorder %s41, %s42
      %p56 = scmp.eq.s32.totalorder %s34, 1
      %p57 = por %p55, %p56
      %p59 = scmp.ne.s32.totalorder %s42, %s58
      %p60 = scmp.eq.s32.totalorder %s34, 0
      %p61 = por %p59, %p60
      %s62 = ssub.s32 %s28, %s35
      %p63 = scmp.eq.s32.totalorder %s62, 0
      %s65 = sadd.s32 %s64, 1
      %s66 = scalar_select %p63, %s64, %s65
      %p69 = pneg %p63
      %p70 = scmp.eq.s32.totalorder %s28, 1
      %p71 = por %p69, %p70
      %p72 = scmp.ne.s32.totalorder %s64, %s67
      %p73 = scmp.eq.s32.totalorder %s28, 0
      %p74 = por %p72, %p73
      %p75 = scmp.ne.s32.totalorder %s64, %s67
      %p76 = scmp.eq.s32.totalorder %s33, 1
      %p77 = por %p75, %p76
      %p78 = scmp.ne.s32.totalorder %s67, %s68
      %p79 = scmp.eq.s32.totalorder %s33, 0
      %p80 = por %p78, %p79
      %p81 = scmp.ne.s32.totalorder %s67, %s68
      %p82 = scmp.eq.s32.totalorder %s34, 1
      %p83 = por %p81, %p82
      %p85 = scmp.ne.s32.totalorder %s68, %s84
      %p86 = scmp.eq.s32.totalorder %s34, 0
      %p87 = por %p85, %p86
      %s88 = ssub.s32 %s28, %s35
      %p89 = scmp.eq.s32.totalorder %s88, 0
      %s91 = sadd.s32 %s90, 1
      %s92 = scalar_select %p89, %s90, %s91
      %p95 = pneg %p89
      %p96 = scmp.eq.s32.totalorder %s28, 1
      %p97 = por %p95, %p96
      %p98 = scmp.ne.s32.totalorder %s90, %s93
      %p99 = scmp.eq.s32.totalorder %s28, 0
      %p100 = por %p98, %p99
      %p101 = scmp.ne.s32.totalorder %s90, %s93
      %p102 = scmp.eq.s32.totalorder %s33, 1
      %p103 = por %p101, %p102
      %p104 = scmp.ne.s32.totalorder %s93, %s94
      %p105 = scmp.eq.s32.totalorder %s33, 0
      %p106 = por %p104, %p105
      %p107 = scmp.ne.s32.totalorder %s93, %s94
      %p108 = scmp.eq.s32.totalorder %s34, 1
      %p109 = por %p107, %p108
      %p111 = scmp.ne.s32.totalorder %s94, %s110
      %p112 = scmp.eq.s32.totalorder %s34, 0
      %p113 = por %p111, %p112
      %s114 = ssub.s32 %s28, %s35
      %p115 = scmp.eq.s32.totalorder %s114, 0
      %s117 = sadd.s32 %s116, 1
      %s118 = scalar_select %p115, %s116, %s117
      %p121 = pneg %p115
      %p122 = scmp.eq.s32.totalorder %s28, 1
      %p123 = por %p121, %p122
      %p124 = scmp.ne.s32.totalorder %s116, %s119
      %p125 = scmp.eq.s32.totalorder %s28, 0
      %p126 = por %p124, %p125
      %p127 = scmp.ne.s32.totalorder %s116, %s119
      %p128 = scmp.eq.s32.totalorder %s33, 1
      %p129 = por %p127, %p128
      %p130 = scmp.ne.s32.totalorder %s119, %s120
      %p131 = scmp.eq.s32.totalorder %s33, 0
      %p132 = por %p130, %p131
      %p133 = scmp.ne.s32.totalorder %s119, %s120
      %p134 = scmp.eq.s32.totalorder %s34, 1
      %p135 = por %p133, %p134
      %p137 = scmp.ne.s32.totalorder %s120, %s136
      %p138 = scmp.eq.s32.totalorder %s34, 0
      %p139 = por %p137, %p138
      %s140 = ssub.s32 %s28, %s35
      %p141 = scmp.eq.s32.totalorder %s140, 0
      %s143 = sadd.s32 %s142, 1
      %s144 = scalar_select %p141, %s142, %s143
      %p147 = pneg %p141
      %p148 = scmp.eq.s32.totalorder %s28, 1
      %p149 = por %p147, %p148
      %p150 = scmp.ne.s32.totalorder %s142, %s145
      %p151 = scmp.eq.s32.totalorder %s28, 0
      %p152 = por %p150, %p151
      %p153 = scmp.ne.s32.totalorder %s142, %s145
      %p154 = scmp.eq.s32.totalorder %s33, 1
      %p155 = por %p153, %p154
      %p156 = scmp.ne.s32.totalorder %s145, %s146
      %p157 = scmp.eq.s32.totalorder %s33, 0
      %p158 = por %p156, %p157
      %p159 = scmp.ne.s32.totalorder %s145, %s146
      %p160 = scmp.eq.s32.totalorder %s34, 1
      %p161 = por %p159, %p160
      %p163 = scmp.ne.s32.totalorder %s146, %s162
      %p164 = scmp.eq.s32.totalorder %s34, 0
      %p165 = por %p163, %p164
      %s166 = ssub.s32 %s28, %s35
      %p167 = scmp.eq.s32.totalorder %s166, 0
      %s169 = sadd.s32 %s168, 1
      %s170 = scalar_select %p167, %s168, %s169
      %p173 = pneg %p167
      %p174 = scmp.eq.s32.totalorder %s28, 1
      %p175 = por %p173, %p174
      %p176 = scmp.ne.s32.totalorder %s168, %s171
      %p177 = scmp.eq.s32.totalorder %s28, 0
      %p178 = por %p176, %p177
      %p179 = scmp.ne.s32.totalorder %s168, %s171
      %p180 = scmp.eq.s32.totalorder %s33, 1
      %p181 = por %p179, %p180
      %p182 = scmp.ne.s32.totalorder %s171, %s172
      %p183 = scmp.eq.s32.totalorder %s33, 0
      %p184 = por %p182, %p183
      %p185 = scmp.ne.s32.totalorder %s171, %s172
      %p186 = scmp.eq.s32.totalorder %s34, 1
      %p187 = por %p185, %p186
      %p189 = scmp.ne.s32.totalorder %s172, %s188
      %p190 = scmp.eq.s32.totalorder %s34, 0
      %p191 = por %p189, %p190
      %s192 = ssub.s32 %s28, %s35
      %p193 = scmp.eq.s32.totalorder %s192, 0
      %s195 = sadd.s32 %s194, 1
      %s196 = scalar_select %p193, %s194, %s195
      %p199 = pneg %p193
      %p200 = scmp.eq.s32.totalorder %s28, 1
      %p201 = por %p199, %p200
      %p202 = scmp.ne.s32.totalorder %s194, %s197
      %p203 = scmp.eq.s32.totalorder %s28, 0
      %p204 = por %p202, %p203
      %p205 = scmp.ne.s32.totalorder %s194, %s197
      %p206 = scmp.eq.s32.totalorder %s33, 1
      %p207 = por %p205, %p206
      %p208 = scmp.ne.s32.totalorder %s197, %s198
      %p209 = scmp.eq.s32.totalorder %s33, 0
      %p210 = por %p208, %p209
      %p211 = scmp.ne.s32.totalorder %s197, %s198
      %p212 = scmp.eq.s32.totalorder %s34, 1
      %p213 = por %p211, %p212
      %p215 = scmp.ne.s32.totalorder %s198, %s214
      %p216 = scmp.eq.s32.totalorder %s34, 0
      %p217 = por %p215, %p216
      %s218 = ssub.s32 %s28, %s35
      %p219 = scmp.eq.s32.totalorder %s218, 0
      %s221 = sadd.s32 %s220, 1
      %s222 = scalar_select %p219, %s220, %s221
      %p225 = pneg %p219
      %p226 = scmp.eq.s32.totalorder %s28, 1
      %p227 = por %p225, %p226
      %p228 = scmp.ne.s32.totalorder %s220, %s223
      %p229 = scmp.eq.s32.totalorder %s28, 0
      %p230 = por %p228, %p229
      %p231 = scmp.ne.s32.totalorder %s220, %s223
      %p232 = scmp.eq.s32.totalorder %s33, 1
      %p233 = por %p231, %p232
      %p234 = scmp.ne.s32.totalorder %s223, %s224
      %p235 = scmp.eq.s32.totalorder %s33, 0
      %p236 = por %p234, %p235
      %p237 = scmp.ne.s32.totalorder %s223, %s224
      %p238 = scmp.eq.s32.totalorder %s34, 1
      %p239 = por %p237, %p238
      %p241 = scmp.ne.s32.totalorder %s224, %s240
      %p242 = scmp.eq.s32.totalorder %s34, 0
      %p243 = por %p241, %p242
      %p244 = scmp.le.s32.totalorder 1, %s28
      %p245 = scmp.lt.s32.totalorder %s28, 3
      %p246 = pnand %p244, %p245
      %p247 = pneg %p246
      // Predicated region
      $region9: #{cspn_forward.1} parent=5 // pred_check
        _
      $region10: #{cspn_forward.1} parent=5 // pred_check_branch
        %249 = sbr.rel (%p246) target = $region12
      $region11: #{cspn_forward.1} parent=5 // pred_region
        %s250 = ssub.s32 %s28, 1
      $region12: #{cspn_forward.1} parent=5 // pred_fallthru
        _
      %p251 = scmp.lt.s32.totalorder %s28, 2
      // Predicated region
      $region13: #{cspn_forward.1} parent=5 // pred_check
        %p252 = pneg %p251
      $region14: #{cspn_forward.1} parent=5 // pred_check_branch
        %254 = sbr.rel (%p252) target = $region16
      $region15: #{cspn_forward.1} parent=5 // pred_region
        // Predicated region
        $region17: #{cspn_forward.1} parent=15 // pred_check
          %p255 = pneg %p48
        $region18: #{cspn_forward.1} parent=15 // pred_check_branch
          %257 = sbr.rel (%p255) target = $region20
        $region19: #{cspn_forward.1} parent=15 // pred_region
          %s258 = sand.u32 %s38, 1
          %s259 = scalar_lea.sflag [#allocation6], %s258
          %s260 = sand.u32 %s38, 1
          %s261 = smul.addr %s260, 16
          %s262 = scalar_lea.vmem [#allocation5], %s261
          %s264 = ssub.s32 256, 256
          %265 = vsyncadd %s259, %s264
          %s266 = smul.addr %s28, 2
          %s267 = smul.addr %s266, 128
          %s268 = scalar_lea.hbm %s0, %s267
          %s269 = sshll.u32 %s262, 4
          %s270 = int_to_ptr.vmem [resolvable:$true] %s269
          %275 = dma.hbm_to_vmem [thread:$0]  %s268, 256, %s270, %s259, 128, 128, 8
        $region20: #{cspn_forward.1} parent=15 // pred_fallthru
          _
        // Predicated region
        $region21: #{cspn_forward.1} parent=15 // pred_check
          %p276 = pneg %p74
        $region22: #{cspn_forward.1} parent=15 // pred_check_branch
          %278 = sbr.rel (%p276) target = $region24
        $region23: #{cspn_forward.1} parent=15 // pred_region
          %s279 = sand.u32 %s28, 1
          %s280 = scalar_lea.sflag [#allocation9], %s279
          %s281 = sand.u32 %s64, 1
          %s282 = smul.addr %s281, 16
          %s283 = scalar_lea.vmem [#allocation8], %s282
          %s285 = ssub.s32 256, 256
          %286 = vsyncadd %s280, %s285
          %s287 = smul.addr %s28, 2
          %s288 = smul.addr %s287, 128
          %s289 = scalar_lea.hbm %s1, %s288
          %s290 = sshll.u32 %s283, 4
          %s291 = int_to_ptr.vmem [resolvable:$true] %s290
          %296 = dma.hbm_to_vmem [thread:$0]  %s289, 256, %s291, %s280, 128, 128, 8
        $region24: #{cspn_forward.1} parent=15 // pred_fallthru
          _
        // Predicated region
        $region25: #{cspn_forward.1} parent=15 // pred_check
          %p297 = pneg %p100
        $region26: #{cspn_forward.1} parent=15 // pred_check_branch
          %299 = sbr.rel (%p297) target = $region28
        $region27: #{cspn_forward.1} parent=15 // pred_region
          %s300 = sand.u32 %s28, 1
          %s301 = scalar_lea.sflag [#allocation9], %s300
          %s302 = sand.u32 %s90, 1
          %s303 = smul.addr %s302, 72
          %s304 = scalar_lea.vmem [#allocation10], %s303
          %s306 = ssub.s32 1152, 1152
          %307 = vsyncadd %s301, %s306
          %s308 = smul.addr %s28, 18
          %s309 = smul.addr %s308, 64
          %s310 = scalar_lea.hbm %s2, %s309
          %s311 = sshll.u32 %s304, 4
          %s312 = int_to_ptr.vmem [resolvable:$true] %s311
          %317 = dma.hbm_to_vmem [thread:$0]  %s310, 1152, %s312, %s301, 64, 64, 4
        $region28: #{cspn_forward.1} parent=15 // pred_fallthru
          _
        // Predicated region
        $region29: #{cspn_forward.1} parent=15 // pred_check
          %p318 = pneg %p126
        $region30: #{cspn_forward.1} parent=15 // pred_check_branch
          %320 = sbr.rel (%p318) target = $region32
        $region31: #{cspn_forward.1} parent=15 // pred_region
          %s321 = sand.u32 %s28, 1
          %s322 = scalar_lea.sflag [#allocation12], %s321
          %s323 = sand.u32 %s116, 1
          %s324 = smul.addr %s323, 200
          %s325 = scalar_lea.vmem [#allocation11], %s324
          %s327 = ssub.s32 3200, 3200
          %328 = vsyncadd %s322, %s327
          %s329 = smul.addr %s28, 50
          %s330 = smul.addr %s329, 64
          %s331 = scalar_lea.hbm %s3, %s330
          %s332 = sshll.u32 %s325, 4
          %s333 = int_to_ptr.vmem [resolvable:$true] %s332
          %338 = dma.hbm_to_vmem [thread:$0]  %s331, 3200, %s333, %s322, 64, 64, 4
        $region32: #{cspn_forward.1} parent=15 // pred_fallthru
          _
        // Predicated region
        $region33: #{cspn_forward.1} parent=15 // pred_check
          %p339 = pneg %p152
        $region34: #{cspn_forward.1} parent=15 // pred_check_branch
          %341 = sbr.rel (%p339) target = $region36
        $region35: #{cspn_forward.1} parent=15 // pred_region
          %s342 = sand.u32 %s28, 1
          %s343 = scalar_lea.sflag [#allocation12], %s342
          %s344 = sand.u32 %s142, 1
          %s345 = smul.addr %s344, 392
          %s346 = scalar_lea.vmem [#allocation13], %s345
          %s348 = ssub.s32 6272, 6272
          %349 = vsyncadd %s343, %s348
          %s350 = smul.addr %s28, 98
          %s351 = smul.addr %s350, 64
          %s352 = scalar_lea.hbm %s4, %s351
          %s353 = sshll.u32 %s346, 4
          %s354 = int_to_ptr.vmem [resolvable:$true] %s353
          %359 = dma.hbm_to_vmem [thread:$0]  %s352, 6272, %s354, %s343, 64, 64, 4
        $region36: #{cspn_forward.1} parent=15 // pred_fallthru
          _
        // Predicated region
        $region37: #{cspn_forward.1} parent=15 // pred_check
          %p360 = pneg %p178
        $region38: #{cspn_forward.1} parent=15 // pred_check_branch
          %362 = sbr.rel (%p360) target = $region40
        $region39: #{cspn_forward.1} parent=15 // pred_region
          %s363 = sand.u32 %s28, 1
          %s364 = scalar_lea.sflag [#allocation15], %s363
          %s365 = sand.u32 %s168, 1
          %s366 = smul.addr %s365, 48
          %s367 = scalar_lea.vmem [#allocation14], %s366
          %s369 = ssub.s32 768, 768
          %370 = vsyncadd %s364, %s369
          %s371 = smul.addr %s28, 6
          %s372 = smul.addr %s371, 128
          %s373 = scalar_lea.hbm %s5, %s372
          %s374 = sshll.u32 %s367, 4
          %s375 = int_to_ptr.vmem [resolvable:$true] %s374
          %380 = dma.hbm_to_vmem [thread:$0]  %s373, 768, %s375, %s364, 128, 128, 8
        $region40: #{cspn_forward.1} parent=15 // pred_fallthru
          _
        // Predicated region
        $region41: #{cspn_forward.1} parent=15 // pred_check
          %p381 = pneg %p204
        $region42: #{cspn_forward.1} parent=15 // pred_check_branch
          %383 = sbr.rel (%p381) target = $region44
        $region43: #{cspn_forward.1} parent=15 // pred_region
          %s384 = sand.u32 %s28, 1
          %s385 = scalar_lea.sflag [#allocation15], %s384
          %s386 = sand.u32 %s194, 1
          %s387 = smul.addr %s386, 48
          %s388 = scalar_lea.vmem [#allocation16], %s387
          %s390 = ssub.s32 768, 768
          %391 = vsyncadd %s385, %s390
          %s392 = smul.addr %s28, 6
          %s393 = smul.addr %s392, 128
          %s394 = scalar_lea.hbm %s6, %s393
          %s395 = sshll.u32 %s388, 4
          %s396 = int_to_ptr.vmem [resolvable:$true] %s395
          %401 = dma.hbm_to_vmem [thread:$0]  %s394, 768, %s396, %s385, 128, 128, 8
        $region44: #{cspn_forward.1} parent=15 // pred_fallthru
          _
      $region16: #{cspn_forward.1} parent=5 // pred_fallthru
        _
      %p402 = scmp.le.s32.totalorder 1, %s28
      %p403 = scmp.lt.s32.totalorder %s28, 3
      %p404 = pnand %p402, %p403
      %p405 = pneg %p404
      // Predicated region
      $region45: #{cspn_forward.1} parent=5 // pred_check
        _
      $region46: #{cspn_forward.1} parent=5 // pred_check_branch
        %407 = sbr.rel (%p404) target = $region48
      $region47: #{cspn_forward.1} parent=5 // pred_region
        %s408 = ssub.s32 %s28, 1
        %s409 = sand.u32 %s41, 1
        %s410 = scalar_lea.sflag [#allocation6], %s409
        %s411 = sand.u32 %s41, 1
        %s412 = smul.addr %s411, 16
        %s413 = scalar_lea.vmem [#allocation5], %s412
        // Predicated region
        $region49: #{cspn_forward.1} parent=47 // pred_check
          %p414 = pneg %p54
        $region50: #{cspn_forward.1} parent=47 // pred_check_branch
          %416 = sbr.rel (%p414) target = $region52
        $region51: #{cspn_forward.1} parent=47 // pred_region
          %417 = dma.done %s410, 256
        $region52: #{cspn_forward.1} parent=47 // pred_fallthru
          _
        %s418 = sand.u32 %s33, 1
        %s419 = scalar_lea.sflag [#allocation9], %s418
        %s420 = sand.u32 %s67, 1
        %s421 = smul.addr %s420, 16
        %s422 = scalar_lea.vmem [#allocation8], %s421
        // Predicated region
        $region53: #{cspn_forward.1} parent=47 // pred_check
          %p423 = pneg %p80
        $region54: #{cspn_forward.1} parent=47 // pred_check_branch
          %425 = sbr.rel (%p423) target = $region56
        $region55: #{cspn_forward.1} parent=47 // pred_region
          %426 = dma.done %s419, 256
        $region56: #{cspn_forward.1} parent=47 // pred_fallthru
          _
        %s427 = sand.u32 %s33, 1
        %s428 = scalar_lea.sflag [#allocation9], %s427
        %s429 = sand.u32 %s93, 1
        %s430 = smul.addr %s429, 72
        %s431 = scalar_lea.vmem [#allocation10], %s430
        // Predicated region
        $region57: #{cspn_forward.1} parent=47 // pred_check
          %p432 = pneg %p106
        $region58: #{cspn_forward.1} parent=47 // pred_check_branch
          %434 = sbr.rel (%p432) target = $region60
        $region59: #{cspn_forward.1} parent=47 // pred_region
          %435 = dma.done %s428, 1152
        $region60: #{cspn_forward.1} parent=47 // pred_fallthru
          _
        %s436 = sand.u32 %s33, 1
        %s437 = scalar_lea.sflag [#allocation12], %s436
        %s438 = sand.u32 %s119, 1
        %s439 = smul.addr %s438, 200
        %s440 = scalar_lea.vmem [#allocation11], %s439
        // Predicated region
        $region61: #{cspn_forward.1} parent=47 // pred_check
          %p441 = pneg %p132
        $region62: #{cspn_forward.1} parent=47 // pred_check_branch
          %443 = sbr.rel (%p441) target = $region64
        $region63: #{cspn_forward.1} parent=47 // pred_region
          %444 = dma.done %s437, 3200
        $region64: #{cspn_forward.1} parent=47 // pred_fallthru
          _
        %s445 = sand.u32 %s33, 1
        %s446 = scalar_lea.sflag [#allocation12], %s445
        %s447 = sand.u32 %s145, 1
        %s448 = smul.addr %s447, 392
        %s449 = scalar_lea.vmem [#allocation13], %s448
        // Predicated region
        $region65: #{cspn_forward.1} parent=47 // pred_check
          %p450 = pneg %p158
        $region66: #{cspn_forward.1} parent=47 // pred_check_branch
          %452 = sbr.rel (%p450) target = $region68
        $region67: #{cspn_forward.1} parent=47 // pred_region
          %453 = dma.done %s446, 6272
        $region68: #{cspn_forward.1} parent=47 // pred_fallthru
          _
        %s454 = sand.u32 %s33, 1
        %s455 = scalar_lea.sflag [#allocation15], %s454
        %s456 = sand.u32 %s171, 1
        %s457 = smul.addr %s456, 48
        %s458 = scalar_lea.vmem [#allocation14], %s457
        // Predicated region
        $region69: #{cspn_forward.1} parent=47 // pred_check
          %p459 = pneg %p184
        $region70: #{cspn_forward.1} parent=47 // pred_check_branch
          %461 = sbr.rel (%p459) target = $region72
        $region71: #{cspn_forward.1} parent=47 // pred_region
          %462 = dma.done %s455, 768
        $region72: #{cspn_forward.1} parent=47 // pred_fallthru
          _
        %s463 = sand.u32 %s33, 1
        %s464 = scalar_lea.sflag [#allocation15], %s463
        %s465 = sand.u32 %s197, 1
        %s466 = smul.addr %s465, 48
        %s467 = scalar_lea.vmem [#allocation16], %s466
        // Predicated region
        $region73: #{cspn_forward.1} parent=47 // pred_check
          %p468 = pneg %p210
        $region74: #{cspn_forward.1} parent=47 // pred_check_branch
          %470 = sbr.rel (%p468) target = $region76
        $region75: #{cspn_forward.1} parent=47 // pred_region
          %471 = dma.done %s464, 768
        $region76: #{cspn_forward.1} parent=47 // pred_fallthru
          _
        %s472 = sand.u32 %s41, 1
        %s473 = scalar_lea.sflag [#allocation6], %s472
        %s474 = sand.u32 %s41, 1
        %s475 = smul.addr %s474, 16
        %s476 = scalar_lea.vmem [#allocation5], %s475
        %p477 = pneg %p54
        %p478 = pneg %p51
        %s479 = sand.u32 %s33, 1
        %s480 = scalar_lea.sflag [#allocation9], %s479
        %s481 = sand.u32 %s67, 1
        %s482 = smul.addr %s481, 16
        %s483 = scalar_lea.vmem [#allocation8], %s482
        %p484 = pneg %p80
        %p485 = pneg %p77
        %s486 = sand.u32 %s33, 1
        %s487 = scalar_lea.sflag [#allocation9], %s486
        %s488 = sand.u32 %s93, 1
        %s489 = smul.addr %s488, 72
        %s490 = scalar_lea.vmem [#allocation10], %s489
        %p491 = pneg %p106
        %p492 = pneg %p103
        %s493 = sand.u32 %s33, 1
        %s494 = scalar_lea.sflag [#allocation12], %s493
        %s495 = sand.u32 %s119, 1
        %s496 = smul.addr %s495, 200
        %s497 = scalar_lea.vmem [#allocation11], %s496
        %p498 = pneg %p132
        %p499 = pneg %p129
        %s500 = sand.u32 %s33, 1
        %s501 = scalar_lea.sflag [#allocation12], %s500
        %s502 = sand.u32 %s145, 1
        %s503 = smul.addr %s502, 392
        %s504 = scalar_lea.vmem [#allocation13], %s503
        %p505 = pneg %p158
        %p506 = pneg %p155
        %s507 = sand.u32 %s33, 1
        %s508 = scalar_lea.sflag [#allocation15], %s507
        %s509 = sand.u32 %s171, 1
        %s510 = smul.addr %s509, 48
        %s511 = scalar_lea.vmem [#allocation14], %s510
        %p512 = pneg %p184
        %p513 = pneg %p181
        %s514 = sand.u32 %s33, 1
        %s515 = scalar_lea.sflag [#allocation15], %s514
        %s516 = sand.u32 %s197, 1
        %s517 = smul.addr %s516, 48
        %s518 = scalar_lea.vmem [#allocation16], %s517
        %p519 = pneg %p210
        %p520 = pneg %p207
        %p521 = pneg %p236
        %p522 = pneg %p233
        %s523 = sand.u32 %s223, 1
        %s524 = scalar_lea.sflag [#allocation7], %s523
        %s525 = sand.u32 %s223, 1
        %s526 = smul.addr %s525, 32
        %s527 = scalar_lea.vmem [#allocation17], %s526
        %v528 = vld [vmem:[%s413] sm:$0xff]
        %v529 = vld [vmem:[%s413 + $0x8] sm:$0xff]
        %v530 = vld [vmem:[%s422] sm:$0xff]
        %v531 = vld [vmem:[%s422 + $0x8] sm:$0xff]
        %v532 = vld [vmem:[%s458] sm:$0xff]
        %v533 = vld [vmem:[%s458 + $0x8] sm:$0xff]
        %s534 = scalar_lea.vmem %s458, 16 [#allocation14]
        %v535 = vld [vmem:[%s534] sm:$0xff]
        %v536 = vld [vmem:[%s534 + $0x8] sm:$0xff]
        %s537 = scalar_lea.vmem %s458, 32 [#allocation14]
        %v538 = vld [vmem:[%s537] sm:$0xff]
        %v539 = vld [vmem:[%s537 + $0x8] sm:$0xff]
        %v540 = vld [vmem:[%s467] sm:$0xff]
        %v541 = vld [vmem:[%s467 + $0x8] sm:$0xff]
        %s542 = scalar_lea.vmem %s467, 16 [#allocation16]
        %v543 = vld [vmem:[%s542] sm:$0xff]
        %v544 = vld [vmem:[%s542 + $0x8] sm:$0xff]
        %s545 = scalar_lea.vmem %s467, 32 [#allocation16]
        %v546 = vld [vmem:[%s545] sm:$0xff]
        %v547 = vld [vmem:[%s545 + $0x8] sm:$0xff]
        %v548 = vsub.f32 1.0, %v532
        %v549 = vsub.f32 1.0, %v533
        %v550 = vsub.f32 1.0, %v535
        %v551 = vsub.f32 1.0, %v536
        %v552 = vsub.f32 1.0, %v538
        %v553 = vsub.f32 1.0, %v539
        %v554 = vmul.f32 %v532, %v530
        %v555 = vmul.f32 %v533, %v531
        %v556 = vmul.f32 %v535, %v530
        %v557 = vmul.f32 %v536, %v531
        %v558 = vmul.f32 %v538, %v530
        %v559 = vmul.f32 %v539, %v531
        %v560 = vlaneseq
        %v561 = vshrl.u32 %v560, 7
        %v562 = vadd.s32 %v561, 8
        %v563 = vlaneseq
        %v564 = vand.u32 %v563, 127
        %v565 = vld [vmem:[%s431] sm:$0xf]
        %v566 = vld [vmem:[%s431 + $0x4] sm:$0xf]
        %v567 = vunpack.c.l.bf16 %v565
        %v568 = vunpack.c.l.bf16 %v566
        %vm569 = vcmp.ge.s32.totalorder %v561, 1
        %vm570 = vcmp.ge.s32.totalorder %v562, 1
        %vm571 = vcmp.ge.s32.totalorder %v564, 1
        %vm572 = vmand %vm569, %vm571
        %vm573 = vmand %vm570, %vm571
        %v574 = vsel %vm572, %v567, 0.0
        %v575 = vsel %vm573, %v568, 0.0
        %vm576 = vcmask 130048
        %577 = vst.msk [vmem:[#allocation2] sm:$0xff] %vm576, %v574
        %578 = vst.msk [vmem:[#allocation2 + $0x8] sm:$0xff] %vm576, %v575
        %s579 = scalar_lea.vmem %s431, 8 [#allocation10]
        %v580 = vld [vmem:[%s579] sm:$0xf]
        %v581 = vld [vmem:[%s579 + $0x4] sm:$0xf]
        %v582 = vunpack.c.l.bf16 %v580
        %v583 = vunpack.c.l.bf16 %v581
        %v584 = vsel %vm569, %v582, 0.0
        %v585 = vsel %vm570, %v583, 0.0
        %s586 = scalar_lea.vmem [#allocation2], 16
        %587 = vst.msk [vmem:[%s586] sm:$0xff] %vm576, %v584
        %588 = vst.msk [vmem:[%s586 + $0x8] sm:$0xff] %vm576, %v585
        %s589 = scalar_lea.vmem %s431, 16 [#allocation10]
        %v590 = vld [vmem:[%s589] sm:$0xf]
        %v591 = vld [vmem:[%s589 + $0x4] sm:$0xf]
        %v592 = vunpack.c.l.bf16 %v590
        %v593 = vunpack.c.l.bf16 %v591
        %vm594 = vcmp.lt.s32.totalorder %v564, 15
        %vm595 = vmand %vm569, %vm594
        %vm596 = vmand %vm570, %vm594
        %v597 = vsel %vm595, %v592, 0.0
        %v598 = vsel %vm596, %v593, 0.0
        %s599 = scalar_lea.vmem [#allocation2], 32
        %600 = vst.msk [vmem:[%s599] sm:$0xff] %vm576, %v597
        %601 = vst.msk [vmem:[%s599 + $0x8] sm:$0xff] %vm576, %v598
        %s602 = scalar_lea.vmem %s431, 24 [#allocation10]
        %v603 = vld [vmem:[%s602] sm:$0xf]
        %v604 = vld [vmem:[%s602 + $0x4] sm:$0xf]
        %v605 = vunpack.c.l.bf16 %v603
        %v606 = vunpack.c.l.bf16 %v604
        %v607 = vsel %vm571, %v605, 0.0
        %v608 = vsel %vm571, %v606, 0.0
        %s609 = scalar_lea.vmem [#allocation2], 48
        %610 = vst.msk [vmem:[%s609] sm:$0xff] %vm576, %v607
        %611 = vst.msk [vmem:[%s609 + $0x8] sm:$0xff] %vm576, %v608
        %s612 = scalar_lea.vmem %s431, 32 [#allocation10]
        %v613 = vld [vmem:[%s612] sm:$0xf]
        %v614 = vld [vmem:[%s612 + $0x4] sm:$0xf]
        %v615 = vunpack.c.l.bf16 %v613
        %v616 = vunpack.c.l.bf16 %v614
        %s617 = scalar_lea.vmem [#allocation2], 64
        %618 = vst.msk [vmem:[%s617] sm:$0xff] %vm576, %v615
        %619 = vst.msk [vmem:[%s617 + $0x8] sm:$0xff] %vm576, %v616
        %s620 = scalar_lea.vmem %s431, 40 [#allocation10]
        %v621 = vld [vmem:[%s620] sm:$0xf]
        %v622 = vld [vmem:[%s620 + $0x4] sm:$0xf]
        %v623 = vunpack.c.l.bf16 %v621
        %v624 = vunpack.c.l.bf16 %v622
        %v625 = vsel %vm594, %v623, 0.0
        %v626 = vsel %vm594, %v624, 0.0
        %s627 = scalar_lea.vmem [#allocation2], 80
        %628 = vst.msk [vmem:[%s627] sm:$0xff] %vm576, %v625
        %629 = vst.msk [vmem:[%s627 + $0x8] sm:$0xff] %vm576, %v626
        %s630 = scalar_lea.vmem %s431, 48 [#allocation10]
        %v631 = vld [vmem:[%s630] sm:$0xf]
        %v632 = vld [vmem:[%s630 + $0x4] sm:$0xf]
        %v633 = vunpack.c.l.bf16 %v631
        %v634 = vunpack.c.l.bf16 %v632
        %vm635 = vcmp.lt.s32.totalorder %v561, 15
        %vm636 = vcmp.lt.s32.totalorder %v562, 15
        %vm637 = vmand %vm635, %vm571
        %vm638 = vmand %vm636, %vm571
        %v639 = vsel %vm637, %v633, 0.0
        %v640 = vsel %vm638, %v634, 0.0
        %s641 = scalar_lea.vmem [#allocation2], 96
        %642 = vst.msk [vmem:[%s641] sm:$0xff] %vm576, %v639
        %643 = vst.msk [vmem:[%s641 + $0x8] sm:$0xff] %vm576, %v640
        %s644 = scalar_lea.vmem %s431, 56 [#allocation10]
        %v645 = vld [vmem:[%s644] sm:$0xf]
        %v646 = vld [vmem:[%s644 + $0x4] sm:$0xf]
        %v647 = vunpack.c.l.bf16 %v645
        %v648 = vunpack.c.l.bf16 %v646
        %v649 = vsel %vm635, %v647, 0.0
        %v650 = vsel %vm636, %v648, 0.0
        %s651 = scalar_lea.vmem [#allocation2], 112
        %652 = vst.msk [vmem:[%s651] sm:$0xff] %vm576, %v649
        %653 = vst.msk [vmem:[%s651 + $0x8] sm:$0xff] %vm576, %v650
        %s654 = scalar_lea.vmem %s431, 64 [#allocation10]
        %v655 = vld [vmem:[%s654] sm:$0xf]
        %v656 = vld [vmem:[%s654 + $0x4] sm:$0xf]
        %v657 = vunpack.c.l.bf16 %v655
        %v658 = vunpack.c.l.bf16 %v656
        %vm659 = vmand %vm635, %vm594
        %vm660 = vmand %vm636, %vm594
        %v661 = vsel %vm659, %v657, 0.0
        %v662 = vsel %vm660, %v658, 0.0
        %s663 = scalar_lea.vmem [#allocation2], 128
        %664 = vst.msk [vmem:[%s663] sm:$0xff] %vm576, %v661
        %665 = vst.msk [vmem:[%s663 + $0x8] sm:$0xff] %vm576, %v662
        %v666 = vld [vmem:[%s440] sm:$0xf]
        %v667 = vld [vmem:[%s440 + $0x4] sm:$0xf]
        %v668 = vunpack.c.l.bf16 %v666
        %v669 = vunpack.c.l.bf16 %v667
        %vm670 = vcmp.ge.s32.totalorder %v561, 2
        %vm671 = vcmp.ge.s32.totalorder %v562, 2
        %vm672 = vcmp.ge.s32.totalorder %v564, 2
        %vm673 = vmand %vm670, %vm672
        %vm674 = vmand %vm671, %vm672
        %v675 = vsel %vm673, %v668, 0.0
        %v676 = vsel %vm674, %v669, 0.0
        %677 = vst.msk [vmem:[#allocation3] sm:$0xff] %vm576, %v675
        %678 = vst.msk [vmem:[#allocation3 + $0x8] sm:$0xff] %vm576, %v676
        %s679 = scalar_lea.vmem %s440, 8 [#allocation11]
        %v680 = vld [vmem:[%s679] sm:$0xf]
        %v681 = vld [vmem:[%s679 + $0x4] sm:$0xf]
        %v682 = vunpack.c.l.bf16 %v680
        %v683 = vunpack.c.l.bf16 %v681
        %vm684 = vmand %vm670, %vm571
        %vm685 = vmand %vm671, %vm571
        %v686 = vsel %vm684, %v682, 0.0
        %v687 = vsel %vm685, %v683, 0.0
        %s688 = scalar_lea.vmem [#allocation3], 16
        %689 = vst.msk [vmem:[%s688] sm:$0xff] %vm576, %v686
        %690 = vst.msk [vmem:[%s688 + $0x8] sm:$0xff] %vm576, %v687
        %s691 = scalar_lea.vmem %s440, 16 [#allocation11]
        %v692 = vld [vmem:[%s691] sm:$0xf]
        %v693 = vld [vmem:[%s691 + $0x4] sm:$0xf]
        %v694 = vunpack.c.l.bf16 %v692
        %v695 = vunpack.c.l.bf16 %v693
        %v696 = vsel %vm670, %v694, 0.0
        %v697 = vsel %vm671, %v695, 0.0
        %s698 = scalar_lea.vmem [#allocation3], 32
        %699 = vst.msk [vmem:[%s698] sm:$0xff] %vm576, %v696
        %700 = vst.msk [vmem:[%s698 + $0x8] sm:$0xff] %vm576, %v697
        %s701 = scalar_lea.vmem %s440, 24 [#allocation11]
        %v702 = vld [vmem:[%s701] sm:$0xf]
        %v703 = vld [vmem:[%s701 + $0x4] sm:$0xf]
        %v704 = vunpack.c.l.bf16 %v702
        %v705 = vunpack.c.l.bf16 %v703
        %vm706 = vmand %vm670, %vm594
        %vm707 = vmand %vm671, %vm594
        %v708 = vsel %vm706, %v704, 0.0
        %v709 = vsel %vm707, %v705, 0.0
        %s710 = scalar_lea.vmem [#allocation3], 48
        %711 = vst.msk [vmem:[%s710] sm:$0xff] %vm576, %v708
        %712 = vst.msk [vmem:[%s710 + $0x8] sm:$0xff] %vm576, %v709
        %s713 = scalar_lea.vmem %s440, 32 [#allocation11]
        %v714 = vld [vmem:[%s713] sm:$0xf]
        %v715 = vld [vmem:[%s713 + $0x4] sm:$0xf]
        %v716 = vunpack.c.l.bf16 %v714
        %v717 = vunpack.c.l.bf16 %v715
        %vm718 = vcmp.lt.s32.totalorder %v564, 14
        %vm719 = vmand %vm670, %vm718
        %vm720 = vmand %vm671, %vm718
        %v721 = vsel %vm719, %v716, 0.0
        %v722 = vsel %vm720, %v717, 0.0
        %s723 = scalar_lea.vmem [#allocation3], 64
        %724 = vst.msk [vmem:[%s723] sm:$0xff] %vm576, %v721
        %725 = vst.msk [vmem:[%s723 + $0x8] sm:$0xff] %vm576, %v722
        %s726 = scalar_lea.vmem %s440, 40 [#allocation11]
        %v727 = vld [vmem:[%s726] sm:$0xf]
        %v728 = vld [vmem:[%s726 + $0x4] sm:$0xf]
        %v729 = vunpack.c.l.bf16 %v727
        %v730 = vunpack.c.l.bf16 %v728
        %vm731 = vmand %vm569, %vm672
        %vm732 = vmand %vm570, %vm672
        %v733 = vsel %vm731, %v729, 0.0
        %v734 = vsel %vm732, %v730, 0.0
        %s735 = scalar_lea.vmem [#allocation3], 80
        %736 = vst.msk [vmem:[%s735] sm:$0xff] %vm576, %v733
        %737 = vst.msk [vmem:[%s735 + $0x8] sm:$0xff] %vm576, %v734
        %s738 = scalar_lea.vmem %s440, 48 [#allocation11]
        %v739 = vld [vmem:[%s738] sm:$0xf]
        %v740 = vld [vmem:[%s738 + $0x4] sm:$0xf]
        %v741 = vunpack.c.l.bf16 %v739
        %v742 = vunpack.c.l.bf16 %v740
        %v743 = vsel %vm572, %v741, 0.0
        %v744 = vsel %vm573, %v742, 0.0
        %s745 = scalar_lea.vmem [#allocation3], 96
        %746 = vst.msk [vmem:[%s745] sm:$0xff] %vm576, %v743
        %747 = vst.msk [vmem:[%s745 + $0x8] sm:$0xff] %vm576, %v744
        %s748 = scalar_lea.vmem %s440, 56 [#allocation11]
        %v749 = vld [vmem:[%s748] sm:$0xf]
        %v750 = vld [vmem:[%s748 + $0x4] sm:$0xf]
        %v751 = vunpack.c.l.bf16 %v749
        %v752 = vunpack.c.l.bf16 %v750
        %v753 = vsel %vm569, %v751, 0.0
        %v754 = vsel %vm570, %v752, 0.0
        %s755 = scalar_lea.vmem [#allocation3], 112
        %756 = vst.msk [vmem:[%s755] sm:$0xff] %vm576, %v753
        %757 = vst.msk [vmem:[%s755 + $0x8] sm:$0xff] %vm576, %v754
        %s758 = scalar_lea.vmem %s440, 64 [#allocation11]
        %v759 = vld [vmem:[%s758] sm:$0xf]
        %v760 = vld [vmem:[%s758 + $0x4] sm:$0xf]
        %v761 = vunpack.c.l.bf16 %v759
        %v762 = vunpack.c.l.bf16 %v760
        %v763 = vsel %vm595, %v761, 0.0
        %v764 = vsel %vm596, %v762, 0.0
        %s765 = scalar_lea.vmem [#allocation3], 128
        %766 = vst.msk [vmem:[%s765] sm:$0xff] %vm576, %v763
        %767 = vst.msk [vmem:[%s765 + $0x8] sm:$0xff] %vm576, %v764
        %s768 = scalar_lea.vmem %s440, 72 [#allocation11]
        %v769 = vld [vmem:[%s768] sm:$0xf]
        %v770 = vld [vmem:[%s768 + $0x4] sm:$0xf]
        %v771 = vunpack.c.l.bf16 %v769
        %v772 = vunpack.c.l.bf16 %v770
        %vm773 = vmand %vm569, %vm718
        %vm774 = vmand %vm570, %vm718
        %v775 = vsel %vm773, %v771, 0.0
        %v776 = vsel %vm774, %v772, 0.0
        %s777 = scalar_lea.vmem [#allocation3], 144
        %778 = vst.msk [vmem:[%s777] sm:$0xff] %vm576, %v775
        %779 = vst.msk [vmem:[%s777 + $0x8] sm:$0xff] %vm576, %v776
        %s780 = scalar_lea.vmem %s440, 80 [#allocation11]
        %v781 = vld [vmem:[%s780] sm:$0xf]
        %v782 = vld [vmem:[%s780 + $0x4] sm:$0xf]
        %v783 = vunpack.c.l.bf16 %v781
        %v784 = vunpack.c.l.bf16 %v782
        %v785 = vsel %vm672, %v783, 0.0
        %v786 = vsel %vm672, %v784, 0.0
        %s787 = scalar_lea.vmem [#allocation3], 160
        %788 = vst.msk [vmem:[%s787] sm:$0xff] %vm576, %v785
        %789 = vst.msk [vmem:[%s787 + $0x8] sm:$0xff] %vm576, %v786
        %s790 = scalar_lea.vmem %s440, 88 [#allocation11]
        %v791 = vld [vmem:[%s790] sm:$0xf]
        %v792 = vld [vmem:[%s790 + $0x4] sm:$0xf]
        %v793 = vunpack.c.l.bf16 %v791
        %v794 = vunpack.c.l.bf16 %v792
        %v795 = vsel %vm571, %v793, 0.0
        %v796 = vsel %vm571, %v794, 0.0
        %s797 = scalar_lea.vmem [#allocation3], 176
        %798 = vst.msk [vmem:[%s797] sm:$0xff] %vm576, %v795
        %799 = vst.msk [vmem:[%s797 + $0x8] sm:$0xff] %vm576, %v796
        %s800 = scalar_lea.vmem %s440, 96 [#allocation11]
        %v801 = vld [vmem:[%s800] sm:$0xf]
        %v802 = vld [vmem:[%s800 + $0x4] sm:$0xf]
        %v803 = vunpack.c.l.bf16 %v801
        %v804 = vunpack.c.l.bf16 %v802
        %s805 = scalar_lea.vmem [#allocation3], 192
        %806 = vst.msk [vmem:[%s805] sm:$0xff] %vm576, %v803
        %807 = vst.msk [vmem:[%s805 + $0x8] sm:$0xff] %vm576, %v804
        %s808 = scalar_lea.vmem %s440, 104 [#allocation11]
        %v809 = vld [vmem:[%s808] sm:$0xf]
        %v810 = vld [vmem:[%s808 + $0x4] sm:$0xf]
        %v811 = vunpack.c.l.bf16 %v809
        %v812 = vunpack.c.l.bf16 %v810
        %v813 = vsel %vm594, %v811, 0.0
        %v814 = vsel %vm594, %v812, 0.0
        %s815 = scalar_lea.vmem [#allocation3], 208
        %816 = vst.msk [vmem:[%s815] sm:$0xff] %vm576, %v813
        %817 = vst.msk [vmem:[%s815 + $0x8] sm:$0xff] %vm576, %v814
        %s818 = scalar_lea.vmem %s440, 112 [#allocation11]
        %v819 = vld [vmem:[%s818] sm:$0xf]
        %v820 = vld [vmem:[%s818 + $0x4] sm:$0xf]
        %v821 = vunpack.c.l.bf16 %v819
        %v822 = vunpack.c.l.bf16 %v820
        %v823 = vsel %vm718, %v821, 0.0
        %v824 = vsel %vm718, %v822, 0.0
        %s825 = scalar_lea.vmem [#allocation3], 224
        %826 = vst.msk [vmem:[%s825] sm:$0xff] %vm576, %v823
        %827 = vst.msk [vmem:[%s825 + $0x8] sm:$0xff] %vm576, %v824
        %s828 = scalar_lea.vmem %s440, 120 [#allocation11]
        %v829 = vld [vmem:[%s828] sm:$0xf]
        %v830 = vld [vmem:[%s828 + $0x4] sm:$0xf]
        %v831 = vunpack.c.l.bf16 %v829
        %v832 = vunpack.c.l.bf16 %v830
        %vm833 = vmand %vm635, %vm672
        %vm834 = vmand %vm636, %vm672
        %v835 = vsel %vm833, %v831, 0.0
        %v836 = vsel %vm834, %v832, 0.0
        %s837 = scalar_lea.vmem [#allocation3], 240
        %838 = vst.msk [vmem:[%s837] sm:$0xff] %vm576, %v835
        %839 = vst.msk [vmem:[%s837 + $0x8] sm:$0xff] %vm576, %v836
        %s840 = scalar_lea.vmem %s440, 128 [#allocation11]
        %v841 = vld [vmem:[%s840] sm:$0xf]
        %v842 = vld [vmem:[%s840 + $0x4] sm:$0xf]
        %v843 = vunpack.c.l.bf16 %v841
        %v844 = vunpack.c.l.bf16 %v842
        %v845 = vsel %vm637, %v843, 0.0
        %v846 = vsel %vm638, %v844, 0.0
        %s847 = scalar_lea.vmem [#allocation3], 256
        %848 = vst.msk [vmem:[%s847] sm:$0xff] %vm576, %v845
        %849 = vst.msk [vmem:[%s847 + $0x8] sm:$0xff] %vm576, %v846
        %s850 = scalar_lea.vmem %s440, 136 [#allocation11]
        %v851 = vld [vmem:[%s850] sm:$0xf]
        %v852 = vld [vmem:[%s850 + $0x4] sm:$0xf]
        %v853 = vunpack.c.l.bf16 %v851
        %v854 = vunpack.c.l.bf16 %v852
        %v855 = vsel %vm635, %v853, 0.0
        %v856 = vsel %vm636, %v854, 0.0
        %s857 = scalar_lea.vmem [#allocation3], 272
        %858 = vst.msk [vmem:[%s857] sm:$0xff] %vm576, %v855
        %859 = vst.msk [vmem:[%s857 + $0x8] sm:$0xff] %vm576, %v856
        %s860 = scalar_lea.vmem %s440, 144 [#allocation11]
        %v861 = vld [vmem:[%s860] sm:$0xf]
        %v862 = vld [vmem:[%s860 + $0x4] sm:$0xf]
        %v863 = vunpack.c.l.bf16 %v861
        %v864 = vunpack.c.l.bf16 %v862
        %v865 = vsel %vm659, %v863, 0.0
        %v866 = vsel %vm660, %v864, 0.0
        %s867 = scalar_lea.vmem [#allocation3], 288
        %868 = vst.msk [vmem:[%s867] sm:$0xff] %vm576, %v865
        %869 = vst.msk [vmem:[%s867 + $0x8] sm:$0xff] %vm576, %v866
        %s870 = scalar_lea.vmem %s440, 152 [#allocation11]
        %v871 = vld [vmem:[%s870] sm:$0xf]
        %v872 = vld [vmem:[%s870 + $0x4] sm:$0xf]
        %v873 = vunpack.c.l.bf16 %v871
        %v874 = vunpack.c.l.bf16 %v872
        %vm875 = vmand %vm635, %vm718
        %vm876 = vmand %vm636, %vm718
        %v877 = vsel %vm875, %v873, 0.0
        %v878 = vsel %vm876, %v874, 0.0
        %s879 = scalar_lea.vmem [#allocation3], 304
        %880 = vst.msk [vmem:[%s879] sm:$0xff] %vm576, %v877
        %881 = vst.msk [vmem:[%s879 + $0x8] sm:$0xff] %vm576, %v878
        %s882 = scalar_lea.vmem %s440, 160 [#allocation11]
        %v883 = vld [vmem:[%s882] sm:$0xf]
        %v884 = vld [vmem:[%s882 + $0x4] sm:$0xf]
        %v885 = vunpack.c.l.bf16 %v883
        %v886 = vunpack.c.l.bf16 %v884
        %vm887 = vcmp.lt.s32.totalorder %v561, 14
        %vm888 = vcmp.lt.s32.totalorder %v562, 14
        %vm889 = vmand %vm887, %vm672
        %vm890 = vmand %vm888, %vm672
        %v891 = vsel %vm889, %v885, 0.0
        %v892 = vsel %vm890, %v886, 0.0
        %s893 = scalar_lea.vmem [#allocation3], 320
        %894 = vst.msk [vmem:[%s893] sm:$0xff] %vm576, %v891
        %895 = vst.msk [vmem:[%s893 + $0x8] sm:$0xff] %vm576, %v892
        %s896 = scalar_lea.vmem %s440, 168 [#allocation11]
        %v897 = vld [vmem:[%s896] sm:$0xf]
        %v898 = vld [vmem:[%s896 + $0x4] sm:$0xf]
        %v899 = vunpack.c.l.bf16 %v897
        %v900 = vunpack.c.l.bf16 %v898
        %vm901 = vmand %vm887, %vm571
        %vm902 = vmand %vm888, %vm571
        %v903 = vsel %vm901, %v899, 0.0
        %v904 = vsel %vm902, %v900, 0.0
        %s905 = scalar_lea.vmem [#allocation3], 336
        %906 = vst.msk [vmem:[%s905] sm:$0xff] %vm576, %v903
        %907 = vst.msk [vmem:[%s905 + $0x8] sm:$0xff] %vm576, %v904
        %s908 = scalar_lea.vmem %s440, 176 [#allocation11]
        %v909 = vld [vmem:[%s908] sm:$0xf]
        %v910 = vld [vmem:[%s908 + $0x4] sm:$0xf]
        %v911 = vunpack.c.l.bf16 %v909
        %v912 = vunpack.c.l.bf16 %v910
        %v913 = vsel %vm887, %v911, 0.0
        %v914 = vsel %vm888, %v912, 0.0
        %s915 = scalar_lea.vmem [#allocation3], 352
        %916 = vst.msk [vmem:[%s915] sm:$0xff] %vm576, %v913
        %917 = vst.msk [vmem:[%s915 + $0x8] sm:$0xff] %vm576, %v914
        %s918 = scalar_lea.vmem %s440, 184 [#allocation11]
        %v919 = vld [vmem:[%s918] sm:$0xf]
        %v920 = vld [vmem:[%s918 + $0x4] sm:$0xf]
        %v921 = vunpack.c.l.bf16 %v919
        %v922 = vunpack.c.l.bf16 %v920
        %vm923 = vmand %vm887, %vm594
        %vm924 = vmand %vm888, %vm594
        %v925 = vsel %vm923, %v921, 0.0
        %v926 = vsel %vm924, %v922, 0.0
        %s927 = scalar_lea.vmem [#allocation3], 368
        %928 = vst.msk [vmem:[%s927] sm:$0xff] %vm576, %v925
        %929 = vst.msk [vmem:[%s927 + $0x8] sm:$0xff] %vm576, %v926
        %s930 = scalar_lea.vmem %s440, 192 [#allocation11]
        %v931 = vld [vmem:[%s930] sm:$0xf]
        %v932 = vld [vmem:[%s930 + $0x4] sm:$0xf]
        %v933 = vunpack.c.l.bf16 %v931
        %v934 = vunpack.c.l.bf16 %v932
        %vm935 = vmand %vm887, %vm718
        %vm936 = vmand %vm888, %vm718
        %v937 = vsel %vm935, %v933, 0.0
        %v938 = vsel %vm936, %v934, 0.0
        %s939 = scalar_lea.vmem [#allocation3], 384
        %940 = vst.msk [vmem:[%s939] sm:$0xff] %vm576, %v937
        %941 = vst.msk [vmem:[%s939 + $0x8] sm:$0xff] %vm576, %v938
        %v942 = vld [vmem:[%s449] sm:$0xf]
        %v943 = vld [vmem:[%s449 + $0x4] sm:$0xf]
        %v944 = vunpack.c.l.bf16 %v942
        %v945 = vunpack.c.l.bf16 %v943
        %vm946 = vcmp.ge.s32.totalorder %v561, 3
        %vm947 = vcmp.ge.s32.totalorder %v562, 3
        %vm948 = vcmp.ge.s32.totalorder %v564, 3
        %vm949 = vmand %vm946, %vm948
        %vm950 = vmand %vm947, %vm948
        %v951 = vsel %vm949, %v944, 0.0
        %v952 = vsel %vm950, %v945, 0.0
        %953 = vst.msk [vmem:[#allocation4] sm:$0xff] %vm576, %v951
        %954 = vst.msk [vmem:[#allocation4 + $0x8] sm:$0xff] %vm576, %v952
        %s955 = scalar_lea.vmem %s449, 8 [#allocation13]
        %v956 = vld [vmem:[%s955] sm:$0xf]
        %v957 = vld [vmem:[%s955 + $0x4] sm:$0xf]
        %v958 = vunpack.c.l.bf16 %v956
        %v959 = vunpack.c.l.bf16 %v957
        %vm960 = vmand %vm946, %vm672
        %vm961 = vmand %vm947, %vm672
        %v962 = vsel %vm960, %v958, 0.0
        %v963 = vsel %vm961, %v959, 0.0
        %s964 = scalar_lea.vmem [#allocation4], 16
        %965 = vst.msk [vmem:[%s964] sm:$0xff] %vm576, %v962
        %966 = vst.msk [vmem:[%s964 + $0x8] sm:$0xff] %vm576, %v963
        %s967 = scalar_lea.vmem %s449, 16 [#allocation13]
        %v968 = vld [vmem:[%s967] sm:$0xf]
        %v969 = vld [vmem:[%s967 + $0x4] sm:$0xf]
        %v970 = vunpack.c.l.bf16 %v968
        %v971 = vunpack.c.l.bf16 %v969
        %vm972 = vmand %vm946, %vm571
        %vm973 = vmand %vm947, %vm571
        %v974 = vsel %vm972, %v970, 0.0
        %v975 = vsel %vm973, %v971, 0.0
        %s976 = scalar_lea.vmem [#allocation4], 32
        %977 = vst.msk [vmem:[%s976] sm:$0xff] %vm576, %v974
        %978 = vst.msk [vmem:[%s976 + $0x8] sm:$0xff] %vm576, %v975
        %s979 = scalar_lea.vmem %s449, 24 [#allocation13]
        %v980 = vld [vmem:[%s979] sm:$0xf]
        %v981 = vld [vmem:[%s979 + $0x4] sm:$0xf]
        %v982 = vunpack.c.l.bf16 %v980
        %v983 = vunpack.c.l.bf16 %v981
        %v984 = vsel %vm946, %v982, 0.0
        %v985 = vsel %vm947, %v983, 0.0
        %s986 = scalar_lea.vmem [#allocation4], 48
        %987 = vst.msk [vmem:[%s986] sm:$0xff] %vm576, %v984
        %988 = vst.msk [vmem:[%s986 + $0x8] sm:$0xff] %vm576, %v985
        %s989 = scalar_lea.vmem %s449, 32 [#allocation13]
        %v990 = vld [vmem:[%s989] sm:$0xf]
        %v991 = vld [vmem:[%s989 + $0x4] sm:$0xf]
        %v992 = vunpack.c.l.bf16 %v990
        %v993 = vunpack.c.l.bf16 %v991
        %vm994 = vmand %vm946, %vm594
        %vm995 = vmand %vm947, %vm594
        %v996 = vsel %vm994, %v992, 0.0
        %v997 = vsel %vm995, %v993, 0.0
        %s998 = scalar_lea.vmem [#allocation4], 64
        %999 = vst.msk [vmem:[%s998] sm:$0xff] %vm576, %v996
        %1000 = vst.msk [vmem:[%s998 + $0x8] sm:$0xff] %vm576, %v997
        %s1001 = scalar_lea.vmem %s449, 40 [#allocation13]
        %v1002 = vld [vmem:[%s1001] sm:$0xf]
        %v1003 = vld [vmem:[%s1001 + $0x4] sm:$0xf]
        %v1004 = vunpack.c.l.bf16 %v1002
        %v1005 = vunpack.c.l.bf16 %v1003
        %vm1006 = vmand %vm946, %vm718
        %vm1007 = vmand %vm947, %vm718
        %v1008 = vsel %vm1006, %v1004, 0.0
        %v1009 = vsel %vm1007, %v1005, 0.0
        %s1010 = scalar_lea.vmem [#allocation4], 80
        %1011 = vst.msk [vmem:[%s1010] sm:$0xff] %vm576, %v1008
        %1012 = vst.msk [vmem:[%s1010 + $0x8] sm:$0xff] %vm576, %v1009
        %s1013 = scalar_lea.vmem %s449, 48 [#allocation13]
        %v1014 = vld [vmem:[%s1013] sm:$0xf]
        %v1015 = vld [vmem:[%s1013 + $0x4] sm:$0xf]
        %v1016 = vunpack.c.l.bf16 %v1014
        %v1017 = vunpack.c.l.bf16 %v1015
        %vm1018 = vcmp.lt.s32.totalorder %v564, 13
        %vm1019 = vmand %vm946, %vm1018
        %vm1020 = vmand %vm947, %vm1018
        %v1021 = vsel %vm1019, %v1016, 0.0
        %v1022 = vsel %vm1020, %v1017, 0.0
        %s1023 = scalar_lea.vmem [#allocation4], 96
        %1024 = vst.msk [vmem:[%s1023] sm:$0xff] %vm576, %v1021
        %1025 = vst.msk [vmem:[%s1023 + $0x8] sm:$0xff] %vm576, %v1022
        %s1026 = scalar_lea.vmem %s449, 56 [#allocation13]
        %v1027 = vld [vmem:[%s1026] sm:$0xf]
        %v1028 = vld [vmem:[%s1026 + $0x4] sm:$0xf]
        %v1029 = vunpack.c.l.bf16 %v1027
        %v1030 = vunpack.c.l.bf16 %v1028
        %vm1031 = vmand %vm670, %vm948
        %vm1032 = vmand %vm671, %vm948
        %v1033 = vsel %vm1031, %v1029, 0.0
        %v1034 = vsel %vm1032, %v1030, 0.0
        %s1035 = scalar_lea.vmem [#allocation4], 112
        %1036 = vst.msk [vmem:[%s1035] sm:$0xff] %vm576, %v1033
        %1037 = vst.msk [vmem:[%s1035 + $0x8] sm:$0xff] %vm576, %v1034
        %s1038 = scalar_lea.vmem %s449, 64 [#allocation13]
        %v1039 = vld [vmem:[%s1038] sm:$0xf]
        %v1040 = vld [vmem:[%s1038 + $0x4] sm:$0xf]
        %v1041 = vunpack.c.l.bf16 %v1039
        %v1042 = vunpack.c.l.bf16 %v1040
        %v1043 = vsel %vm673, %v1041, 0.0
        %v1044 = vsel %vm674, %v1042, 0.0
        %s1045 = scalar_lea.vmem [#allocation4], 128
        %1046 = vst.msk [vmem:[%s1045] sm:$0xff] %vm576, %v1043
        %1047 = vst.msk [vmem:[%s1045 + $0x8] sm:$0xff] %vm576, %v1044
        %s1048 = scalar_lea.vmem %s449, 72 [#allocation13]
        %v1049 = vld [vmem:[%s1048] sm:$0xf]
        %v1050 = vld [vmem:[%s1048 + $0x4] sm:$0xf]
        %v1051 = vunpack.c.l.bf16 %v1049
        %v1052 = vunpack.c.l.bf16 %v1050
        %v1053 = vsel %vm684, %v1051, 0.0
        %v1054 = vsel %vm685, %v1052, 0.0
        %s1055 = scalar_lea.vmem [#allocation4], 144
        %1056 = vst.msk [vmem:[%s1055] sm:$0xff] %vm576, %v1053
        %1057 = vst.msk [vmem:[%s1055 + $0x8] sm:$0xff] %vm576, %v1054
        %s1058 = scalar_lea.vmem %s449, 80 [#allocation13]
        %v1059 = vld [vmem:[%s1058] sm:$0xf]
        %v1060 = vld [vmem:[%s1058 + $0x4] sm:$0xf]
        %v1061 = vunpack.c.l.bf16 %v1059
        %v1062 = vunpack.c.l.bf16 %v1060
        %v1063 = vsel %vm670, %v1061, 0.0
        %v1064 = vsel %vm671, %v1062, 0.0
        %s1065 = scalar_lea.vmem [#allocation4], 160
        %1066 = vst.msk [vmem:[%s1065] sm:$0xff] %vm576, %v1063
        %1067 = vst.msk [vmem:[%s1065 + $0x8] sm:$0xff] %vm576, %v1064
        %s1068 = scalar_lea.vmem %s449, 88 [#allocation13]
        %v1069 = vld [vmem:[%s1068] sm:$0xf]
        %v1070 = vld [vmem:[%s1068 + $0x4] sm:$0xf]
        %v1071 = vunpack.c.l.bf16 %v1069
        %v1072 = vunpack.c.l.bf16 %v1070
        %v1073 = vsel %vm706, %v1071, 0.0
        %v1074 = vsel %vm707, %v1072, 0.0
        %s1075 = scalar_lea.vmem [#allocation4], 176
        %1076 = vst.msk [vmem:[%s1075] sm:$0xff] %vm576, %v1073
        %1077 = vst.msk [vmem:[%s1075 + $0x8] sm:$0xff] %vm576, %v1074
        %s1078 = scalar_lea.vmem %s449, 96 [#allocation13]
        %v1079 = vld [vmem:[%s1078] sm:$0xf]
        %v1080 = vld [vmem:[%s1078 + $0x4] sm:$0xf]
        %v1081 = vunpack.c.l.bf16 %v1079
        %v1082 = vunpack.c.l.bf16 %v1080
        %v1083 = vsel %vm719, %v1081, 0.0
        %v1084 = vsel %vm720, %v1082, 0.0
        %s1085 = scalar_lea.vmem [#allocation4], 192
        %1086 = vst.msk [vmem:[%s1085] sm:$0xff] %vm576, %v1083
        %1087 = vst.msk [vmem:[%s1085 + $0x8] sm:$0xff] %vm576, %v1084
        %s1088 = scalar_lea.vmem %s449, 104 [#allocation13]
        %v1089 = vld [vmem:[%s1088] sm:$0xf]
        %v1090 = vld [vmem:[%s1088 + $0x4] sm:$0xf]
        %v1091 = vunpack.c.l.bf16 %v1089
        %v1092 = vunpack.c.l.bf16 %v1090
        %vm1093 = vmand %vm670, %vm1018
        %vm1094 = vmand %vm671, %vm1018
        %v1095 = vsel %vm1093, %v1091, 0.0
        %v1096 = vsel %vm1094, %v1092, 0.0
        %s1097 = scalar_lea.vmem [#allocation4], 208
        %1098 = vst.msk [vmem:[%s1097] sm:$0xff] %vm576, %v1095
        %1099 = vst.msk [vmem:[%s1097 + $0x8] sm:$0xff] %vm576, %v1096
        %s1100 = scalar_lea.vmem %s449, 112 [#allocation13]
        %v1101 = vld [vmem:[%s1100] sm:$0xf]
        %v1102 = vld [vmem:[%s1100 + $0x4] sm:$0xf]
        %v1103 = vunpack.c.l.bf16 %v1101
        %v1104 = vunpack.c.l.bf16 %v1102
        %vm1105 = vmand %vm569, %vm948
        %vm1106 = vmand %vm570, %vm948
        %v1107 = vsel %vm1105, %v1103, 0.0
        %v1108 = vsel %vm1106, %v1104, 0.0
        %s1109 = scalar_lea.vmem [#allocation4], 224
        %1110 = vst.msk [vmem:[%s1109] sm:$0xff] %vm576, %v1107
        %1111 = vst.msk [vmem:[%s1109 + $0x8] sm:$0xff] %vm576, %v1108
        %s1112 = scalar_lea.vmem %s449, 120 [#allocation13]
        %v1113 = vld [vmem:[%s1112] sm:$0xf]
        %v1114 = vld [vmem:[%s1112 + $0x4] sm:$0xf]
        %v1115 = vunpack.c.l.bf16 %v1113
        %v1116 = vunpack.c.l.bf16 %v1114
        %v1117 = vsel %vm731, %v1115, 0.0
        %v1118 = vsel %vm732, %v1116, 0.0
        %s1119 = scalar_lea.vmem [#allocation4], 240
        %1120 = vst.msk [vmem:[%s1119] sm:$0xff] %vm576, %v1117
        %1121 = vst.msk [vmem:[%s1119 + $0x8] sm:$0xff] %vm576, %v1118
        %s1122 = scalar_lea.vmem %s449, 128 [#allocation13]
        %v1123 = vld [vmem:[%s1122] sm:$0xf]
        %v1124 = vld [vmem:[%s1122 + $0x4] sm:$0xf]
        %v1125 = vunpack.c.l.bf16 %v1123
        %v1126 = vunpack.c.l.bf16 %v1124
        %v1127 = vsel %vm572, %v1125, 0.0
        %v1128 = vsel %vm573, %v1126, 0.0
        %s1129 = scalar_lea.vmem [#allocation4], 256
        %1130 = vst.msk [vmem:[%s1129] sm:$0xff] %vm576, %v1127
        %1131 = vst.msk [vmem:[%s1129 + $0x8] sm:$0xff] %vm576, %v1128
        %s1132 = scalar_lea.vmem %s449, 136 [#allocation13]
        %v1133 = vld [vmem:[%s1132] sm:$0xf]
        %v1134 = vld [vmem:[%s1132 + $0x4] sm:$0xf]
        %v1135 = vunpack.c.l.bf16 %v1133
        %v1136 = vunpack.c.l.bf16 %v1134
        %v1137 = vsel %vm569, %v1135, 0.0
        %v1138 = vsel %vm570, %v1136, 0.0
        %s1139 = scalar_lea.vmem [#allocation4], 272
        %1140 = vst.msk [vmem:[%s1139] sm:$0xff] %vm576, %v1137
        %1141 = vst.msk [vmem:[%s1139 + $0x8] sm:$0xff] %vm576, %v1138
        %s1142 = scalar_lea.vmem %s449, 144 [#allocation13]
        %v1143 = vld [vmem:[%s1142] sm:$0xf]
        %v1144 = vld [vmem:[%s1142 + $0x4] sm:$0xf]
        %v1145 = vunpack.c.l.bf16 %v1143
        %v1146 = vunpack.c.l.bf16 %v1144
        %v1147 = vsel %vm595, %v1145, 0.0
        %v1148 = vsel %vm596, %v1146, 0.0
        %s1149 = scalar_lea.vmem [#allocation4], 288
        %1150 = vst.msk [vmem:[%s1149] sm:$0xff] %vm576, %v1147
        %1151 = vst.msk [vmem:[%s1149 + $0x8] sm:$0xff] %vm576, %v1148
        %s1152 = scalar_lea.vmem %s449, 152 [#allocation13]
        %v1153 = vld [vmem:[%s1152] sm:$0xf]
        %v1154 = vld [vmem:[%s1152 + $0x4] sm:$0xf]
        %v1155 = vunpack.c.l.bf16 %v1153
        %v1156 = vunpack.c.l.bf16 %v1154
        %v1157 = vsel %vm773, %v1155, 0.0
        %v1158 = vsel %vm774, %v1156, 0.0
        %s1159 = scalar_lea.vmem [#allocation4], 304
        %1160 = vst.msk [vmem:[%s1159] sm:$0xff] %vm576, %v1157
        %1161 = vst.msk [vmem:[%s1159 + $0x8] sm:$0xff] %vm576, %v1158
        %s1162 = scalar_lea.vmem %s449, 160 [#allocation13]
        %v1163 = vld [vmem:[%s1162] sm:$0xf]
        %v1164 = vld [vmem:[%s1162 + $0x4] sm:$0xf]
        %v1165 = vunpack.c.l.bf16 %v1163
        %v1166 = vunpack.c.l.bf16 %v1164
        %vm1167 = vmand %vm569, %vm1018
        %vm1168 = vmand %vm570, %vm1018
        %v1169 = vsel %vm1167, %v1165, 0.0
        %v1170 = vsel %vm1168, %v1166, 0.0
        %s1171 = scalar_lea.vmem [#allocation4], 320
        %1172 = vst.msk [vmem:[%s1171] sm:$0xff] %vm576, %v1169
        %1173 = vst.msk [vmem:[%s1171 + $0x8] sm:$0xff] %vm576, %v1170
        %s1174 = scalar_lea.vmem %s449, 168 [#allocation13]
        %v1175 = vld [vmem:[%s1174] sm:$0xf]
        %v1176 = vld [vmem:[%s1174 + $0x4] sm:$0xf]
        %v1177 = vunpack.c.l.bf16 %v1175
        %v1178 = vunpack.c.l.bf16 %v1176
        %v1179 = vsel %vm948, %v1177, 0.0
        %v1180 = vsel %vm948, %v1178, 0.0
        %s1181 = scalar_lea.vmem [#allocation4], 336
        %1182 = vst.msk [vmem:[%s1181] sm:$0xff] %vm576, %v1179
        %1183 = vst.msk [vmem:[%s1181 + $0x8] sm:$0xff] %vm576, %v1180
        %s1184 = scalar_lea.vmem %s449, 176 [#allocation13]
        %v1185 = vld [vmem:[%s1184] sm:$0xf]
        %v1186 = vld [vmem:[%s1184 + $0x4] sm:$0xf]
        %v1187 = vunpack.c.l.bf16 %v1185
        %v1188 = vunpack.c.l.bf16 %v1186
        %v1189 = vsel %vm672, %v1187, 0.0
        %v1190 = vsel %vm672, %v1188, 0.0
        %s1191 = scalar_lea.vmem [#allocation4], 352
        %1192 = vst.msk [vmem:[%s1191] sm:$0xff] %vm576, %v1189
        %1193 = vst.msk [vmem:[%s1191 + $0x8] sm:$0xff] %vm576, %v1190
        %s1194 = scalar_lea.vmem %s449, 184 [#allocation13]
        %v1195 = vld [vmem:[%s1194] sm:$0xf]
        %v1196 = vld [vmem:[%s1194 + $0x4] sm:$0xf]
        %v1197 = vunpack.c.l.bf16 %v1195
        %v1198 = vunpack.c.l.bf16 %v1196
        %v1199 = vsel %vm571, %v1197, 0.0
        %v1200 = vsel %vm571, %v1198, 0.0
        %s1201 = scalar_lea.vmem [#allocation4], 368
        %1202 = vst.msk [vmem:[%s1201] sm:$0xff] %vm576, %v1199
        %1203 = vst.msk [vmem:[%s1201 + $0x8] sm:$0xff] %vm576, %v1200
        %s1204 = scalar_lea.vmem %s449, 192 [#allocation13]
        %v1205 = vld [vmem:[%s1204] sm:$0xf]
        %v1206 = vld [vmem:[%s1204 + $0x4] sm:$0xf]
        %v1207 = vunpack.c.l.bf16 %v1205
        %v1208 = vunpack.c.l.bf16 %v1206
        %s1209 = scalar_lea.vmem [#allocation4], 384
        %1210 = vst.msk [vmem:[%s1209] sm:$0xff] %vm576, %v1207
        %1211 = vst.msk [vmem:[%s1209 + $0x8] sm:$0xff] %vm576, %v1208
        %s1212 = scalar_lea.vmem %s449, 200 [#allocation13]
        %v1213 = vld [vmem:[%s1212] sm:$0xf]
        %v1214 = vld [vmem:[%s1212 + $0x4] sm:$0xf]
        %v1215 = vunpack.c.l.bf16 %v1213
        %v1216 = vunpack.c.l.bf16 %v1214
        %v1217 = vsel %vm594, %v1215, 0.0
        %v1218 = vsel %vm594, %v1216, 0.0
        %s1219 = scalar_lea.vmem [#allocation4], 400
        %1220 = vst.msk [vmem:[%s1219] sm:$0xff] %vm576, %v1217
        %1221 = vst.msk [vmem:[%s1219 + $0x8] sm:$0xff] %vm576, %v1218
        %s1222 = scalar_lea.vmem %s449, 208 [#allocation13]
        %v1223 = vld [vmem:[%s1222] sm:$0xf]
        %v1224 = vld [vmem:[%s1222 + $0x4] sm:$0xf]
        %v1225 = vunpack.c.l.bf16 %v1223
        %v1226 = vunpack.c.l.bf16 %v1224
        %v1227 = vsel %vm718, %v1225, 0.0
        %v1228 = vsel %vm718, %v1226, 0.0
        %s1229 = scalar_lea.vmem [#allocation4], 416
        %1230 = vst.msk [vmem:[%s1229] sm:$0xff] %vm576, %v1227
        %1231 = vst.msk [vmem:[%s1229 + $0x8] sm:$0xff] %vm576, %v1228
        %s1232 = scalar_lea.vmem %s449, 216 [#allocation13]
        %v1233 = vld [vmem:[%s1232] sm:$0xf]
        %v1234 = vld [vmem:[%s1232 + $0x4] sm:$0xf]
        %v1235 = vunpack.c.l.bf16 %v1233
        %v1236 = vunpack.c.l.bf16 %v1234
        %v1237 = vsel %vm1018, %v1235, 0.0
        %v1238 = vsel %vm1018, %v1236, 0.0
        %s1239 = scalar_lea.vmem [#allocation4], 432
        %1240 = vst.msk [vmem:[%s1239] sm:$0xff] %vm576, %v1237
        %1241 = vst.msk [vmem:[%s1239 + $0x8] sm:$0xff] %vm576, %v1238
        %s1242 = scalar_lea.vmem %s449, 224 [#allocation13]
        %v1243 = vld [vmem:[%s1242] sm:$0xf]
        %v1244 = vld [vmem:[%s1242 + $0x4] sm:$0xf]
        %v1245 = vunpack.c.l.bf16 %v1243
        %v1246 = vunpack.c.l.bf16 %v1244
        %vm1247 = vmand %vm635, %vm948
        %vm1248 = vmand %vm636, %vm948
        %v1249 = vsel %vm1247, %v1245, 0.0
        %v1250 = vsel %vm1248, %v1246, 0.0
        %s1251 = scalar_lea.vmem [#allocation4], 448
        %1252 = vst.msk [vmem:[%s1251] sm:$0xff] %vm576, %v1249
        %1253 = vst.msk [vmem:[%s1251 + $0x8] sm:$0xff] %vm576, %v1250
        %s1254 = scalar_lea.vmem %s449, 232 [#allocation13]
        %v1255 = vld [vmem:[%s1254] sm:$0xf]
        %v1256 = vld [vmem:[%s1254 + $0x4] sm:$0xf]
        %v1257 = vunpack.c.l.bf16 %v1255
        %v1258 = vunpack.c.l.bf16 %v1256
        %v1259 = vsel %vm833, %v1257, 0.0
        %v1260 = vsel %vm834, %v1258, 0.0
        %s1261 = scalar_lea.vmem [#allocation4], 464
        %1262 = vst.msk [vmem:[%s1261] sm:$0xff] %vm576, %v1259
        %1263 = vst.msk [vmem:[%s1261 + $0x8] sm:$0xff] %vm576, %v1260
        %s1264 = scalar_lea.vmem %s449, 240 [#allocation13]
        %v1265 = vld [vmem:[%s1264] sm:$0xf]
        %v1266 = vld [vmem:[%s1264 + $0x4] sm:$0xf]
        %v1267 = vunpack.c.l.bf16 %v1265
        %v1268 = vunpack.c.l.bf16 %v1266
        %v1269 = vsel %vm637, %v1267, 0.0
        %v1270 = vsel %vm638, %v1268, 0.0
        %s1271 = scalar_lea.vmem [#allocation4], 480
        %1272 = vst.msk [vmem:[%s1271] sm:$0xff] %vm576, %v1269
        %1273 = vst.msk [vmem:[%s1271 + $0x8] sm:$0xff] %vm576, %v1270
        %s1274 = scalar_lea.vmem %s449, 248 [#allocation13]
        %v1275 = vld [vmem:[%s1274] sm:$0xf]
        %v1276 = vld [vmem:[%s1274 + $0x4] sm:$0xf]
        %v1277 = vunpack.c.l.bf16 %v1275
        %v1278 = vunpack.c.l.bf16 %v1276
        %v1279 = vsel %vm635, %v1277, 0.0
        %v1280 = vsel %vm636, %v1278, 0.0
        %s1281 = scalar_lea.vmem [#allocation4], 496
        %1282 = vst.msk [vmem:[%s1281] sm:$0xff] %vm576, %v1279
        %1283 = vst.msk [vmem:[%s1281 + $0x8] sm:$0xff] %vm576, %v1280
        %s1284 = scalar_lea.vmem %s449, 256 [#allocation13]
        %v1285 = vld [vmem:[%s1284] sm:$0xf]
        %v1286 = vld [vmem:[%s1284 + $0x4] sm:$0xf]
        %v1287 = vunpack.c.l.bf16 %v1285
        %v1288 = vunpack.c.l.bf16 %v1286
        %v1289 = vsel %vm659, %v1287, 0.0
        %v1290 = vsel %vm660, %v1288, 0.0
        %s1291 = scalar_lea.vmem [#allocation4], 512
        %1292 = vst.msk [vmem:[%s1291] sm:$0xff] %vm576, %v1289
        %1293 = vst.msk [vmem:[%s1291 + $0x8] sm:$0xff] %vm576, %v1290
        %s1294 = scalar_lea.vmem %s449, 264 [#allocation13]
        %v1295 = vld [vmem:[%s1294] sm:$0xf]
        %v1296 = vld [vmem:[%s1294 + $0x4] sm:$0xf]
        %v1297 = vunpack.c.l.bf16 %v1295
        %v1298 = vunpack.c.l.bf16 %v1296
        %v1299 = vsel %vm875, %v1297, 0.0
        %v1300 = vsel %vm876, %v1298, 0.0
        %s1301 = scalar_lea.vmem [#allocation4], 528
        %1302 = vst.msk [vmem:[%s1301] sm:$0xff] %vm576, %v1299
        %1303 = vst.msk [vmem:[%s1301 + $0x8] sm:$0xff] %vm576, %v1300
        %s1304 = scalar_lea.vmem %s449, 272 [#allocation13]
        %v1305 = vld [vmem:[%s1304] sm:$0xf]
        %v1306 = vld [vmem:[%s1304 + $0x4] sm:$0xf]
        %v1307 = vunpack.c.l.bf16 %v1305
        %v1308 = vunpack.c.l.bf16 %v1306
        %vm1309 = vmand %vm635, %vm1018
        %vm1310 = vmand %vm636, %vm1018
        %v1311 = vsel %vm1309, %v1307, 0.0
        %v1312 = vsel %vm1310, %v1308, 0.0
        %s1313 = scalar_lea.vmem [#allocation4], 544
        %1314 = vst.msk [vmem:[%s1313] sm:$0xff] %vm576, %v1311
        %1315 = vst.msk [vmem:[%s1313 + $0x8] sm:$0xff] %vm576, %v1312
        %s1316 = scalar_lea.vmem %s449, 280 [#allocation13]
        %v1317 = vld [vmem:[%s1316] sm:$0xf]
        %v1318 = vld [vmem:[%s1316 + $0x4] sm:$0xf]
        %v1319 = vunpack.c.l.bf16 %v1317
        %v1320 = vunpack.c.l.bf16 %v1318
        %vm1321 = vmand %vm887, %vm948
        %vm1322 = vmand %vm888, %vm948
        %v1323 = vsel %vm1321, %v1319, 0.0
        %v1324 = vsel %vm1322, %v1320, 0.0
        %s1325 = scalar_lea.vmem [#allocation4], 560
        %1326 = vst.msk [vmem:[%s1325] sm:$0xff] %vm576, %v1323
        %1327 = vst.msk [vmem:[%s1325 + $0x8] sm:$0xff] %vm576, %v1324
        %s1328 = scalar_lea.vmem %s449, 288 [#allocation13]
        %v1329 = vld [vmem:[%s1328] sm:$0xf]
        %v1330 = vld [vmem:[%s1328 + $0x4] sm:$0xf]
        %v1331 = vunpack.c.l.bf16 %v1329
        %v1332 = vunpack.c.l.bf16 %v1330
        %v1333 = vsel %vm889, %v1331, 0.0
        %v1334 = vsel %vm890, %v1332, 0.0
        %s1335 = scalar_lea.vmem [#allocation4], 576
        %1336 = vst.msk [vmem:[%s1335] sm:$0xff] %vm576, %v1333
        %1337 = vst.msk [vmem:[%s1335 + $0x8] sm:$0xff] %vm576, %v1334
        %s1338 = scalar_lea.vmem %s449, 296 [#allocation13]
        %v1339 = vld [vmem:[%s1338] sm:$0xf]
        %v1340 = vld [vmem:[%s1338 + $0x4] sm:$0xf]
        %v1341 = vunpack.c.l.bf16 %v1339
        %v1342 = vunpack.c.l.bf16 %v1340
        %v1343 = vsel %vm901, %v1341, 0.0
        %v1344 = vsel %vm902, %v1342, 0.0
        %s1345 = scalar_lea.vmem [#allocation4], 592
        %1346 = vst.msk [vmem:[%s1345] sm:$0xff] %vm576, %v1343
        %1347 = vst.msk [vmem:[%s1345 + $0x8] sm:$0xff] %vm576, %v1344
        %s1348 = scalar_lea.vmem %s449, 304 [#allocation13]
        %v1349 = vld [vmem:[%s1348] sm:$0xf]
        %v1350 = vld [vmem:[%s1348 + $0x4] sm:$0xf]
        %v1351 = vunpack.c.l.bf16 %v1349
        %v1352 = vunpack.c.l.bf16 %v1350
        %v1353 = vsel %vm887, %v1351, 0.0
        %v1354 = vsel %vm888, %v1352, 0.0
        %s1355 = scalar_lea.vmem [#allocation4], 608
        %1356 = vst.msk [vmem:[%s1355] sm:$0xff] %vm576, %v1353
        %1357 = vst.msk [vmem:[%s1355 + $0x8] sm:$0xff] %vm576, %v1354
        %s1358 = scalar_lea.vmem %s449, 312 [#allocation13]
        %v1359 = vld [vmem:[%s1358] sm:$0xf]
        %v1360 = vld [vmem:[%s1358 + $0x4] sm:$0xf]
        %v1361 = vunpack.c.l.bf16 %v1359
        %v1362 = vunpack.c.l.bf16 %v1360
        %v1363 = vsel %vm923, %v1361, 0.0
        %v1364 = vsel %vm924, %v1362, 0.0
        %s1365 = scalar_lea.vmem [#allocation4], 624
        %1366 = vst.msk [vmem:[%s1365] sm:$0xff] %vm576, %v1363
        %1367 = vst.msk [vmem:[%s1365 + $0x8] sm:$0xff] %vm576, %v1364
        %s1368 = scalar_lea.vmem %s449, 320 [#allocation13]
        %v1369 = vld [vmem:[%s1368] sm:$0xf]
        %v1370 = vld [vmem:[%s1368 + $0x4] sm:$0xf]
        %v1371 = vunpack.c.l.bf16 %v1369
        %v1372 = vunpack.c.l.bf16 %v1370
        %v1373 = vsel %vm935, %v1371, 0.0
        %v1374 = vsel %vm936, %v1372, 0.0
        %s1375 = scalar_lea.vmem [#allocation4], 640
        %1376 = vst.msk [vmem:[%s1375] sm:$0xff] %vm576, %v1373
        %1377 = vst.msk [vmem:[%s1375 + $0x8] sm:$0xff] %vm576, %v1374
        %s1378 = scalar_lea.vmem %s449, 328 [#allocation13]
        %v1379 = vld [vmem:[%s1378] sm:$0xf]
        %v1380 = vld [vmem:[%s1378 + $0x4] sm:$0xf]
        %v1381 = vunpack.c.l.bf16 %v1379
        %v1382 = vunpack.c.l.bf16 %v1380
        %vm1383 = vmand %vm887, %vm1018
        %vm1384 = vmand %vm888, %vm1018
        %v1385 = vsel %vm1383, %v1381, 0.0
        %v1386 = vsel %vm1384, %v1382, 0.0
        %s1387 = scalar_lea.vmem [#allocation4], 656
        %1388 = vst.msk [vmem:[%s1387] sm:$0xff] %vm576, %v1385
        %1389 = vst.msk [vmem:[%s1387 + $0x8] sm:$0xff] %vm576, %v1386
        %s1390 = scalar_lea.vmem %s449, 336 [#allocation13]
        %v1391 = vld [vmem:[%s1390] sm:$0xf]
        %v1392 = vld [vmem:[%s1390 + $0x4] sm:$0xf]
        %v1393 = vunpack.c.l.bf16 %v1391
        %v1394 = vunpack.c.l.bf16 %v1392
        %vm1395 = vcmp.lt.s32.totalorder %v561, 13
        %vm1396 = vcmp.lt.s32.totalorder %v562, 13
        %vm1397 = vmand %vm1395, %vm948
        %vm1398 = vmand %vm1396, %vm948
        %v1399 = vsel %vm1397, %v1393, 0.0
        %v1400 = vsel %vm1398, %v1394, 0.0
        %s1401 = scalar_lea.vmem [#allocation4], 672
        %1402 = vst.msk [vmem:[%s1401] sm:$0xff] %vm576, %v1399
        %1403 = vst.msk [vmem:[%s1401 + $0x8] sm:$0xff] %vm576, %v1400
        %s1404 = scalar_lea.vmem %s449, 344 [#allocation13]
        %v1405 = vld [vmem:[%s1404] sm:$0xf]
        %v1406 = vld [vmem:[%s1404 + $0x4] sm:$0xf]
        %v1407 = vunpack.c.l.bf16 %v1405
        %v1408 = vunpack.c.l.bf16 %v1406
        %vm1409 = vmand %vm1395, %vm672
        %vm1410 = vmand %vm1396, %vm672
        %v1411 = vsel %vm1409, %v1407, 0.0
        %v1412 = vsel %vm1410, %v1408, 0.0
        %s1413 = scalar_lea.vmem [#allocation4], 688
        %1414 = vst.msk [vmem:[%s1413] sm:$0xff] %vm576, %v1411
        %1415 = vst.msk [vmem:[%s1413 + $0x8] sm:$0xff] %vm576, %v1412
        %s1416 = scalar_lea.vmem %s449, 352 [#allocation13]
        %v1417 = vld [vmem:[%s1416] sm:$0xf]
        %v1418 = vld [vmem:[%s1416 + $0x4] sm:$0xf]
        %v1419 = vunpack.c.l.bf16 %v1417
        %v1420 = vunpack.c.l.bf16 %v1418
        %vm1421 = vmand %vm1395, %vm571
        %vm1422 = vmand %vm1396, %vm571
        %v1423 = vsel %vm1421, %v1419, 0.0
        %v1424 = vsel %vm1422, %v1420, 0.0
        %s1425 = scalar_lea.vmem [#allocation4], 704
        %1426 = vst.msk [vmem:[%s1425] sm:$0xff] %vm576, %v1423
        %1427 = vst.msk [vmem:[%s1425 + $0x8] sm:$0xff] %vm576, %v1424
        %s1428 = scalar_lea.vmem %s449, 360 [#allocation13]
        %v1429 = vld [vmem:[%s1428] sm:$0xf]
        %v1430 = vld [vmem:[%s1428 + $0x4] sm:$0xf]
        %v1431 = vunpack.c.l.bf16 %v1429
        %v1432 = vunpack.c.l.bf16 %v1430
        %v1433 = vsel %vm1395, %v1431, 0.0
        %v1434 = vsel %vm1396, %v1432, 0.0
        %s1435 = scalar_lea.vmem [#allocation4], 720
        %1436 = vst.msk [vmem:[%s1435] sm:$0xff] %vm576, %v1433
        %1437 = vst.msk [vmem:[%s1435 + $0x8] sm:$0xff] %vm576, %v1434
        %s1438 = scalar_lea.vmem %s449, 368 [#allocation13]
        %v1439 = vld [vmem:[%s1438] sm:$0xf]
        %v1440 = vld [vmem:[%s1438 + $0x4] sm:$0xf]
        %v1441 = vunpack.c.l.bf16 %v1439
        %v1442 = vunpack.c.l.bf16 %v1440
        %vm1443 = vmand %vm1395, %vm594
        %vm1444 = vmand %vm1396, %vm594
        %v1445 = vsel %vm1443, %v1441, 0.0
        %v1446 = vsel %vm1444, %v1442, 0.0
        %s1447 = scalar_lea.vmem [#allocation4], 736
        %1448 = vst.msk [vmem:[%s1447] sm:$0xff] %vm576, %v1445
        %1449 = vst.msk [vmem:[%s1447 + $0x8] sm:$0xff] %vm576, %v1446
        %s1450 = scalar_lea.vmem %s449, 376 [#allocation13]
        %v1451 = vld [vmem:[%s1450] sm:$0xf]
        %v1452 = vld [vmem:[%s1450 + $0x4] sm:$0xf]
        %v1453 = vunpack.c.l.bf16 %v1451
        %v1454 = vunpack.c.l.bf16 %v1452
        %vm1455 = vmand %vm1395, %vm718
        %vm1456 = vmand %vm1396, %vm718
        %v1457 = vsel %vm1455, %v1453, 0.0
        %v1458 = vsel %vm1456, %v1454, 0.0
        %s1459 = scalar_lea.vmem [#allocation4], 752
        %1460 = vst.msk [vmem:[%s1459] sm:$0xff] %vm576, %v1457
        %1461 = vst.msk [vmem:[%s1459 + $0x8] sm:$0xff] %vm576, %v1458
        %s1462 = scalar_lea.vmem %s449, 384 [#allocation13]
        %v1463 = vld [vmem:[%s1462] sm:$0xf]
        %v1464 = vld [vmem:[%s1462 + $0x4] sm:$0xf]
        %v1465 = vunpack.c.l.bf16 %v1463
        %v1466 = vunpack.c.l.bf16 %v1464
        %vm1467 = vmand %vm1395, %vm1018
        %vm1468 = vmand %vm1396, %vm1018
        %v1469 = vsel %vm1467, %v1465, 0.0
        %v1470 = vsel %vm1468, %v1466, 0.0
        %s1471 = scalar_lea.vmem [#allocation4], 768
        %1472 = vst.msk [vmem:[%s1471] sm:$0xff] %vm576, %v1469
        %1473 = vst.msk [vmem:[%s1471 + $0x8] sm:$0xff] %vm576, %v1470
        %v1474 = vrot.slane %v528, 7
        %v1475 = vrot.slane %v529, 7
        %vm1476 = vcmp.lt.s32.totalorder %v561, 1
        %v1477 = vsel %vm1476, %v1474, %v1475
        %v1478 = vsel %vm1476, %v1475, %v1474
        %vm1479 = vcmask 1047680
        %1480 = vrot.lane.b32.xlu0 %v1478, 16
        %v1481 = vpop.permute.xlu0 %1480
        %v1482 = vsel %vm1479, %v1481, %v1478
        %1483 = vrot.lane.b32.xlu0 %v1477, 16
        %v1484 = vpop.permute.xlu0 %1483
        %v1485 = vsel %vm1479, %v1484, %v1477
        %1486 = vrot.lane.b32.xlu0 %v1482, 16
        %v1487 = vpop.permute.xlu0 %1486
        %1488 = vrot.lane.b32.xlu0 %v1485, 16
        %v1489 = vpop.permute.xlu0 %1488
        %v1490 = vsel %vm1479, %v1487, %v1478
        %v1491 = vsel %vm1479, %v1489, %v1477
        %v1492 = vld [vmem:[#allocation2] sm:$0xff]
        %v1493 = vld [vmem:[#allocation2 + $0x8] sm:$0xff]
        %1496 = vrot.lane.b32.xlu0 %v1490, 113
        %v1497 = vpop.permute.xlu0 %1496
        %1498 = vrot.lane.b32.xlu0 %v1491, 113
        %v1499 = vpop.permute.xlu0 %1498
        %v1502 = vmul.f32 %v1492, %v1497
        %v1503 = vmul.f32 %v1493, %v1499
        %v1504 = vld [vmem:[%s586] sm:$0xff]
        %v1505 = vld [vmem:[%s586 + $0x8] sm:$0xff]
        %v1506 = vmul.f32 %v1504, %v1478
        %v1507 = vmul.f32 %v1505, %v1477
        %v1508 = vadd.f32 %v1502, %v1506
        %v1509 = vadd.f32 %v1503, %v1507
        %v1510 = vld [vmem:[%s599] sm:$0xff]
        %v1511 = vld [vmem:[%s599 + $0x8] sm:$0xff]
        %1512 = vrot.lane.b32.xlu0 %v1490, 127
        %v1513 = vpop.permute.xlu0 %1512
        %1514 = vrot.lane.b32.xlu0 %v1491, 127
        %v1515 = vpop.permute.xlu0 %1514
        %v1518 = vmul.f32 %v1510, %v1513
        %v1519 = vmul.f32 %v1511, %v1515
        %v1520 = vadd.f32 %v1508, %v1518
        %v1521 = vadd.f32 %v1509, %v1519
        %1522 = vrot.lane.b32.xlu0 %v528, 16
        %v1523 = vpop.permute.xlu0 %1522
        %v1524 = vsel %vm1479, %v1523, %v528
        %1525 = vrot.lane.b32.xlu0 %v529, 16
        %v1526 = vpop.permute.xlu0 %1525
        %v1527 = vsel %vm1479, %v1526, %v529
        %1528 = vrot.lane.b32.xlu0 %v1524, 16
        %v1529 = vpop.permute.xlu0 %1528
        %1530 = vrot.lane.b32.xlu0 %v1527, 16
        %v1531 = vpop.permute.xlu0 %1530
        %v1532 = vsel %vm1479, %v1529, %v528
        %v1533 = vsel %vm1479, %v1531, %v529
        %v1534 = vld [vmem:[%s609] sm:$0xff]
        %v1535 = vld [vmem:[%s609 + $0x8] sm:$0xff]
        %1538 = vrot.lane.b32.xlu0 %v1532, 113
        %v1539 = vpop.permute.xlu0 %1538
        %1540 = vrot.lane.b32.xlu0 %v1533, 113
        %v1541 = vpop.permute.xlu0 %1540
        %v1544 = vmul.f32 %v1534, %v1539
        %v1545 = vmul.f32 %v1535, %v1541
        %v1546 = vld [vmem:[%s617] sm:$0xff]
        %v1547 = vld [vmem:[%s617 + $0x8] sm:$0xff]
        %v1548 = vmul.f32 %v1546, %v528
        %v1549 = vmul.f32 %v1547, %v529
        %v1550 = vadd.f32 %v1544, %v1548
        %v1551 = vadd.f32 %v1545, %v1549
        %v1552 = vld [vmem:[%s627] sm:$0xff]
        %v1553 = vld [vmem:[%s627 + $0x8] sm:$0xff]
        %1554 = vrot.lane.b32.xlu0 %v1532, 127
        %v1555 = vpop.permute.xlu0 %1554
        %1556 = vrot.lane.b32.xlu0 %v1533, 127
        %v1557 = vpop.permute.xlu0 %1556
        %v1560 = vmul.f32 %v1552, %v1555
        %v1561 = vmul.f32 %v1553, %v1557
        %v1562 = vadd.f32 %v1550, %v1560
        %v1563 = vadd.f32 %v1551, %v1561
        %v1564 = vadd.f32 %v1520, %v1562
        %v1565 = vadd.f32 %v1521, %v1563
        %v1566 = vrot.slane %v528, 1
        %v1567 = vrot.slane %v529, 1
        %vm1568 = vcmp.lt.s32.totalorder %v561, 7
        %v1569 = vsel %vm1568, %v1566, %v1567
        %v1570 = vsel %vm1568, %v1567, %v1566
        %1571 = vrot.lane.b32.xlu0 %v1569, 16
        %v1572 = vpop.permute.xlu0 %1571
        %v1573 = vsel %vm1479, %v1572, %v1569
        %1574 = vrot.lane.b32.xlu0 %v1570, 16
        %v1575 = vpop.permute.xlu0 %1574
        %v1576 = vsel %vm1479, %v1575, %v1570
        %1577 = vrot.lane.b32.xlu0 %v1573, 16
        %v1578 = vpop.permute.xlu0 %1577
        %1579 = vrot.lane.b32.xlu0 %v1576, 16
        %v1580 = vpop.permute.xlu0 %1579
        %v1581 = vsel %vm1479, %v1578, %v1569
        %v1582 = vsel %vm1479, %v1580, %v1570
        %v1583 = vld [vmem:[%s641] sm:$0xff]
        %v1584 = vld [vmem:[%s641 + $0x8] sm:$0xff]
        %1587 = vrot.lane.b32.xlu0 %v1581, 113
        %v1588 = vpop.permute.xlu0 %1587
        %1589 = vrot.lane.b32.xlu0 %v1582, 113
        %v1590 = vpop.permute.xlu0 %1589
        %v1593 = vmul.f32 %v1583, %v1588
        %v1594 = vmul.f32 %v1584, %v1590
        %v1595 = vld [vmem:[%s651] sm:$0xff]
        %v1596 = vld [vmem:[%s651 + $0x8] sm:$0xff]
        %v1597 = vmul.f32 %v1595, %v1569
        %v1598 = vmul.f32 %v1596, %v1570
        %v1599 = vadd.f32 %v1593, %v1597
        %v1600 = vadd.f32 %v1594, %v1598
        %v1601 = vld [vmem:[%s663] sm:$0xff]
        %v1602 = vld [vmem:[%s663 + $0x8] sm:$0xff]
        %1603 = vrot.lane.b32.xlu0 %v1581, 127
        %v1604 = vpop.permute.xlu0 %1603
        %1605 = vrot.lane.b32.xlu0 %v1582, 127
        %v1606 = vpop.permute.xlu0 %1605
        %v1609 = vmul.f32 %v1601, %v1604
        %v1610 = vmul.f32 %v1602, %v1606
        %v1611 = vadd.f32 %v1599, %v1609
        %v1612 = vadd.f32 %v1600, %v1610
        %v1613 = vadd.f32 %v1564, %v1611
        %v1614 = vadd.f32 %v1565, %v1612
        %v1615 = vmul.f32 %v548, %v1613
        %v1616 = vmul.f32 %v549, %v1614
        %v1617 = vadd.f32 %v1615, %v554
        %v1618 = vadd.f32 %v1616, %v555
        %v1619 = vrot.slane %v528, 6
        %v1620 = vrot.slane %v529, 6
        %vm1621 = vcmp.lt.s32.totalorder %v561, 2
        %v1622 = vsel %vm1621, %v1619, %v1620
        %v1623 = vsel %vm1621, %v1620, %v1619
        %1624 = vrot.lane.b32.xlu0 %v1623, 16
        %v1625 = vpop.permute.xlu0 %1624
        %v1626 = vsel %vm1479, %v1625, %v1623
        %1627 = vrot.lane.b32.xlu0 %v1622, 16
        %v1628 = vpop.permute.xlu0 %1627
        %v1629 = vsel %vm1479, %v1628, %v1622
        %1630 = vrot.lane.b32.xlu0 %v1626, 16
        %v1631 = vpop.permute.xlu0 %1630
        %1632 = vrot.lane.b32.xlu0 %v1629, 16
        %v1633 = vpop.permute.xlu0 %1632
        %v1634 = vsel %vm1479, %v1631, %v1623
        %v1635 = vsel %vm1479, %v1633, %v1622
        %v1636 = vld [vmem:[#allocation3] sm:$0xff]
        %v1637 = vld [vmem:[#allocation3 + $0x8] sm:$0xff]
        %1640 = vrot.lane.b32.xlu0 %v1634, 114
        %v1641 = vpop.permute.xlu0 %1640
        %1642 = vrot.lane.b32.xlu0 %v1635, 114
        %v1643 = vpop.permute.xlu0 %1642
        %v1646 = vmul.f32 %v1636, %v1641
        %v1647 = vmul.f32 %v1637, %v1643
        %v1648 = vld [vmem:[%s688] sm:$0xff]
        %v1649 = vld [vmem:[%s688 + $0x8] sm:$0xff]
        %1650 = vrot.lane.b32.xlu0 %v1634, 113
        %v1651 = vpop.permute.xlu0 %1650
        %1652 = vrot.lane.b32.xlu0 %v1635, 113
        %v1653 = vpop.permute.xlu0 %1652
        %v1656 = vmul.f32 %v1648, %v1651
        %v1657 = vmul.f32 %v1649, %v1653
        %v1658 = vadd.f32 %v1646, %v1656
        %v1659 = vadd.f32 %v1647, %v1657
        %v1660 = vld [vmem:[%s698] sm:$0xff]
        %v1661 = vld [vmem:[%s698 + $0x8] sm:$0xff]
        %v1662 = vmul.f32 %v1660, %v1623
        %v1663 = vmul.f32 %v1661, %v1622
        %v1664 = vadd.f32 %v1658, %v1662
        %v1665 = vadd.f32 %v1659, %v1663
        %v1666 = vld [vmem:[%s710] sm:$0xff]
        %v1667 = vld [vmem:[%s710 + $0x8] sm:$0xff]
        %1668 = vrot.lane.b32.xlu0 %v1634, 127
        %v1669 = vpop.permute.xlu0 %1668
        %1670 = vrot.lane.b32.xlu0 %v1635, 127
        %v1671 = vpop.permute.xlu0 %1670
        %v1674 = vmul.f32 %v1666, %v1669
        %v1675 = vmul.f32 %v1667, %v1671
        %v1676 = vadd.f32 %v1664, %v1674
        %v1677 = vadd.f32 %v1665, %v1675
        %v1678 = vld [vmem:[%s723] sm:$0xff]
        %v1679 = vld [vmem:[%s723 + $0x8] sm:$0xff]
        %1680 = vrot.lane.b32.xlu0 %v1634, 126
        %v1681 = vpop.permute.xlu0 %1680
        %1682 = vrot.lane.b32.xlu0 %v1635, 126
        %v1683 = vpop.permute.xlu0 %1682
        %v1686 = vmul.f32 %v1678, %v1681
        %v1687 = vmul.f32 %v1679, %v1683
        %v1688 = vadd.f32 %v1676, %v1686
        %v1689 = vadd.f32 %v1677, %v1687
        %v1690 = vld [vmem:[%s735] sm:$0xff]
        %v1691 = vld [vmem:[%s735 + $0x8] sm:$0xff]
        %1692 = vrot.lane.b32.xlu0 %v1490, 114
        %v1693 = vpop.permute.xlu0 %1692
        %1694 = vrot.lane.b32.xlu0 %v1491, 114
        %v1695 = vpop.permute.xlu0 %1694
        %v1698 = vmul.f32 %v1690, %v1693
        %v1699 = vmul.f32 %v1691, %v1695
        %v1700 = vld [vmem:[%s745] sm:$0xff]
        %v1701 = vld [vmem:[%s745 + $0x8] sm:$0xff]
        %v1702 = vmul.f32 %v1700, %v1497
        %v1703 = vmul.f32 %v1701, %v1499
        %v1704 = vadd.f32 %v1698, %v1702
        %v1705 = vadd.f32 %v1699, %v1703
        %v1706 = vld [vmem:[%s755] sm:$0xff]
        %v1707 = vld [vmem:[%s755 + $0x8] sm:$0xff]
        %v1708 = vmul.f32 %v1706, %v1478
        %v1709 = vmul.f32 %v1707, %v1477
        %v1710 = vadd.f32 %v1704, %v1708
        %v1711 = vadd.f32 %v1705, %v1709
        %v1712 = vld [vmem:[%s765] sm:$0xff]
        %v1713 = vld [vmem:[%s765 + $0x8] sm:$0xff]
        %v1714 = vmul.f32 %v1712, %v1513
        %v1715 = vmul.f32 %v1713, %v1515
        %v1716 = vadd.f32 %v1710, %v1714
        %v1717 = vadd.f32 %v1711, %v1715
        %v1718 = vld [vmem:[%s777] sm:$0xff]
        %v1719 = vld [vmem:[%s777 + $0x8] sm:$0xff]
        %1720 = vrot.lane.b32.xlu0 %v1490, 126
        %v1721 = vpop.permute.xlu0 %1720
        %1722 = vrot.lane.b32.xlu0 %v1491, 126
        %v1723 = vpop.permute.xlu0 %1722
        %v1726 = vmul.f32 %v1718, %v1721
        %v1727 = vmul.f32 %v1719, %v1723
        %v1728 = vadd.f32 %v1716, %v1726
        %v1729 = vadd.f32 %v1717, %v1727
        %v1730 = vadd.f32 %v1688, %v1728
        %v1731 = vadd.f32 %v1689, %v1729
        %v1732 = vld [vmem:[%s787] sm:$0xff]
        %v1733 = vld [vmem:[%s787 + $0x8] sm:$0xff]
        %1734 = vrot.lane.b32.xlu0 %v1532, 114
        %v1735 = vpop.permute.xlu0 %1734
        %1736 = vrot.lane.b32.xlu0 %v1533, 114
        %v1737 = vpop.permute.xlu0 %1736
        %v1740 = vmul.f32 %v1732, %v1735
        %v1741 = vmul.f32 %v1733, %v1737
        %v1742 = vld [vmem:[%s797] sm:$0xff]
        %v1743 = vld [vmem:[%s797 + $0x8] sm:$0xff]
        %v1744 = vmul.f32 %v1742, %v1539
        %v1745 = vmul.f32 %v1743, %v1541
        %v1746 = vadd.f32 %v1740, %v1744
        %v1747 = vadd.f32 %v1741, %v1745
        %v1748 = vld [vmem:[%s805] sm:$0xff]
        %v1749 = vld [vmem:[%s805 + $0x8] sm:$0xff]
        %v1750 = vmul.f32 %v1748, %v528
        %v1751 = vmul.f32 %v1749, %v529
        %v1752 = vadd.f32 %v1746, %v1750
        %v1753 = vadd.f32 %v1747, %v1751
        %v1754 = vld [vmem:[%s815] sm:$0xff]
        %v1755 = vld [vmem:[%s815 + $0x8] sm:$0xff]
        %v1756 = vmul.f32 %v1754, %v1555
        %v1757 = vmul.f32 %v1755, %v1557
        %v1758 = vadd.f32 %v1752, %v1756
        %v1759 = vadd.f32 %v1753, %v1757
        %v1760 = vld [vmem:[%s825] sm:$0xff]
        %v1761 = vld [vmem:[%s825 + $0x8] sm:$0xff]
        %1762 = vrot.lane.b32.xlu0 %v1532, 126
        %v1763 = vpop.permute.xlu0 %1762
        %1764 = vrot.lane.b32.xlu0 %v1533, 126
        %v1765 = vpop.permute.xlu0 %1764
        %v1768 = vmul.f32 %v1760, %v1763
        %v1769 = vmul.f32 %v1761, %v1765
        %v1770 = vadd.f32 %v1758, %v1768
        %v1771 = vadd.f32 %v1759, %v1769
        %v1772 = vadd.f32 %v1730, %v1770
        %v1773 = vadd.f32 %v1731, %v1771
        %v1774 = vld [vmem:[%s837] sm:$0xff]
        %v1775 = vld [vmem:[%s837 + $0x8] sm:$0xff]
        %1776 = vrot.lane.b32.xlu0 %v1581, 114
        %v1777 = vpop.permute.xlu0 %1776
        %1778 = vrot.lane.b32.xlu0 %v1582, 114
        %v1779 = vpop.permute.xlu0 %1778
        %v1782 = vmul.f32 %v1774, %v1777
        %v1783 = vmul.f32 %v1775, %v1779
        %v1784 = vld [vmem:[%s847] sm:$0xff]
        %v1785 = vld [vmem:[%s847 + $0x8] sm:$0xff]
        %v1786 = vmul.f32 %v1784, %v1588
        %v1787 = vmul.f32 %v1785, %v1590
        %v1788 = vadd.f32 %v1782, %v1786
        %v1789 = vadd.f32 %v1783, %v1787
        %v1790 = vld [vmem:[%s857] sm:$0xff]
        %v1791 = vld [vmem:[%s857 + $0x8] sm:$0xff]
        %v1792 = vmul.f32 %v1790, %v1569
        %v1793 = vmul.f32 %v1791, %v1570
        %v1794 = vadd.f32 %v1788, %v1792
        %v1795 = vadd.f32 %v1789, %v1793
        %v1796 = vld [vmem:[%s867] sm:$0xff]
        %v1797 = vld [vmem:[%s867 + $0x8] sm:$0xff]
        %v1798 = vmul.f32 %v1796, %v1604
        %v1799 = vmul.f32 %v1797, %v1606
        %v1800 = vadd.f32 %v1794, %v1798
        %v1801 = vadd.f32 %v1795, %v1799
        %v1802 = vld [vmem:[%s879] sm:$0xff]
        %v1803 = vld [vmem:[%s879 + $0x8] sm:$0xff]
        %1804 = vrot.lane.b32.xlu0 %v1581, 126
        %v1805 = vpop.permute.xlu0 %1804
        %1806 = vrot.lane.b32.xlu0 %v1582, 126
        %v1807 = vpop.permute.xlu0 %1806
        %v1810 = vmul.f32 %v1802, %v1805
        %v1811 = vmul.f32 %v1803, %v1807
        %v1812 = vadd.f32 %v1800, %v1810
        %v1813 = vadd.f32 %v1801, %v1811
        %v1814 = vadd.f32 %v1772, %v1812
        %v1815 = vadd.f32 %v1773, %v1813
        %v1816 = vrot.slane %v528, 2
        %v1817 = vrot.slane %v529, 2
        %vm1818 = vcmp.lt.s32.totalorder %v561, 6
        %v1819 = vsel %vm1818, %v1816, %v1817
        %v1820 = vsel %vm1818, %v1817, %v1816
        %1821 = vrot.lane.b32.xlu0 %v1819, 16
        %v1822 = vpop.permute.xlu0 %1821
        %v1823 = vsel %vm1479, %v1822, %v1819
        %1824 = vrot.lane.b32.xlu0 %v1820, 16
        %v1825 = vpop.permute.xlu0 %1824
        %v1826 = vsel %vm1479, %v1825, %v1820
        %1827 = vrot.lane.b32.xlu0 %v1823, 16
        %v1828 = vpop.permute.xlu0 %1827
        %1829 = vrot.lane.b32.xlu0 %v1826, 16
        %v1830 = vpop.permute.xlu0 %1829
        %v1831 = vsel %vm1479, %v1828, %v1819
        %v1832 = vsel %vm1479, %v1830, %v1820
        %v1833 = vld [vmem:[%s893] sm:$0xff]
        %v1834 = vld [vmem:[%s893 + $0x8] sm:$0xff]
        %1837 = vrot.lane.b32.xlu0 %v1831, 114
        %v1838 = vpop.permute.xlu0 %1837
        %1839 = vrot.lane.b32.xlu0 %v1832, 114
        %v1840 = vpop.permute.xlu0 %1839
        %v1843 = vmul.f32 %v1833, %v1838
        %v1844 = vmul.f32 %v1834, %v1840
        %v1845 = vld [vmem:[%s905] sm:$0xff]
        %v1846 = vld [vmem:[%s905 + $0x8] sm:$0xff]
        %1847 = vrot.lane.b32.xlu0 %v1831, 113
        %v1848 = vpop.permute.xlu0 %1847
        %1849 = vrot.lane.b32.xlu0 %v1832, 113
        %v1850 = vpop.permute.xlu0 %1849
        %v1853 = vmul.f32 %v1845, %v1848
        %v1854 = vmul.f32 %v1846, %v1850
        %v1855 = vadd.f32 %v1843, %v1853
        %v1856 = vadd.f32 %v1844, %v1854
        %v1857 = vld [vmem:[%s915] sm:$0xff]
        %v1858 = vld [vmem:[%s915 + $0x8] sm:$0xff]
        %v1859 = vmul.f32 %v1857, %v1819
        %v1860 = vmul.f32 %v1858, %v1820
        %v1861 = vadd.f32 %v1855, %v1859
        %v1862 = vadd.f32 %v1856, %v1860
        %v1863 = vld [vmem:[%s927] sm:$0xff]
        %v1864 = vld [vmem:[%s927 + $0x8] sm:$0xff]
        %1865 = vrot.lane.b32.xlu0 %v1831, 127
        %v1866 = vpop.permute.xlu0 %1865
        %1867 = vrot.lane.b32.xlu0 %v1832, 127
        %v1868 = vpop.permute.xlu0 %1867
        %v1871 = vmul.f32 %v1863, %v1866
        %v1872 = vmul.f32 %v1864, %v1868
        %v1873 = vadd.f32 %v1861, %v1871
        %v1874 = vadd.f32 %v1862, %v1872
        %v1875 = vld [vmem:[%s939] sm:$0xff]
        %v1876 = vld [vmem:[%s939 + $0x8] sm:$0xff]
        %1877 = vrot.lane.b32.xlu0 %v1831, 126
        %v1878 = vpop.permute.xlu0 %1877
        %1879 = vrot.lane.b32.xlu0 %v1832, 126
        %v1880 = vpop.permute.xlu0 %1879
        %v1883 = vmul.f32 %v1875, %v1878
        %v1884 = vmul.f32 %v1876, %v1880
        %v1885 = vadd.f32 %v1873, %v1883
        %v1886 = vadd.f32 %v1874, %v1884
        %v1887 = vadd.f32 %v1814, %v1885
        %v1888 = vadd.f32 %v1815, %v1886
        %v1889 = vmul.f32 %v550, %v1887
        %v1890 = vmul.f32 %v551, %v1888
        %v1891 = vadd.f32 %v1889, %v556
        %v1892 = vadd.f32 %v1890, %v557
        %v1893 = vrot.slane %v528, 5
        %v1894 = vrot.slane %v529, 5
        %vm1895 = vcmp.lt.s32.totalorder %v561, 3
        %v1896 = vsel %vm1895, %v1893, %v1894
        %v1897 = vsel %vm1895, %v1894, %v1893
        %1898 = vrot.lane.b32.xlu0 %v1897, 16
        %v1899 = vpop.permute.xlu0 %1898
        %v1900 = vsel %vm1479, %v1899, %v1897
        %1901 = vrot.lane.b32.xlu0 %v1896, 16
        %v1902 = vpop.permute.xlu0 %1901
        %v1903 = vsel %vm1479, %v1902, %v1896
        %1904 = vrot.lane.b32.xlu0 %v1900, 16
        %v1905 = vpop.permute.xlu0 %1904
        %1906 = vrot.lane.b32.xlu0 %v1903, 16
        %v1907 = vpop.permute.xlu0 %1906
        %v1908 = vsel %vm1479, %v1905, %v1897
        %v1909 = vsel %vm1479, %v1907, %v1896
        %v1910 = vld [vmem:[#allocation4] sm:$0xff]
        %v1911 = vld [vmem:[#allocation4 + $0x8] sm:$0xff]
        %1914 = vrot.lane.b32.xlu0 %v1908, 115
        %v1915 = vpop.permute.xlu0 %1914
        %1916 = vrot.lane.b32.xlu0 %v1909, 115
        %v1917 = vpop.permute.xlu0 %1916
        %v1920 = vmul.f32 %v1910, %v1915
        %v1921 = vmul.f32 %v1911, %v1917
        %v1922 = vld [vmem:[%s964] sm:$0xff]
        %v1923 = vld [vmem:[%s964 + $0x8] sm:$0xff]
        %1924 = vrot.lane.b32.xlu0 %v1908, 114
        %v1925 = vpop.permute.xlu0 %1924
        %1926 = vrot.lane.b32.xlu0 %v1909, 114
        %v1927 = vpop.permute.xlu0 %1926
        %v1930 = vmul.f32 %v1922, %v1925
        %v1931 = vmul.f32 %v1923, %v1927
        %v1932 = vadd.f32 %v1920, %v1930
        %v1933 = vadd.f32 %v1921, %v1931
        %v1934 = vld [vmem:[%s976] sm:$0xff]
        %v1935 = vld [vmem:[%s976 + $0x8] sm:$0xff]
        %1936 = vrot.lane.b32.xlu0 %v1908, 113
        %v1937 = vpop.permute.xlu0 %1936
        %1938 = vrot.lane.b32.xlu0 %v1909, 113
        %v1939 = vpop.permute.xlu0 %1938
        %v1942 = vmul.f32 %v1934, %v1937
        %v1943 = vmul.f32 %v1935, %v1939
        %v1944 = vadd.f32 %v1932, %v1942
        %v1945 = vadd.f32 %v1933, %v1943
        %v1946 = vld [vmem:[%s986] sm:$0xff]
        %v1947 = vld [vmem:[%s986 + $0x8] sm:$0xff]
        %v1948 = vmul.f32 %v1946, %v1897
        %v1949 = vmul.f32 %v1947, %v1896
        %v1950 = vadd.f32 %v1944, %v1948
        %v1951 = vadd.f32 %v1945, %v1949
        %v1952 = vld [vmem:[%s998] sm:$0xff]
        %v1953 = vld [vmem:[%s998 + $0x8] sm:$0xff]
        %1954 = vrot.lane.b32.xlu0 %v1908, 127
        %v1955 = vpop.permute.xlu0 %1954
        %1956 = vrot.lane.b32.xlu0 %v1909, 127
        %v1957 = vpop.permute.xlu0 %1956
        %v1960 = vmul.f32 %v1952, %v1955
        %v1961 = vmul.f32 %v1953, %v1957
        %v1962 = vadd.f32 %v1950, %v1960
        %v1963 = vadd.f32 %v1951, %v1961
        %v1964 = vld [vmem:[%s1010] sm:$0xff]
        %v1965 = vld [vmem:[%s1010 + $0x8] sm:$0xff]
        %1966 = vrot.lane.b32.xlu0 %v1908, 126
        %v1967 = vpop.permute.xlu0 %1966
        %1968 = vrot.lane.b32.xlu0 %v1909, 126
        %v1969 = vpop.permute.xlu0 %1968
        %v1972 = vmul.f32 %v1964, %v1967
        %v1973 = vmul.f32 %v1965, %v1969
        %v1974 = vadd.f32 %v1962, %v1972
        %v1975 = vadd.f32 %v1963, %v1973
        %v1976 = vld [vmem:[%s1023] sm:$0xff]
        %v1977 = vld [vmem:[%s1023 + $0x8] sm:$0xff]
        %1978 = vrot.lane.b32.xlu0 %v1908, 125
        %v1979 = vpop.permute.xlu0 %1978
        %1980 = vrot.lane.b32.xlu0 %v1909, 125
        %v1981 = vpop.permute.xlu0 %1980
        %v1984 = vmul.f32 %v1976, %v1979
        %v1985 = vmul.f32 %v1977, %v1981
        %v1986 = vadd.f32 %v1974, %v1984
        %v1987 = vadd.f32 %v1975, %v1985
        %v1988 = vld [vmem:[%s1035] sm:$0xff]
        %v1989 = vld [vmem:[%s1035 + $0x8] sm:$0xff]
        %1990 = vrot.lane.b32.xlu0 %v1634, 115
        %v1991 = vpop.permute.xlu0 %1990
        %1992 = vrot.lane.b32.xlu0 %v1635, 115
        %v1993 = vpop.permute.xlu0 %1992
        %v1996 = vmul.f32 %v1988, %v1991
        %v1997 = vmul.f32 %v1989, %v1993
        %v1998 = vld [vmem:[%s1045] sm:$0xff]
        %v1999 = vld [vmem:[%s1045 + $0x8] sm:$0xff]
        %v2000 = vmul.f32 %v1998, %v1641
        %v2001 = vmul.f32 %v1999, %v1643
        %v2002 = vadd.f32 %v1996, %v2000
        %v2003 = vadd.f32 %v1997, %v2001
        %v2004 = vld [vmem:[%s1055] sm:$0xff]
        %v2005 = vld [vmem:[%s1055 + $0x8] sm:$0xff]
        %v2006 = vmul.f32 %v2004, %v1651
        %v2007 = vmul.f32 %v2005, %v1653
        %v2008 = vadd.f32 %v2002, %v2006
        %v2009 = vadd.f32 %v2003, %v2007
        %v2010 = vld [vmem:[%s1065] sm:$0xff]
        %v2011 = vld [vmem:[%s1065 + $0x8] sm:$0xff]
        %v2012 = vmul.f32 %v2010, %v1623
        %v2013 = vmul.f32 %v2011, %v1622
        %v2014 = vadd.f32 %v2008, %v2012
        %v2015 = vadd.f32 %v2009, %v2013
        %v2016 = vld [vmem:[%s1075] sm:$0xff]
        %v2017 = vld [vmem:[%s1075 + $0x8] sm:$0xff]
        %v2018 = vmul.f32 %v2016, %v1669
        %v2019 = vmul.f32 %v2017, %v1671
        %v2020 = vadd.f32 %v2014, %v2018
        %v2021 = vadd.f32 %v2015, %v2019
        %v2022 = vld [vmem:[%s1085] sm:$0xff]
        %v2023 = vld [vmem:[%s1085 + $0x8] sm:$0xff]
        %v2024 = vmul.f32 %v2022, %v1681
        %v2025 = vmul.f32 %v2023, %v1683
        %v2026 = vadd.f32 %v2020, %v2024
        %v2027 = vadd.f32 %v2021, %v2025
        %v2028 = vld [vmem:[%s1097] sm:$0xff]
        %v2029 = vld [vmem:[%s1097 + $0x8] sm:$0xff]
        %2030 = vrot.lane.b32.xlu0 %v1634, 125
        %v2031 = vpop.permute.xlu0 %2030
        %2032 = vrot.lane.b32.xlu0 %v1635, 125
        %v2033 = vpop.permute.xlu0 %2032
        %v2036 = vmul.f32 %v2028, %v2031
        %v2037 = vmul.f32 %v2029, %v2033
        %v2038 = vadd.f32 %v2026, %v2036
        %v2039 = vadd.f32 %v2027, %v2037
        %v2040 = vadd.f32 %v1986, %v2038
        %v2041 = vadd.f32 %v1987, %v2039
        %v2042 = vld [vmem:[%s1109] sm:$0xff]
        %v2043 = vld [vmem:[%s1109 + $0x8] sm:$0xff]
        %2044 = vrot.lane.b32.xlu0 %v1490, 115
        %v2045 = vpop.permute.xlu0 %2044
        %2046 = vrot.lane.b32.xlu0 %v1491, 115
        %v2047 = vpop.permute.xlu0 %2046
        %v2050 = vmul.f32 %v2042, %v2045
        %v2051 = vmul.f32 %v2043, %v2047
        %v2052 = vld [vmem:[%s1119] sm:$0xff]
        %v2053 = vld [vmem:[%s1119 + $0x8] sm:$0xff]
        %v2054 = vmul.f32 %v2052, %v1693
        %v2055 = vmul.f32 %v2053, %v1695
        %v2056 = vadd.f32 %v2050, %v2054
        %v2057 = vadd.f32 %v2051, %v2055
        %v2058 = vld [vmem:[%s1129] sm:$0xff]
        %v2059 = vld [vmem:[%s1129 + $0x8] sm:$0xff]
        %v2060 = vmul.f32 %v2058, %v1497
        %v2061 = vmul.f32 %v2059, %v1499
        %v2062 = vadd.f32 %v2056, %v2060
        %v2063 = vadd.f32 %v2057, %v2061
        %v2064 = vld [vmem:[%s1139] sm:$0xff]
        %v2065 = vld [vmem:[%s1139 + $0x8] sm:$0xff]
        %v2066 = vmul.f32 %v2064, %v1478
        %v2067 = vmul.f32 %v2065, %v1477
        %v2068 = vadd.f32 %v2062, %v2066
        %v2069 = vadd.f32 %v2063, %v2067
        %v2070 = vld [vmem:[%s1149] sm:$0xff]
        %v2071 = vld [vmem:[%s1149 + $0x8] sm:$0xff]
        %v2072 = vmul.f32 %v2070, %v1513
        %v2073 = vmul.f32 %v2071, %v1515
        %v2074 = vadd.f32 %v2068, %v2072
        %v2075 = vadd.f32 %v2069, %v2073
        %v2076 = vld [vmem:[%s1159] sm:$0xff]
        %v2077 = vld [vmem:[%s1159 + $0x8] sm:$0xff]
        %v2078 = vmul.f32 %v2076, %v1721
        %v2079 = vmul.f32 %v2077, %v1723
        %v2080 = vadd.f32 %v2074, %v2078
        %v2081 = vadd.f32 %v2075, %v2079
        %v2082 = vld [vmem:[%s1171] sm:$0xff]
        %v2083 = vld [vmem:[%s1171 + $0x8] sm:$0xff]
        %2084 = vrot.lane.b32.xlu0 %v1490, 125
        %v2085 = vpop.permute.xlu0 %2084
        %2086 = vrot.lane.b32.xlu0 %v1491, 125
        %v2087 = vpop.permute.xlu0 %2086
        %v2090 = vmul.f32 %v2082, %v2085
        %v2091 = vmul.f32 %v2083, %v2087
        %v2092 = vadd.f32 %v2080, %v2090
        %v2093 = vadd.f32 %v2081, %v2091
        %v2094 = vadd.f32 %v2040, %v2092
        %v2095 = vadd.f32 %v2041, %v2093
        %v2096 = vld [vmem:[%s1181] sm:$0xff]
        %v2097 = vld [vmem:[%s1181 + $0x8] sm:$0xff]
        %2098 = vrot.lane.b32.xlu0 %v1532, 115
        %v2099 = vpop.permute.xlu0 %2098
        %2100 = vrot.lane.b32.xlu0 %v1533, 115
        %v2101 = vpop.permute.xlu0 %2100
        %v2104 = vmul.f32 %v2096, %v2099
        %v2105 = vmul.f32 %v2097, %v2101
        %v2106 = vld [vmem:[%s1191] sm:$0xff]
        %v2107 = vld [vmem:[%s1191 + $0x8] sm:$0xff]
        %v2108 = vmul.f32 %v2106, %v1735
        %v2109 = vmul.f32 %v2107, %v1737
        %v2110 = vadd.f32 %v2104, %v2108
        %v2111 = vadd.f32 %v2105, %v2109
        %v2112 = vld [vmem:[%s1201] sm:$0xff]
        %v2113 = vld [vmem:[%s1201 + $0x8] sm:$0xff]
        %v2114 = vmul.f32 %v2112, %v1539
        %v2115 = vmul.f32 %v2113, %v1541
        %v2116 = vadd.f32 %v2110, %v2114
        %v2117 = vadd.f32 %v2111, %v2115
        %v2118 = vld [vmem:[%s1209] sm:$0xff]
        %v2119 = vld [vmem:[%s1209 + $0x8] sm:$0xff]
        %v2120 = vmul.f32 %v2118, %v528
        %v2121 = vmul.f32 %v2119, %v529
        %v2122 = vadd.f32 %v2116, %v2120
        %v2123 = vadd.f32 %v2117, %v2121
        %v2124 = vld [vmem:[%s1219] sm:$0xff]
        %v2125 = vld [vmem:[%s1219 + $0x8] sm:$0xff]
        %v2126 = vmul.f32 %v2124, %v1555
        %v2127 = vmul.f32 %v2125, %v1557
        %v2128 = vadd.f32 %v2122, %v2126
        %v2129 = vadd.f32 %v2123, %v2127
        %v2130 = vld [vmem:[%s1229] sm:$0xff]
        %v2131 = vld [vmem:[%s1229 + $0x8] sm:$0xff]
        %v2132 = vmul.f32 %v2130, %v1763
        %v2133 = vmul.f32 %v2131, %v1765
        %v2134 = vadd.f32 %v2128, %v2132
        %v2135 = vadd.f32 %v2129, %v2133
        %v2136 = vld [vmem:[%s1239] sm:$0xff]
        %v2137 = vld [vmem:[%s1239 + $0x8] sm:$0xff]
        %2138 = vrot.lane.b32.xlu0 %v1532, 125
        %v2139 = vpop.permute.xlu0 %2138
        %2140 = vrot.lane.b32.xlu0 %v1533, 125
        %v2141 = vpop.permute.xlu0 %2140
        %v2144 = vmul.f32 %v2136, %v2139
        %v2145 = vmul.f32 %v2137, %v2141
        %v2146 = vadd.f32 %v2134, %v2144
        %v2147 = vadd.f32 %v2135, %v2145
        %v2148 = vadd.f32 %v2094, %v2146
        %v2149 = vadd.f32 %v2095, %v2147
        %v2150 = vld [vmem:[%s1251] sm:$0xff]
        %v2151 = vld [vmem:[%s1251 + $0x8] sm:$0xff]
        %2152 = vrot.lane.b32.xlu0 %v1581, 115
        %v2153 = vpop.permute.xlu0 %2152
        %2154 = vrot.lane.b32.xlu0 %v1582, 115
        %v2155 = vpop.permute.xlu0 %2154
        %v2158 = vmul.f32 %v2150, %v2153
        %v2159 = vmul.f32 %v2151, %v2155
        %v2160 = vld [vmem:[%s1261] sm:$0xff]
        %v2161 = vld [vmem:[%s1261 + $0x8] sm:$0xff]
        %v2162 = vmul.f32 %v2160, %v1777
        %v2163 = vmul.f32 %v2161, %v1779
        %v2164 = vadd.f32 %v2158, %v2162
        %v2165 = vadd.f32 %v2159, %v2163
        %v2166 = vld [vmem:[%s1271] sm:$0xff]
        %v2167 = vld [vmem:[%s1271 + $0x8] sm:$0xff]
        %v2168 = vmul.f32 %v2166, %v1588
        %v2169 = vmul.f32 %v2167, %v1590
        %v2170 = vadd.f32 %v2164, %v2168
        %v2171 = vadd.f32 %v2165, %v2169
        %v2172 = vld [vmem:[%s1281] sm:$0xff]
        %v2173 = vld [vmem:[%s1281 + $0x8] sm:$0xff]
        %v2174 = vmul.f32 %v2172, %v1569
        %v2175 = vmul.f32 %v2173, %v1570
        %v2176 = vadd.f32 %v2170, %v2174
        %v2177 = vadd.f32 %v2171, %v2175
        %v2178 = vld [vmem:[%s1291] sm:$0xff]
        %v2179 = vld [vmem:[%s1291 + $0x8] sm:$0xff]
        %v2180 = vmul.f32 %v2178, %v1604
        %v2181 = vmul.f32 %v2179, %v1606
        %v2182 = vadd.f32 %v2176, %v2180
        %v2183 = vadd.f32 %v2177, %v2181
        %v2184 = vld [vmem:[%s1301] sm:$0xff]
        %v2185 = vld [vmem:[%s1301 + $0x8] sm:$0xff]
        %v2186 = vmul.f32 %v2184, %v1805
        %v2187 = vmul.f32 %v2185, %v1807
        %v2188 = vadd.f32 %v2182, %v2186
        %v2189 = vadd.f32 %v2183, %v2187
        %v2190 = vld [vmem:[%s1313] sm:$0xff]
        %v2191 = vld [vmem:[%s1313 + $0x8] sm:$0xff]
        %2192 = vrot.lane.b32.xlu0 %v1581, 125
        %v2193 = vpop.permute.xlu0 %2192
        %2194 = vrot.lane.b32.xlu0 %v1582, 125
        %v2195 = vpop.permute.xlu0 %2194
        %v2198 = vmul.f32 %v2190, %v2193
        %v2199 = vmul.f32 %v2191, %v2195
        %v2200 = vadd.f32 %v2188, %v2198
        %v2201 = vadd.f32 %v2189, %v2199
        %v2202 = vadd.f32 %v2148, %v2200
        %v2203 = vadd.f32 %v2149, %v2201
        %v2204 = vld [vmem:[%s1325] sm:$0xff]
        %v2205 = vld [vmem:[%s1325 + $0x8] sm:$0xff]
        %2206 = vrot.lane.b32.xlu0 %v1831, 115
        %v2207 = vpop.permute.xlu0 %2206
        %2208 = vrot.lane.b32.xlu0 %v1832, 115
        %v2209 = vpop.permute.xlu0 %2208
        %v2212 = vmul.f32 %v2204, %v2207
        %v2213 = vmul.f32 %v2205, %v2209
        %v2214 = vld [vmem:[%s1335] sm:$0xff]
        %v2215 = vld [vmem:[%s1335 + $0x8] sm:$0xff]
        %v2216 = vmul.f32 %v2214, %v1838
        %v2217 = vmul.f32 %v2215, %v1840
        %v2218 = vadd.f32 %v2212, %v2216
        %v2219 = vadd.f32 %v2213, %v2217
        %v2220 = vld [vmem:[%s1345] sm:$0xff]
        %v2221 = vld [vmem:[%s1345 + $0x8] sm:$0xff]
        %v2222 = vmul.f32 %v2220, %v1848
        %v2223 = vmul.f32 %v2221, %v1850
        %v2224 = vadd.f32 %v2218, %v2222
        %v2225 = vadd.f32 %v2219, %v2223
        %v2226 = vld [vmem:[%s1355] sm:$0xff]
        %v2227 = vld [vmem:[%s1355 + $0x8] sm:$0xff]
        %v2228 = vmul.f32 %v2226, %v1819
        %v2229 = vmul.f32 %v2227, %v1820
        %v2230 = vadd.f32 %v2224, %v2228
        %v2231 = vadd.f32 %v2225, %v2229
        %v2232 = vld [vmem:[%s1365] sm:$0xff]
        %v2233 = vld [vmem:[%s1365 + $0x8] sm:$0xff]
        %v2234 = vmul.f32 %v2232, %v1866
        %v2235 = vmul.f32 %v2233, %v1868
        %v2236 = vadd.f32 %v2230, %v2234
        %v2237 = vadd.f32 %v2231, %v2235
        %v2238 = vld [vmem:[%s1375] sm:$0xff]
        %v2239 = vld [vmem:[%s1375 + $0x8] sm:$0xff]
        %v2240 = vmul.f32 %v2238, %v1878
        %v2241 = vmul.f32 %v2239, %v1880
        %v2242 = vadd.f32 %v2236, %v2240
        %v2243 = vadd.f32 %v2237, %v2241
        %v2244 = vld [vmem:[%s1387] sm:$0xff]
        %v2245 = vld [vmem:[%s1387 + $0x8] sm:$0xff]
        %2246 = vrot.lane.b32.xlu0 %v1831, 125
        %v2247 = vpop.permute.xlu0 %2246
        %2248 = vrot.lane.b32.xlu0 %v1832, 125
        %v2249 = vpop.permute.xlu0 %2248
        %v2252 = vmul.f32 %v2244, %v2247
        %v2253 = vmul.f32 %v2245, %v2249
        %v2254 = vadd.f32 %v2242, %v2252
        %v2255 = vadd.f32 %v2243, %v2253
        %v2256 = vadd.f32 %v2202, %v2254
        %v2257 = vadd.f32 %v2203, %v2255
        %v2258 = vrot.slane %v528, 3
        %v2259 = vrot.slane %v529, 3
        %vm2260 = vcmp.lt.s32.totalorder %v561, 5
        %v2261 = vsel %vm2260, %v2258, %v2259
        %v2262 = vsel %vm2260, %v2259, %v2258
        %2263 = vrot.lane.b32.xlu0 %v2261, 16
        %v2264 = vpop.permute.xlu0 %2263
        %v2265 = vsel %vm1479, %v2264, %v2261
        %2266 = vrot.lane.b32.xlu0 %v2262, 16
        %v2267 = vpop.permute.xlu0 %2266
        %v2268 = vsel %vm1479, %v2267, %v2262
        %2269 = vrot.lane.b32.xlu0 %v2265, 16
        %v2270 = vpop.permute.xlu0 %2269
        %2271 = vrot.lane.b32.xlu0 %v2268, 16
        %v2272 = vpop.permute.xlu0 %2271
        %v2273 = vsel %vm1479, %v2270, %v2261
        %v2274 = vsel %vm1479, %v2272, %v2262
        %v2275 = vld [vmem:[%s1401] sm:$0xff]
        %v2276 = vld [vmem:[%s1401 + $0x8] sm:$0xff]
        %2279 = vrot.lane.b32.xlu0 %v2273, 115
        %v2280 = vpop.permute.xlu0 %2279
        %2281 = vrot.lane.b32.xlu0 %v2274, 115
        %v2282 = vpop.permute.xlu0 %2281
        %v2285 = vmul.f32 %v2275, %v2280
        %v2286 = vmul.f32 %v2276, %v2282
        %v2287 = vld [vmem:[%s1413] sm:$0xff]
        %v2288 = vld [vmem:[%s1413 + $0x8] sm:$0xff]
        %2289 = vrot.lane.b32.xlu0 %v2273, 114
        %v2290 = vpop.permute.xlu0 %2289
        %2291 = vrot.lane.b32.xlu0 %v2274, 114
        %v2292 = vpop.permute.xlu0 %2291
        %v2295 = vmul.f32 %v2287, %v2290
        %v2296 = vmul.f32 %v2288, %v2292
        %v2297 = vadd.f32 %v2285, %v2295
        %v2298 = vadd.f32 %v2286, %v2296
        %v2299 = vld [vmem:[%s1425] sm:$0xff]
        %v2300 = vld [vmem:[%s1425 + $0x8] sm:$0xff]
        %2301 = vrot.lane.b32.xlu0 %v2273, 113
        %v2302 = vpop.permute.xlu0 %2301
        %2303 = vrot.lane.b32.xlu0 %v2274, 113
        %v2304 = vpop.permute.xlu0 %2303
        %v2307 = vmul.f32 %v2299, %v2302
        %v2308 = vmul.f32 %v2300, %v2304
        %v2309 = vadd.f32 %v2297, %v2307
        %v2310 = vadd.f32 %v2298, %v2308
        %v2311 = vld [vmem:[%s1435] sm:$0xff]
        %v2312 = vld [vmem:[%s1435 + $0x8] sm:$0xff]
        %v2313 = vmul.f32 %v2311, %v2261
        %v2314 = vmul.f32 %v2312, %v2262
        %v2315 = vadd.f32 %v2309, %v2313
        %v2316 = vadd.f32 %v2310, %v2314
        %v2317 = vld [vmem:[%s1447] sm:$0xff]
        %v2318 = vld [vmem:[%s1447 + $0x8] sm:$0xff]
        %2319 = vrot.lane.b32.xlu0 %v2273, 127
        %v2320 = vpop.permute.xlu0 %2319
        %2321 = vrot.lane.b32.xlu0 %v2274, 127
        %v2322 = vpop.permute.xlu0 %2321
        %v2325 = vmul.f32 %v2317, %v2320
        %v2326 = vmul.f32 %v2318, %v2322
        %v2327 = vadd.f32 %v2315, %v2325
        %v2328 = vadd.f32 %v2316, %v2326
        %v2329 = vld [vmem:[%s1459] sm:$0xff]
        %v2330 = vld [vmem:[%s1459 + $0x8] sm:$0xff]
        %2331 = vrot.lane.b32.xlu0 %v2273, 126
        %v2332 = vpop.permute.xlu0 %2331
        %2333 = vrot.lane.b32.xlu0 %v2274, 126
        %v2334 = vpop.permute.xlu0 %2333
        %v2337 = vmul.f32 %v2329, %v2332
        %v2338 = vmul.f32 %v2330, %v2334
        %v2339 = vadd.f32 %v2327, %v2337
        %v2340 = vadd.f32 %v2328, %v2338
        %v2341 = vld [vmem:[%s1471] sm:$0xff]
        %v2342 = vld [vmem:[%s1471 + $0x8] sm:$0xff]
        %2343 = vrot.lane.b32.xlu0 %v2273, 125
        %v2344 = vpop.permute.xlu0 %2343
        %2345 = vrot.lane.b32.xlu0 %v2274, 125
        %v2346 = vpop.permute.xlu0 %2345
        %v2349 = vmul.f32 %v2341, %v2344
        %v2350 = vmul.f32 %v2342, %v2346
        %v2351 = vadd.f32 %v2339, %v2349
        %v2352 = vadd.f32 %v2340, %v2350
        %v2353 = vadd.f32 %v2256, %v2351
        %v2354 = vadd.f32 %v2257, %v2352
        %v2355 = vmul.f32 %v552, %v2353
        %v2356 = vmul.f32 %v553, %v2354
        %v2357 = vadd.f32 %v2355, %v558
        %v2358 = vadd.f32 %v2356, %v559
        %v2359 = vmul.f32 %v540, %v1617
        %v2360 = vmul.f32 %v541, %v1618
        %v2361 = vmul.f32 %v543, %v1891
        %v2362 = vmul.f32 %v544, %v1892
        %v2363 = vadd.f32 %v2359, %v2361
        %v2364 = vadd.f32 %v2360, %v2362
        %v2365 = vmul.f32 %v546, %v2357
        %v2366 = vmul.f32 %v547, %v2358
        %v2367 = vadd.f32 %v2363, %v2365
        %v2368 = vadd.f32 %v2364, %v2366
        %2369 = vst.msk [vmem:[%s527] sm:$0xff] %vm576, %v2367
        %2370 = vst.msk [vmem:[%s527 + $0x8] sm:$0xff] %vm576, %v2368
        %v2371 = vrot.slane %v1617, 7
        %v2372 = vrot.slane %v1618, 7
        %v2373 = vsel %vm1476, %v2371, %v2372
        %v2374 = vsel %vm1476, %v2372, %v2371
        %2375 = vrot.lane.b32.xlu0 %v2374, 16
        %v2376 = vpop.permute.xlu0 %2375
        %v2377 = vsel %vm1479, %v2376, %v2374
        %2378 = vrot.lane.b32.xlu0 %v2373, 16
        %v2379 = vpop.permute.xlu0 %2378
        %v2380 = vsel %vm1479, %v2379, %v2373
        %2381 = vrot.lane.b32.xlu0 %v2377, 16
        %v2382 = vpop.permute.xlu0 %2381
        %2383 = vrot.lane.b32.xlu0 %v2380, 16
        %v2384 = vpop.permute.xlu0 %2383
        %v2385 = vsel %vm1479, %v2382, %v2374
        %v2386 = vsel %vm1479, %v2384, %v2373
        %v2387 = vld [vmem:[#allocation2] sm:$0xff]
        %v2388 = vld [vmem:[#allocation2 + $0x8] sm:$0xff]
        %2391 = vrot.lane.b32.xlu0 %v2385, 113
        %v2392 = vpop.permute.xlu0 %2391
        %2393 = vrot.lane.b32.xlu0 %v2386, 113
        %v2394 = vpop.permute.xlu0 %2393
        %v2397 = vmul.f32 %v2387, %v2392
        %v2398 = vmul.f32 %v2388, %v2394
        %v2399 = vld [vmem:[%s586] sm:$0xff]
        %v2400 = vld [vmem:[%s586 + $0x8] sm:$0xff]
        %v2401 = vmul.f32 %v2399, %v2374
        %v2402 = vmul.f32 %v2400, %v2373
        %v2403 = vadd.f32 %v2397, %v2401
        %v2404 = vadd.f32 %v2398, %v2402
        %v2405 = vld [vmem:[%s599] sm:$0xff]
        %v2406 = vld [vmem:[%s599 + $0x8] sm:$0xff]
        %2407 = vrot.lane.b32.xlu0 %v2385, 127
        %v2408 = vpop.permute.xlu0 %2407
        %2409 = vrot.lane.b32.xlu0 %v2386, 127
        %v2410 = vpop.permute.xlu0 %2409
        %v2413 = vmul.f32 %v2405, %v2408
        %v2414 = vmul.f32 %v2406, %v2410
        %v2415 = vadd.f32 %v2403, %v2413
        %v2416 = vadd.f32 %v2404, %v2414
        %2417 = vrot.lane.b32.xlu0 %v1617, 16
        %v2418 = vpop.permute.xlu0 %2417
        %v2419 = vsel %vm1479, %v2418, %v1617
        %2420 = vrot.lane.b32.xlu0 %v1618, 16
        %v2421 = vpop.permute.xlu0 %2420
        %v2422 = vsel %vm1479, %v2421, %v1618
        %2423 = vrot.lane.b32.xlu0 %v2419, 16
        %v2424 = vpop.permute.xlu0 %2423
        %2425 = vrot.lane.b32.xlu0 %v2422, 16
        %v2426 = vpop.permute.xlu0 %2425
        %v2427 = vsel %vm1479, %v2424, %v1617
        %v2428 = vsel %vm1479, %v2426, %v1618
        %v2429 = vld [vmem:[%s609] sm:$0xff]
        %v2430 = vld [vmem:[%s609 + $0x8] sm:$0xff]
        %2433 = vrot.lane.b32.xlu0 %v2427, 113
        %v2434 = vpop.permute.xlu0 %2433
        %2435 = vrot.lane.b32.xlu0 %v2428, 113
        %v2436 = vpop.permute.xlu0 %2435
        %v2439 = vmul.f32 %v2429, %v2434
        %v2440 = vmul.f32 %v2430, %v2436
        %v2441 = vld [vmem:[%s617] sm:$0xff]
        %v2442 = vld [vmem:[%s617 + $0x8] sm:$0xff]
        %v2443 = vmul.f32 %v2441, %v1617
        %v2444 = vmul.f32 %v2442, %v1618
        %v2445 = vadd.f32 %v2439, %v2443
        %v2446 = vadd.f32 %v2440, %v2444
        %v2447 = vld [vmem:[%s627] sm:$0xff]
        %v2448 = vld [vmem:[%s627 + $0x8] sm:$0xff]
        %2449 = vrot.lane.b32.xlu0 %v2427, 127
        %v2450 = vpop.permute.xlu0 %2449
        %2451 = vrot.lane.b32.xlu0 %v2428, 127
        %v2452 = vpop.permute.xlu0 %2451
        %v2455 = vmul.f32 %v2447, %v2450
        %v2456 = vmul.f32 %v2448, %v2452
        %v2457 = vadd.f32 %v2445, %v2455
        %v2458 = vadd.f32 %v2446, %v2456
        %v2459 = vadd.f32 %v2415, %v2457
        %v2460 = vadd.f32 %v2416, %v2458
        %v2461 = vrot.slane %v1617, 1
        %v2462 = vrot.slane %v1618, 1
        %v2463 = vsel %vm1568, %v2461, %v2462
        %v2464 = vsel %vm1568, %v2462, %v2461
        %2465 = vrot.lane.b32.xlu0 %v2463, 16
        %v2466 = vpop.permute.xlu0 %2465
        %v2467 = vsel %vm1479, %v2466, %v2463
        %2468 = vrot.lane.b32.xlu0 %v2464, 16
        %v2469 = vpop.permute.xlu0 %2468
        %v2470 = vsel %vm1479, %v2469, %v2464
        %2471 = vrot.lane.b32.xlu0 %v2467, 16
        %v2472 = vpop.permute.xlu0 %2471
        %2473 = vrot.lane.b32.xlu0 %v2470, 16
        %v2474 = vpop.permute.xlu0 %2473
        %v2475 = vsel %vm1479, %v2472, %v2463
        %v2476 = vsel %vm1479, %v2474, %v2464
        %v2477 = vld [vmem:[%s641] sm:$0xff]
        %v2478 = vld [vmem:[%s641 + $0x8] sm:$0xff]
        %2481 = vrot.lane.b32.xlu0 %v2475, 113
        %v2482 = vpop.permute.xlu0 %2481
        %2483 = vrot.lane.b32.xlu0 %v2476, 113
        %v2484 = vpop.permute.xlu0 %2483
        %v2487 = vmul.f32 %v2477, %v2482
        %v2488 = vmul.f32 %v2478, %v2484
        %v2489 = vld [vmem:[%s651] sm:$0xff]
        %v2490 = vld [vmem:[%s651 + $0x8] sm:$0xff]
        %v2491 = vmul.f32 %v2489, %v2463
        %v2492 = vmul.f32 %v2490, %v2464
        %v2493 = vadd.f32 %v2487, %v2491
        %v2494 = vadd.f32 %v2488, %v2492
        %v2495 = vld [vmem:[%s663] sm:$0xff]
        %v2496 = vld [vmem:[%s663 + $0x8] sm:$0xff]
        %2497 = vrot.lane.b32.xlu0 %v2475, 127
        %v2498 = vpop.permute.xlu0 %2497
        %2499 = vrot.lane.b32.xlu0 %v2476, 127
        %v2500 = vpop.permute.xlu0 %2499
        %v2503 = vmul.f32 %v2495, %v2498
        %v2504 = vmul.f32 %v2496, %v2500
        %v2505 = vadd.f32 %v2493, %v2503
        %v2506 = vadd.f32 %v2494, %v2504
        %v2507 = vadd.f32 %v2459, %v2505
        %v2508 = vadd.f32 %v2460, %v2506
        %v2509 = vmul.f32 %v548, %v2507
        %v2510 = vmul.f32 %v549, %v2508
        %v2511 = vadd.f32 %v2509, %v554
        %v2512 = vadd.f32 %v2510, %v555
        %v2513 = vrot.slane %v1891, 6
        %v2514 = vrot.slane %v1892, 6
        %v2515 = vsel %vm1621, %v2513, %v2514
        %v2516 = vsel %vm1621, %v2514, %v2513
        %2517 = vrot.lane.b32.xlu0 %v2516, 16
        %v2518 = vpop.permute.xlu0 %2517
        %v2519 = vsel %vm1479, %v2518, %v2516
        %2520 = vrot.lane.b32.xlu0 %v2515, 16
        %v2521 = vpop.permute.xlu0 %2520
        %v2522 = vsel %vm1479, %v2521, %v2515
        %2523 = vrot.lane.b32.xlu0 %v2519, 16
        %v2524 = vpop.permute.xlu0 %2523
        %2525 = vrot.lane.b32.xlu0 %v2522, 16
        %v2526 = vpop.permute.xlu0 %2525
        %v2527 = vsel %vm1479, %v2524, %v2516
        %v2528 = vsel %vm1479, %v2526, %v2515
        %v2529 = vld [vmem:[#allocation3] sm:$0xff]
        %v2530 = vld [vmem:[#allocation3 + $0x8] sm:$0xff]
        %2533 = vrot.lane.b32.xlu0 %v2527, 114
        %v2534 = vpop.permute.xlu0 %2533
        %2535 = vrot.lane.b32.xlu0 %v2528, 114
        %v2536 = vpop.permute.xlu0 %2535
        %v2539 = vmul.f32 %v2529, %v2534
        %v2540 = vmul.f32 %v2530, %v2536
        %v2541 = vld [vmem:[%s688] sm:$0xff]
        %v2542 = vld [vmem:[%s688 + $0x8] sm:$0xff]
        %2543 = vrot.lane.b32.xlu0 %v2527, 113
        %v2544 = vpop.permute.xlu0 %2543
        %2545 = vrot.lane.b32.xlu0 %v2528, 113
        %v2546 = vpop.permute.xlu0 %2545
        %v2549 = vmul.f32 %v2541, %v2544
        %v2550 = vmul.f32 %v2542, %v2546
        %v2551 = vadd.f32 %v2539, %v2549
        %v2552 = vadd.f32 %v2540, %v2550
        %v2553 = vld [vmem:[%s698] sm:$0xff]
        %v2554 = vld [vmem:[%s698 + $0x8] sm:$0xff]
        %v2555 = vmul.f32 %v2553, %v2516
        %v2556 = vmul.f32 %v2554, %v2515
        %v2557 = vadd.f32 %v2551, %v2555
        %v2558 = vadd.f32 %v2552, %v2556
        %v2559 = vld [vmem:[%s710] sm:$0xff]
        %v2560 = vld [vmem:[%s710 + $0x8] sm:$0xff]
        %2561 = vrot.lane.b32.xlu0 %v2527, 127
        %v2562 = vpop.permute.xlu0 %2561
        %2563 = vrot.lane.b32.xlu0 %v2528, 127
        %v2564 = vpop.permute.xlu0 %2563
        %v2567 = vmul.f32 %v2559, %v2562
        %v2568 = vmul.f32 %v2560, %v2564
        %v2569 = vadd.f32 %v2557, %v2567
        %v2570 = vadd.f32 %v2558, %v2568
        %v2571 = vld [vmem:[%s723] sm:$0xff]
        %v2572 = vld [vmem:[%s723 + $0x8] sm:$0xff]
        %2573 = vrot.lane.b32.xlu0 %v2527, 126
        %v2574 = vpop.permute.xlu0 %2573
        %2575 = vrot.lane.b32.xlu0 %v2528, 126
        %v2576 = vpop.permute.xlu0 %2575
        %v2579 = vmul.f32 %v2571, %v2574
        %v2580 = vmul.f32 %v2572, %v2576
        %v2581 = vadd.f32 %v2569, %v2579
        %v2582 = vadd.f32 %v2570, %v2580
        %v2583 = vrot.slane %v1891, 7
        %v2584 = vrot.slane %v1892, 7
        %v2585 = vsel %vm1476, %v2583, %v2584
        %v2586 = vsel %vm1476, %v2584, %v2583
        %2587 = vrot.lane.b32.xlu0 %v2586, 16
        %v2588 = vpop.permute.xlu0 %2587
        %v2589 = vsel %vm1479, %v2588, %v2586
        %2590 = vrot.lane.b32.xlu0 %v2585, 16
        %v2591 = vpop.permute.xlu0 %2590
        %v2592 = vsel %vm1479, %v2591, %v2585
        %2593 = vrot.lane.b32.xlu0 %v2589, 16
        %v2594 = vpop.permute.xlu0 %2593
        %2595 = vrot.lane.b32.xlu0 %v2592, 16
        %v2596 = vpop.permute.xlu0 %2595
        %v2597 = vsel %vm1479, %v2594, %v2586
        %v2598 = vsel %vm1479, %v2596, %v2585
        %v2599 = vld [vmem:[%s735] sm:$0xff]
        %v2600 = vld [vmem:[%s735 + $0x8] sm:$0xff]
        %2603 = vrot.lane.b32.xlu0 %v2597, 114
        %v2604 = vpop.permute.xlu0 %2603
        %2605 = vrot.lane.b32.xlu0 %v2598, 114
        %v2606 = vpop.permute.xlu0 %2605
        %v2609 = vmul.f32 %v2599, %v2604
        %v2610 = vmul.f32 %v2600, %v2606
        %v2611 = vld [vmem:[%s745] sm:$0xff]
        %v2612 = vld [vmem:[%s745 + $0x8] sm:$0xff]
        %2613 = vrot.lane.b32.xlu0 %v2597, 113
        %v2614 = vpop.permute.xlu0 %2613
        %2615 = vrot.lane.b32.xlu0 %v2598, 113
        %v2616 = vpop.permute.xlu0 %2615
        %v2619 = vmul.f32 %v2611, %v2614
        %v2620 = vmul.f32 %v2612, %v2616
        %v2621 = vadd.f32 %v2609, %v2619
        %v2622 = vadd.f32 %v2610, %v2620
        %v2623 = vld [vmem:[%s755] sm:$0xff]
        %v2624 = vld [vmem:[%s755 + $0x8] sm:$0xff]
        %v2625 = vmul.f32 %v2623, %v2586
        %v2626 = vmul.f32 %v2624, %v2585
        %v2627 = vadd.f32 %v2621, %v2625
        %v2628 = vadd.f32 %v2622, %v2626
        %v2629 = vld [vmem:[%s765] sm:$0xff]
        %v2630 = vld [vmem:[%s765 + $0x8] sm:$0xff]
        %2631 = vrot.lane.b32.xlu0 %v2597, 127
        %v2632 = vpop.permute.xlu0 %2631
        %2633 = vrot.lane.b32.xlu0 %v2598, 127
        %v2634 = vpop.permute.xlu0 %2633
        %v2637 = vmul.f32 %v2629, %v2632
        %v2638 = vmul.f32 %v2630, %v2634
        %v2639 = vadd.f32 %v2627, %v2637
        %v2640 = vadd.f32 %v2628, %v2638
        %v2641 = vld [vmem:[%s777] sm:$0xff]
        %v2642 = vld [vmem:[%s777 + $0x8] sm:$0xff]
        %2643 = vrot.lane.b32.xlu0 %v2597, 126
        %v2644 = vpop.permute.xlu0 %2643
        %2645 = vrot.lane.b32.xlu0 %v2598, 126
        %v2646 = vpop.permute.xlu0 %2645
        %v2649 = vmul.f32 %v2641, %v2644
        %v2650 = vmul.f32 %v2642, %v2646
        %v2651 = vadd.f32 %v2639, %v2649
        %v2652 = vadd.f32 %v2640, %v2650
        %v2653 = vadd.f32 %v2581, %v2651
        %v2654 = vadd.f32 %v2582, %v2652
        %2655 = vrot.lane.b32.xlu0 %v1891, 16
        %v2656 = vpop.permute.xlu0 %2655
        %v2657 = vsel %vm1479, %v2656, %v1891
        %2658 = vrot.lane.b32.xlu0 %v1892, 16
        %v2659 = vpop.permute.xlu0 %2658
        %v2660 = vsel %vm1479, %v2659, %v1892
        %2661 = vrot.lane.b32.xlu0 %v2657, 16
        %v2662 = vpop.permute.xlu0 %2661
        %2663 = vrot.lane.b32.xlu0 %v2660, 16
        %v2664 = vpop.permute.xlu0 %2663
        %v2665 = vsel %vm1479, %v2662, %v1891
        %v2666 = vsel %vm1479, %v2664, %v1892
        %v2667 = vld [vmem:[%s787] sm:$0xff]
        %v2668 = vld [vmem:[%s787 + $0x8] sm:$0xff]
        %2671 = vrot.lane.b32.xlu0 %v2665, 114
        %v2672 = vpop.permute.xlu0 %2671
        %2673 = vrot.lane.b32.xlu0 %v2666, 114
        %v2674 = vpop.permute.xlu0 %2673
        %v2677 = vmul.f32 %v2667, %v2672
        %v2678 = vmul.f32 %v2668, %v2674
        %v2679 = vld [vmem:[%s797] sm:$0xff]
        %v2680 = vld [vmem:[%s797 + $0x8] sm:$0xff]
        %2681 = vrot.lane.b32.xlu0 %v2665, 113
        %v2682 = vpop.permute.xlu0 %2681
        %2683 = vrot.lane.b32.xlu0 %v2666, 113
        %v2684 = vpop.permute.xlu0 %2683
        %v2687 = vmul.f32 %v2679, %v2682
        %v2688 = vmul.f32 %v2680, %v2684
        %v2689 = vadd.f32 %v2677, %v2687
        %v2690 = vadd.f32 %v2678, %v2688
        %v2691 = vld [vmem:[%s805] sm:$0xff]
        %v2692 = vld [vmem:[%s805 + $0x8] sm:$0xff]
        %v2693 = vmul.f32 %v2691, %v1891
        %v2694 = vmul.f32 %v2692, %v1892
        %v2695 = vadd.f32 %v2689, %v2693
        %v2696 = vadd.f32 %v2690, %v2694
        %v2697 = vld [vmem:[%s815] sm:$0xff]
        %v2698 = vld [vmem:[%s815 + $0x8] sm:$0xff]
        %2699 = vrot.lane.b32.xlu0 %v2665, 127
        %v2700 = vpop.permute.xlu0 %2699
        %2701 = vrot.lane.b32.xlu0 %v2666, 127
        %v2702 = vpop.permute.xlu0 %2701
        %v2705 = vmul.f32 %v2697, %v2700
        %v2706 = vmul.f32 %v2698, %v2702
        %v2707 = vadd.f32 %v2695, %v2705
        %v2708 = vadd.f32 %v2696, %v2706
        %v2709 = vld [vmem:[%s825] sm:$0xff]
        %v2710 = vld [vmem:[%s825 + $0x8] sm:$0xff]
        %2711 = vrot.lane.b32.xlu0 %v2665, 126
        %v2712 = vpop.permute.xlu0 %2711
        %2713 = vrot.lane.b32.xlu0 %v2666, 126
        %v2714 = vpop.permute.xlu0 %2713
        %v2717 = vmul.f32 %v2709, %v2712
        %v2718 = vmul.f32 %v2710, %v2714
        %v2719 = vadd.f32 %v2707, %v2717
        %v2720 = vadd.f32 %v2708, %v2718
        %v2721 = vadd.f32 %v2653, %v2719
        %v2722 = vadd.f32 %v2654, %v2720
        %v2723 = vrot.slane %v1891, 1
        %v2724 = vrot.slane %v1892, 1
        %v2725 = vsel %vm1568, %v2723, %v2724
        %v2726 = vsel %vm1568, %v2724, %v2723
        %2727 = vrot.lane.b32.xlu0 %v2725, 16
        %v2728 = vpop.permute.xlu0 %2727
        %v2729 = vsel %vm1479, %v2728, %v2725
        %2730 = vrot.lane.b32.xlu0 %v2726, 16
        %v2731 = vpop.permute.xlu0 %2730
        %v2732 = vsel %vm1479, %v2731, %v2726
        %2733 = vrot.lane.b32.xlu0 %v2729, 16
        %v2734 = vpop.permute.xlu0 %2733
        %2735 = vrot.lane.b32.xlu0 %v2732, 16
        %v2736 = vpop.permute.xlu0 %2735
        %v2737 = vsel %vm1479, %v2734, %v2725
        %v2738 = vsel %vm1479, %v2736, %v2726
        %v2739 = vld [vmem:[%s837] sm:$0xff]
        %v2740 = vld [vmem:[%s837 + $0x8] sm:$0xff]
        %2743 = vrot.lane.b32.xlu0 %v2737, 114
        %v2744 = vpop.permute.xlu0 %2743
        %2745 = vrot.lane.b32.xlu0 %v2738, 114
        %v2746 = vpop.permute.xlu0 %2745
        %v2749 = vmul.f32 %v2739, %v2744
        %v2750 = vmul.f32 %v2740, %v2746
        %v2751 = vld [vmem:[%s847] sm:$0xff]
        %v2752 = vld [vmem:[%s847 + $0x8] sm:$0xff]
        %2753 = vrot.lane.b32.xlu0 %v2737, 113
        %v2754 = vpop.permute.xlu0 %2753
        %2755 = vrot.lane.b32.xlu0 %v2738, 113
        %v2756 = vpop.permute.xlu0 %2755
        %v2759 = vmul.f32 %v2751, %v2754
        %v2760 = vmul.f32 %v2752, %v2756
        %v2761 = vadd.f32 %v2749, %v2759
        %v2762 = vadd.f32 %v2750, %v2760
        %v2763 = vld [vmem:[%s857] sm:$0xff]
        %v2764 = vld [vmem:[%s857 + $0x8] sm:$0xff]
        %v2765 = vmul.f32 %v2763, %v2725
        %v2766 = vmul.f32 %v2764, %v2726
        %v2767 = vadd.f32 %v2761, %v2765
        %v2768 = vadd.f32 %v2762, %v2766
        %v2769 = vld [vmem:[%s867] sm:$0xff]
        %v2770 = vld [vmem:[%s867 + $0x8] sm:$0xff]
        %2771 = vrot.lane.b32.xlu0 %v2737, 127
        %v2772 = vpop.permute.xlu0 %2771
        %2773 = vrot.lane.b32.xlu0 %v2738, 127
        %v2774 = vpop.permute.xlu0 %2773
        %v2777 = vmul.f32 %v2769, %v2772
        %v2778 = vmul.f32 %v2770, %v2774
        %v2779 = vadd.f32 %v2767, %v2777
        %v2780 = vadd.f32 %v2768, %v2778
        %v2781 = vld [vmem:[%s879] sm:$0xff]
        %v2782 = vld [vmem:[%s879 + $0x8] sm:$0xff]
        %2783 = vrot.lane.b32.xlu0 %v2737, 126
        %v2784 = vpop.permute.xlu0 %2783
        %2785 = vrot.lane.b32.xlu0 %v2738, 126
        %v2786 = vpop.permute.xlu0 %2785
        %v2789 = vmul.f32 %v2781, %v2784
        %v2790 = vmul.f32 %v2782, %v2786
        %v2791 = vadd.f32 %v2779, %v2789
        %v2792 = vadd.f32 %v2780, %v2790
        %v2793 = vadd.f32 %v2721, %v2791
        %v2794 = vadd.f32 %v2722, %v2792
        %v2795 = vrot.slane %v1891, 2
        %v2796 = vrot.slane %v1892, 2
        %v2797 = vsel %vm1818, %v2795, %v2796
        %v2798 = vsel %vm1818, %v2796, %v2795
        %2799 = vrot.lane.b32.xlu0 %v2797, 16
        %v2800 = vpop.permute.xlu0 %2799
        %v2801 = vsel %vm1479, %v2800, %v2797
        %2802 = vrot.lane.b32.xlu0 %v2798, 16
        %v2803 = vpop.permute.xlu0 %2802
        %v2804 = vsel %vm1479, %v2803, %v2798
        %2805 = vrot.lane.b32.xlu0 %v2801, 16
        %v2806 = vpop.permute.xlu0 %2805
        %2807 = vrot.lane.b32.xlu0 %v2804, 16
        %v2808 = vpop.permute.xlu0 %2807
        %v2809 = vsel %vm1479, %v2806, %v2797
        %v2810 = vsel %vm1479, %v2808, %v2798
        %v2811 = vld [vmem:[%s893] sm:$0xff]
        %v2812 = vld [vmem:[%s893 + $0x8] sm:$0xff]
        %2815 = vrot.lane.b32.xlu0 %v2809, 114
        %v2816 = vpop.permute.xlu0 %2815
        %2817 = vrot.lane.b32.xlu0 %v2810, 114
        %v2818 = vpop.permute.xlu0 %2817
        %v2821 = vmul.f32 %v2811, %v2816
        %v2822 = vmul.f32 %v2812, %v2818
        %v2823 = vld [vmem:[%s905] sm:$0xff]
        %v2824 = vld [vmem:[%s905 + $0x8] sm:$0xff]
        %2825 = vrot.lane.b32.xlu0 %v2809, 113
        %v2826 = vpop.permute.xlu0 %2825
        %2827 = vrot.lane.b32.xlu0 %v2810, 113
        %v2828 = vpop.permute.xlu0 %2827
        %v2831 = vmul.f32 %v2823, %v2826
        %v2832 = vmul.f32 %v2824, %v2828
        %v2833 = vadd.f32 %v2821, %v2831
        %v2834 = vadd.f32 %v2822, %v2832
        %v2835 = vld [vmem:[%s915] sm:$0xff]
        %v2836 = vld [vmem:[%s915 + $0x8] sm:$0xff]
        %v2837 = vmul.f32 %v2835, %v2797
        %v2838 = vmul.f32 %v2836, %v2798
        %v2839 = vadd.f32 %v2833, %v2837
        %v2840 = vadd.f32 %v2834, %v2838
        %v2841 = vld [vmem:[%s927] sm:$0xff]
        %v2842 = vld [vmem:[%s927 + $0x8] sm:$0xff]
        %2843 = vrot.lane.b32.xlu0 %v2809, 127
        %v2844 = vpop.permute.xlu0 %2843
        %2845 = vrot.lane.b32.xlu0 %v2810, 127
        %v2846 = vpop.permute.xlu0 %2845
        %v2849 = vmul.f32 %v2841, %v2844
        %v2850 = vmul.f32 %v2842, %v2846
        %v2851 = vadd.f32 %v2839, %v2849
        %v2852 = vadd.f32 %v2840, %v2850
        %v2853 = vld [vmem:[%s939] sm:$0xff]
        %v2854 = vld [vmem:[%s939 + $0x8] sm:$0xff]
        %2855 = vrot.lane.b32.xlu0 %v2809, 126
        %v2856 = vpop.permute.xlu0 %2855
        %2857 = vrot.lane.b32.xlu0 %v2810, 126
        %v2858 = vpop.permute.xlu0 %2857
        %v2861 = vmul.f32 %v2853, %v2856
        %v2862 = vmul.f32 %v2854, %v2858
        %v2863 = vadd.f32 %v2851, %v2861
        %v2864 = vadd.f32 %v2852, %v2862
        %v2865 = vadd.f32 %v2793, %v2863
        %v2866 = vadd.f32 %v2794, %v2864
        %v2867 = vmul.f32 %v550, %v2865
        %v2868 = vmul.f32 %v551, %v2866
        %v2869 = vadd.f32 %v2867, %v556
        %v2870 = vadd.f32 %v2868, %v557
        %v2871 = vrot.slane %v2357, 5
        %v2872 = vrot.slane %v2358, 5
        %v2873 = vsel %vm1895, %v2871, %v2872
        %v2874 = vsel %vm1895, %v2872, %v2871
        %2875 = vrot.lane.b32.xlu0 %v2874, 16
        %v2876 = vpop.permute.xlu0 %2875
        %v2877 = vsel %vm1479, %v2876, %v2874
        %2878 = vrot.lane.b32.xlu0 %v2873, 16
        %v2879 = vpop.permute.xlu0 %2878
        %v2880 = vsel %vm1479, %v2879, %v2873
        %2881 = vrot.lane.b32.xlu0 %v2877, 16
        %v2882 = vpop.permute.xlu0 %2881
        %2883 = vrot.lane.b32.xlu0 %v2880, 16
        %v2884 = vpop.permute.xlu0 %2883
        %v2885 = vsel %vm1479, %v2882, %v2874
        %v2886 = vsel %vm1479, %v2884, %v2873
        %v2887 = vld [vmem:[#allocation4] sm:$0xff]
        %v2888 = vld [vmem:[#allocation4 + $0x8] sm:$0xff]
        %2891 = vrot.lane.b32.xlu0 %v2885, 115
        %v2892 = vpop.permute.xlu0 %2891
        %2893 = vrot.lane.b32.xlu0 %v2886, 115
        %v2894 = vpop.permute.xlu0 %2893
        %v2897 = vmul.f32 %v2887, %v2892
        %v2898 = vmul.f32 %v2888, %v2894
        %v2899 = vld [vmem:[%s964] sm:$0xff]
        %v2900 = vld [vmem:[%s964 + $0x8] sm:$0xff]
        %2901 = vrot.lane.b32.xlu0 %v2885, 114
        %v2902 = vpop.permute.xlu0 %2901
        %2903 = vrot.lane.b32.xlu0 %v2886, 114
        %v2904 = vpop.permute.xlu0 %2903
        %v2907 = vmul.f32 %v2899, %v2902
        %v2908 = vmul.f32 %v2900, %v2904
        %v2909 = vadd.f32 %v2897, %v2907
        %v2910 = vadd.f32 %v2898, %v2908
        %v2911 = vld [vmem:[%s976] sm:$0xff]
        %v2912 = vld [vmem:[%s976 + $0x8] sm:$0xff]
        %2913 = vrot.lane.b32.xlu0 %v2885, 113
        %v2914 = vpop.permute.xlu0 %2913
        %2915 = vrot.lane.b32.xlu0 %v2886, 113
        %v2916 = vpop.permute.xlu0 %2915
        %v2919 = vmul.f32 %v2911, %v2914
        %v2920 = vmul.f32 %v2912, %v2916
        %v2921 = vadd.f32 %v2909, %v2919
        %v2922 = vadd.f32 %v2910, %v2920
        %v2923 = vld [vmem:[%s986] sm:$0xff]
        %v2924 = vld [vmem:[%s986 + $0x8] sm:$0xff]
        %v2925 = vmul.f32 %v2923, %v2874
        %v2926 = vmul.f32 %v2924, %v2873
        %v2927 = vadd.f32 %v2921, %v2925
        %v2928 = vadd.f32 %v2922, %v2926
        %v2929 = vld [vmem:[%s998] sm:$0xff]
        %v2930 = vld [vmem:[%s998 + $0x8] sm:$0xff]
        %2931 = vrot.lane.b32.xlu0 %v2885, 127
        %v2932 = vpop.permute.xlu0 %2931
        %2933 = vrot.lane.b32.xlu0 %v2886, 127
        %v2934 = vpop.permute.xlu0 %2933
        %v2937 = vmul.f32 %v2929, %v2932
        %v2938 = vmul.f32 %v2930, %v2934
        %v2939 = vadd.f32 %v2927, %v2937
        %v2940 = vadd.f32 %v2928, %v2938
        %v2941 = vld [vmem:[%s1010] sm:$0xff]
        %v2942 = vld [vmem:[%s1010 + $0x8] sm:$0xff]
        %2943 = vrot.lane.b32.xlu0 %v2885, 126
        %v2944 = vpop.permute.xlu0 %2943
        %2945 = vrot.lane.b32.xlu0 %v2886, 126
        %v2946 = vpop.permute.xlu0 %2945
        %v2949 = vmul.f32 %v2941, %v2944
        %v2950 = vmul.f32 %v2942, %v2946
        %v2951 = vadd.f32 %v2939, %v2949
        %v2952 = vadd.f32 %v2940, %v2950
        %v2953 = vld [vmem:[%s1023] sm:$0xff]
        %v2954 = vld [vmem:[%s1023 + $0x8] sm:$0xff]
        %2955 = vrot.lane.b32.xlu0 %v2885, 125
        %v2956 = vpop.permute.xlu0 %2955
        %2957 = vrot.lane.b32.xlu0 %v2886, 125
        %v2958 = vpop.permute.xlu0 %2957
        %v2961 = vmul.f32 %v2953, %v2956
        %v2962 = vmul.f32 %v2954, %v2958
        %v2963 = vadd.f32 %v2951, %v2961
        %v2964 = vadd.f32 %v2952, %v2962
        %v2965 = vrot.slane %v2357, 6
        %v2966 = vrot.slane %v2358, 6
        %v2967 = vsel %vm1621, %v2965, %v2966
        %v2968 = vsel %vm1621, %v2966, %v2965
        %2969 = vrot.lane.b32.xlu0 %v2968, 16
        %v2970 = vpop.permute.xlu0 %2969
        %v2971 = vsel %vm1479, %v2970, %v2968
        %2972 = vrot.lane.b32.xlu0 %v2967, 16
        %v2973 = vpop.permute.xlu0 %2972
        %v2974 = vsel %vm1479, %v2973, %v2967
        %2975 = vrot.lane.b32.xlu0 %v2971, 16
        %v2976 = vpop.permute.xlu0 %2975
        %2977 = vrot.lane.b32.xlu0 %v2974, 16
        %v2978 = vpop.permute.xlu0 %2977
        %v2979 = vsel %vm1479, %v2976, %v2968
        %v2980 = vsel %vm1479, %v2978, %v2967
        %v2981 = vld [vmem:[%s1035] sm:$0xff]
        %v2982 = vld [vmem:[%s1035 + $0x8] sm:$0xff]
        %2985 = vrot.lane.b32.xlu0 %v2979, 115
        %v2986 = vpop.permute.xlu0 %2985
        %2987 = vrot.lane.b32.xlu0 %v2980, 115
        %v2988 = vpop.permute.xlu0 %2987
        %v2991 = vmul.f32 %v2981, %v2986
        %v2992 = vmul.f32 %v2982, %v2988
        %v2993 = vld [vmem:[%s1045] sm:$0xff]
        %v2994 = vld [vmem:[%s1045 + $0x8] sm:$0xff]
        %2995 = vrot.lane.b32.xlu0 %v2979, 114
        %v2996 = vpop.permute.xlu0 %2995
        %2997 = vrot.lane.b32.xlu0 %v2980, 114
        %v2998 = vpop.permute.xlu0 %2997
        %v3001 = vmul.f32 %v2993, %v2996
        %v3002 = vmul.f32 %v2994, %v2998
        %v3003 = vadd.f32 %v2991, %v3001
        %v3004 = vadd.f32 %v2992, %v3002
        %v3005 = vld [vmem:[%s1055] sm:$0xff]
        %v3006 = vld [vmem:[%s1055 + $0x8] sm:$0xff]
        %3007 = vrot.lane.b32.xlu0 %v2979, 113
        %v3008 = vpop.permute.xlu0 %3007
        %3009 = vrot.lane.b32.xlu0 %v2980, 113
        %v3010 = vpop.permute.xlu0 %3009
        %v3013 = vmul.f32 %v3005, %v3008
        %v3014 = vmul.f32 %v3006, %v3010
        %v3015 = vadd.f32 %v3003, %v3013
        %v3016 = vadd.f32 %v3004, %v3014
        %v3017 = vld [vmem:[%s1065] sm:$0xff]
        %v3018 = vld [vmem:[%s1065 + $0x8] sm:$0xff]
        %v3019 = vmul.f32 %v3017, %v2968
        %v3020 = vmul.f32 %v3018, %v2967
        %v3021 = vadd.f32 %v3015, %v3019
        %v3022 = vadd.f32 %v3016, %v3020
        %v3023 = vld [vmem:[%s1075] sm:$0xff]
        %v3024 = vld [vmem:[%s1075 + $0x8] sm:$0xff]
        %3025 = vrot.lane.b32.xlu0 %v2979, 127
        %v3026 = vpop.permute.xlu0 %3025
        %3027 = vrot.lane.b32.xlu0 %v2980, 127
        %v3028 = vpop.permute.xlu0 %3027
        %v3031 = vmul.f32 %v3023, %v3026
        %v3032 = vmul.f32 %v3024, %v3028
        %v3033 = vadd.f32 %v3021, %v3031
        %v3034 = vadd.f32 %v3022, %v3032
        %v3035 = vld [vmem:[%s1085] sm:$0xff]
        %v3036 = vld [vmem:[%s1085 + $0x8] sm:$0xff]
        %3037 = vrot.lane.b32.xlu0 %v2979, 126
        %v3038 = vpop.permute.xlu0 %3037
        %3039 = vrot.lane.b32.xlu0 %v2980, 126
        %v3040 = vpop.permute.xlu0 %3039
        %v3043 = vmul.f32 %v3035, %v3038
        %v3044 = vmul.f32 %v3036, %v3040
        %v3045 = vadd.f32 %v3033, %v3043
        %v3046 = vadd.f32 %v3034, %v3044
        %v3047 = vld [vmem:[%s1097] sm:$0xff]
        %v3048 = vld [vmem:[%s1097 + $0x8] sm:$0xff]
        %3049 = vrot.lane.b32.xlu0 %v2979, 125
        %v3050 = vpop.permute.xlu0 %3049
        %3051 = vrot.lane.b32.xlu0 %v2980, 125
        %v3052 = vpop.permute.xlu0 %3051
        %v3055 = vmul.f32 %v3047, %v3050
        %v3056 = vmul.f32 %v3048, %v3052
        %v3057 = vadd.f32 %v3045, %v3055
        %v3058 = vadd.f32 %v3046, %v3056
        %v3059 = vadd.f32 %v2963, %v3057
        %v3060 = vadd.f32 %v2964, %v3058
        %v3061 = vrot.slane %v2357, 7
        %v3062 = vrot.slane %v2358, 7
        %v3063 = vsel %vm1476, %v3061, %v3062
        %v3064 = vsel %vm1476, %v3062, %v3061
        %3065 = vrot.lane.b32.xlu0 %v3064, 16
        %v3066 = vpop.permute.xlu0 %3065
        %v3067 = vsel %vm1479, %v3066, %v3064
        %3068 = vrot.lane.b32.xlu0 %v3063, 16
        %v3069 = vpop.permute.xlu0 %3068
        %v3070 = vsel %vm1479, %v3069, %v3063
        %3071 = vrot.lane.b32.xlu0 %v3067, 16
        %v3072 = vpop.permute.xlu0 %3071
        %3073 = vrot.lane.b32.xlu0 %v3070, 16
        %v3074 = vpop.permute.xlu0 %3073
        %v3075 = vsel %vm1479, %v3072, %v3064
        %v3076 = vsel %vm1479, %v3074, %v3063
        %v3077 = vld [vmem:[%s1109] sm:$0xff]
        %v3078 = vld [vmem:[%s1109 + $0x8] sm:$0xff]
        %3081 = vrot.lane.b32.xlu0 %v3075, 115
        %v3082 = vpop.permute.xlu0 %3081
        %3083 = vrot.lane.b32.xlu0 %v3076, 115
        %v3084 = vpop.permute.xlu0 %3083
        %v3087 = vmul.f32 %v3077, %v3082
        %v3088 = vmul.f32 %v3078, %v3084
        %v3089 = vld [vmem:[%s1119] sm:$0xff]
        %v3090 = vld [vmem:[%s1119 + $0x8] sm:$0xff]
        %3091 = vrot.lane.b32.xlu0 %v3075, 114
        %v3092 = vpop.permute.xlu0 %3091
        %3093 = vrot.lane.b32.xlu0 %v3076, 114
        %v3094 = vpop.permute.xlu0 %3093
        %v3097 = vmul.f32 %v3089, %v3092
        %v3098 = vmul.f32 %v3090, %v3094
        %v3099 = vadd.f32 %v3087, %v3097
        %v3100 = vadd.f32 %v3088, %v3098
        %v3101 = vld [vmem:[%s1129] sm:$0xff]
        %v3102 = vld [vmem:[%s1129 + $0x8] sm:$0xff]
        %3103 = vrot.lane.b32.xlu0 %v3075, 113
        %v3104 = vpop.permute.xlu0 %3103
        %3105 = vrot.lane.b32.xlu0 %v3076, 113
        %v3106 = vpop.permute.xlu0 %3105
        %v3109 = vmul.f32 %v3101, %v3104
        %v3110 = vmul.f32 %v3102, %v3106
        %v3111 = vadd.f32 %v3099, %v3109
        %v3112 = vadd.f32 %v3100, %v3110
        %v3113 = vld [vmem:[%s1139] sm:$0xff]
        %v3114 = vld [vmem:[%s1139 + $0x8] sm:$0xff]
        %v3115 = vmul.f32 %v3113, %v3064
        %v3116 = vmul.f32 %v3114, %v3063
        %v3117 = vadd.f32 %v3111, %v3115
        %v3118 = vadd.f32 %v3112, %v3116
        %v3119 = vld [vmem:[%s1149] sm:$0xff]
        %v3120 = vld [vmem:[%s1149 + $0x8] sm:$0xff]
        %3121 = vrot.lane.b32.xlu0 %v3075, 127
        %v3122 = vpop.permute.xlu0 %3121
        %3123 = vrot.lane.b32.xlu0 %v3076, 127
        %v3124 = vpop.permute.xlu0 %3123
        %v3127 = vmul.f32 %v3119, %v3122
        %v3128 = vmul.f32 %v3120, %v3124
        %v3129 = vadd.f32 %v3117, %v3127
        %v3130 = vadd.f32 %v3118, %v3128
        %v3131 = vld [vmem:[%s1159] sm:$0xff]
        %v3132 = vld [vmem:[%s1159 + $0x8] sm:$0xff]
        %3133 = vrot.lane.b32.xlu0 %v3075, 126
        %v3134 = vpop.permute.xlu0 %3133
        %3135 = vrot.lane.b32.xlu0 %v3076, 126
        %v3136 = vpop.permute.xlu0 %3135
        %v3139 = vmul.f32 %v3131, %v3134
        %v3140 = vmul.f32 %v3132, %v3136
        %v3141 = vadd.f32 %v3129, %v3139
        %v3142 = vadd.f32 %v3130, %v3140
        %v3143 = vld [vmem:[%s1171] sm:$0xff]
        %v3144 = vld [vmem:[%s1171 + $0x8] sm:$0xff]
        %3145 = vrot.lane.b32.xlu0 %v3075, 125
        %v3146 = vpop.permute.xlu0 %3145
        %3147 = vrot.lane.b32.xlu0 %v3076, 125
        %v3148 = vpop.permute.xlu0 %3147
        %v3151 = vmul.f32 %v3143, %v3146
        %v3152 = vmul.f32 %v3144, %v3148
        %v3153 = vadd.f32 %v3141, %v3151
        %v3154 = vadd.f32 %v3142, %v3152
        %v3155 = vadd.f32 %v3059, %v3153
        %v3156 = vadd.f32 %v3060, %v3154
        %3157 = vrot.lane.b32.xlu0 %v2357, 16
        %v3158 = vpop.permute.xlu0 %3157
        %v3159 = vsel %vm1479, %v3158, %v2357
        %3160 = vrot.lane.b32.xlu0 %v2358, 16
        %v3161 = vpop.permute.xlu0 %3160
        %v3162 = vsel %vm1479, %v3161, %v2358
        %3163 = vrot.lane.b32.xlu0 %v3159, 16
        %v3164 = vpop.permute.xlu0 %3163
        %3165 = vrot.lane.b32.xlu0 %v3162, 16
        %v3166 = vpop.permute.xlu0 %3165
        %v3167 = vsel %vm1479, %v3164, %v2357
        %v3168 = vsel %vm1479, %v3166, %v2358
        %v3169 = vld [vmem:[%s1181] sm:$0xff]
        %v3170 = vld [vmem:[%s1181 + $0x8] sm:$0xff]
        %3173 = vrot.lane.b32.xlu0 %v3167, 115
        %v3174 = vpop.permute.xlu0 %3173
        %3175 = vrot.lane.b32.xlu0 %v3168, 115
        %v3176 = vpop.permute.xlu0 %3175
        %v3179 = vmul.f32 %v3169, %v3174
        %v3180 = vmul.f32 %v3170, %v3176
        %v3181 = vld [vmem:[%s1191] sm:$0xff]
        %v3182 = vld [vmem:[%s1191 + $0x8] sm:$0xff]
        %3183 = vrot.lane.b32.xlu0 %v3167, 114
        %v3184 = vpop.permute.xlu0 %3183
        %3185 = vrot.lane.b32.xlu0 %v3168, 114
        %v3186 = vpop.permute.xlu0 %3185
        %v3189 = vmul.f32 %v3181, %v3184
        %v3190 = vmul.f32 %v3182, %v3186
        %v3191 = vadd.f32 %v3179, %v3189
        %v3192 = vadd.f32 %v3180, %v3190
        %v3193 = vld [vmem:[%s1201] sm:$0xff]
        %v3194 = vld [vmem:[%s1201 + $0x8] sm:$0xff]
        %3195 = vrot.lane.b32.xlu0 %v3167, 113
        %v3196 = vpop.permute.xlu0 %3195
        %3197 = vrot.lane.b32.xlu0 %v3168, 113
        %v3198 = vpop.permute.xlu0 %3197
        %v3201 = vmul.f32 %v3193, %v3196
        %v3202 = vmul.f32 %v3194, %v3198
        %v3203 = vadd.f32 %v3191, %v3201
        %v3204 = vadd.f32 %v3192, %v3202
        %v3205 = vld [vmem:[%s1209] sm:$0xff]
        %v3206 = vld [vmem:[%s1209 + $0x8] sm:$0xff]
        %v3207 = vmul.f32 %v3205, %v2357
        %v3208 = vmul.f32 %v3206, %v2358
        %v3209 = vadd.f32 %v3203, %v3207
        %v3210 = vadd.f32 %v3204, %v3208
        %v3211 = vld [vmem:[%s1219] sm:$0xff]
        %v3212 = vld [vmem:[%s1219 + $0x8] sm:$0xff]
        %3213 = vrot.lane.b32.xlu0 %v3167, 127
        %v3214 = vpop.permute.xlu0 %3213
        %3215 = vrot.lane.b32.xlu0 %v3168, 127
        %v3216 = vpop.permute.xlu0 %3215
        %v3219 = vmul.f32 %v3211, %v3214
        %v3220 = vmul.f32 %v3212, %v3216
        %v3221 = vadd.f32 %v3209, %v3219
        %v3222 = vadd.f32 %v3210, %v3220
        %v3223 = vld [vmem:[%s1229] sm:$0xff]
        %v3224 = vld [vmem:[%s1229 + $0x8] sm:$0xff]
        %3225 = vrot.lane.b32.xlu0 %v3167, 126
        %v3226 = vpop.permute.xlu0 %3225
        %3227 = vrot.lane.b32.xlu0 %v3168, 126
        %v3228 = vpop.permute.xlu0 %3227
        %v3231 = vmul.f32 %v3223, %v3226
        %v3232 = vmul.f32 %v3224, %v3228
        %v3233 = vadd.f32 %v3221, %v3231
        %v3234 = vadd.f32 %v3222, %v3232
        %v3235 = vld [vmem:[%s1239] sm:$0xff]
        %v3236 = vld [vmem:[%s1239 + $0x8] sm:$0xff]
        %3237 = vrot.lane.b32.xlu0 %v3167, 125
        %v3238 = vpop.permute.xlu0 %3237
        %3239 = vrot.lane.b32.xlu0 %v3168, 125
        %v3240 = vpop.permute.xlu0 %3239
        %v3243 = vmul.f32 %v3235, %v3238
        %v3244 = vmul.f32 %v3236, %v3240
        %v3245 = vadd.f32 %v3233, %v3243
        %v3246 = vadd.f32 %v3234, %v3244
        %v3247 = vadd.f32 %v3155, %v3245
        %v3248 = vadd.f32 %v3156, %v3246
        %v3249 = vrot.slane %v2357, 1
        %v3250 = vrot.slane %v2358, 1
        %v3251 = vsel %vm1568, %v3249, %v3250
        %v3252 = vsel %vm1568, %v3250, %v3249
        %3253 = vrot.lane.b32.xlu0 %v3251, 16
        %v3254 = vpop.permute.xlu0 %3253
        %v3255 = vsel %vm1479, %v3254, %v3251
        %3256 = vrot.lane.b32.xlu0 %v3252, 16
        %v3257 = vpop.permute.xlu0 %3256
        %v3258 = vsel %vm1479, %v3257, %v3252
        %3259 = vrot.lane.b32.xlu0 %v3255, 16
        %v3260 = vpop.permute.xlu0 %3259
        %3261 = vrot.lane.b32.xlu0 %v3258, 16
        %v3262 = vpop.permute.xlu0 %3261
        %v3263 = vsel %vm1479, %v3260, %v3251
        %v3264 = vsel %vm1479, %v3262, %v3252
        %v3265 = vld [vmem:[%s1251] sm:$0xff]
        %v3266 = vld [vmem:[%s1251 + $0x8] sm:$0xff]
        %3269 = vrot.lane.b32.xlu0 %v3263, 115
        %v3270 = vpop.permute.xlu0 %3269
        %3271 = vrot.lane.b32.xlu0 %v3264, 115
        %v3272 = vpop.permute.xlu0 %3271
        %v3275 = vmul.f32 %v3265, %v3270
        %v3276 = vmul.f32 %v3266, %v3272
        %v3277 = vld [vmem:[%s1261] sm:$0xff]
        %v3278 = vld [vmem:[%s1261 + $0x8] sm:$0xff]
        %3279 = vrot.lane.b32.xlu0 %v3263, 114
        %v3280 = vpop.permute.xlu0 %3279
        %3281 = vrot.lane.b32.xlu0 %v3264, 114
        %v3282 = vpop.permute.xlu0 %3281
        %v3285 = vmul.f32 %v3277, %v3280
        %v3286 = vmul.f32 %v3278, %v3282
        %v3287 = vadd.f32 %v3275, %v3285
        %v3288 = vadd.f32 %v3276, %v3286
        %v3289 = vld [vmem:[%s1271] sm:$0xff]
        %v3290 = vld [vmem:[%s1271 + $0x8] sm:$0xff]
        %3291 = vrot.lane.b32.xlu0 %v3263, 113
        %v3292 = vpop.permute.xlu0 %3291
        %3293 = vrot.lane.b32.xlu0 %v3264, 113
        %v3294 = vpop.permute.xlu0 %3293
        %v3297 = vmul.f32 %v3289, %v3292
        %v3298 = vmul.f32 %v3290, %v3294
        %v3299 = vadd.f32 %v3287, %v3297
        %v3300 = vadd.f32 %v3288, %v3298
        %v3301 = vld [vmem:[%s1281] sm:$0xff]
        %v3302 = vld [vmem:[%s1281 + $0x8] sm:$0xff]
        %v3303 = vmul.f32 %v3301, %v3251
        %v3304 = vmul.f32 %v3302, %v3252
        %v3305 = vadd.f32 %v3299, %v3303
        %v3306 = vadd.f32 %v3300, %v3304
        %v3307 = vld [vmem:[%s1291] sm:$0xff]
        %v3308 = vld [vmem:[%s1291 + $0x8] sm:$0xff]
        %3309 = vrot.lane.b32.xlu0 %v3263, 127
        %v3310 = vpop.permute.xlu0 %3309
        %3311 = vrot.lane.b32.xlu0 %v3264, 127
        %v3312 = vpop.permute.xlu0 %3311
        %v3315 = vmul.f32 %v3307, %v3310
        %v3316 = vmul.f32 %v3308, %v3312
        %v3317 = vadd.f32 %v3305, %v3315
        %v3318 = vadd.f32 %v3306, %v3316
        %v3319 = vld [vmem:[%s1301] sm:$0xff]
        %v3320 = vld [vmem:[%s1301 + $0x8] sm:$0xff]
        %3321 = vrot.lane.b32.xlu0 %v3263, 126
        %v3322 = vpop.permute.xlu0 %3321
        %3323 = vrot.lane.b32.xlu0 %v3264, 126
        %v3324 = vpop.permute.xlu0 %3323
        %v3327 = vmul.f32 %v3319, %v3322
        %v3328 = vmul.f32 %v3320, %v3324
        %v3329 = vadd.f32 %v3317, %v3327
        %v3330 = vadd.f32 %v3318, %v3328
        %v3331 = vld [vmem:[%s1313] sm:$0xff]
        %v3332 = vld [vmem:[%s1313 + $0x8] sm:$0xff]
        %3333 = vrot.lane.b32.xlu0 %v3263, 125
        %v3334 = vpop.permute.xlu0 %3333
        %3335 = vrot.lane.b32.xlu0 %v3264, 125
        %v3336 = vpop.permute.xlu0 %3335
        %v3339 = vmul.f32 %v3331, %v3334
        %v3340 = vmul.f32 %v3332, %v3336
        %v3341 = vadd.f32 %v3329, %v3339
        %v3342 = vadd.f32 %v3330, %v3340
        %v3343 = vadd.f32 %v3247, %v3341
        %v3344 = vadd.f32 %v3248, %v3342
        %v3345 = vrot.slane %v2357, 2
        %v3346 = vrot.slane %v2358, 2
        %v3347 = vsel %vm1818, %v3345, %v3346
        %v3348 = vsel %vm1818, %v3346, %v3345
        %3349 = vrot.lane.b32.xlu0 %v3347, 16
        %v3350 = vpop.permute.xlu0 %3349
        %v3351 = vsel %vm1479, %v3350, %v3347
        %3352 = vrot.lane.b32.xlu0 %v3348, 16
        %v3353 = vpop.permute.xlu0 %3352
        %v3354 = vsel %vm1479, %v3353, %v3348
        %3355 = vrot.lane.b32.xlu0 %v3351, 16
        %v3356 = vpop.permute.xlu0 %3355
        %3357 = vrot.lane.b32.xlu0 %v3354, 16
        %v3358 = vpop.permute.xlu0 %3357
        %v3359 = vsel %vm1479, %v3356, %v3347
        %v3360 = vsel %vm1479, %v3358, %v3348
        %v3361 = vld [vmem:[%s1325] sm:$0xff]
        %v3362 = vld [vmem:[%s1325 + $0x8] sm:$0xff]
        %3365 = vrot.lane.b32.xlu0 %v3359, 115
        %v3366 = vpop.permute.xlu0 %3365
        %3367 = vrot.lane.b32.xlu0 %v3360, 115
        %v3368 = vpop.permute.xlu0 %3367
        %v3371 = vmul.f32 %v3361, %v3366
        %v3372 = vmul.f32 %v3362, %v3368
        %v3373 = vld [vmem:[%s1335] sm:$0xff]
        %v3374 = vld [vmem:[%s1335 + $0x8] sm:$0xff]
        %3375 = vrot.lane.b32.xlu0 %v3359, 114
        %v3376 = vpop.permute.xlu0 %3375
        %3377 = vrot.lane.b32.xlu0 %v3360, 114
        %v3378 = vpop.permute.xlu0 %3377
        %v3381 = vmul.f32 %v3373, %v3376
        %v3382 = vmul.f32 %v3374, %v3378
        %v3383 = vadd.f32 %v3371, %v3381
        %v3384 = vadd.f32 %v3372, %v3382
        %v3385 = vld [vmem:[%s1345] sm:$0xff]
        %v3386 = vld [vmem:[%s1345 + $0x8] sm:$0xff]
        %3387 = vrot.lane.b32.xlu0 %v3359, 113
        %v3388 = vpop.permute.xlu0 %3387
        %3389 = vrot.lane.b32.xlu0 %v3360, 113
        %v3390 = vpop.permute.xlu0 %3389
        %v3393 = vmul.f32 %v3385, %v3388
        %v3394 = vmul.f32 %v3386, %v3390
        %v3395 = vadd.f32 %v3383, %v3393
        %v3396 = vadd.f32 %v3384, %v3394
        %v3397 = vld [vmem:[%s1355] sm:$0xff]
        %v3398 = vld [vmem:[%s1355 + $0x8] sm:$0xff]
        %v3399 = vmul.f32 %v3397, %v3347
        %v3400 = vmul.f32 %v3398, %v3348
        %v3401 = vadd.f32 %v3395, %v3399
        %v3402 = vadd.f32 %v3396, %v3400
        %v3403 = vld [vmem:[%s1365] sm:$0xff]
        %v3404 = vld [vmem:[%s1365 + $0x8] sm:$0xff]
        %3405 = vrot.lane.b32.xlu0 %v3359, 127
        %v3406 = vpop.permute.xlu0 %3405
        %3407 = vrot.lane.b32.xlu0 %v3360, 127
        %v3408 = vpop.permute.xlu0 %3407
        %v3411 = vmul.f32 %v3403, %v3406
        %v3412 = vmul.f32 %v3404, %v3408
        %v3413 = vadd.f32 %v3401, %v3411
        %v3414 = vadd.f32 %v3402, %v3412
        %v3415 = vld [vmem:[%s1375] sm:$0xff]
        %v3416 = vld [vmem:[%s1375 + $0x8] sm:$0xff]
        %3417 = vrot.lane.b32.xlu0 %v3359, 126
        %v3418 = vpop.permute.xlu0 %3417
        %3419 = vrot.lane.b32.xlu0 %v3360, 126
        %v3420 = vpop.permute.xlu0 %3419
        %v3423 = vmul.f32 %v3415, %v3418
        %v3424 = vmul.f32 %v3416, %v3420
        %v3425 = vadd.f32 %v3413, %v3423
        %v3426 = vadd.f32 %v3414, %v3424
        %v3427 = vld [vmem:[%s1387] sm:$0xff]
        %v3428 = vld [vmem:[%s1387 + $0x8] sm:$0xff]
        %3429 = vrot.lane.b32.xlu0 %v3359, 125
        %v3430 = vpop.permute.xlu0 %3429
        %3431 = vrot.lane.b32.xlu0 %v3360, 125
        %v3432 = vpop.permute.xlu0 %3431
        %v3435 = vmul.f32 %v3427, %v3430
        %v3436 = vmul.f32 %v3428, %v3432
        %v3437 = vadd.f32 %v3425, %v3435
        %v3438 = vadd.f32 %v3426, %v3436
        %v3439 = vadd.f32 %v3343, %v3437
        %v3440 = vadd.f32 %v3344, %v3438
        %v3441 = vrot.slane %v2357, 3
        %v3442 = vrot.slane %v2358, 3
        %v3443 = vsel %vm2260, %v3441, %v3442
        %v3444 = vsel %vm2260, %v3442, %v3441
        %3445 = vrot.lane.b32.xlu0 %v3443, 16
        %v3446 = vpop.permute.xlu0 %3445
        %v3447 = vsel %vm1479, %v3446, %v3443
        %3448 = vrot.lane.b32.xlu0 %v3444, 16
        %v3449 = vpop.permute.xlu0 %3448
        %v3450 = vsel %vm1479, %v3449, %v3444
        %3451 = vrot.lane.b32.xlu0 %v3447, 16
        %v3452 = vpop.permute.xlu0 %3451
        %3453 = vrot.lane.b32.xlu0 %v3450, 16
        %v3454 = vpop.permute.xlu0 %3453
        %v3455 = vsel %vm1479, %v3452, %v3443
        %v3456 = vsel %vm1479, %v3454, %v3444
        %v3457 = vld [vmem:[%s1401] sm:$0xff]
        %v3458 = vld [vmem:[%s1401 + $0x8] sm:$0xff]
        %3461 = vrot.lane.b32.xlu0 %v3455, 115
        %v3462 = vpop.permute.xlu0 %3461
        %3463 = vrot.lane.b32.xlu0 %v3456, 115
        %v3464 = vpop.permute.xlu0 %3463
        %v3467 = vmul.f32 %v3457, %v3462
        %v3468 = vmul.f32 %v3458, %v3464
        %v3469 = vld [vmem:[%s1413] sm:$0xff]
        %v3470 = vld [vmem:[%s1413 + $0x8] sm:$0xff]
        %3471 = vrot.lane.b32.xlu0 %v3455, 114
        %v3472 = vpop.permute.xlu0 %3471
        %3473 = vrot.lane.b32.xlu0 %v3456, 114
        %v3474 = vpop.permute.xlu0 %3473
        %v3477 = vmul.f32 %v3469, %v3472
        %v3478 = vmul.f32 %v3470, %v3474
        %v3479 = vadd.f32 %v3467, %v3477
        %v3480 = vadd.f32 %v3468, %v3478
        %v3481 = vld [vmem:[%s1425] sm:$0xff]
        %v3482 = vld [vmem:[%s1425 + $0x8] sm:$0xff]
        %3483 = vrot.lane.b32.xlu0 %v3455, 113
        %v3484 = vpop.permute.xlu0 %3483
        %3485 = vrot.lane.b32.xlu0 %v3456, 113
        %v3486 = vpop.permute.xlu0 %3485
        %v3489 = vmul.f32 %v3481, %v3484
        %v3490 = vmul.f32 %v3482, %v3486
        %v3491 = vadd.f32 %v3479, %v3489
        %v3492 = vadd.f32 %v3480, %v3490
        %v3493 = vld [vmem:[%s1435] sm:$0xff]
        %v3494 = vld [vmem:[%s1435 + $0x8] sm:$0xff]
        %v3495 = vmul.f32 %v3493, %v3443
        %v3496 = vmul.f32 %v3494, %v3444
        %v3497 = vadd.f32 %v3491, %v3495
        %v3498 = vadd.f32 %v3492, %v3496
        %v3499 = vld [vmem:[%s1447] sm:$0xff]
        %v3500 = vld [vmem:[%s1447 + $0x8] sm:$0xff]
        %3501 = vrot.lane.b32.xlu0 %v3455, 127
        %v3502 = vpop.permute.xlu0 %3501
        %3503 = vrot.lane.b32.xlu0 %v3456, 127
        %v3504 = vpop.permute.xlu0 %3503
        %v3507 = vmul.f32 %v3499, %v3502
        %v3508 = vmul.f32 %v3500, %v3504
        %v3509 = vadd.f32 %v3497, %v3507
        %v3510 = vadd.f32 %v3498, %v3508
        %v3511 = vld [vmem:[%s1459] sm:$0xff]
        %v3512 = vld [vmem:[%s1459 + $0x8] sm:$0xff]
        %3513 = vrot.lane.b32.xlu0 %v3455, 126
        %v3514 = vpop.permute.xlu0 %3513
        %3515 = vrot.lane.b32.xlu0 %v3456, 126
        %v3516 = vpop.permute.xlu0 %3515
        %v3519 = vmul.f32 %v3511, %v3514
        %v3520 = vmul.f32 %v3512, %v3516
        %v3521 = vadd.f32 %v3509, %v3519
        %v3522 = vadd.f32 %v3510, %v3520
        %v3523 = vld [vmem:[%s1471] sm:$0xff]
        %v3524 = vld [vmem:[%s1471 + $0x8] sm:$0xff]
        %3525 = vrot.lane.b32.xlu0 %v3455, 125
        %v3526 = vpop.permute.xlu0 %3525
        %3527 = vrot.lane.b32.xlu0 %v3456, 125
        %v3528 = vpop.permute.xlu0 %3527
        %v3531 = vmul.f32 %v3523, %v3526
        %v3532 = vmul.f32 %v3524, %v3528
        %v3533 = vadd.f32 %v3521, %v3531
        %v3534 = vadd.f32 %v3522, %v3532
        %v3535 = vadd.f32 %v3439, %v3533
        %v3536 = vadd.f32 %v3440, %v3534
        %v3537 = vmul.f32 %v552, %v3535
        %v3538 = vmul.f32 %v553, %v3536
        %v3539 = vadd.f32 %v3537, %v558
        %v3540 = vadd.f32 %v3538, %v559
        %v3541 = vmul.f32 %v540, %v2511
        %v3542 = vmul.f32 %v541, %v2512
        %v3543 = vmul.f32 %v543, %v2869
        %v3544 = vmul.f32 %v544, %v2870
        %v3545 = vadd.f32 %v3541, %v3543
        %v3546 = vadd.f32 %v3542, %v3544
        %v3547 = vmul.f32 %v546, %v3539
        %v3548 = vmul.f32 %v547, %v3540
        %v3549 = vadd.f32 %v3545, %v3547
        %v3550 = vadd.f32 %v3546, %v3548
        %s3551 = scalar_lea.vmem %s527, 16 [#allocation17]
        %3552 = vst.msk [vmem:[%s3551] sm:$0xff] %vm576, %v3549
        %3553 = vst.msk [vmem:[%s3551 + $0x8] sm:$0xff] %vm576, %v3550
        %s3554 = sand.u32 %s223, 1
        %s3555 = scalar_lea.sflag [#allocation7], %s3554
        %s3556 = sand.u32 %s223, 1
        %s3557 = smul.addr %s3556, 32
        %s3558 = scalar_lea.vmem [#allocation17], %s3557
        // Predicated region
        $region77: #{cspn_forward.1} parent=47 // pred_check
          %p3559 = pneg %p233
        $region78: #{cspn_forward.1} parent=47 // pred_check_branch
          %3561 = sbr.rel (%p3559) target = $region80
        $region79: #{cspn_forward.1} parent=47 // pred_region
          %s3563 = ssub.s32 512, 512
          %3564 = vsyncadd %s3555, %s3563
          %s3565 = smul.addr %s33, 4
          %s3566 = smul.addr %s3565, 128
          %s3567 = scalar_lea.hbm %s7, %s3566
          %s3568 = sshll.u32 %s3558, 4
          %s3569 = int_to_ptr.vmem [resolvable:$true] %s3568
          %3574 = dma.vmem_to_hbm [thread:$0]  %s3569, 512, %s3567, %s3555, 128, 128, 8
        $region80: #{cspn_forward.1} parent=47 // pred_fallthru
          _
      $region48: #{cspn_forward.1} parent=5 // pred_fallthru
        _
      %p3575 = scmp.le.s32.totalorder 2, %s28
      // Predicated region
      $region81: #{cspn_forward.1} parent=5 // pred_check
        %p3576 = pneg %p3575
      $region82: #{cspn_forward.1} parent=5 // pred_check_branch
        %3578 = sbr.rel (%p3576) target = $region84
      $region83: #{cspn_forward.1} parent=5 // pred_region
        %s3579 = ssub.s32 %s28, 2
        // Predicated region
        $region85: #{cspn_forward.1} parent=83 // pred_check
          %p3580 = pneg %p239
        $region86: #{cspn_forward.1} parent=83 // pred_check_branch
          %3582 = sbr.rel (%p3580) target = $region88
        $region87: #{cspn_forward.1} parent=83 // pred_region
          %s3583 = sand.u32 %s224, 1
          %s3584 = scalar_lea.sflag [#allocation7], %s3583
          %s3585 = sand.u32 %s224, 1
          %s3586 = smul.addr %s3585, 32
          %s3587 = scalar_lea.vmem [#allocation17], %s3586
          %3588 = dma.done %s3584, 512
        $region88: #{cspn_forward.1} parent=83 // pred_fallthru
          _
      $region84: #{cspn_forward.1} parent=5 // pred_fallthru
        _
    $region6: #{cspn_forward.1} parent=1 // loop_footer
      %s32 = sadd.s32 1, %s28
    $region7: #{cspn_forward.1} parent=1 // loop_footer_branch
      %27 = sbr.rel target = $region3
    $region8: #{cspn_forward.1} parent=1 // loop_exit
      _
    %3589 = vsyncpa [#allocation6], 1
    %s3590 = scalar_lea.sflag [#allocation6], 1
    %3591 = vsyncpa %s3590, 1
    %3592 = vsyncpa [#allocation9], 1
    %s3593 = scalar_lea.sflag [#allocation9], 1
    %3594 = vsyncpa %s3593, 1
    %3595 = vsyncpa [#allocation12], 1
    %s3596 = scalar_lea.sflag [#allocation12], 1
    %3597 = vsyncpa %s3596, 1
    %3598 = vsyncpa [#allocation15], 1
    %s3599 = scalar_lea.sflag [#allocation15], 1
    %3600 = vsyncpa %s3599, 1
    %3601 = vsyncpa [#allocation7], 1
    %s3602 = scalar_lea.sflag [#allocation7], 1
    %3603 = vsyncpa %s3602, 1

</llo_original>
